<compile_context>
chip_gen: v5e
topology: v5e:2x2
jax: 0.10.0
libtpu: 0.0.40
codegen_flags: <defaults>
</compile_context>

<pallas_src>
import jax
import jax.numpy as jnp
from jax import lax
from jax.experimental import pallas as pl
from jax.experimental.pallas import tpu as pltpu

EPS = 1e-5        # PyTorch LayerNorm default eps
FF_TILE = 512     # K-chunk for the feed-forward when FF is large
LANE = 128


def _round_up(x, m):
    return ((x + m - 1) // m) * m


# --------------------------------------------------------------------------------------
# kernel factory (all dims static; one batch element per grid step)
# --------------------------------------------------------------------------------------
def _make_decoder_kernel(L, SM, E, H, FF, E_out, compute_dtype):
    D = E // H
    scale = 1.0 / (D ** 0.5)
    f32 = jnp.float32
    cd = compute_dtype

    def _layernorm(v, w_ref, b_ref):
        # PyTorch LayerNorm: biased variance over last dim, eps inside rsqrt.
        mu = jnp.mean(v, axis=-1, keepdims=True)
        var = jnp.mean((v - mu) ** 2, axis=-1, keepdims=True)
        return (v - mu) * lax.rsqrt(var + EPS) * w_ref[...] + b_ref[...]

    def _softmax_rows(s):
        s = s - jnp.max(s, axis=-1, keepdims=True)
        p = jnp.exp(s)
        denom = jnp.sum(p, axis=-1, keepdims=True)
        # EUP approximate reciprocal + one Newton step (off the VALU divide path, ~exact)
        r = pl.reciprocal(denom, approx=True)
        r = r * (2.0 - denom * r)
        return p * r

    def _attention(q, k, v, Lq, Lk, mask, o_w_ref, o_b_ref):
        """q: (Lq, E) f32 already scaled by 1/sqrt(D); k, v: (Lk, E) f32;
        mask broadcastable to (H, Lq, Lk).  One relayout to head-major, batched einsum over
        heads, one relayout back, then a single full-K output projection."""
        q3 = q.reshape(Lq, H, D).transpose(1, 0, 2).astype(cd)       # (H, Lq, D)
        k3 = k.reshape(Lk, H, D).transpose(1, 0, 2).astype(cd)       # (H, Lk, D)
        v3 = v.reshape(Lk, H, D).transpose(1, 0, 2).astype(cd)       # (H, Lk, D)
        s = jnp.einsum('hqd,hkd->hqk', q3, k3, preferred_element_type=f32)
        s = s + mask
        p = _softmax_rows(s).astype(cd)
        ctx = jnp.einsum('hqk,hkd->hqd', p, v3, preferred_element_type=f32)   # (H, Lq, D)
        ctx = ctx.transpose(1, 0, 2).reshape(Lq, E).astype(cd)                # (Lq, E)
        # single K=E output projection (fills the MXU; no per-head accumulate chain)
        return jnp.dot(ctx, o_w_ref[...], preferred_element_type=f32) + o_b_ref[...]

    def kernel(tgt_ref, mem_ref, tmask_ref, mmask_ref,
               qkv_w_ref, qkv_b_ref, o_w_ref, o_b_ref,
               cq_w_ref, cq_b_ref, ckv_w_ref, ckv_b_ref, co_w_ref, co_b_ref,
               ln1_w_ref, ln1_b_ref, ln2_w_ref, ln2_b_ref, ln3_w_ref, ln3_b_ref,
               w1_ref, b1_ref, w2_ref, b2_ref,
               out_ref):
        x_in = tgt_ref[...]                        # (L, E), compute dtype
        mem = mem_ref[...]                         # (SM, E), compute dtype

        # ---------------- self attention (single fused QKV matmul) ----------------
        qkv = jnp.dot(x_in, qkv_w_ref[...],
                      preferred_element_type=f32) + qkv_b_ref[...]            # (L, 3E) f32
        q = qkv[:, 0:E] * scale
        sa = _attention(q, qkv[:, E:2 * E], qkv[:, 2 * E:3 * E], L, L,
                        tmask_ref[...].astype(f32)[jnp.newaxis],
                        o_w_ref, o_b_ref)
        x = _layernorm(x_in.astype(f32) + sa, ln1_w_ref, ln1_b_ref)           # (L, E) f32

        # --------------- cross attention (fused K/V matmul over memory) -----------
        cq = jnp.dot(x.astype(cd), cq_w_ref[...],
                     preferred_element_type=f32) + cq_b_ref[...]              # (L, E) f32
        ckv = jnp.dot(mem, ckv_w_ref[...],
                      preferred_element_type=f32) + ckv_b_ref[...]            # (SM, 2E) f32
        ca = _attention(cq * scale, ckv[:, 0:E], ckv[:, E:2 * E], L, SM,
                        mmask_ref[...].astype(f32),
                        co_w_ref, co_b_ref)
        x = _layernorm(x + ca, ln2_w_ref, ln2_b_ref)

        # ------------------------------- feed-forward -----------------------------
        xc = x.astype(cd)
        if FF > FF_TILE and FF % FF_TILE == 0:
            n_chunks = FF // FF_TILE

            def ff_body(c, acc):
                off = pl.multiple_of(c * FF_TILE, FF_TILE)
                h1 = (jnp.dot(xc, w1_ref[:, pl.ds(off, FF_TILE)],
                              preferred_element_type=f32)
                      + b1_ref[:, pl.ds(off, FF_TILE)])
                h1 = jnp.maximum(h1, 0.0).astype(cd)
                return acc + jnp.dot(h1, w2_ref[pl.ds(off, FF_TILE), :],
                                     preferred_element_type=f32)

            ff = lax.fori_loop(0, n_chunks, ff_body, jnp.zeros((L, E), f32)) + b2_ref[...]
        else:
            h1 = jnp.dot(xc, w1_ref[...], preferred_element_type=f32) + b1_ref[...]
            h1 = jnp.maximum(h1, 0.0).astype(cd)
            ff = jnp.dot(h1, w2_ref[...], preferred_element_type=f32) + b2_ref[...]
        x = _layernorm(x + ff, ln3_w_ref, ln3_b_ref)

        # --------------- lane-dense store (output lanes padded to 128 mult) -------
        xo = x.astype(out_ref.dtype)
        if E_out != E:
            xo = jnp.concatenate(
                [xo, jnp.zeros((L, E_out - E), out_ref.dtype)], axis=-1)
        out_ref[...] = xo

    return kernel


# --------------------------------------------------------------------------------------
# wrapper: weight fusion / pre-transpose + pallas_call
# --------------------------------------------------------------------------------------
def transformer_decoder_layer(tgt, memory, params, nhead, tgt_mask, memory_mask,
                              compute_dtype=None):
    """tgt: (B, L, E), memory: (B, SM, E); params: PyTorch-layout weights.
    tgt_mask: (L, L) additive mask (or None); memory_mask: (B*nhead, L, SM) additive mask
    (batch-major / head-minor, matching PyTorch MHA internals).
    Returns (out (B, L, E), cache=None)  [use_cache=False path]."""
    B, L, E = tgt.shape
    _, SM, _ = memory.shape
    H = nhead
    FF = params["w1"].shape[0]
    f32 = jnp.float32
    cd = jnp.dtype(compute_dtype) if compute_dtype is not None else tgt.dtype

    # ---- host-side (free XLA) parameter preprocessing: fuse + pre-transpose + dtype ----
    def cw(w):  # big matrices in the MXU compute dtype (bf16 when activations are bf16)
        return w.astype(cd)

    qkv_w = cw(jnp.concatenate([params["q_w"], params["k_w"], params["v_w"]], axis=0).T)
    qkv_b = jnp.concatenate([params["q_b"], params["k_b"], params["v_b"]]
                            ).reshape(1, 3 * E).astype(f32)
    o_wT = cw(params["o_w"].T);   o_b = params["o_b"].reshape(1, E).astype(f32)
    cq_wT = cw(params["cq_w"].T); cq_b = params["cq_b"].reshape(1, E).astype(f32)
    ckv_w = cw(jnp.concatenate([params["ck_w"], params["cv_w"]], axis=0).T)
    ckv_b = jnp.concatenate([params["ck_b"], params["cv_b"]]).reshape(1, 2 * E).astype(f32)
    co_wT = cw(params["co_w"].T); co_b = params["co_b"].reshape(1, E).astype(f32)
    w1T = cw(params["w1"].T);     b1 = params["b1"].reshape(1, FF).astype(f32)
    w2T = cw(params["w2"].T);     b2 = params["b2"].reshape(1, E).astype(f32)
    ln1_w = params["ln1_w"].reshape(1, E).astype(f32)
    ln1_b = params["ln1_b"].reshape(1, E).astype(f32)
    ln2_w = params["ln2_w"].reshape(1, E).astype(f32)
    ln2_b = params["ln2_b"].reshape(1, E).astype(f32)
    ln3_w = params["ln3_w"].reshape(1, E).astype(f32)
    ln3_b = params["ln3_b"].reshape(1, E).astype(f32)

    # ---- masks (match the PyTorch forward: memory_mask[:, -L:] then (b h) l s -> b h l s) ----
    tmask = jnp.zeros((L, L), cd) if tgt_mask is None else tgt_mask.astype(cd)
    assert memory_mask.shape[0] == B * H, "memory_mask must be (B*nhead, L, SM), batch-major"
    mmask = memory_mask[:, -L:, :].reshape(B, H, L, SM).astype(cd)

    x_tgt = tgt.astype(cd)
    x_mem = memory.astype(cd)

    E_out = _round_up(E, LANE)     # lane-dense output block
    kernel = _make_decoder_kernel(L, SM, E, H, FF, E_out, cd)

    def const2d(shape):
        return pl.BlockSpec(shape, lambda b: (0, 0))

    in_specs = [
        pl.BlockSpec((None, L, E), lambda b: (b, 0, 0)),         # tgt   -> kernel (L, E)
        pl.BlockSpec((None, SM, E), lambda b: (b, 0, 0)),        # memory -> kernel (SM, E)
        const2d((L, L)),                                         # tgt_mask
        pl.BlockSpec((None, H, L, SM), lambda b: (b, 0, 0, 0)),  # memory_mask -> (H, L, SM)
        const2d((E, 3 * E)), const2d((1, 3 * E)),                # fused qkv proj
        const2d((E, E)), const2d((1, E)),                        # out proj
        const2d((E, E)), const2d((1, E)),                        # cross q proj
        const2d((E, 2 * E)), const2d((1, 2 * E)),                # fused cross kv proj
        const2d((E, E)), const2d((1, E)),                        # cross out proj
        const2d((1, E)), const2d((1, E)),                        # norm1
        const2d((1, E)), const2d((1, E)),                        # norm2
        const2d((1, E)), const2d((1, E)),                        # norm3
        const2d((E, FF)), const2d((1, FF)),                      # linear1
        const2d((FF, E)), const2d((1, E)),                       # linear2
    ]

    out_padded = pl.pallas_call(
        kernel,
        out_shape=jax.ShapeDtypeStruct((B, L, E_out), tgt.dtype),
        grid_spec=pltpu.PrefetchScalarGridSpec(
            num_scalar_prefetch=0,
            grid=(B,),                                           # pipelined, both TCs on v7x
            in_specs=in_specs,
            out_specs=pl.BlockSpec((None, L, E_out), lambda b: (b, 0, 0)),
        ),
        compiler_params=pltpu.CompilerParams(
            dimension_semantics=("parallel",),
            vmem_limit_bytes=48 * 1024 * 1024,                   # fits v7x's 64 MiB VMEM
        ),
    )(x_tgt, x_mem, tmask, mmask,
      qkv_w, qkv_b, o_wT, o_b,
      cq_wT, cq_b, ckv_w, ckv_b, co_wT, co_b,
      ln1_w, ln1_b, ln2_w, ln2_b, ln3_w, ln3_b,
      w1T, b1, w2T, b2)

    out = out_padded[:, :, :E] if E_out != E else out_padded
    return out, None      # cache=None (use_cache=False)


# --------------------------------------------------------------------------------------
# pure-JAX reference (mirrors the PyTorch forward, eval-mode dropout)
# --------------------------------------------------------------------------------------
def reference(tgt, memory, p, nhead, tgt_mask, memory_mask):
    B, L, E = tgt.shape
    H = nhead
    D = E // H

    def linear(x, w, b):
        return jnp.einsum("ble,fe->blf", x, w) + b

    def ln(v, w, b):
        mu = jnp.mean(v, -1, keepdims=True)
        var = jnp.mean((v - mu) ** 2, -1, keepdims=True)
        return (v - mu) / jnp.sqrt(var + EPS) * w + b

    def attn(q, k, v, mask, o_w, o_b):
        q = q.reshape(B, -1, H, D).transpose(0, 2, 1, 3)
        k = k.reshape(B, -1, H, D).transpose(0, 2, 1, 3)
        v = v.reshape(B, -1, H, D).transpose(0, 2, 1, 3)
        s = jnp.einsum("bhqd,bhkd->bhqk", q, k) / (D ** 0.5)
        if mask is not None:
            if mask.ndim == 2:
                s = s + mask[None, None]
            else:
                s = s + mask.reshape(B, H, mask.shape[1], mask.shape[2])
        pr = jax.nn.softmax(s, axis=-1)
        o = jnp.einsum("bhqk,bhkd->bhqd", pr, v).transpose(0, 2, 1, 3).reshape(B, -1, E)
        return jnp.einsum("ble,fe->blf", o, o_w) + o_b

    x = tgt
    sa = attn(linear(x, p["q_w"], p["q_b"]), linear(x, p["k_w"], p["k_b"]),
              linear(x, p["v_w"], p["v_b"]), tgt_mask, p["o_w"], p["o_b"])
    x = ln(x + sa, p["ln1_w"], p["ln1_b"])
    ca = attn(linear(x, p["cq_w"], p["cq_b"]), linear(memory, p["ck_w"], p["ck_b"]),
              linear(memory, p["cv_w"], p["cv_b"]), memory_mask[:, -L:],
              p["co_w"], p["co_b"])
    x = ln(x + ca, p["ln2_w"], p["ln2_b"])
    ff = jnp.einsum("blf,ef->ble",
                    jnp.maximum(linear(x, p["w1"], p["b1"]), 0.0), p["w2"]) + p["b2"]
    x = ln(x + ff, p["ln3_w"], p["ln3_b"])
    return x


if __name__ == "__main__":
    jax.config.update("jax_default_matmul_precision", "highest")

    B, L, SM, E, H, FF = 2, 8, 16, 32, 4, 64

    key = jax.random.PRNGKey(0)
    ks = jax.random.split(key, 32)

    def w(i, shape, s=0.1):
        return jax.random.normal(ks[i], shape, jnp.float32) * s

    params = {
        "q_w":  w(0, (E, E)),  "q_b":  w(1, (E,)),
        "k_w":  w(2, (E, E)),  "k_b":  w(3, (E,)),
        "v_w":  w(4, (E, E)),  "v_b":  w(5, (E,)),
        "o_w":  w(6, (E, E)),  "o_b":  w(7, (E,)),
        "cq_w": w(8, (E, E)),  "cq_b": w(9, (E,)),
        "ck_w": w(10, (E, E)), "ck_b": w(11, (E,)),
        "cv_w": w(12, (E, E)), "cv_b": w(13, (E,)),
        "co_w": w(14, (E, E)), "co_b": w(15, (E,)),
        "w1":   w(16, (FF, E)), "b1":  w(17, (FF,)),
        "w2":   w(18, (E, FF)), "b2":  w(19, (E,)),
        "ln1_w": 1.0 + w(20, (E,)), "ln1_b": w(21, (E,)),
        "ln2_w": 1.0 + w(22, (E,)), "ln2_b": w(23, (E,)),
        "ln3_w": 1.0 + w(24, (E,)), "ln3_b": w(25, (E,)),
    }
    tgt = jax.random.normal(ks[26], (B, L, E), jnp.float32)
    memory = jax.random.normal(ks[27], (B, SM, E), jnp.float32)

    # 2-D causal additive mask for self-attention, 3-D additive mask for cross-attention
    causal_mask = jnp.where(jnp.tril(jnp.ones((L, L), dtype=bool)), 0.0, -1e9).astype(jnp.float32)
    memory_mask = jax.random.normal(ks[28], (B * H, L, SM), jnp.float32) * 0.5

    out, cache = transformer_decoder_layer(tgt, memory, params, H, causal_mask, memory_mask)
    out = jax.block_until_ready(out)

    ref = reference(tgt, memory, params, H, causal_mask, memory_mask)
    assert cache is None
    assert out.shape == (B, L, E)
    err = float(jnp.max(jnp.abs(out - ref)))
    assert jnp.allclose(out, ref, atol=1e-3, rtol=1e-3), f"mismatch vs reference, max abs err={err}"

    print("KERNEL_OK")
</pallas_src>

<mosaic_0001>
module attributes {stable_mosaic.version = 11 : i64} {
  func.func @kernel(%arg0: i32, %arg1: memref<1x8x32xf32, #tpu.memory_space<vmem>>, %arg2: memref<1x16x32xf32, #tpu.memory_space<vmem>>, %arg3: memref<8x8xf32, #tpu.memory_space<vmem>>, %arg4: memref<1x4x8x16xf32, #tpu.memory_space<vmem>>, %arg5: memref<32x96xf32, #tpu.memory_space<vmem>>, %arg6: memref<1x96xf32, #tpu.memory_space<vmem>>, %arg7: memref<32x32xf32, #tpu.memory_space<vmem>>, %arg8: memref<1x32xf32, #tpu.memory_space<vmem>>, %arg9: memref<32x32xf32, #tpu.memory_space<vmem>>, %arg10: memref<1x32xf32, #tpu.memory_space<vmem>>, %arg11: memref<32x64xf32, #tpu.memory_space<vmem>>, %arg12: memref<1x64xf32, #tpu.memory_space<vmem>>, %arg13: memref<32x32xf32, #tpu.memory_space<vmem>>, %arg14: memref<1x32xf32, #tpu.memory_space<vmem>>, %arg15: memref<1x32xf32, #tpu.memory_space<vmem>>, %arg16: memref<1x32xf32, #tpu.memory_space<vmem>>, %arg17: memref<1x32xf32, #tpu.memory_space<vmem>>, %arg18: memref<1x32xf32, #tpu.memory_space<vmem>>, %arg19: memref<1x32xf32, #tpu.memory_space<vmem>>, %arg20: memref<1x32xf32, #tpu.memory_space<vmem>>, %arg21: memref<32x64xf32, #tpu.memory_space<vmem>>, %arg22: memref<1x64xf32, #tpu.memory_space<vmem>>, %arg23: memref<64x32xf32, #tpu.memory_space<vmem>>, %arg24: memref<1x32xf32, #tpu.memory_space<vmem>>, %arg25: memref<1x8x128xf32, #tpu.memory_space<vmem>>) attributes {dimension_semantics = [#tpu.dimension_semantics<parallel>], iteration_bounds = array<i64: 2>, scalar_prefetch = 0 : i64, scratch_operands = 0 : i64, tpu.core_type = #tpu.core_type<tc>, window_params = [{transform_indices = @transform_0, window_bounds = array<i64: 1, 8, 32>}, {transform_indices = @transform_1, window_bounds = array<i64: 1, 16, 32>}, {pipeline_mode = #tpu.pipeline_mode<synchronous>, transform_indices = @transform_2, window_bounds = array<i64: 8, 8>}, {transform_indices = @transform_3, window_bounds = array<i64: 1, 4, 8, 16>}, {pipeline_mode = #tpu.pipeline_mode<synchronous>, transform_indices = @transform_4, window_bounds = array<i64: 32, 96>}, {pipeline_mode = #tpu.pipeline_mode<synchronous>, transform_indices = @transform_5, window_bounds = array<i64: 1, 96>}, {pipeline_mode = #tpu.pipeline_mode<synchronous>, transform_indices = @transform_6, window_bounds = array<i64: 32, 32>}, {pipeline_mode = #tpu.pipeline_mode<synchronous>, transform_indices = @transform_7, window_bounds = array<i64: 1, 32>}, {pipeline_mode = #tpu.pipeline_mode<synchronous>, transform_indices = @transform_8, window_bounds = array<i64: 32, 32>}, {pipeline_mode = #tpu.pipeline_mode<synchronous>, transform_indices = @transform_9, window_bounds = array<i64: 1, 32>}, {pipeline_mode = #tpu.pipeline_mode<synchronous>, transform_indices = @transform_10, window_bounds = array<i64: 32, 64>}, {pipeline_mode = #tpu.pipeline_mode<synchronous>, transform_indices = @transform_11, window_bounds = array<i64: 1, 64>}, {pipeline_mode = #tpu.pipeline_mode<synchronous>, transform_indices = @transform_12, window_bounds = array<i64: 32, 32>}, {pipeline_mode = #tpu.pipeline_mode<synchronous>, transform_indices = @transform_13, window_bounds = array<i64: 1, 32>}, {pipeline_mode = #tpu.pipeline_mode<synchronous>, transform_indices = @transform_14, window_bounds = array<i64: 1, 32>}, {pipeline_mode = #tpu.pipeline_mode<synchronous>, transform_indices = @transform_15, window_bounds = array<i64: 1, 32>}, {pipeline_mode = #tpu.pipeline_mode<synchronous>, transform_indices = @transform_16, window_bounds = array<i64: 1, 32>}, {pipeline_mode = #tpu.pipeline_mode<synchronous>, transform_indices = @transform_17, window_bounds = array<i64: 1, 32>}, {pipeline_mode = #tpu.pipeline_mode<synchronous>, transform_indices = @transform_18, window_bounds = array<i64: 1, 32>}, {pipeline_mode = #tpu.pipeline_mode<synchronous>, transform_indices = @transform_19, window_bounds = array<i64: 1, 32>}, {pipeline_mode = #tpu.pipeline_mode<synchronous>, transform_indices = @transform_20, window_bounds = array<i64: 32, 64>}, {pipeline_mode = #tpu.pipeline_mode<synchronous>, transform_indices = @transform_21, window_bounds = array<i64: 1, 64>}, {pipeline_mode = #tpu.pipeline_mode<synchronous>, transform_indices = @transform_22, window_bounds = array<i64: 64, 32>}, {pipeline_mode = #tpu.pipeline_mode<synchronous>, transform_indices = @transform_23, window_bounds = array<i64: 1, 32>}, {transform_indices = @transform_24, window_bounds = array<i64: 1, 8, 128>}]} {
    %c0 = arith.constant 0 : index
    %c0_0 = arith.constant 0 : index
    %c0_1 = arith.constant 0 : index
    %0 = vector.load %arg1[%c0, %c0_0, %c0_1] : memref<1x8x32xf32, #tpu.memory_space<vmem>>, vector<1x8x32xf32>
    %1 = vector.shape_cast %0 : vector<1x8x32xf32> to vector<8x32xf32>
    %c0_2 = arith.constant 0 : index
    %c0_3 = arith.constant 0 : index
    %c0_4 = arith.constant 0 : index
    %2 = vector.load %arg2[%c0_2, %c0_3, %c0_4] : memref<1x16x32xf32, #tpu.memory_space<vmem>>, vector<1x16x32xf32>
    %3 = vector.shape_cast %2 : vector<1x16x32xf32> to vector<16x32xf32>
    %c0_5 = arith.constant 0 : index
    %c0_6 = arith.constant 0 : index
    %4 = vector.load %arg5[%c0_5, %c0_6] : memref<32x96xf32, #tpu.memory_space<vmem>>, vector<32x96xf32>
    %cst = arith.constant dense<0.000000e+00> : vector<8x96xf32>
    %5 = tpu.matmul %1, %4, %cst {dimension_numbers = #tpu.dot_dimension_numbers<[1], [0], [0], [1], [0, 0, 1, 1], [], []>, precision = #tpu.contract_precision<fp32>} : vector<8x32xf32>, vector<32x96xf32>, vector<8x96xf32> -> vector<8x96xf32>
    %c0_7 = arith.constant 0 : index
    %c0_8 = arith.constant 0 : index
    %6 = vector.load %arg6[%c0_7, %c0_8] : memref<1x96xf32, #tpu.memory_space<vmem>>, vector<1x96xf32>
    %7 = vector.broadcast %6 : vector<1x96xf32> to vector<8x96xf32>
    %8 = arith.addf %5, %7 : vector<8x96xf32>
    %9 = vector.extract_strided_slice %8 {offsets = [0, 0], sizes = [8, 32], strides = [1, 1]} : vector<8x96xf32> to vector<8x32xf32>
    %cst_9 = arith.constant 0.353553385 : f32
    %10 = vector.broadcast %cst_9 : f32 to vector<8x32xf32>
    %11 = arith.mulf %9, %10 : vector<8x32xf32>
    %12 = vector.extract_strided_slice %8 {offsets = [0, 32], sizes = [8, 32], strides = [1, 1]} : vector<8x96xf32> to vector<8x32xf32>
    %13 = vector.extract_strided_slice %8 {offsets = [0, 64], sizes = [8, 32], strides = [1, 1]} : vector<8x96xf32> to vector<8x32xf32>
    %c0_10 = arith.constant 0 : index
    %c0_11 = arith.constant 0 : index
    %14 = vector.load %arg3[%c0_10, %c0_11] : memref<8x8xf32, #tpu.memory_space<vmem>>, vector<8x8xf32>
    %15 = vector.shape_cast %14 : vector<8x8xf32> to vector<1x8x8xf32>
    %16 = vector.shape_cast %11 : vector<8x32xf32> to vector<8x4x8xf32>
    %17 = tpu.transpose %16, [1, 0, 2] : vector<8x4x8xf32> -> vector<4x8x8xf32>
    %18 = vector.shape_cast %12 : vector<8x32xf32> to vector<8x4x8xf32>
    %19 = tpu.transpose %18, [1, 0, 2] : vector<8x4x8xf32> -> vector<4x8x8xf32>
    %20 = vector.shape_cast %13 : vector<8x32xf32> to vector<8x4x8xf32>
    %21 = tpu.transpose %20, [1, 0, 2] : vector<8x4x8xf32> -> vector<4x8x8xf32>
    "tpu.trace_start"() <{level = 10 : i32, message = "hqd,hkd->hqk"}> : () -> ()
    %cst_12 = arith.constant dense<0.000000e+00> : vector<4x8x8xf32>
    %22 = tpu.matmul %17, %19, %cst_12 {dimension_numbers = #tpu.dot_dimension_numbers<[2], [2], [1], [1], [0, 0, 0, 1, 1, 1], [0], [0]>, precision = #tpu.contract_precision<fp32>} : vector<4x8x8xf32>, vector<4x8x8xf32>, vector<4x8x8xf32> -> vector<4x8x8xf32>
    "tpu.trace_stop"() : () -> ()
    %23 = vector.broadcast %15 : vector<1x8x8xf32> to vector<4x8x8xf32>
    %24 = arith.addf %22, %23 : vector<4x8x8xf32>
    %cst_13 = arith.constant dense<0xFF800000> : vector<4x8xf32>
    %25 = vector.multi_reduction <maximumf>, %24, %cst_13 [2] : vector<4x8x8xf32> to vector<4x8xf32>
    %26 = vector.shape_cast %25 : vector<4x8xf32> to vector<4x8x1xf32>
    %27 = vector.broadcast %26 : vector<4x8x1xf32> to vector<4x8x8xf32>
    %28 = arith.subf %24, %27 : vector<4x8x8xf32>
    %29 = math.exp %28 : vector<4x8x8xf32>
    %cst_14 = arith.constant dense<0.000000e+00> : vector<4x8xf32>
    %30 = vector.multi_reduction <add>, %29, %cst_14 [2] : vector<4x8x8xf32> to vector<4x8xf32>
    %31 = vector.shape_cast %30 : vector<4x8xf32> to vector<4x8x1xf32>
    %32 = tpu.reciprocal %31 {approx = true} : vector<4x8x1xf32> -> vector<4x8x1xf32>
    %33 = arith.mulf %31, %32 : vector<4x8x1xf32>
    %cst_15 = arith.constant 2.000000e+00 : f32
    %34 = vector.broadcast %cst_15 : f32 to vector<4x8x1xf32>
    %35 = arith.subf %34, %33 : vector<4x8x1xf32>
    %36 = arith.mulf %32, %35 : vector<4x8x1xf32>
    %37 = vector.broadcast %36 : vector<4x8x1xf32> to vector<4x8x8xf32>
    %38 = arith.mulf %29, %37 : vector<4x8x8xf32>
    "tpu.trace_start"() <{level = 10 : i32, message = "hqk,hkd->hqd"}> : () -> ()
    %cst_16 = arith.constant dense<0.000000e+00> : vector<4x8x8xf32>
    %39 = tpu.matmul %38, %21, %cst_16 {dimension_numbers = #tpu.dot_dimension_numbers<[2], [1], [1], [2], [0, 0, 0, 1, 1, 2], [0], [0]>, precision = #tpu.contract_precision<fp32>} : vector<4x8x8xf32>, vector<4x8x8xf32>, vector<4x8x8xf32> -> vector<4x8x8xf32>
    "tpu.trace_stop"() : () -> ()
    %40 = tpu.transpose %39, [1, 0, 2] : vector<4x8x8xf32> -> vector<8x4x8xf32>
    %41 = vector.shape_cast %40 : vector<8x4x8xf32> to vector<8x32xf32>
    %c0_17 = arith.constant 0 : index
    %c0_18 = arith.constant 0 : index
    %42 = vector.load %arg7[%c0_17, %c0_18] : memref<32x32xf32, #tpu.memory_space<vmem>>, vector<32x32xf32>
    %cst_19 = arith.constant dense<0.000000e+00> : vector<8x32xf32>
    %43 = tpu.matmul %41, %42, %cst_19 {dimension_numbers = #tpu.dot_dimension_numbers<[1], [0], [0], [1], [0, 0, 1, 1], [], []>, precision = #tpu.contract_precision<fp32>} : vector<8x32xf32>, vector<32x32xf32>, vector<8x32xf32> -> vector<8x32xf32>
    %c0_20 = arith.constant 0 : index
    %c0_21 = arith.constant 0 : index
    %44 = vector.load %arg8[%c0_20, %c0_21] : memref<1x32xf32, #tpu.memory_space<vmem>>, vector<1x32xf32>
    %45 = vector.broadcast %44 : vector<1x32xf32> to vector<8x32xf32>
    %46 = arith.addf %43, %45 : vector<8x32xf32>
    %47 = arith.addf %1, %46 : vector<8x32xf32>
    %cst_22 = arith.constant dense<0.000000e+00> : vector<8xf32>
    %48 = vector.multi_reduction <add>, %47, %cst_22 [1] : vector<8x32xf32> to vector<8xf32>
    %49 = vector.shape_cast %48 : vector<8xf32> to vector<8x1xf32>
    %cst_23 = arith.constant 3.200000e+01 : f32
    %50 = vector.broadcast %cst_23 : f32 to vector<8x1xf32>
    %51 = arith.divf %49, %50 : vector<8x1xf32>
    %52 = vector.broadcast %51 : vector<8x1xf32> to vector<8x32xf32>
    %53 = arith.subf %47, %52 : vector<8x32xf32>
    %54 = arith.mulf %53, %53 : vector<8x32xf32>
    %cst_24 = arith.constant dense<0.000000e+00> : vector<8xf32>
    %55 = vector.multi_reduction <add>, %54, %cst_24 [1] : vector<8x32xf32> to vector<8xf32>
    %56 = vector.shape_cast %55 : vector<8xf32> to vector<8x1xf32>
    %cst_25 = arith.constant 3.200000e+01 : f32
    %57 = vector.broadcast %cst_25 : f32 to vector<8x1xf32>
    %58 = arith.divf %56, %57 : vector<8x1xf32>
    %59 = vector.broadcast %51 : vector<8x1xf32> to vector<8x32xf32>
    %60 = arith.subf %47, %59 : vector<8x32xf32>
    %cst_26 = arith.constant 9.99999974E-6 : f32
    %61 = vector.broadcast %cst_26 : f32 to vector<8x1xf32>
    %62 = arith.addf %58, %61 : vector<8x1xf32>
    %63 = math.rsqrt %62 : vector<8x1xf32>
    %64 = vector.broadcast %63 : vector<8x1xf32> to vector<8x32xf32>
    %65 = arith.mulf %60, %64 : vector<8x32xf32>
    %c0_27 = arith.constant 0 : index
    %c0_28 = arith.constant 0 : index
    %66 = vector.load %arg15[%c0_27, %c0_28] : memref<1x32xf32, #tpu.memory_space<vmem>>, vector<1x32xf32>
    %67 = vector.broadcast %66 : vector<1x32xf32> to vector<8x32xf32>
    %68 = arith.mulf %65, %67 : vector<8x32xf32>
    %c0_29 = arith.constant 0 : index
    %c0_30 = arith.constant 0 : index
    %69 = vector.load %arg16[%c0_29, %c0_30] : memref<1x32xf32, #tpu.memory_space<vmem>>, vector<1x32xf32>
    %70 = vector.broadcast %69 : vector<1x32xf32> to vector<8x32xf32>
    %71 = arith.addf %68, %70 : vector<8x32xf32>
    %c0_31 = arith.constant 0 : index
    %c0_32 = arith.constant 0 : index
    %72 = vector.load %arg9[%c0_31, %c0_32] : memref<32x32xf32, #tpu.memory_space<vmem>>, vector<32x32xf32>
    %cst_33 = arith.constant dense<0.000000e+00> : vector<8x32xf32>
    %73 = tpu.matmul %71, %72, %cst_33 {dimension_numbers = #tpu.dot_dimension_numbers<[1], [0], [0], [1], [0, 0, 1, 1], [], []>, precision = #tpu.contract_precision<fp32>} : vector<8x32xf32>, vector<32x32xf32>, vector<8x32xf32> -> vector<8x32xf32>
    %c0_34 = arith.constant 0 : index
    %c0_35 = arith.constant 0 : index
    %74 = vector.load %arg10[%c0_34, %c0_35] : memref<1x32xf32, #tpu.memory_space<vmem>>, vector<1x32xf32>
    %75 = vector.broadcast %74 : vector<1x32xf32> to vector<8x32xf32>
    %76 = arith.addf %73, %75 : vector<8x32xf32>
    %c0_36 = arith.constant 0 : index
    %c0_37 = arith.constant 0 : index
    %77 = vector.load %arg11[%c0_36, %c0_37] : memref<32x64xf32, #tpu.memory_space<vmem>>, vector<32x64xf32>
    %cst_38 = arith.constant dense<0.000000e+00> : vector<16x64xf32>
    %78 = tpu.matmul %3, %77, %cst_38 {dimension_numbers = #tpu.dot_dimension_numbers<[1], [0], [0], [1], [0, 0, 1, 1], [], []>, precision = #tpu.contract_precision<fp32>} : vector<16x32xf32>, vector<32x64xf32>, vector<16x64xf32> -> vector<16x64xf32>
    %c0_39 = arith.constant 0 : index
    %c0_40 = arith.constant 0 : index
    %79 = vector.load %arg12[%c0_39, %c0_40] : memref<1x64xf32, #tpu.memory_space<vmem>>, vector<1x64xf32>
    %80 = vector.broadcast %79 : vector<1x64xf32> to vector<16x64xf32>
    %81 = arith.addf %78, %80 : vector<16x64xf32>
    %cst_41 = arith.constant 0.353553385 : f32
    %82 = vector.broadcast %cst_41 : f32 to vector<8x32xf32>
    %83 = arith.mulf %76, %82 : vector<8x32xf32>
    %84 = vector.extract_strided_slice %81 {offsets = [0, 0], sizes = [16, 32], strides = [1, 1]} : vector<16x64xf32> to vector<16x32xf32>
    %85 = vector.extract_strided_slice %81 {offsets = [0, 32], sizes = [16, 32], strides = [1, 1]} : vector<16x64xf32> to vector<16x32xf32>
    %c0_42 = arith.constant 0 : index
    %c0_43 = arith.constant 0 : index
    %c0_44 = arith.constant 0 : index
    %c0_45 = arith.constant 0 : index
    %86 = vector.load %arg4[%c0_42, %c0_43, %c0_44, %c0_45] : memref<1x4x8x16xf32, #tpu.memory_space<vmem>>, vector<1x4x8x16xf32>
    %87 = vector.shape_cast %86 : vector<1x4x8x16xf32> to vector<4x8x16xf32>
    %88 = vector.shape_cast %83 : vector<8x32xf32> to vector<8x4x8xf32>
    %89 = tpu.transpose %88, [1, 0, 2] : vector<8x4x8xf32> -> vector<4x8x8xf32>
    %90 = vector.shape_cast %84 : vector<16x32xf32> to vector<16x4x8xf32>
    %91 = tpu.transpose %90, [1, 0, 2] : vector<16x4x8xf32> -> vector<4x16x8xf32>
    %92 = vector.shape_cast %85 : vector<16x32xf32> to vector<16x4x8xf32>
    %93 = tpu.transpose %92, [1, 0, 2] : vector<16x4x8xf32> -> vector<4x16x8xf32>
    "tpu.trace_start"() <{level = 10 : i32, message = "hqd,hkd->hqk"}> : () -> ()
    %cst_46 = arith.constant dense<0.000000e+00> : vector<4x8x16xf32>
    %94 = tpu.matmul %89, %91, %cst_46 {dimension_numbers = #tpu.dot_dimension_numbers<[2], [2], [1], [1], [0, 0, 0, 1, 1, 1], [0], [0]>, precision = #tpu.contract_precision<fp32>} : vector<4x8x8xf32>, vector<4x16x8xf32>, vector<4x8x16xf32> -> vector<4x8x16xf32>
    "tpu.trace_stop"() : () -> ()
    %95 = arith.addf %94, %87 : vector<4x8x16xf32>
    %cst_47 = arith.constant dense<0xFF800000> : vector<4x8xf32>
    %96 = vector.multi_reduction <maximumf>, %95, %cst_47 [2] : vector<4x8x16xf32> to vector<4x8xf32>
    %97 = vector.shape_cast %96 : vector<4x8xf32> to vector<4x8x1xf32>
    %98 = vector.broadcast %97 : vector<4x8x1xf32> to vector<4x8x16xf32>
    %99 = arith.subf %95, %98 : vector<4x8x16xf32>
    %100 = math.exp %99 : vector<4x8x16xf32>
    %cst_48 = arith.constant dense<0.000000e+00> : vector<4x8xf32>
    %101 = vector.multi_reduction <add>, %100, %cst_48 [2] : vector<4x8x16xf32> to vector<4x8xf32>
    %102 = vector.shape_cast %101 : vector<4x8xf32> to vector<4x8x1xf32>
    %103 = tpu.reciprocal %102 {approx = true} : vector<4x8x1xf32> -> vector<4x8x1xf32>
    %104 = arith.mulf %102, %103 : vector<4x8x1xf32>
    %cst_49 = arith.constant 2.000000e+00 : f32
    %105 = vector.broadcast %cst_49 : f32 to vector<4x8x1xf32>
    %106 = arith.subf %105, %104 : vector<4x8x1xf32>
    %107 = arith.mulf %103, %106 : vector<4x8x1xf32>
    %108 = vector.broadcast %107 : vector<4x8x1xf32> to vector<4x8x16xf32>
    %109 = arith.mulf %100, %108 : vector<4x8x16xf32>
    "tpu.trace_start"() <{level = 10 : i32, message = "hqk,hkd->hqd"}> : () -> ()
    %cst_50 = arith.constant dense<0.000000e+00> : vector<4x8x8xf32>
    %110 = tpu.matmul %109, %93, %cst_50 {dimension_numbers = #tpu.dot_dimension_numbers<[2], [1], [1], [2], [0, 0, 0, 1, 1, 2], [0], [0]>, precision = #tpu.contract_precision<fp32>} : vector<4x8x16xf32>, vector<4x16x8xf32>, vector<4x8x8xf32> -> vector<4x8x8xf32>
    "tpu.trace_stop"() : () -> ()
    %111 = tpu.transpose %110, [1, 0, 2] : vector<4x8x8xf32> -> vector<8x4x8xf32>
    %112 = vector.shape_cast %111 : vector<8x4x8xf32> to vector<8x32xf32>
    %c0_51 = arith.constant 0 : index
    %c0_52 = arith.constant 0 : index
    %113 = vector.load %arg13[%c0_51, %c0_52] : memref<32x32xf32, #tpu.memory_space<vmem>>, vector<32x32xf32>
    %cst_53 = arith.constant dense<0.000000e+00> : vector<8x32xf32>
    %114 = tpu.matmul %112, %113, %cst_53 {dimension_numbers = #tpu.dot_dimension_numbers<[1], [0], [0], [1], [0, 0, 1, 1], [], []>, precision = #tpu.contract_precision<fp32>} : vector<8x32xf32>, vector<32x32xf32>, vector<8x32xf32> -> vector<8x32xf32>
    %c0_54 = arith.constant 0 : index
    %c0_55 = arith.constant 0 : index
    %115 = vector.load %arg14[%c0_54, %c0_55] : memref<1x32xf32, #tpu.memory_space<vmem>>, vector<1x32xf32>
    %116 = vector.broadcast %115 : vector<1x32xf32> to vector<8x32xf32>
    %117 = arith.addf %114, %116 : vector<8x32xf32>
    %118 = arith.addf %71, %117 : vector<8x32xf32>
    %cst_56 = arith.constant dense<0.000000e+00> : vector<8xf32>
    %119 = vector.multi_reduction <add>, %118, %cst_56 [1] : vector<8x32xf32> to vector<8xf32>
    %120 = vector.shape_cast %119 : vector<8xf32> to vector<8x1xf32>
    %cst_57 = arith.constant 3.200000e+01 : f32
    %121 = vector.broadcast %cst_57 : f32 to vector<8x1xf32>
    %122 = arith.divf %120, %121 : vector<8x1xf32>
    %123 = vector.broadcast %122 : vector<8x1xf32> to vector<8x32xf32>
    %124 = arith.subf %118, %123 : vector<8x32xf32>
    %125 = arith.mulf %124, %124 : vector<8x32xf32>
    %cst_58 = arith.constant dense<0.000000e+00> : vector<8xf32>
    %126 = vector.multi_reduction <add>, %125, %cst_58 [1] : vector<8x32xf32> to vector<8xf32>
    %127 = vector.shape_cast %126 : vector<8xf32> to vector<8x1xf32>
    %cst_59 = arith.constant 3.200000e+01 : f32
    %128 = vector.broadcast %cst_59 : f32 to vector<8x1xf32>
    %129 = arith.divf %127, %128 : vector<8x1xf32>
    %130 = vector.broadcast %122 : vector<8x1xf32> to vector<8x32xf32>
    %131 = arith.subf %118, %130 : vector<8x32xf32>
    %cst_60 = arith.constant 9.99999974E-6 : f32
    %132 = vector.broadcast %cst_60 : f32 to vector<8x1xf32>
    %133 = arith.addf %129, %132 : vector<8x1xf32>
    %134 = math.rsqrt %133 : vector<8x1xf32>
    %135 = vector.broadcast %134 : vector<8x1xf32> to vector<8x32xf32>
    %136 = arith.mulf %131, %135 : vector<8x32xf32>
    %c0_61 = arith.constant 0 : index
    %c0_62 = arith.constant 0 : index
    %137 = vector.load %arg17[%c0_61, %c0_62] : memref<1x32xf32, #tpu.memory_space<vmem>>, vector<1x32xf32>
    %138 = vector.broadcast %137 : vector<1x32xf32> to vector<8x32xf32>
    %139 = arith.mulf %136, %138 : vector<8x32xf32>
    %c0_63 = arith.constant 0 : index
    %c0_64 = arith.constant 0 : index
    %140 = vector.load %arg18[%c0_63, %c0_64] : memref<1x32xf32, #tpu.memory_space<vmem>>, vector<1x32xf32>
    %141 = vector.broadcast %140 : vector<1x32xf32> to vector<8x32xf32>
    %142 = arith.addf %139, %141 : vector<8x32xf32>
    %c0_65 = arith.constant 0 : index
    %c0_66 = arith.constant 0 : index
    %143 = vector.load %arg21[%c0_65, %c0_66] : memref<32x64xf32, #tpu.memory_space<vmem>>, vector<32x64xf32>
    %cst_67 = arith.constant dense<0.000000e+00> : vector<8x64xf32>
    %144 = tpu.matmul %142, %143, %cst_67 {dimension_numbers = #tpu.dot_dimension_numbers<[1], [0], [0], [1], [0, 0, 1, 1], [], []>, precision = #tpu.contract_precision<fp32>} : vector<8x32xf32>, vector<32x64xf32>, vector<8x64xf32> -> vector<8x64xf32>
    %c0_68 = arith.constant 0 : index
    %c0_69 = arith.constant 0 : index
    %145 = vector.load %arg22[%c0_68, %c0_69] : memref<1x64xf32, #tpu.memory_space<vmem>>, vector<1x64xf32>
    %146 = vector.broadcast %145 : vector<1x64xf32> to vector<8x64xf32>
    %147 = arith.addf %144, %146 : vector<8x64xf32>
    %cst_70 = arith.constant 0.000000e+00 : f32
    %148 = vector.broadcast %cst_70 : f32 to vector<8x64xf32>
    %149 = arith.maximumf %147, %148 : vector<8x64xf32>
    %c0_71 = arith.constant 0 : index
    %c0_72 = arith.constant 0 : index
    %150 = vector.load %arg23[%c0_71, %c0_72] : memref<64x32xf32, #tpu.memory_space<vmem>>, vector<64x32xf32>
    %cst_73 = arith.constant dense<0.000000e+00> : vector<8x32xf32>
    %151 = tpu.matmul %149, %150, %cst_73 {dimension_numbers = #tpu.dot_dimension_numbers<[1], [0], [0], [1], [0, 0, 1, 1], [], []>, precision = #tpu.contract_precision<fp32>} : vector<8x64xf32>, vector<64x32xf32>, vector<8x32xf32> -> vector<8x32xf32>
    %c0_74 = arith.constant 0 : index
    %c0_75 = arith.constant 0 : index
    %152 = vector.load %arg24[%c0_74, %c0_75] : memref<1x32xf32, #tpu.memory_space<vmem>>, vector<1x32xf32>
    %153 = vector.broadcast %152 : vector<1x32xf32> to vector<8x32xf32>
    %154 = arith.addf %151, %153 : vector<8x32xf32>
    %155 = arith.addf %142, %154 : vector<8x32xf32>
    %cst_76 = arith.constant dense<0.000000e+00> : vector<8xf32>
    %156 = vector.multi_reduction <add>, %155, %cst_76 [1] : vector<8x32xf32> to vector<8xf32>
    %157 = vector.shape_cast %156 : vector<8xf32> to vector<8x1xf32>
    %cst_77 = arith.constant 3.200000e+01 : f32
    %158 = vector.broadcast %cst_77 : f32 to vector<8x1xf32>
    %159 = arith.divf %157, %158 : vector<8x1xf32>
    %160 = vector.broadcast %159 : vector<8x1xf32> to vector<8x32xf32>
    %161 = arith.subf %155, %160 : vector<8x32xf32>
    %162 = arith.mulf %161, %161 : vector<8x32xf32>
    %cst_78 = arith.constant dense<0.000000e+00> : vector<8xf32>
    %163 = vector.multi_reduction <add>, %162, %cst_78 [1] : vector<8x32xf32> to vector<8xf32>
    %164 = vector.shape_cast %163 : vector<8xf32> to vector<8x1xf32>
    %cst_79 = arith.constant 3.200000e+01 : f32
    %165 = vector.broadcast %cst_79 : f32 to vector<8x1xf32>
    %166 = arith.divf %164, %165 : vector<8x1xf32>
    %167 = vector.broadcast %159 : vector<8x1xf32> to vector<8x32xf32>
    %168 = arith.subf %155, %167 : vector<8x32xf32>
    %cst_80 = arith.constant 9.99999974E-6 : f32
    %169 = vector.broadcast %cst_80 : f32 to vector<8x1xf32>
    %170 = arith.addf %166, %169 : vector<8x1xf32>
    %171 = math.rsqrt %170 : vector<8x1xf32>
    %172 = vector.broadcast %171 : vector<8x1xf32> to vector<8x32xf32>
    %173 = arith.mulf %168, %172 : vector<8x32xf32>
    %c0_81 = arith.constant 0 : index
    %c0_82 = arith.constant 0 : index
    %174 = vector.load %arg19[%c0_81, %c0_82] : memref<1x32xf32, #tpu.memory_space<vmem>>, vector<1x32xf32>
    %175 = vector.broadcast %174 : vector<1x32xf32> to vector<8x32xf32>
    %176 = arith.mulf %173, %175 : vector<8x32xf32>
    %c0_83 = arith.constant 0 : index
    %c0_84 = arith.constant 0 : index
    %177 = vector.load %arg20[%c0_83, %c0_84] : memref<1x32xf32, #tpu.memory_space<vmem>>, vector<1x32xf32>
    %178 = vector.broadcast %177 : vector<1x32xf32> to vector<8x32xf32>
    %179 = arith.addf %176, %178 : vector<8x32xf32>
    %cst_85 = arith.constant 0.000000e+00 : f32
    %180 = vector.broadcast %cst_85 : f32 to vector<8x96xf32>
    %181 = tpu.concatenate %179, %180 in 1 : vector<8x32xf32>, vector<8x96xf32> -> vector<8x128xf32>
    %c0_86 = arith.constant 0 : index
    %c0_87 = arith.constant 0 : index
    %c0_88 = arith.constant 0 : index
    %182 = vector.load %arg25[%c0_86, %c0_87, %c0_88] : memref<1x8x128xf32, #tpu.memory_space<vmem>>, vector<1x8x128xf32>
    %183 = vector.shape_cast %182 : vector<1x8x128xf32> to vector<8x128xf32>
    %184 = vector.shape_cast %181 : vector<8x128xf32> to vector<1x8x128xf32>
    tpu.vector_store %arg25[%c0_86, %c0_87, %c0_88], %184 {strides = array<i32>} : memref<1x8x128xf32, #tpu.memory_space<vmem>>, vector<1x8x128xf32>,
    return
  }
  func.func @transform_0(%arg0: i32) -> (i32, i32, i32) {
    %c0_i32 = arith.constant 0 : i32
    %c0_i32_0 = arith.constant 0 : i32
    %c0_i32_1 = arith.constant 0 : i32
    return %arg0, %c0_i32, %c0_i32_0 : i32, i32, i32
  }
  func.func @transform_1(%arg0: i32) -> (i32, i32, i32) {
    %c0_i32 = arith.constant 0 : i32
    %c0_i32_0 = arith.constant 0 : i32
    %c0_i32_1 = arith.constant 0 : i32
    return %arg0, %c0_i32, %c0_i32_0 : i32, i32, i32
  }
  func.func @transform_2(%arg0: i32) -> (i32, i32) {
    %c0_i32 = arith.constant 0 : i32
    %c0_i32_0 = arith.constant 0 : i32
    %c0_i32_1 = arith.constant 0 : i32
    return %c0_i32, %c0_i32_0 : i32, i32
  }
  func.func @transform_3(%arg0: i32) -> (i32, i32, i32, i32) {
    %c0_i32 = arith.constant 0 : i32
    %c0_i32_0 = arith.constant 0 : i32
    %c0_i32_1 = arith.constant 0 : i32
    %c0_i32_2 = arith.constant 0 : i32
    return %arg0, %c0_i32, %c0_i32_0, %c0_i32_1 : i32, i32, i32, i32
  }
  func.func @transform_4(%arg0: i32) -> (i32, i32) {
    %c0_i32 = arith.constant 0 : i32
    %c0_i32_0 = arith.constant 0 : i32
    %c0_i32_1 = arith.constant 0 : i32
    return %c0_i32, %c0_i32_0 : i32, i32
  }
  func.func @transform_5(%arg0: i32) -> (i32, i32) {
    %c0_i32 = arith.constant 0 : i32
    %c0_i32_0 = arith.constant 0 : i32
    %c0_i32_1 = arith.constant 0 : i32
    return %c0_i32, %c0_i32_0 : i32, i32
  }
  func.func @transform_6(%arg0: i32) -> (i32, i32) {
    %c0_i32 = arith.constant 0 : i32
    %c0_i32_0 = arith.constant 0 : i32
    %c0_i32_1 = arith.constant 0 : i32
    return %c0_i32, %c0_i32_0 : i32, i32
  }
  func.func @transform_7(%arg0: i32) -> (i32, i32) {
    %c0_i32 = arith.constant 0 : i32
    %c0_i32_0 = arith.constant 0 : i32
    %c0_i32_1 = arith.constant 0 : i32
    return %c0_i32, %c0_i32_0 : i32, i32
  }
  func.func @transform_8(%arg0: i32) -> (i32, i32) {
    %c0_i32 = arith.constant 0 : i32
    %c0_i32_0 = arith.constant 0 : i32
    %c0_i32_1 = arith.constant 0 : i32
    return %c0_i32, %c0_i32_0 : i32, i32
  }
  func.func @transform_9(%arg0: i32) -> (i32, i32) {
    %c0_i32 = arith.constant 0 : i32
    %c0_i32_0 = arith.constant 0 : i32
    %c0_i32_1 = arith.constant 0 : i32
    return %c0_i32, %c0_i32_0 : i32, i32
  }
  func.func @transform_10(%arg0: i32) -> (i32, i32) {
    %c0_i32 = arith.constant 0 : i32
    %c0_i32_0 = arith.constant 0 : i32
    %c0_i32_1 = arith.constant 0 : i32
    return %c0_i32, %c0_i32_0 : i32, i32
  }
  func.func @transform_11(%arg0: i32) -> (i32, i32) {
    %c0_i32 = arith.constant 0 : i32
    %c0_i32_0 = arith.constant 0 : i32
    %c0_i32_1 = arith.constant 0 : i32
    return %c0_i32, %c0_i32_0 : i32, i32
  }
  func.func @transform_12(%arg0: i32) -> (i32, i32) {
    %c0_i32 = arith.constant 0 : i32
    %c0_i32_0 = arith.constant 0 : i32
    %c0_i32_1 = arith.constant 0 : i32
    return %c0_i32, %c0_i32_0 : i32, i32
  }
  func.func @transform_13(%arg0: i32) -> (i32, i32) {
    %c0_i32 = arith.constant 0 : i32
    %c0_i32_0 = arith.constant 0 : i32
    %c0_i32_1 = arith.constant 0 : i32
    return %c0_i32, %c0_i32_0 : i32, i32
  }
  func.func @transform_14(%arg0: i32) -> (i32, i32) {
    %c0_i32 = arith.constant 0 : i32
    %c0_i32_0 = arith.constant 0 : i32
    %c0_i32_1 = arith.constant 0 : i32
    return %c0_i32, %c0_i32_0 : i32, i32
  }
  func.func @transform_15(%arg0: i32) -> (i32, i32) {
    %c0_i32 = arith.constant 0 : i32
    %c0_i32_0 = arith.constant 0 : i32
    %c0_i32_1 = arith.constant 0 : i32
    return %c0_i32, %c0_i32_0 : i32, i32
  }
  func.func @transform_16(%arg0: i32) -> (i32, i32) {
    %c0_i32 = arith.constant 0 : i32
    %c0_i32_0 = arith.constant 0 : i32
    %c0_i32_1 = arith.constant 0 : i32
    return %c0_i32, %c0_i32_0 : i32, i32
  }
  func.func @transform_17(%arg0: i32) -> (i32, i32) {
    %c0_i32 = arith.constant 0 : i32
    %c0_i32_0 = arith.constant 0 : i32
    %c0_i32_1 = arith.constant 0 : i32
    return %c0_i32, %c0_i32_0 : i32, i32
  }
  func.func @transform_18(%arg0: i32) -> (i32, i32) {
    %c0_i32 = arith.constant 0 : i32
    %c0_i32_0 = arith.constant 0 : i32
    %c0_i32_1 = arith.constant 0 : i32
    return %c0_i32, %c0_i32_0 : i32, i32
  }
  func.func @transform_19(%arg0: i32) -> (i32, i32) {
    %c0_i32 = arith.constant 0 : i32
    %c0_i32_0 = arith.constant 0 : i32
    %c0_i32_1 = arith.constant 0 : i32
    return %c0_i32, %c0_i32_0 : i32, i32
  }
  func.func @transform_20(%arg0: i32) -> (i32, i32) {
    %c0_i32 = arith.constant 0 : i32
    %c0_i32_0 = arith.constant 0 : i32
    %c0_i32_1 = arith.constant 0 : i32
    return %c0_i32, %c0_i32_0 : i32, i32
  }
  func.func @transform_21(%arg0: i32) -> (i32, i32) {
    %c0_i32 = arith.constant 0 : i32
    %c0_i32_0 = arith.constant 0 : i32
    %c0_i32_1 = arith.constant 0 : i32
    return %c0_i32, %c0_i32_0 : i32, i32
  }
  func.func @transform_22(%arg0: i32) -> (i32, i32) {
    %c0_i32 = arith.constant 0 : i32
    %c0_i32_0 = arith.constant 0 : i32
    %c0_i32_1 = arith.constant 0 : i32
    return %c0_i32, %c0_i32_0 : i32, i32
  }
  func.func @transform_23(%arg0: i32) -> (i32, i32) {
    %c0_i32 = arith.constant 0 : i32
    %c0_i32_0 = arith.constant 0 : i32
    %c0_i32_1 = arith.constant 0 : i32
    return %c0_i32, %c0_i32_0 : i32, i32
  }
  func.func @transform_24(%arg0: i32) -> (i32, i32, i32) {
    %c0_i32 = arith.constant 0 : i32
    %c0_i32_0 = arith.constant 0 : i32
    %c0_i32_1 = arith.constant 0 : i32
    return %arg0, %c0_i32, %c0_i32_0 : i32, i32, i32
  }
}

</mosaic_0001>

<llo_original>
// kernel: tpu_custom_call.1
$region0: #{tpu_custom_call.1}
  #allocation0 [shape = 'u32[]', space=smem, size = 0x4, offset = 0x4, fixed_abs, tag = 'smem constant byte address 0x4 - core index']
  #allocation1 [shape = 'u32[72,128]{1,0:T(1,128)}', space=vmem, size = 0x9000, scoped, tag = 'internal scratch']
  %s0 = inlined_call_operand.hbm [shape: f32[2,8,32], index: 0, kind: input, shape index: {}]
  %s1 = inlined_call_operand.vmem [shape: f32[2,16,32], index: 1, kind: input, shape index: {}]
  %s2 = inlined_call_operand.hbm [shape: f32[8,8], index: 2, kind: input, shape index: {}]
  %s3 = inlined_call_operand.vmem [shape: f32[2,4,8,16], index: 3, kind: input, shape index: {}]
  %s4 = inlined_call_operand.hbm [shape: f32[32,96], index: 4, kind: input, shape index: {}]
  %s5 = inlined_call_operand.vmem [shape: f32[1,96], index: 5, kind: input, shape index: {}]
  %s6 = inlined_call_operand.hbm [shape: f32[32,32], index: 6, kind: input, shape index: {}]
  %s7 = inlined_call_operand.vmem [shape: f32[1,32], index: 7, kind: input, shape index: {}]
  %s8 = inlined_call_operand.hbm [shape: f32[32,32], index: 8, kind: input, shape index: {}]
  %s9 = inlined_call_operand.vmem [shape: f32[1,32], index: 9, kind: input, shape index: {}]
  %s10 = inlined_call_operand.hbm [shape: f32[32,64], index: 10, kind: input, shape index: {}]
  %s11 = inlined_call_operand.vmem [shape: f32[1,64], index: 11, kind: input, shape index: {}]
  %s12 = inlined_call_operand.hbm [shape: f32[32,32], index: 12, kind: input, shape index: {}]
  %s13 = inlined_call_operand.vmem [shape: f32[1,32], index: 13, kind: input, shape index: {}]
  %s14 = inlined_call_operand.vmem [shape: f32[1,32], index: 14, kind: input, shape index: {}]
  %s15 = inlined_call_operand.vmem [shape: f32[1,32], index: 15, kind: input, shape index: {}]
  %s16 = inlined_call_operand.vmem [shape: f32[1,32], index: 16, kind: input, shape index: {}]
  %s17 = inlined_call_operand.vmem [shape: f32[1,32], index: 17, kind: input, shape index: {}]
  %s18 = inlined_call_operand.vmem [shape: f32[1,32], index: 18, kind: input, shape index: {}]
  %s19 = inlined_call_operand.vmem [shape: f32[1,32], index: 19, kind: input, shape index: {}]
  %s20 = inlined_call_operand.hbm [shape: f32[32,64], index: 20, kind: input, shape index: {}]
  %s21 = inlined_call_operand.vmem [shape: f32[1,64], index: 21, kind: input, shape index: {}]
  %s22 = inlined_call_operand.vmem [shape: f32[64,32], index: 22, kind: input, shape index: {}]
  %s23 = inlined_call_operand.vmem [shape: f32[1,32], index: 23, kind: input, shape index: {}]
  %s24 = inlined_call_operand.hbm [shape: f32[2,8,128], index: 24, kind: output, shape index: {}]
  %s25 = sld [smem:[#allocation0]]
  $region161: #{tpu_custom_call.1} parent=0
    _
  %s27 = ssub.s32 1, %s25
  %s28 = scalar_select 0, %s27, %s25
  $region1: #{tpu_custom_call.1} parent=0
    #allocation2 [shape = 'u8[8192]{0}', space=vmem, size = 0x2000, scoped, tag = 'input window, operand 0']
    #allocation3 [shape = 's32[2]{0}', space=sflag, size = 0x8, scoped, tag = 'scoped memory for tpu_custom_call.1']
    #allocation4 [shape = 's32[2]{0}', space=sflag, size = 0x8, scoped, tag = 'scoped memory for tpu_custom_call.1']
    #allocation5 [shape = 'u8[4096]{0}', space=vmem, size = 0x1000, scoped, tag = 'input window, operand 2, single buffered']
    #allocation6 [shape = 's32[1]{0}', space=sflag, size = 0x4, scoped, tag = 'scoped memory for tpu_custom_call.1']
    #allocation7 [shape = 'u8[16384]{0}', space=vmem, size = 0x4000, scoped, tag = 'input window, operand 4, single buffered']
    #allocation8 [shape = 'u8[16384]{0}', space=vmem, size = 0x4000, scoped, tag = 'input window, operand 6, single buffered']
    #allocation9 [shape = 's32[1]{0}', space=sflag, size = 0x4, scoped, tag = 'scoped memory for tpu_custom_call.1']
    #allocation10 [shape = 'u8[16384]{0}', space=vmem, size = 0x4000, scoped, tag = 'input window, operand 8, single buffered']
    #allocation11 [shape = 'u8[16384]{0}', space=vmem, size = 0x4000, scoped, tag = 'input window, operand 10, single buffered']
    #allocation12 [shape = 's32[1]{0}', space=sflag, size = 0x4, scoped, tag = 'scoped memory for tpu_custom_call.1']
    #allocation13 [shape = 'u8[16384]{0}', space=vmem, size = 0x4000, scoped, tag = 'input window, operand 12, single buffered']
    #allocation14 [shape = 'u8[16384]{0}', space=vmem, size = 0x4000, scoped, tag = 'input window, operand 20, single buffered']
    #allocation15 [shape = 's32[1]{0}', space=sflag, size = 0x4, scoped, tag = 'scoped memory for tpu_custom_call.1']
    #allocation16 [shape = 'u8[8192]{0}', space=vmem, size = 0x2000, scoped, tag = 'output window, operand 0']
    %29 = vsyncpa [#allocation3], 0
    %s30 = scalar_lea.sflag [#allocation3], 1
    %31 = vsyncpa %s30, 0
    %32 = vsyncpa [#allocation6], 0
    %33 = vsyncpa [#allocation9], 0
    %34 = vsyncpa [#allocation12], 0
    %35 = vsyncpa [#allocation15], 0
    %36 = vsyncpa [#allocation4], 0
    %s37 = scalar_lea.sflag [#allocation4], 1
    %38 = vsyncpa %s37, 0
    loop: start=0, step=1, limit=4
    $region2: #{tpu_custom_call.1} parent=1 // loop_pre_header
      _
    $region3: #{tpu_custom_call.1} parent=1 // loop_header
      %s40 = sphi 0, %s44
      %p41 = scmp.ge.s32.totalorder %s40, 4
      %s50 = sphi 0, %s52
      %s53 = sphi 0, %s50
      %s54 = sphi 0, %s53
      %s70 = sphi 0, %s54
      %s76 = sphi 0, %s78
      %s79 = sphi 0, %s76
      %s80 = sphi 0, %s79
      %s96 = sphi 0, %s80
      %s100 = sphi 0, %s100
      %s102 = sphi 0, %s100
      %s103 = sphi 0, %s102
      %s117 = sphi 0, %s103
      %s123 = sphi 0, %s125
      %s126 = sphi 0, %s123
      %s127 = sphi 0, %s126
      %s143 = sphi 0, %s127
      %s147 = sphi 0, %s147
      %s149 = sphi 0, %s147
      %s150 = sphi 0, %s149
      %s164 = sphi 0, %s150
      %s168 = sphi 0, %s168
      %s170 = sphi 0, %s168
      %s171 = sphi 0, %s170
      %s185 = sphi 0, %s171
      %s189 = sphi 0, %s189
      %s191 = sphi 0, %s189
      %s192 = sphi 0, %s191
      %s206 = sphi 0, %s192
      %s210 = sphi 0, %s210
      %s212 = sphi 0, %s210
      %s213 = sphi 0, %s212
      %s227 = sphi 0, %s213
      %s231 = sphi 0, %s231
      %s233 = sphi 0, %s231
      %s234 = sphi 0, %s233
      %s248 = sphi 0, %s234
      %s252 = sphi 0, %s252
      %s254 = sphi 0, %s252
      %s255 = sphi 0, %s254
      %s269 = sphi 0, %s255
      %s273 = sphi 0, %s273
      %s275 = sphi 0, %s273
      %s276 = sphi 0, %s275
      %s290 = sphi 0, %s276
      %s294 = sphi 0, %s294
      %s296 = sphi 0, %s294
      %s297 = sphi 0, %s296
      %s311 = sphi 0, %s297
      %s315 = sphi 0, %s315
      %s317 = sphi 0, %s315
      %s318 = sphi 0, %s317
      %s332 = sphi 0, %s318
      %s336 = sphi 0, %s336
      %s338 = sphi 0, %s336
      %s339 = sphi 0, %s338
      %s353 = sphi 0, %s339
      %s357 = sphi 0, %s357
      %s359 = sphi 0, %s357
      %s360 = sphi 0, %s359
      %s374 = sphi 0, %s360
      %s378 = sphi 0, %s378
      %s380 = sphi 0, %s378
      %s381 = sphi 0, %s380
      %s395 = sphi 0, %s381
      %s399 = sphi 0, %s399
      %s401 = sphi 0, %s399
      %s402 = sphi 0, %s401
      %s416 = sphi 0, %s402
      %s420 = sphi 0, %s420
      %s422 = sphi 0, %s420
      %s423 = sphi 0, %s422
      %s437 = sphi 0, %s423
      %s441 = sphi 0, %s441
      %s443 = sphi 0, %s441
      %s444 = sphi 0, %s443
      %s458 = sphi 0, %s444
      %s462 = sphi 0, %s462
      %s464 = sphi 0, %s462
      %s465 = sphi 0, %s464
      %s479 = sphi 0, %s465
      %s483 = sphi 0, %s483
      %s485 = sphi 0, %s483
      %s486 = sphi 0, %s485
      %s500 = sphi 0, %s486
      %s504 = sphi 0, %s504
      %s506 = sphi 0, %s504
      %s507 = sphi 0, %s506
      %s521 = sphi 0, %s507
      %s525 = sphi 0, %s525
      %s527 = sphi 0, %s525
      %s528 = sphi 0, %s527
      %s542 = sphi 0, %s528
      %s546 = sphi 0, %s546
      %s548 = sphi 0, %s546
      %s549 = sphi 0, %s548
      %s563 = sphi 0, %s549
      %s569 = sphi 0, %s571
      %s572 = sphi 0, %s569
      %s573 = sphi 0, %s572
      %s589 = sphi 0, %s573
    $region4: #{tpu_custom_call.1} parent=1 // loop_header_branch
      %43 = sbr.rel (%p41) target = $region8
    $region5: #{tpu_custom_call.1} parent=1 // loop_body
      %s45 = ssub.s32 %s40, 1
      %s46 = ssub.s32 %s40, 2
      %s47 = sadd.s32 %s40, 1
      %s48 = ssub.s32 %s40, %s47
      %p49 = scmp.eq.s32.totalorder %s48, 0
      %s51 = sadd.s32 %s50, 1
      %s52 = scalar_select %p49, %s50, %s51
      %p55 = pneg %p49
      %p56 = scmp.eq.s32.totalorder %s40, 1
      %p57 = por %p55, %p56
      %p58 = scmp.ne.s32.totalorder %s50, %s53
      %p59 = scmp.eq.s32.totalorder %s40, 0
      %p60 = por %p58, %p59
      %p61 = scmp.ne.s32.totalorder %s50, %s53
      %p62 = scmp.eq.s32.totalorder %s45, 1
      %p63 = por %p61, %p62
      %p64 = scmp.ne.s32.totalorder %s53, %s54
      %p65 = scmp.eq.s32.totalorder %s45, 0
      %p66 = por %p64, %p65
      %p67 = scmp.ne.s32.totalorder %s53, %s54
      %p68 = scmp.eq.s32.totalorder %s46, 1
      %p69 = por %p67, %p68
      %p71 = scmp.ne.s32.totalorder %s54, %s70
      %p72 = scmp.eq.s32.totalorder %s46, 0
      %p73 = por %p71, %p72
      %s74 = ssub.s32 %s40, %s47
      %p75 = scmp.eq.s32.totalorder %s74, 0
      %s77 = sadd.s32 %s76, 1
      %s78 = scalar_select %p75, %s76, %s77
      %p81 = pneg %p75
      %p82 = scmp.eq.s32.totalorder %s40, 1
      %p83 = por %p81, %p82
      %p84 = scmp.ne.s32.totalorder %s76, %s79
      %p85 = scmp.eq.s32.totalorder %s40, 0
      %p86 = por %p84, %p85
      %p87 = scmp.ne.s32.totalorder %s76, %s79
      %p88 = scmp.eq.s32.totalorder %s45, 1
      %p89 = por %p87, %p88
      %p90 = scmp.ne.s32.totalorder %s79, %s80
      %p91 = scmp.eq.s32.totalorder %s45, 0
      %p92 = por %p90, %p91
      %p93 = scmp.ne.s32.totalorder %s79, %s80
      %p94 = scmp.eq.s32.totalorder %s46, 1
      %p95 = por %p93, %p94
      %p97 = scmp.ne.s32.totalorder %s80, %s96
      %p98 = scmp.eq.s32.totalorder %s46, 0
      %p99 = por %p97, %p98
      %s101 = sadd.s32 %s100, 1
      %p104 = scmp.eq.s32.totalorder %s40, 1
      %p105 = scmp.ne.s32.totalorder %s100, %s102
      %p106 = scmp.eq.s32.totalorder %s40, 0
      %p107 = por %p105, %p106
      %p108 = scmp.ne.s32.totalorder %s100, %s102
      %p109 = scmp.eq.s32.totalorder %s45, 1
      %p110 = por %p108, %p109
      %p111 = scmp.ne.s32.totalorder %s102, %s103
      %p112 = scmp.eq.s32.totalorder %s45, 0
      %p113 = por %p111, %p112
      %p114 = scmp.ne.s32.totalorder %s102, %s103
      %p115 = scmp.eq.s32.totalorder %s46, 1
      %p116 = por %p114, %p115
      %p118 = scmp.ne.s32.totalorder %s103, %s117
      %p119 = scmp.eq.s32.totalorder %s46, 0
      %p120 = por %p118, %p119
      %s121 = ssub.s32 %s40, %s47
      %p122 = scmp.eq.s32.totalorder %s121, 0
      %s124 = sadd.s32 %s123, 1
      %s125 = scalar_select %p122, %s123, %s124
      %p128 = pneg %p122
      %p129 = scmp.eq.s32.totalorder %s40, 1
      %p130 = por %p128, %p129
      %p131 = scmp.ne.s32.totalorder %s123, %s126
      %p132 = scmp.eq.s32.totalorder %s40, 0
      %p133 = por %p131, %p132
      %p134 = scmp.ne.s32.totalorder %s123, %s126
      %p135 = scmp.eq.s32.totalorder %s45, 1
      %p136 = por %p134, %p135
      %p137 = scmp.ne.s32.totalorder %s126, %s127
      %p138 = scmp.eq.s32.totalorder %s45, 0
      %p139 = por %p137, %p138
      %p140 = scmp.ne.s32.totalorder %s126, %s127
      %p141 = scmp.eq.s32.totalorder %s46, 1
      %p142 = por %p140, %p141
      %p144 = scmp.ne.s32.totalorder %s127, %s143
      %p145 = scmp.eq.s32.totalorder %s46, 0
      %p146 = por %p144, %p145
      %s148 = sadd.s32 %s147, 1
      %p151 = scmp.eq.s32.totalorder %s40, 1
      %p152 = scmp.ne.s32.totalorder %s147, %s149
      %p153 = scmp.eq.s32.totalorder %s40, 0
      %p154 = por %p152, %p153
      %p155 = scmp.ne.s32.totalorder %s147, %s149
      %p156 = scmp.eq.s32.totalorder %s45, 1
      %p157 = por %p155, %p156
      %p158 = scmp.ne.s32.totalorder %s149, %s150
      %p159 = scmp.eq.s32.totalorder %s45, 0
      %p160 = por %p158, %p159
      %p161 = scmp.ne.s32.totalorder %s149, %s150
      %p162 = scmp.eq.s32.totalorder %s46, 1
      %p163 = por %p161, %p162
      %p165 = scmp.ne.s32.totalorder %s150, %s164
      %p166 = scmp.eq.s32.totalorder %s46, 0
      %p167 = por %p165, %p166
      %s169 = sadd.s32 %s168, 1
      %p172 = scmp.eq.s32.totalorder %s40, 1
      %p173 = scmp.ne.s32.totalorder %s168, %s170
      %p174 = scmp.eq.s32.totalorder %s40, 0
      %p175 = por %p173, %p174
      %p176 = scmp.ne.s32.totalorder %s168, %s170
      %p177 = scmp.eq.s32.totalorder %s45, 1
      %p178 = por %p176, %p177
      %p179 = scmp.ne.s32.totalorder %s170, %s171
      %p180 = scmp.eq.s32.totalorder %s45, 0
      %p181 = por %p179, %p180
      %p182 = scmp.ne.s32.totalorder %s170, %s171
      %p183 = scmp.eq.s32.totalorder %s46, 1
      %p184 = por %p182, %p183
      %p186 = scmp.ne.s32.totalorder %s171, %s185
      %p187 = scmp.eq.s32.totalorder %s46, 0
      %p188 = por %p186, %p187
      %s190 = sadd.s32 %s189, 1
      %p193 = scmp.eq.s32.totalorder %s40, 1
      %p194 = scmp.ne.s32.totalorder %s189, %s191
      %p195 = scmp.eq.s32.totalorder %s40, 0
      %p196 = por %p194, %p195
      %p197 = scmp.ne.s32.totalorder %s189, %s191
      %p198 = scmp.eq.s32.totalorder %s45, 1
      %p199 = por %p197, %p198
      %p200 = scmp.ne.s32.totalorder %s191, %s192
      %p201 = scmp.eq.s32.totalorder %s45, 0
      %p202 = por %p200, %p201
      %p203 = scmp.ne.s32.totalorder %s191, %s192
      %p204 = scmp.eq.s32.totalorder %s46, 1
      %p205 = por %p203, %p204
      %p207 = scmp.ne.s32.totalorder %s192, %s206
      %p208 = scmp.eq.s32.totalorder %s46, 0
      %p209 = por %p207, %p208
      %s211 = sadd.s32 %s210, 1
      %p214 = scmp.eq.s32.totalorder %s40, 1
      %p215 = scmp.ne.s32.totalorder %s210, %s212
      %p216 = scmp.eq.s32.totalorder %s40, 0
      %p217 = por %p215, %p216
      %p218 = scmp.ne.s32.totalorder %s210, %s212
      %p219 = scmp.eq.s32.totalorder %s45, 1
      %p220 = por %p218, %p219
      %p221 = scmp.ne.s32.totalorder %s212, %s213
      %p222 = scmp.eq.s32.totalorder %s45, 0
      %p223 = por %p221, %p222
      %p224 = scmp.ne.s32.totalorder %s212, %s213
      %p225 = scmp.eq.s32.totalorder %s46, 1
      %p226 = por %p224, %p225
      %p228 = scmp.ne.s32.totalorder %s213, %s227
      %p229 = scmp.eq.s32.totalorder %s46, 0
      %p230 = por %p228, %p229
      %s232 = sadd.s32 %s231, 1
      %p235 = scmp.eq.s32.totalorder %s40, 1
      %p236 = scmp.ne.s32.totalorder %s231, %s233
      %p237 = scmp.eq.s32.totalorder %s40, 0
      %p238 = por %p236, %p237
      %p239 = scmp.ne.s32.totalorder %s231, %s233
      %p240 = scmp.eq.s32.totalorder %s45, 1
      %p241 = por %p239, %p240
      %p242 = scmp.ne.s32.totalorder %s233, %s234
      %p243 = scmp.eq.s32.totalorder %s45, 0
      %p244 = por %p242, %p243
      %p245 = scmp.ne.s32.totalorder %s233, %s234
      %p246 = scmp.eq.s32.totalorder %s46, 1
      %p247 = por %p245, %p246
      %p249 = scmp.ne.s32.totalorder %s234, %s248
      %p250 = scmp.eq.s32.totalorder %s46, 0
      %p251 = por %p249, %p250
      %s253 = sadd.s32 %s252, 1
      %p256 = scmp.eq.s32.totalorder %s40, 1
      %p257 = scmp.ne.s32.totalorder %s252, %s254
      %p258 = scmp.eq.s32.totalorder %s40, 0
      %p259 = por %p257, %p258
      %p260 = scmp.ne.s32.totalorder %s252, %s254
      %p261 = scmp.eq.s32.totalorder %s45, 1
      %p262 = por %p260, %p261
      %p263 = scmp.ne.s32.totalorder %s254, %s255
      %p264 = scmp.eq.s32.totalorder %s45, 0
      %p265 = por %p263, %p264
      %p266 = scmp.ne.s32.totalorder %s254, %s255
      %p267 = scmp.eq.s32.totalorder %s46, 1
      %p268 = por %p266, %p267
      %p270 = scmp.ne.s32.totalorder %s255, %s269
      %p271 = scmp.eq.s32.totalorder %s46, 0
      %p272 = por %p270, %p271
      %s274 = sadd.s32 %s273, 1
      %p277 = scmp.eq.s32.totalorder %s40, 1
      %p278 = scmp.ne.s32.totalorder %s273, %s275
      %p279 = scmp.eq.s32.totalorder %s40, 0
      %p280 = por %p278, %p279
      %p281 = scmp.ne.s32.totalorder %s273, %s275
      %p282 = scmp.eq.s32.totalorder %s45, 1
      %p283 = por %p281, %p282
      %p284 = scmp.ne.s32.totalorder %s275, %s276
      %p285 = scmp.eq.s32.totalorder %s45, 0
      %p286 = por %p284, %p285
      %p287 = scmp.ne.s32.totalorder %s275, %s276
      %p288 = scmp.eq.s32.totalorder %s46, 1
      %p289 = por %p287, %p288
      %p291 = scmp.ne.s32.totalorder %s276, %s290
      %p292 = scmp.eq.s32.totalorder %s46, 0
      %p293 = por %p291, %p292
      %s295 = sadd.s32 %s294, 1
      %p298 = scmp.eq.s32.totalorder %s40, 1
      %p299 = scmp.ne.s32.totalorder %s294, %s296
      %p300 = scmp.eq.s32.totalorder %s40, 0
      %p301 = por %p299, %p300
      %p302 = scmp.ne.s32.totalorder %s294, %s296
      %p303 = scmp.eq.s32.totalorder %s45, 1
      %p304 = por %p302, %p303
      %p305 = scmp.ne.s32.totalorder %s296, %s297
      %p306 = scmp.eq.s32.totalorder %s45, 0
      %p307 = por %p305, %p306
      %p308 = scmp.ne.s32.totalorder %s296, %s297
      %p309 = scmp.eq.s32.totalorder %s46, 1
      %p310 = por %p308, %p309
      %p312 = scmp.ne.s32.totalorder %s297, %s311
      %p313 = scmp.eq.s32.totalorder %s46, 0
      %p314 = por %p312, %p313
      %s316 = sadd.s32 %s315, 1
      %p319 = scmp.eq.s32.totalorder %s40, 1
      %p320 = scmp.ne.s32.totalorder %s315, %s317
      %p321 = scmp.eq.s32.totalorder %s40, 0
      %p322 = por %p320, %p321
      %p323 = scmp.ne.s32.totalorder %s315, %s317
      %p324 = scmp.eq.s32.totalorder %s45, 1
      %p325 = por %p323, %p324
      %p326 = scmp.ne.s32.totalorder %s317, %s318
      %p327 = scmp.eq.s32.totalorder %s45, 0
      %p328 = por %p326, %p327
      %p329 = scmp.ne.s32.totalorder %s317, %s318
      %p330 = scmp.eq.s32.totalorder %s46, 1
      %p331 = por %p329, %p330
      %p333 = scmp.ne.s32.totalorder %s318, %s332
      %p334 = scmp.eq.s32.totalorder %s46, 0
      %p335 = por %p333, %p334
      %s337 = sadd.s32 %s336, 1
      %p340 = scmp.eq.s32.totalorder %s40, 1
      %p341 = scmp.ne.s32.totalorder %s336, %s338
      %p342 = scmp.eq.s32.totalorder %s40, 0
      %p343 = por %p341, %p342
      %p344 = scmp.ne.s32.totalorder %s336, %s338
      %p345 = scmp.eq.s32.totalorder %s45, 1
      %p346 = por %p344, %p345
      %p347 = scmp.ne.s32.totalorder %s338, %s339
      %p348 = scmp.eq.s32.totalorder %s45, 0
      %p349 = por %p347, %p348
      %p350 = scmp.ne.s32.totalorder %s338, %s339
      %p351 = scmp.eq.s32.totalorder %s46, 1
      %p352 = por %p350, %p351
      %p354 = scmp.ne.s32.totalorder %s339, %s353
      %p355 = scmp.eq.s32.totalorder %s46, 0
      %p356 = por %p354, %p355
      %s358 = sadd.s32 %s357, 1
      %p361 = scmp.eq.s32.totalorder %s40, 1
      %p362 = scmp.ne.s32.totalorder %s357, %s359
      %p363 = scmp.eq.s32.totalorder %s40, 0
      %p364 = por %p362, %p363
      %p365 = scmp.ne.s32.totalorder %s357, %s359
      %p366 = scmp.eq.s32.totalorder %s45, 1
      %p367 = por %p365, %p366
      %p368 = scmp.ne.s32.totalorder %s359, %s360
      %p369 = scmp.eq.s32.totalorder %s45, 0
      %p370 = por %p368, %p369
      %p371 = scmp.ne.s32.totalorder %s359, %s360
      %p372 = scmp.eq.s32.totalorder %s46, 1
      %p373 = por %p371, %p372
      %p375 = scmp.ne.s32.totalorder %s360, %s374
      %p376 = scmp.eq.s32.totalorder %s46, 0
      %p377 = por %p375, %p376
      %s379 = sadd.s32 %s378, 1
      %p382 = scmp.eq.s32.totalorder %s40, 1
      %p383 = scmp.ne.s32.totalorder %s378, %s380
      %p384 = scmp.eq.s32.totalorder %s40, 0
      %p385 = por %p383, %p384
      %p386 = scmp.ne.s32.totalorder %s378, %s380
      %p387 = scmp.eq.s32.totalorder %s45, 1
      %p388 = por %p386, %p387
      %p389 = scmp.ne.s32.totalorder %s380, %s381
      %p390 = scmp.eq.s32.totalorder %s45, 0
      %p391 = por %p389, %p390
      %p392 = scmp.ne.s32.totalorder %s380, %s381
      %p393 = scmp.eq.s32.totalorder %s46, 1
      %p394 = por %p392, %p393
      %p396 = scmp.ne.s32.totalorder %s381, %s395
      %p397 = scmp.eq.s32.totalorder %s46, 0
      %p398 = por %p396, %p397
      %s400 = sadd.s32 %s399, 1
      %p403 = scmp.eq.s32.totalorder %s40, 1
      %p404 = scmp.ne.s32.totalorder %s399, %s401
      %p405 = scmp.eq.s32.totalorder %s40, 0
      %p406 = por %p404, %p405
      %p407 = scmp.ne.s32.totalorder %s399, %s401
      %p408 = scmp.eq.s32.totalorder %s45, 1
      %p409 = por %p407, %p408
      %p410 = scmp.ne.s32.totalorder %s401, %s402
      %p411 = scmp.eq.s32.totalorder %s45, 0
      %p412 = por %p410, %p411
      %p413 = scmp.ne.s32.totalorder %s401, %s402
      %p414 = scmp.eq.s32.totalorder %s46, 1
      %p415 = por %p413, %p414
      %p417 = scmp.ne.s32.totalorder %s402, %s416
      %p418 = scmp.eq.s32.totalorder %s46, 0
      %p419 = por %p417, %p418
      %s421 = sadd.s32 %s420, 1
      %p424 = scmp.eq.s32.totalorder %s40, 1
      %p425 = scmp.ne.s32.totalorder %s420, %s422
      %p426 = scmp.eq.s32.totalorder %s40, 0
      %p427 = por %p425, %p426
      %p428 = scmp.ne.s32.totalorder %s420, %s422
      %p429 = scmp.eq.s32.totalorder %s45, 1
      %p430 = por %p428, %p429
      %p431 = scmp.ne.s32.totalorder %s422, %s423
      %p432 = scmp.eq.s32.totalorder %s45, 0
      %p433 = por %p431, %p432
      %p434 = scmp.ne.s32.totalorder %s422, %s423
      %p435 = scmp.eq.s32.totalorder %s46, 1
      %p436 = por %p434, %p435
      %p438 = scmp.ne.s32.totalorder %s423, %s437
      %p439 = scmp.eq.s32.totalorder %s46, 0
      %p440 = por %p438, %p439
      %s442 = sadd.s32 %s441, 1
      %p445 = scmp.eq.s32.totalorder %s40, 1
      %p446 = scmp.ne.s32.totalorder %s441, %s443
      %p447 = scmp.eq.s32.totalorder %s40, 0
      %p448 = por %p446, %p447
      %p449 = scmp.ne.s32.totalorder %s441, %s443
      %p450 = scmp.eq.s32.totalorder %s45, 1
      %p451 = por %p449, %p450
      %p452 = scmp.ne.s32.totalorder %s443, %s444
      %p453 = scmp.eq.s32.totalorder %s45, 0
      %p454 = por %p452, %p453
      %p455 = scmp.ne.s32.totalorder %s443, %s444
      %p456 = scmp.eq.s32.totalorder %s46, 1
      %p457 = por %p455, %p456
      %p459 = scmp.ne.s32.totalorder %s444, %s458
      %p460 = scmp.eq.s32.totalorder %s46, 0
      %p461 = por %p459, %p460
      %s463 = sadd.s32 %s462, 1
      %p466 = scmp.eq.s32.totalorder %s40, 1
      %p467 = scmp.ne.s32.totalorder %s462, %s464
      %p468 = scmp.eq.s32.totalorder %s40, 0
      %p469 = por %p467, %p468
      %p470 = scmp.ne.s32.totalorder %s462, %s464
      %p471 = scmp.eq.s32.totalorder %s45, 1
      %p472 = por %p470, %p471
      %p473 = scmp.ne.s32.totalorder %s464, %s465
      %p474 = scmp.eq.s32.totalorder %s45, 0
      %p475 = por %p473, %p474
      %p476 = scmp.ne.s32.totalorder %s464, %s465
      %p477 = scmp.eq.s32.totalorder %s46, 1
      %p478 = por %p476, %p477
      %p480 = scmp.ne.s32.totalorder %s465, %s479
      %p481 = scmp.eq.s32.totalorder %s46, 0
      %p482 = por %p480, %p481
      %s484 = sadd.s32 %s483, 1
      %p487 = scmp.eq.s32.totalorder %s40, 1
      %p488 = scmp.ne.s32.totalorder %s483, %s485
      %p489 = scmp.eq.s32.totalorder %s40, 0
      %p490 = por %p488, %p489
      %p491 = scmp.ne.s32.totalorder %s483, %s485
      %p492 = scmp.eq.s32.totalorder %s45, 1
      %p493 = por %p491, %p492
      %p494 = scmp.ne.s32.totalorder %s485, %s486
      %p495 = scmp.eq.s32.totalorder %s45, 0
      %p496 = por %p494, %p495
      %p497 = scmp.ne.s32.totalorder %s485, %s486
      %p498 = scmp.eq.s32.totalorder %s46, 1
      %p499 = por %p497, %p498
      %p501 = scmp.ne.s32.totalorder %s486, %s500
      %p502 = scmp.eq.s32.totalorder %s46, 0
      %p503 = por %p501, %p502
      %s505 = sadd.s32 %s504, 1
      %p508 = scmp.eq.s32.totalorder %s40, 1
      %p509 = scmp.ne.s32.totalorder %s504, %s506
      %p510 = scmp.eq.s32.totalorder %s40, 0
      %p511 = por %p509, %p510
      %p512 = scmp.ne.s32.totalorder %s504, %s506
      %p513 = scmp.eq.s32.totalorder %s45, 1
      %p514 = por %p512, %p513
      %p515 = scmp.ne.s32.totalorder %s506, %s507
      %p516 = scmp.eq.s32.totalorder %s45, 0
      %p517 = por %p515, %p516
      %p518 = scmp.ne.s32.totalorder %s506, %s507
      %p519 = scmp.eq.s32.totalorder %s46, 1
      %p520 = por %p518, %p519
      %p522 = scmp.ne.s32.totalorder %s507, %s521
      %p523 = scmp.eq.s32.totalorder %s46, 0
      %p524 = por %p522, %p523
      %s526 = sadd.s32 %s525, 1
      %p529 = scmp.eq.s32.totalorder %s40, 1
      %p530 = scmp.ne.s32.totalorder %s525, %s527
      %p531 = scmp.eq.s32.totalorder %s40, 0
      %p532 = por %p530, %p531
      %p533 = scmp.ne.s32.totalorder %s525, %s527
      %p534 = scmp.eq.s32.totalorder %s45, 1
      %p535 = por %p533, %p534
      %p536 = scmp.ne.s32.totalorder %s527, %s528
      %p537 = scmp.eq.s32.totalorder %s45, 0
      %p538 = por %p536, %p537
      %p539 = scmp.ne.s32.totalorder %s527, %s528
      %p540 = scmp.eq.s32.totalorder %s46, 1
      %p541 = por %p539, %p540
      %p543 = scmp.ne.s32.totalorder %s528, %s542
      %p544 = scmp.eq.s32.totalorder %s46, 0
      %p545 = por %p543, %p544
      %s547 = sadd.s32 %s546, 1
      %p550 = scmp.eq.s32.totalorder %s40, 1
      %p551 = scmp.ne.s32.totalorder %s546, %s548
      %p552 = scmp.eq.s32.totalorder %s40, 0
      %p553 = por %p551, %p552
      %p554 = scmp.ne.s32.totalorder %s546, %s548
      %p555 = scmp.eq.s32.totalorder %s45, 1
      %p556 = por %p554, %p555
      %p557 = scmp.ne.s32.totalorder %s548, %s549
      %p558 = scmp.eq.s32.totalorder %s45, 0
      %p559 = por %p557, %p558
      %p560 = scmp.ne.s32.totalorder %s548, %s549
      %p561 = scmp.eq.s32.totalorder %s46, 1
      %p562 = por %p560, %p561
      %p564 = scmp.ne.s32.totalorder %s549, %s563
      %p565 = scmp.eq.s32.totalorder %s46, 0
      %p566 = por %p564, %p565
      %s567 = ssub.s32 %s40, %s47
      %p568 = scmp.eq.s32.totalorder %s567, 0
      %s570 = sadd.s32 %s569, 1
      %s571 = scalar_select %p568, %s569, %s570
      %p574 = pneg %p568
      %p575 = scmp.eq.s32.totalorder %s40, 1
      %p576 = por %p574, %p575
      %p577 = scmp.ne.s32.totalorder %s569, %s572
      %p578 = scmp.eq.s32.totalorder %s40, 0
      %p579 = por %p577, %p578
      %p580 = scmp.ne.s32.totalorder %s569, %s572
      %p581 = scmp.eq.s32.totalorder %s45, 1
      %p582 = por %p580, %p581
      %p583 = scmp.ne.s32.totalorder %s572, %s573
      %p584 = scmp.eq.s32.totalorder %s45, 0
      %p585 = por %p583, %p584
      %p586 = scmp.ne.s32.totalorder %s572, %s573
      %p587 = scmp.eq.s32.totalorder %s46, 1
      %p588 = por %p586, %p587
      %p590 = scmp.ne.s32.totalorder %s573, %s589
      %p591 = scmp.eq.s32.totalorder %s46, 0
      %p592 = por %p590, %p591
      %p593 = scmp.le.s32.totalorder 1, %s40
      %p594 = scmp.lt.s32.totalorder %s40, 3
      %p595 = pnand %p593, %p594
      %p596 = pneg %p595
      // Predicated region
      $region9: #{tpu_custom_call.1} parent=5 // pred_check
        _
      $region10: #{tpu_custom_call.1} parent=5 // pred_check_branch
        %598 = sbr.rel (%p595) target = $region12
      $region11: #{tpu_custom_call.1} parent=5 // pred_region
        %s599 = ssub.s32 %s40, 1
        // Predicated region
        $region13: #{tpu_custom_call.1} parent=11 // pred_check
          %p600 = pneg %p113
        $region14: #{tpu_custom_call.1} parent=11 // pred_check_branch
          %602 = sbr.rel (%p600) target = $region16
        $region15: #{tpu_custom_call.1} parent=11 // pred_region
          %604 = vsyncadd [#allocation6], 0
          %s606 = sshll.u32 %s2, 4
          %s607 = int_to_ptr.hbm [resolvable:$true] %s606
          %s608 = sshll.u32 [#allocation5], 4
          %s609 = int_to_ptr.vmem [resolvable:$true] %s608
          %611 = dma.hbm_to_vmem [thread:$0]  %s607, 128, %s609, [#allocation6]
        $region16: #{tpu_custom_call.1} parent=11 // pred_fallthru
          _
        // Predicated region
        $region17: #{tpu_custom_call.1} parent=11 // pred_check
          %p612 = pneg %p160
        $region18: #{tpu_custom_call.1} parent=11 // pred_check_branch
          %614 = sbr.rel (%p612) target = $region20
        $region19: #{tpu_custom_call.1} parent=11 // pred_region
          %616 = vsyncadd [#allocation6], 0
          %s617 = sshll.u32 %s4, 4
          %s618 = int_to_ptr.hbm [resolvable:$true] %s617
          %s619 = sshll.u32 [#allocation7], 4
          %s620 = int_to_ptr.vmem [resolvable:$true] %s619
          %625 = dma.hbm_to_vmem [thread:$0]  %s618, 512, %s620, [#allocation6], 128, 128, 8
        $region20: #{tpu_custom_call.1} parent=11 // pred_fallthru
          _
        // Predicated region
        $region21: #{tpu_custom_call.1} parent=11 // pred_check
          %p626 = pneg %p181
        $region22: #{tpu_custom_call.1} parent=11 // pred_check_branch
          %628 = sbr.rel (%p626) target = $region24
        $region23: #{tpu_custom_call.1} parent=11 // pred_region
          _
        $region24: #{tpu_custom_call.1} parent=11 // pred_fallthru
          _
        // Predicated region
        $region25: #{tpu_custom_call.1} parent=11 // pred_check
          %p629 = pneg %p202
        $region26: #{tpu_custom_call.1} parent=11 // pred_check_branch
          %631 = sbr.rel (%p629) target = $region28
        $region27: #{tpu_custom_call.1} parent=11 // pred_region
          %633 = vsyncadd [#allocation9], 0
          %s634 = sshll.u32 %s6, 4
          %s635 = int_to_ptr.hbm [resolvable:$true] %s634
          %s636 = sshll.u32 [#allocation8], 4
          %s637 = int_to_ptr.vmem [resolvable:$true] %s636
          %642 = dma.hbm_to_vmem [thread:$0]  %s635, 512, %s637, [#allocation9], 128, 128, 8
        $region28: #{tpu_custom_call.1} parent=11 // pred_fallthru
          _
        // Predicated region
        $region29: #{tpu_custom_call.1} parent=11 // pred_check
          %p643 = pneg %p223
        $region30: #{tpu_custom_call.1} parent=11 // pred_check_branch
          %645 = sbr.rel (%p643) target = $region32
        $region31: #{tpu_custom_call.1} parent=11 // pred_region
          _
        $region32: #{tpu_custom_call.1} parent=11 // pred_fallthru
          _
        // Predicated region
        $region33: #{tpu_custom_call.1} parent=11 // pred_check
          %p646 = pneg %p244
        $region34: #{tpu_custom_call.1} parent=11 // pred_check_branch
          %648 = sbr.rel (%p646) target = $region36
        $region35: #{tpu_custom_call.1} parent=11 // pred_region
          %650 = vsyncadd [#allocation9], 0
          %s651 = sshll.u32 %s8, 4
          %s652 = int_to_ptr.hbm [resolvable:$true] %s651
          %s653 = sshll.u32 [#allocation10], 4
          %s654 = int_to_ptr.vmem [resolvable:$true] %s653
          %659 = dma.hbm_to_vmem [thread:$0]  %s652, 512, %s654, [#allocation9], 128, 128, 8
        $region36: #{tpu_custom_call.1} parent=11 // pred_fallthru
          _
        // Predicated region
        $region37: #{tpu_custom_call.1} parent=11 // pred_check
          %p660 = pneg %p265
        $region38: #{tpu_custom_call.1} parent=11 // pred_check_branch
          %662 = sbr.rel (%p660) target = $region40
        $region39: #{tpu_custom_call.1} parent=11 // pred_region
          _
        $region40: #{tpu_custom_call.1} parent=11 // pred_fallthru
          _
        // Predicated region
        $region41: #{tpu_custom_call.1} parent=11 // pred_check
          %p663 = pneg %p286
        $region42: #{tpu_custom_call.1} parent=11 // pred_check_branch
          %665 = sbr.rel (%p663) target = $region44
        $region43: #{tpu_custom_call.1} parent=11 // pred_region
          %667 = vsyncadd [#allocation12], 0
          %s668 = sshll.u32 %s10, 4
          %s669 = int_to_ptr.hbm [resolvable:$true] %s668
          %s670 = sshll.u32 [#allocation11], 4
          %s671 = int_to_ptr.vmem [resolvable:$true] %s670
          %676 = dma.hbm_to_vmem [thread:$0]  %s669, 512, %s671, [#allocation12], 128, 128, 8
        $region44: #{tpu_custom_call.1} parent=11 // pred_fallthru
          _
        // Predicated region
        $region45: #{tpu_custom_call.1} parent=11 // pred_check
          %p677 = pneg %p307
        $region46: #{tpu_custom_call.1} parent=11 // pred_check_branch
          %679 = sbr.rel (%p677) target = $region48
        $region47: #{tpu_custom_call.1} parent=11 // pred_region
          _
        $region48: #{tpu_custom_call.1} parent=11 // pred_fallthru
          _
        // Predicated region
        $region49: #{tpu_custom_call.1} parent=11 // pred_check
          %p680 = pneg %p328
        $region50: #{tpu_custom_call.1} parent=11 // pred_check_branch
          %682 = sbr.rel (%p680) target = $region52
        $region51: #{tpu_custom_call.1} parent=11 // pred_region
          %684 = vsyncadd [#allocation12], 0
          %s685 = sshll.u32 %s12, 4
          %s686 = int_to_ptr.hbm [resolvable:$true] %s685
          %s687 = sshll.u32 [#allocation13], 4
          %s688 = int_to_ptr.vmem [resolvable:$true] %s687
          %693 = dma.hbm_to_vmem [thread:$0]  %s686, 512, %s688, [#allocation12], 128, 128, 8
        $region52: #{tpu_custom_call.1} parent=11 // pred_fallthru
          _
        // Predicated region
        $region53: #{tpu_custom_call.1} parent=11 // pred_check
          %p694 = pneg %p349
        $region54: #{tpu_custom_call.1} parent=11 // pred_check_branch
          %696 = sbr.rel (%p694) target = $region56
        $region55: #{tpu_custom_call.1} parent=11 // pred_region
          _
        $region56: #{tpu_custom_call.1} parent=11 // pred_fallthru
          _
        // Predicated region
        $region57: #{tpu_custom_call.1} parent=11 // pred_check
          %p697 = pneg %p370
        $region58: #{tpu_custom_call.1} parent=11 // pred_check_branch
          %699 = sbr.rel (%p697) target = $region60
        $region59: #{tpu_custom_call.1} parent=11 // pred_region
          _
        $region60: #{tpu_custom_call.1} parent=11 // pred_fallthru
          _
        // Predicated region
        $region61: #{tpu_custom_call.1} parent=11 // pred_check
          %p700 = pneg %p391
        $region62: #{tpu_custom_call.1} parent=11 // pred_check_branch
          %702 = sbr.rel (%p700) target = $region64
        $region63: #{tpu_custom_call.1} parent=11 // pred_region
          _
        $region64: #{tpu_custom_call.1} parent=11 // pred_fallthru
          _
        // Predicated region
        $region65: #{tpu_custom_call.1} parent=11 // pred_check
          %p703 = pneg %p412
        $region66: #{tpu_custom_call.1} parent=11 // pred_check_branch
          %705 = sbr.rel (%p703) target = $region68
        $region67: #{tpu_custom_call.1} parent=11 // pred_region
          _
        $region68: #{tpu_custom_call.1} parent=11 // pred_fallthru
          _
        // Predicated region
        $region69: #{tpu_custom_call.1} parent=11 // pred_check
          %p706 = pneg %p433
        $region70: #{tpu_custom_call.1} parent=11 // pred_check_branch
          %708 = sbr.rel (%p706) target = $region72
        $region71: #{tpu_custom_call.1} parent=11 // pred_region
          _
        $region72: #{tpu_custom_call.1} parent=11 // pred_fallthru
          _
        // Predicated region
        $region73: #{tpu_custom_call.1} parent=11 // pred_check
          %p709 = pneg %p454
        $region74: #{tpu_custom_call.1} parent=11 // pred_check_branch
          %711 = sbr.rel (%p709) target = $region76
        $region75: #{tpu_custom_call.1} parent=11 // pred_region
          _
        $region76: #{tpu_custom_call.1} parent=11 // pred_fallthru
          _
        // Predicated region
        $region77: #{tpu_custom_call.1} parent=11 // pred_check
          %p712 = pneg %p475
        $region78: #{tpu_custom_call.1} parent=11 // pred_check_branch
          %714 = sbr.rel (%p712) target = $region80
        $region79: #{tpu_custom_call.1} parent=11 // pred_region
          _
        $region80: #{tpu_custom_call.1} parent=11 // pred_fallthru
          _
        // Predicated region
        $region81: #{tpu_custom_call.1} parent=11 // pred_check
          %p715 = pneg %p496
        $region82: #{tpu_custom_call.1} parent=11 // pred_check_branch
          %717 = sbr.rel (%p715) target = $region84
        $region83: #{tpu_custom_call.1} parent=11 // pred_region
          %719 = vsyncadd [#allocation15], 0
          %s720 = sshll.u32 %s20, 4
          %s721 = int_to_ptr.hbm [resolvable:$true] %s720
          %s722 = sshll.u32 [#allocation14], 4
          %s723 = int_to_ptr.vmem [resolvable:$true] %s722
          %728 = dma.hbm_to_vmem [thread:$0]  %s721, 512, %s723, [#allocation15], 128, 128, 8
        $region84: #{tpu_custom_call.1} parent=11 // pred_fallthru
          _
        // Predicated region
        $region85: #{tpu_custom_call.1} parent=11 // pred_check
          %p729 = pneg %p517
        $region86: #{tpu_custom_call.1} parent=11 // pred_check_branch
          %731 = sbr.rel (%p729) target = $region88
        $region87: #{tpu_custom_call.1} parent=11 // pred_region
          _
        $region88: #{tpu_custom_call.1} parent=11 // pred_fallthru
          _
        // Predicated region
        $region89: #{tpu_custom_call.1} parent=11 // pred_check
          %p732 = pneg %p538
        $region90: #{tpu_custom_call.1} parent=11 // pred_check_branch
          %734 = sbr.rel (%p732) target = $region92
        $region91: #{tpu_custom_call.1} parent=11 // pred_region
          _
        $region92: #{tpu_custom_call.1} parent=11 // pred_fallthru
          _
        // Predicated region
        $region93: #{tpu_custom_call.1} parent=11 // pred_check
          %p735 = pneg %p559
        $region94: #{tpu_custom_call.1} parent=11 // pred_check_branch
          %737 = sbr.rel (%p735) target = $region96
        $region95: #{tpu_custom_call.1} parent=11 // pred_region
          _
        $region96: #{tpu_custom_call.1} parent=11 // pred_fallthru
          _
      $region12: #{tpu_custom_call.1} parent=5 // pred_fallthru
        _
      %p738 = scmp.lt.s32.totalorder %s40, 2
      // Predicated region
      $region97: #{tpu_custom_call.1} parent=5 // pred_check
        %p739 = pneg %p738
      $region98: #{tpu_custom_call.1} parent=5 // pred_check_branch
        %741 = sbr.rel (%p739) target = $region100
      $region99: #{tpu_custom_call.1} parent=5 // pred_region
        // Predicated region
        $region101: #{tpu_custom_call.1} parent=99 // pred_check
          %p742 = pneg %p60
        $region102: #{tpu_custom_call.1} parent=99 // pred_check_branch
          %744 = sbr.rel (%p742) target = $region104
        $region103: #{tpu_custom_call.1} parent=99 // pred_region
          %s745 = sand.u32 %s50, 1
          %s746 = scalar_lea.sflag [#allocation3], %s745
          %s747 = sand.u32 %s50, 1
          %s748 = smul.addr %s747, 8
          %s749 = scalar_lea.vmem [#allocation2], %s748
          %751 = vsyncadd %s746, 0
          %s752 = smul.addr %s40, 8
          %s753 = scalar_lea.hbm %s0, %s752
          %s755 = sshll.u32 %s753, 4
          %s756 = int_to_ptr.hbm [resolvable:$true] %s755
          %s757 = sshll.u32 %s749, 4
          %s758 = int_to_ptr.vmem [resolvable:$true] %s757
          %760 = dma.hbm_to_vmem [thread:$0]  %s756, 128, %s758, %s746
        $region104: #{tpu_custom_call.1} parent=99 // pred_fallthru
          _
        // Predicated region
        $region105: #{tpu_custom_call.1} parent=99 // pred_check
          %p761 = pneg %p86
        $region106: #{tpu_custom_call.1} parent=99 // pred_check_branch
          %763 = sbr.rel (%p761) target = $region108
        $region107: #{tpu_custom_call.1} parent=99 // pred_region
          %p764 = scmp.lt.s32.totalorder %s40, 1
          %s765 = scalar_select %p764, %s40, 1
          %s766 = smul.addr %s765, 2
          %s767 = smul.addr %s766, 8
          %s768 = scalar_lea.vmem %s1, %s767
        $region108: #{tpu_custom_call.1} parent=99 // pred_fallthru
          _
        // Predicated region
        $region109: #{tpu_custom_call.1} parent=99 // pred_check
          %p769 = pneg %p133
        $region110: #{tpu_custom_call.1} parent=99 // pred_check_branch
          %771 = sbr.rel (%p769) target = $region112
        $region111: #{tpu_custom_call.1} parent=99 // pred_region
          %p772 = scmp.lt.s32.totalorder %s40, 1
          %s773 = scalar_select %p772, %s40, 1
          %s774 = smul.addr %s773, 4
          %s775 = smul.addr %s774, 8
          %s776 = scalar_lea.vmem %s3, %s775
        $region112: #{tpu_custom_call.1} parent=99 // pred_fallthru
          _
      $region100: #{tpu_custom_call.1} parent=5 // pred_fallthru
        _
      %p777 = scmp.le.s32.totalorder 1, %s40
      %p778 = scmp.lt.s32.totalorder %s40, 3
      %p779 = pnand %p777, %p778
      %p780 = pneg %p779
      // Predicated region
      $region113: #{tpu_custom_call.1} parent=5 // pred_check
        _
      $region114: #{tpu_custom_call.1} parent=5 // pred_check_branch
        %782 = sbr.rel (%p779) target = $region116
      $region115: #{tpu_custom_call.1} parent=5 // pred_region
        %s783 = ssub.s32 %s40, 1
        %s784 = sand.u32 %s53, 1
        %s785 = scalar_lea.sflag [#allocation3], %s784
        %s786 = sand.u32 %s53, 1
        %s787 = smul.addr %s786, 8
        %s788 = scalar_lea.vmem [#allocation2], %s787
        // Predicated region
        $region117: #{tpu_custom_call.1} parent=115 // pred_check
          %p789 = pneg %p66
        $region118: #{tpu_custom_call.1} parent=115 // pred_check_branch
          %791 = sbr.rel (%p789) target = $region120
        $region119: #{tpu_custom_call.1} parent=115 // pred_region
          %793 = dma.done %s785, 128
        $region120: #{tpu_custom_call.1} parent=115 // pred_fallthru
          _
        // Predicated region
        $region121: #{tpu_custom_call.1} parent=115 // pred_check
          %p794 = pneg %p113
        $region122: #{tpu_custom_call.1} parent=115 // pred_check_branch
          %796 = sbr.rel (%p794) target = $region124
        $region123: #{tpu_custom_call.1} parent=115 // pred_region
          %798 = dma.done [#allocation6], 128
        $region124: #{tpu_custom_call.1} parent=115 // pred_fallthru
          _
        // Predicated region
        $region125: #{tpu_custom_call.1} parent=115 // pred_check
          %p799 = pneg %p160
        $region126: #{tpu_custom_call.1} parent=115 // pred_check_branch
          %801 = sbr.rel (%p799) target = $region128
        $region127: #{tpu_custom_call.1} parent=115 // pred_region
          %803 = dma.done [#allocation6], 512
        $region128: #{tpu_custom_call.1} parent=115 // pred_fallthru
          _
        // Predicated region
        $region129: #{tpu_custom_call.1} parent=115 // pred_check
          %p804 = pneg %p202
        $region130: #{tpu_custom_call.1} parent=115 // pred_check_branch
          %806 = sbr.rel (%p804) target = $region132
        $region131: #{tpu_custom_call.1} parent=115 // pred_region
          %808 = dma.done [#allocation9], 512
        $region132: #{tpu_custom_call.1} parent=115 // pred_fallthru
          _
        // Predicated region
        $region133: #{tpu_custom_call.1} parent=115 // pred_check
          %p809 = pneg %p244
        $region134: #{tpu_custom_call.1} parent=115 // pred_check_branch
          %811 = sbr.rel (%p809) target = $region136
        $region135: #{tpu_custom_call.1} parent=115 // pred_region
          %813 = dma.done [#allocation9], 512
        $region136: #{tpu_custom_call.1} parent=115 // pred_fallthru
          _
        // Predicated region
        $region137: #{tpu_custom_call.1} parent=115 // pred_check
          %p814 = pneg %p286
        $region138: #{tpu_custom_call.1} parent=115 // pred_check_branch
          %816 = sbr.rel (%p814) target = $region140
        $region139: #{tpu_custom_call.1} parent=115 // pred_region
          %818 = dma.done [#allocation12], 512
        $region140: #{tpu_custom_call.1} parent=115 // pred_fallthru
          _
        // Predicated region
        $region141: #{tpu_custom_call.1} parent=115 // pred_check
          %p819 = pneg %p328
        $region142: #{tpu_custom_call.1} parent=115 // pred_check_branch
          %821 = sbr.rel (%p819) target = $region144
        $region143: #{tpu_custom_call.1} parent=115 // pred_region
          %823 = dma.done [#allocation12], 512
        $region144: #{tpu_custom_call.1} parent=115 // pred_fallthru
          _
        // Predicated region
        $region145: #{tpu_custom_call.1} parent=115 // pred_check
          %p824 = pneg %p496
        $region146: #{tpu_custom_call.1} parent=115 // pred_check_branch
          %826 = sbr.rel (%p824) target = $region148
        $region147: #{tpu_custom_call.1} parent=115 // pred_region
          %828 = dma.done [#allocation15], 512
        $region148: #{tpu_custom_call.1} parent=115 // pred_fallthru
          _
        %s829 = sand.u32 %s53, 1
        %s830 = scalar_lea.sflag [#allocation3], %s829
        %s831 = sand.u32 %s53, 1
        %s832 = smul.addr %s831, 8
        %s833 = scalar_lea.vmem [#allocation2], %s832
        %p834 = pneg %p66
        %p835 = pneg %p63
        %p836 = scmp.lt.s32.totalorder %s45, 1
        %s837 = scalar_select %p836, %s45, 1
        %s838 = smul.addr %s837, 2
        %s839 = smul.addr %s838, 8
        %s840 = scalar_lea.vmem %s1, %s839
        %p841 = pneg %p92
        %p842 = pneg %p89
        %p843 = pneg %p113
        %p844 = pneg %p110
        %p845 = scmp.lt.s32.totalorder %s45, 1
        %s846 = scalar_select %p845, %s45, 1
        %s847 = smul.addr %s846, 4
        %s848 = smul.addr %s847, 8
        %s849 = scalar_lea.vmem %s3, %s848
        %p850 = pneg %p139
        %p851 = pneg %p136
        %p852 = pneg %p160
        %p853 = pneg %p157
        %p854 = pneg %p181
        %p855 = pneg %p178
        %p856 = pneg %p202
        %p857 = pneg %p199
        %p858 = pneg %p223
        %p859 = pneg %p220
        %p860 = pneg %p244
        %p861 = pneg %p241
        %p862 = pneg %p265
        %p863 = pneg %p262
        %p864 = pneg %p286
        %p865 = pneg %p283
        %p866 = pneg %p307
        %p867 = pneg %p304
        %p868 = pneg %p328
        %p869 = pneg %p325
        %p870 = pneg %p349
        %p871 = pneg %p346
        %p872 = pneg %p370
        %p873 = pneg %p367
        %p874 = pneg %p391
        %p875 = pneg %p388
        %p876 = pneg %p412
        %p877 = pneg %p409
        %p878 = pneg %p433
        %p879 = pneg %p430
        %p880 = pneg %p454
        %p881 = pneg %p451
        %p882 = pneg %p475
        %p883 = pneg %p472
        %p884 = pneg %p496
        %p885 = pneg %p493
        %p886 = pneg %p517
        %p887 = pneg %p514
        %p888 = pneg %p538
        %p889 = pneg %p535
        %p890 = pneg %p559
        %p891 = pneg %p556
        %p892 = pneg %p585
        %p893 = pneg %p582
        %s894 = sand.u32 %s572, 1
        %s895 = scalar_lea.sflag [#allocation4], %s894
        %s896 = sand.u32 %s572, 1
        %s897 = smul.addr %s896, 8
        %s898 = scalar_lea.vmem [#allocation16], %s897
        %p899 = scmp.lt.s32.totalorder %s45, 1
        %s900 = scalar_select %p899, %s45, 1
        %s901 = smul.addr %s900, 2
        %s902 = smul.addr %s901, 8
        %s903 = scalar_lea.vmem %s1, %s902
        %p904 = scmp.lt.s32.totalorder %s45, 1
        %s905 = scalar_select %p904, %s45, 1
        %s906 = smul.addr %s905, 4
        %s907 = smul.addr %s906, 8
        %s908 = scalar_lea.vmem %s3, %s907
        %v909 = vld [vmem:[%s788] sm:$0xff]
        %v910 = vld [vmem:[%s903] sm:$0xff]
        %v911 = vld [vmem:[%s903 + $0x8] sm:$0xff]
        %v912 = vld [vmem:[#allocation7] sm:$0xff]
        %v913 = vld [vmem:[#allocation7 + $0x8] sm:$0xff]
        %v914 = vld [vmem:[#allocation7 + $0x10] sm:$0xff]
        %v915 = vld [vmem:[#allocation7 + $0x18] sm:$0xff]
        %v916 = vld [vmem:[%s5] sm:$0x1]
        %v918 = vperm.slane %v916, 0
        %vm920 = vcmask 261120
        %v922 = vsel %vm920, %v909, 0
        %924 = vmatpush.msra.mxu0 0.0
        %925 = vmatpush.msra.mxu0 0.0
        %926 = vmatpush.msra.mxu0 0.0
        %927 = vmatpush.msra.mxu0 0.0
        %928 = vmatpush.msra.mxu0 0.0
        %929 = vmatpush.msra.mxu0 0.0
        %930 = vmatpush.msra.mxu0 0.0
        %931 = vmatpush.msra.mxu0 0.0
        %932 = vmatpush.msra.mxu0 0.0
        %933 = vmatpush.msra.mxu0 0.0
        %934 = vmatpush.msra.mxu0 0.0
        %935 = vmatpush.msra.mxu0 0.0
        %v936 = vand.u32 %v915, 4294901760
        %937 = vmatpush.msra.mxu0 %v936
        %v938 = vand.u32 %v914, 4294901760
        %939 = vmatpush.msra.mxu0 %v938
        %v940 = vand.u32 %v913, 4294901760
        %941 = vmatpush.msra.mxu0 %v940
        %v942 = vand.u32 %v912, 4294901760
        %943 = vmatpush.msra.mxu0 %v942
        %v944 = vand.u32 %v922, 4294901760
        %v945 = vsub.f32 %v922, %v944
        %v946 = vand.u32 %v945, 4294901760
        %v947 = vsub.f32 %v945, %v946
        %v948 = vand.u32 %v947, 4294901760
        %949 = vmatmul.f32.gmra.mxu0 %v948
        %v950 = vpop.f32.mrf.mxu0
        %v951 = vadd.f32 %v918, %v950
        %952 = vdwg.mxu0
        %953 = vmatpush.msra.mxu0 0.0
        %954 = vmatpush.msra.mxu0 0.0
        %955 = vmatpush.msra.mxu0 0.0
        %956 = vmatpush.msra.mxu0 0.0
        %957 = vmatpush.msra.mxu0 0.0
        %958 = vmatpush.msra.mxu0 0.0
        %959 = vmatpush.msra.mxu0 0.0
        %960 = vmatpush.msra.mxu0 0.0
        %961 = vmatpush.msra.mxu0 0.0
        %962 = vmatpush.msra.mxu0 0.0
        %963 = vmatpush.msra.mxu0 0.0
        %964 = vmatpush.msra.mxu0 0.0
        %v965 = vand.u32 %v915, 4294901760
        %v966 = vsub.f32 %v915, %v965
        %v967 = vand.u32 %v966, 4294901760
        %v968 = vsub.f32 %v966, %v967
        %v969 = vand.u32 %v968, 4294901760
        %970 = vmatpush.msra.mxu0 %v969
        %v971 = vand.u32 %v914, 4294901760
        %v972 = vsub.f32 %v914, %v971
        %v973 = vand.u32 %v972, 4294901760
        %v974 = vsub.f32 %v972, %v973
        %v975 = vand.u32 %v974, 4294901760
        %976 = vmatpush.msra.mxu0 %v975
        %v977 = vand.u32 %v913, 4294901760
        %v978 = vsub.f32 %v913, %v977
        %v979 = vand.u32 %v978, 4294901760
        %v980 = vsub.f32 %v978, %v979
        %v981 = vand.u32 %v980, 4294901760
        %982 = vmatpush.msra.mxu0 %v981
        %v983 = vand.u32 %v912, 4294901760
        %v984 = vsub.f32 %v912, %v983
        %v985 = vand.u32 %v984, 4294901760
        %v986 = vsub.f32 %v984, %v985
        %v987 = vand.u32 %v986, 4294901760
        %988 = vmatpush.msra.mxu0 %v987
        %v989 = vand.u32 %v922, 4294901760
        %990 = vmatmul.f32.gmra.mxu0 %v989
        %v991 = vpop.f32.mrf.mxu0
        %v992 = vadd.f32 %v951, %v991
        %993 = vdwg.mxu0
        %994 = vmatpush.msra.mxu0 0.0
        %995 = vmatpush.msra.mxu0 0.0
        %996 = vmatpush.msra.mxu0 0.0
        %997 = vmatpush.msra.mxu0 0.0
        %998 = vmatpush.msra.mxu0 0.0
        %999 = vmatpush.msra.mxu0 0.0
        %1000 = vmatpush.msra.mxu0 0.0
        %1001 = vmatpush.msra.mxu0 0.0
        %1002 = vmatpush.msra.mxu0 0.0
        %1003 = vmatpush.msra.mxu0 0.0
        %1004 = vmatpush.msra.mxu0 0.0
        %1005 = vmatpush.msra.mxu0 0.0
        %v1006 = vand.u32 %v915, 4294901760
        %v1007 = vsub.f32 %v915, %v1006
        %1008 = vmatpush.msra.mxu0 %v1007
        %v1009 = vand.u32 %v914, 4294901760
        %v1010 = vsub.f32 %v914, %v1009
        %1011 = vmatpush.msra.mxu0 %v1010
        %v1012 = vand.u32 %v913, 4294901760
        %v1013 = vsub.f32 %v913, %v1012
        %1014 = vmatpush.msra.mxu0 %v1013
        %v1015 = vand.u32 %v912, 4294901760
        %v1016 = vsub.f32 %v912, %v1015
        %1017 = vmatpush.msra.mxu0 %v1016
        %v1018 = vand.u32 %v922, 4294901760
        %v1019 = vsub.f32 %v922, %v1018
        %1020 = vmatmul.f32.gmra.mxu0 %v1019
        %v1021 = vpop.f32.mrf.mxu0
        %v1022 = vadd.f32 %v992, %v1021
        %1023 = vdwg.mxu0
        %1024 = vmatpush.msra.mxu0 0.0
        %1025 = vmatpush.msra.mxu0 0.0
        %1026 = vmatpush.msra.mxu0 0.0
        %1027 = vmatpush.msra.mxu0 0.0
        %1028 = vmatpush.msra.mxu0 0.0
        %1029 = vmatpush.msra.mxu0 0.0
        %1030 = vmatpush.msra.mxu0 0.0
        %1031 = vmatpush.msra.mxu0 0.0
        %1032 = vmatpush.msra.mxu0 0.0
        %1033 = vmatpush.msra.mxu0 0.0
        %1034 = vmatpush.msra.mxu0 0.0
        %1035 = vmatpush.msra.mxu0 0.0
        %v1036 = vand.u32 %v915, 4294901760
        %1037 = vmatpush.msra.mxu0 %v1036
        %v1038 = vand.u32 %v914, 4294901760
        %1039 = vmatpush.msra.mxu0 %v1038
        %v1040 = vand.u32 %v913, 4294901760
        %1041 = vmatpush.msra.mxu0 %v1040
        %v1042 = vand.u32 %v912, 4294901760
        %1043 = vmatpush.msra.mxu0 %v1042
        %v1044 = vand.u32 %v922, 4294901760
        %v1045 = vsub.f32 %v922, %v1044
        %v1046 = vand.u32 %v1045, 4294901760
        %1047 = vmatmul.f32.gmra.mxu0 %v1046
        %v1048 = vpop.f32.mrf.mxu0
        %v1049 = vadd.f32 %v1022, %v1048
        %1050 = vdwg.mxu0
        %1051 = vmatpush.msra.mxu0 0.0
        %1052 = vmatpush.msra.mxu0 0.0
        %1053 = vmatpush.msra.mxu0 0.0
        %1054 = vmatpush.msra.mxu0 0.0
        %1055 = vmatpush.msra.mxu0 0.0
        %1056 = vmatpush.msra.mxu0 0.0
        %1057 = vmatpush.msra.mxu0 0.0
        %1058 = vmatpush.msra.mxu0 0.0
        %1059 = vmatpush.msra.mxu0 0.0
        %1060 = vmatpush.msra.mxu0 0.0
        %1061 = vmatpush.msra.mxu0 0.0
        %1062 = vmatpush.msra.mxu0 0.0
        %v1063 = vand.u32 %v915, 4294901760
        %v1064 = vsub.f32 %v915, %v1063
        %v1065 = vand.u32 %v1064, 4294901760
        %1066 = vmatpush.msra.mxu0 %v1065
        %v1067 = vand.u32 %v914, 4294901760
        %v1068 = vsub.f32 %v914, %v1067
        %v1069 = vand.u32 %v1068, 4294901760
        %1070 = vmatpush.msra.mxu0 %v1069
        %v1071 = vand.u32 %v913, 4294901760
        %v1072 = vsub.f32 %v913, %v1071
        %v1073 = vand.u32 %v1072, 4294901760
        %1074 = vmatpush.msra.mxu0 %v1073
        %v1075 = vand.u32 %v912, 4294901760
        %v1076 = vsub.f32 %v912, %v1075
        %v1077 = vand.u32 %v1076, 4294901760
        %1078 = vmatpush.msra.mxu0 %v1077
        %v1079 = vand.u32 %v922, 4294901760
        %1080 = vmatmul.f32.gmra.mxu0 %v1079
        %v1081 = vpop.f32.mrf.mxu0
        %v1082 = vadd.f32 %v1049, %v1081
        %1083 = vdwg.mxu0
        %1084 = vmatpush.msra.mxu0 0.0
        %1085 = vmatpush.msra.mxu0 0.0
        %1086 = vmatpush.msra.mxu0 0.0
        %1087 = vmatpush.msra.mxu0 0.0
        %1088 = vmatpush.msra.mxu0 0.0
        %1089 = vmatpush.msra.mxu0 0.0
        %1090 = vmatpush.msra.mxu0 0.0
        %1091 = vmatpush.msra.mxu0 0.0
        %1092 = vmatpush.msra.mxu0 0.0
        %1093 = vmatpush.msra.mxu0 0.0
        %1094 = vmatpush.msra.mxu0 0.0
        %1095 = vmatpush.msra.mxu0 0.0
        %v1096 = vand.u32 %v915, 4294901760
        %1097 = vmatpush.msra.mxu0 %v1096
        %v1098 = vand.u32 %v914, 4294901760
        %1099 = vmatpush.msra.mxu0 %v1098
        %v1100 = vand.u32 %v913, 4294901760
        %1101 = vmatpush.msra.mxu0 %v1100
        %v1102 = vand.u32 %v912, 4294901760
        %1103 = vmatpush.msra.mxu0 %v1102
        %v1104 = vand.u32 %v922, 4294901760
        %1105 = vmatmul.f32.gmra.mxu0 %v1104
        %v1106 = vpop.f32.mrf.mxu0
        %v1107 = vadd.f32 %v1082, %v1106
        %1108 = vdwg.mxu0
        %v1109 = vmul.f32 %v1107, 0.35355338
        %v1110 = vld [vmem:[#allocation5] sm:$0xff]
        %1112 = vrot.lane.b32.xlu0 %v1109, 120
        %v1113 = vpop.permute.xlu0 %1112
        %1115 = vrot.lane.b32.xlu0 %v1109, 112
        %v1116 = vpop.permute.xlu0 %1115
        %1118 = vrot.lane.b32.xlu0 %v1109, 104
        %v1119 = vpop.permute.xlu0 %1118
        %v1121 = vrot.slane %v1116, 4
        %vm1122 = vcmask 1047556
        %v1123 = vsel %vm1122, %v1121, %v1109
        %v1124 = vrot.slane %v1109, 4
        %v1125 = vsel %vm1122, %v1116, %v1124
        %v1127 = vunpack.c.l.s4 1983009808
        %v1128 = vunpack.c.0.s8 %v1127
        %v1129 = vperm.slane %v1123, %v1128
        %v1131 = vunpack.c.l.s4 1983009808
        %v1132 = vunpack.c.0.s8 %v1131
        %v1133 = vperm.slane %v1125, %v1132
        %v1134 = vrot.slane %v1119, 4
        %v1135 = vsel %vm1122, %v1134, %v1113
        %v1136 = vrot.slane %v1113, 4
        %v1137 = vsel %vm1122, %v1119, %v1136
        %v1139 = vunpack.c.l.s4 1983009808
        %v1140 = vunpack.c.0.s8 %v1139
        %v1141 = vperm.slane %v1135, %v1140
        %v1143 = vunpack.c.l.s4 1983009808
        %v1144 = vunpack.c.0.s8 %v1143
        %v1145 = vperm.slane %v1137, %v1144
        %v1146 = vrot.slane %v1141, 4
        %v1147 = vsel %vm1122, %v1146, %v1129
        %v1148 = vrot.slane %v1129, 4
        %v1149 = vsel %vm1122, %v1141, %v1148
        %v1151 = vunpack.c.l.s4 1934713408
        %v1152 = vunpack.c.0.s8 %v1151
        %v1153 = vperm.slane %v1147, %v1152
        %v1155 = vunpack.c.l.s4 1934713408
        %v1156 = vunpack.c.0.s8 %v1155
        %v1157 = vperm.slane %v1149, %v1156
        %v1158 = vrot.slane %v1145, 4
        %v1159 = vsel %vm1122, %v1158, %v1133
        %v1160 = vrot.slane %v1133, 4
        %v1161 = vsel %vm1122, %v1145, %v1160
        %v1163 = vunpack.c.l.s4 1934713408
        %v1164 = vunpack.c.0.s8 %v1163
        %v1165 = vperm.slane %v1159, %v1164
        %v1167 = vunpack.c.l.s4 1934713408
        %v1168 = vunpack.c.0.s8 %v1167
        %v1169 = vperm.slane %v1161, %v1168
        %v1170 = vrot.slane %v1153, 4
        %v1171 = vsel %vm1122, 0.0, %v1170
        %v1172 = vrot.slane %v1157, 4
        %v1173 = vsel %vm1122, 0.0, %v1172
        %v1174 = vrot.slane %v1165, 4
        %v1175 = vsel %vm1122, 0.0, %v1174
        %v1176 = vrot.slane %v1169, 4
        %v1177 = vsel %vm1122, 0.0, %v1176
        %v1178 = vsel %vm1122, %v1172, %v1153
        %v1180 = vunpack.c.l.s4 1983009808
        %v1181 = vunpack.c.0.s8 %v1180
        %v1182 = vperm.slane %v1178, %v1181
        %v1183 = vrot.slane %v1173, 4
        %v1184 = vsel %vm1122, %v1183, %v1171
        %v1186 = vunpack.c.l.s4 1983009808
        %v1187 = vunpack.c.0.s8 %v1186
        %v1188 = vperm.slane %v1184, %v1187
        %v1189 = vsel %vm1122, %v1176, %v1165
        %v1191 = vunpack.c.l.s4 1983009808
        %v1192 = vunpack.c.0.s8 %v1191
        %v1193 = vperm.slane %v1189, %v1192
        %v1194 = vrot.slane %v1177, 4
        %v1195 = vsel %vm1122, %v1194, %v1175
        %v1197 = vunpack.c.l.s4 1983009808
        %v1198 = vunpack.c.0.s8 %v1197
        %v1199 = vperm.slane %v1195, %v1198
        %v1200 = vrot.slane %v1188, 4
        %v1201 = vsel %vm1122, %v1200, %v1182
        %v1202 = vrot.slane %v1182, 4
        %v1203 = vsel %vm1122, %v1188, %v1202
        %v1205 = vunpack.c.l.s4 1934713408
        %v1206 = vunpack.c.0.s8 %v1205
        %v1207 = vperm.slane %v1201, %v1206
        %v1209 = vunpack.c.l.s4 1934713408
        %v1210 = vunpack.c.0.s8 %v1209
        %v1211 = vperm.slane %v1203, %v1210
        %v1212 = vrot.slane %v1199, 4
        %v1213 = vsel %vm1122, %v1212, %v1193
        %v1214 = vrot.slane %v1193, 4
        %v1215 = vsel %vm1122, %v1199, %v1214
        %v1217 = vunpack.c.l.s4 1934713408
        %v1218 = vunpack.c.0.s8 %v1217
        %v1219 = vperm.slane %v1213, %v1218
        %v1221 = vunpack.c.l.s4 1934713408
        %v1222 = vunpack.c.0.s8 %v1221
        %v1223 = vperm.slane %v1215, %v1222
        %v1224 = vrot.slane %v1219, 4
        %v1225 = vsel %vm1122, %v1224, %v1207
        %v1226 = vrot.slane %v1207, 4
        %v1227 = vsel %vm1122, %v1219, %v1226
        %v1228 = vrot.slane %v1223, 4
        %v1229 = vsel %vm1122, %v1228, %v1211
        %v1230 = vrot.slane %v1211, 4
        %v1231 = vsel %vm1122, %v1223, %v1230
        %1233 = vrot.lane.b32.xlu0 %v1107, 120
        %v1234 = vpop.permute.xlu0 %1233
        %1235 = vrot.lane.b32.xlu0 %v1107, 112
        %v1236 = vpop.permute.xlu0 %1235
        %1237 = vrot.lane.b32.xlu0 %v1107, 104
        %v1238 = vpop.permute.xlu0 %1237
        %1239 = vrot.lane.b32.xlu0 %v1107, 96
        %v1240 = vpop.permute.xlu0 %1239
        %1241 = vrot.lane.b32.xlu0 %v1234, 96
        %v1242 = vpop.permute.xlu0 %1241
        %1243 = vrot.lane.b32.xlu0 %v1236, 96
        %v1244 = vpop.permute.xlu0 %1243
        %1245 = vrot.lane.b32.xlu0 %v1238, 96
        %v1246 = vpop.permute.xlu0 %1245
        %v1251 = vrot.slane %v1244, 4
        %v1252 = vsel %vm1122, %v1251, %v1240
        %v1253 = vrot.slane %v1240, 4
        %v1254 = vsel %vm1122, %v1244, %v1253
        %v1256 = vunpack.c.l.s4 1983009808
        %v1257 = vunpack.c.0.s8 %v1256
        %v1258 = vperm.slane %v1252, %v1257
        %v1260 = vunpack.c.l.s4 1983009808
        %v1261 = vunpack.c.0.s8 %v1260
        %v1262 = vperm.slane %v1254, %v1261
        %v1263 = vrot.slane %v1246, 4
        %v1264 = vsel %vm1122, %v1263, %v1242
        %v1265 = vrot.slane %v1242, 4
        %v1266 = vsel %vm1122, %v1246, %v1265
        %v1268 = vunpack.c.l.s4 1983009808
        %v1269 = vunpack.c.0.s8 %v1268
        %v1270 = vperm.slane %v1264, %v1269
        %v1272 = vunpack.c.l.s4 1983009808
        %v1273 = vunpack.c.0.s8 %v1272
        %v1274 = vperm.slane %v1266, %v1273
        %v1275 = vrot.slane %v1270, 4
        %v1276 = vsel %vm1122, %v1275, %v1258
        %v1277 = vrot.slane %v1258, 4
        %v1278 = vsel %vm1122, %v1270, %v1277
        %v1280 = vunpack.c.l.s4 1934713408
        %v1281 = vunpack.c.0.s8 %v1280
        %v1282 = vperm.slane %v1276, %v1281
        %v1284 = vunpack.c.l.s4 1934713408
        %v1285 = vunpack.c.0.s8 %v1284
        %v1286 = vperm.slane %v1278, %v1285
        %v1287 = vrot.slane %v1274, 4
        %v1288 = vsel %vm1122, %v1287, %v1262
        %v1289 = vrot.slane %v1262, 4
        %v1290 = vsel %vm1122, %v1274, %v1289
        %v1292 = vunpack.c.l.s4 1934713408
        %v1293 = vunpack.c.0.s8 %v1292
        %v1294 = vperm.slane %v1288, %v1293
        %v1296 = vunpack.c.l.s4 1934713408
        %v1297 = vunpack.c.0.s8 %v1296
        %v1298 = vperm.slane %v1290, %v1297
        %v1299 = vrot.slane %v1282, 4
        %v1300 = vsel %vm1122, 0.0, %v1299
        %v1301 = vrot.slane %v1286, 4
        %v1302 = vsel %vm1122, 0.0, %v1301
        %v1303 = vrot.slane %v1294, 4
        %v1304 = vsel %vm1122, 0.0, %v1303
        %v1305 = vrot.slane %v1298, 4
        %v1306 = vsel %vm1122, 0.0, %v1305
        %v1307 = vsel %vm1122, %v1301, %v1282
        %v1309 = vunpack.c.l.s4 1983009808
        %v1310 = vunpack.c.0.s8 %v1309
        %v1311 = vperm.slane %v1307, %v1310
        %v1312 = vrot.slane %v1302, 4
        %v1313 = vsel %vm1122, %v1312, %v1300
        %v1315 = vunpack.c.l.s4 1983009808
        %v1316 = vunpack.c.0.s8 %v1315
        %v1317 = vperm.slane %v1313, %v1316
        %v1318 = vsel %vm1122, %v1305, %v1294
        %v1320 = vunpack.c.l.s4 1983009808
        %v1321 = vunpack.c.0.s8 %v1320
        %v1322 = vperm.slane %v1318, %v1321
        %v1323 = vrot.slane %v1306, 4
        %v1324 = vsel %vm1122, %v1323, %v1304
        %v1326 = vunpack.c.l.s4 1983009808
        %v1327 = vunpack.c.0.s8 %v1326
        %v1328 = vperm.slane %v1324, %v1327
        %v1329 = vrot.slane %v1317, 4
        %v1330 = vsel %vm1122, %v1329, %v1311
        %v1331 = vrot.slane %v1311, 4
        %v1332 = vsel %vm1122, %v1317, %v1331
        %v1334 = vunpack.c.l.s4 1934713408
        %v1335 = vunpack.c.0.s8 %v1334
        %v1336 = vperm.slane %v1330, %v1335
        %v1338 = vunpack.c.l.s4 1934713408
        %v1339 = vunpack.c.0.s8 %v1338
        %v1340 = vperm.slane %v1332, %v1339
        %v1341 = vrot.slane %v1328, 4
        %v1342 = vsel %vm1122, %v1341, %v1322
        %v1343 = vrot.slane %v1322, 4
        %v1344 = vsel %vm1122, %v1328, %v1343
        %v1346 = vunpack.c.l.s4 1934713408
        %v1347 = vunpack.c.0.s8 %v1346
        %v1348 = vperm.slane %v1342, %v1347
        %v1350 = vunpack.c.l.s4 1934713408
        %v1351 = vunpack.c.0.s8 %v1350
        %v1352 = vperm.slane %v1344, %v1351
        %v1353 = vrot.slane %v1348, 4
        %v1354 = vsel %vm1122, %v1353, %v1336
        %v1355 = vrot.slane %v1336, 4
        %v1356 = vsel %vm1122, %v1348, %v1355
        %v1357 = vrot.slane %v1352, 4
        %v1358 = vsel %vm1122, %v1357, %v1340
        %v1359 = vrot.slane %v1340, 4
        %v1360 = vsel %vm1122, %v1352, %v1359
        %1361 = vrot.lane.b32.xlu0 %v1107, 64
        %v1362 = vpop.permute.xlu0 %1361
        %1363 = vrot.lane.b32.xlu0 %v1234, 64
        %v1364 = vpop.permute.xlu0 %1363
        %1365 = vrot.lane.b32.xlu0 %v1236, 64
        %v1366 = vpop.permute.xlu0 %1365
        %1367 = vrot.lane.b32.xlu0 %v1238, 64
        %v1368 = vpop.permute.xlu0 %1367
        %v1373 = vrot.slane %v1366, 4
        %v1374 = vsel %vm1122, %v1373, %v1362
        %v1375 = vrot.slane %v1362, 4
        %v1376 = vsel %vm1122, %v1366, %v1375
        %v1378 = vunpack.c.l.s4 1983009808
        %v1379 = vunpack.c.0.s8 %v1378
        %v1380 = vperm.slane %v1374, %v1379
        %v1382 = vunpack.c.l.s4 1983009808
        %v1383 = vunpack.c.0.s8 %v1382
        %v1384 = vperm.slane %v1376, %v1383
        %v1385 = vrot.slane %v1368, 4
        %v1386 = vsel %vm1122, %v1385, %v1364
        %v1387 = vrot.slane %v1364, 4
        %v1388 = vsel %vm1122, %v1368, %v1387
        %v1390 = vunpack.c.l.s4 1983009808
        %v1391 = vunpack.c.0.s8 %v1390
        %v1392 = vperm.slane %v1386, %v1391
        %v1394 = vunpack.c.l.s4 1983009808
        %v1395 = vunpack.c.0.s8 %v1394
        %v1396 = vperm.slane %v1388, %v1395
        %v1397 = vrot.slane %v1392, 4
        %v1398 = vsel %vm1122, %v1397, %v1380
        %v1399 = vrot.slane %v1380, 4
        %v1400 = vsel %vm1122, %v1392, %v1399
        %v1402 = vunpack.c.l.s4 1934713408
        %v1403 = vunpack.c.0.s8 %v1402
        %v1404 = vperm.slane %v1398, %v1403
        %v1406 = vunpack.c.l.s4 1934713408
        %v1407 = vunpack.c.0.s8 %v1406
        %v1408 = vperm.slane %v1400, %v1407
        %v1409 = vrot.slane %v1396, 4
        %v1410 = vsel %vm1122, %v1409, %v1384
        %v1411 = vrot.slane %v1384, 4
        %v1412 = vsel %vm1122, %v1396, %v1411
        %v1414 = vunpack.c.l.s4 1934713408
        %v1415 = vunpack.c.0.s8 %v1414
        %v1416 = vperm.slane %v1410, %v1415
        %v1418 = vunpack.c.l.s4 1934713408
        %v1419 = vunpack.c.0.s8 %v1418
        %v1420 = vperm.slane %v1412, %v1419
        %v1421 = vrot.slane %v1404, 4
        %v1422 = vsel %vm1122, 0.0, %v1421
        %v1423 = vrot.slane %v1408, 4
        %v1424 = vsel %vm1122, 0.0, %v1423
        %v1425 = vrot.slane %v1416, 4
        %v1426 = vsel %vm1122, 0.0, %v1425
        %v1427 = vrot.slane %v1420, 4
        %v1428 = vsel %vm1122, 0.0, %v1427
        %v1429 = vsel %vm1122, %v1423, %v1404
        %v1431 = vunpack.c.l.s4 1983009808
        %v1432 = vunpack.c.0.s8 %v1431
        %v1433 = vperm.slane %v1429, %v1432
        %v1434 = vrot.slane %v1424, 4
        %v1435 = vsel %vm1122, %v1434, %v1422
        %v1437 = vunpack.c.l.s4 1983009808
        %v1438 = vunpack.c.0.s8 %v1437
        %v1439 = vperm.slane %v1435, %v1438
        %v1440 = vsel %vm1122, %v1427, %v1416
        %v1442 = vunpack.c.l.s4 1983009808
        %v1443 = vunpack.c.0.s8 %v1442
        %v1444 = vperm.slane %v1440, %v1443
        %v1445 = vrot.slane %v1428, 4
        %v1446 = vsel %vm1122, %v1445, %v1426
        %v1448 = vunpack.c.l.s4 1983009808
        %v1449 = vunpack.c.0.s8 %v1448
        %v1450 = vperm.slane %v1446, %v1449
        %v1451 = vrot.slane %v1439, 4
        %v1452 = vsel %vm1122, %v1451, %v1433
        %v1453 = vrot.slane %v1433, 4
        %v1454 = vsel %vm1122, %v1439, %v1453
        %v1456 = vunpack.c.l.s4 1934713408
        %v1457 = vunpack.c.0.s8 %v1456
        %v1458 = vperm.slane %v1452, %v1457
        %v1460 = vunpack.c.l.s4 1934713408
        %v1461 = vunpack.c.0.s8 %v1460
        %v1462 = vperm.slane %v1454, %v1461
        %v1463 = vrot.slane %v1450, 4
        %v1464 = vsel %vm1122, %v1463, %v1444
        %v1465 = vrot.slane %v1444, 4
        %v1466 = vsel %vm1122, %v1450, %v1465
        %v1468 = vunpack.c.l.s4 1934713408
        %v1469 = vunpack.c.0.s8 %v1468
        %v1470 = vperm.slane %v1464, %v1469
        %v1472 = vunpack.c.l.s4 1934713408
        %v1473 = vunpack.c.0.s8 %v1472
        %v1474 = vperm.slane %v1466, %v1473
        %v1475 = vrot.slane %v1470, 4
        %v1476 = vsel %vm1122, %v1475, %v1458
        %v1477 = vrot.slane %v1458, 4
        %v1478 = vsel %vm1122, %v1470, %v1477
        %v1479 = vrot.slane %v1474, 4
        %v1480 = vsel %vm1122, %v1479, %v1462
        %v1481 = vrot.slane %v1462, 4
        %v1482 = vsel %vm1122, %v1474, %v1481
        %vm1483 = vcmask 64512
        %v1485 = vsel %vm1483, %v1225, 0
        %v1488 = vsel %vm1483, %v1354, 0
        %1490 = vmatpush.xpose.msra.mxu0 0.0
        %1491 = vmatpush.xpose.msra.mxu0 0.0
        %1492 = vmatpush.xpose.msra.mxu0 0.0
        %1493 = vmatpush.xpose.msra.mxu0 0.0
        %1494 = vmatpush.xpose.msra.mxu0 0.0
        %1495 = vmatpush.xpose.msra.mxu0 0.0
        %1496 = vmatpush.xpose.msra.mxu0 0.0
        %1497 = vmatpush.xpose.msra.mxu0 0.0
        %1498 = vmatpush.xpose.msra.mxu0 0.0
        %1499 = vmatpush.xpose.msra.mxu0 0.0
        %1500 = vmatpush.xpose.msra.mxu0 0.0
        %1501 = vmatpush.xpose.msra.mxu0 0.0
        %1502 = vmatpush.xpose.msra.mxu0 0.0
        %1503 = vmatpush.xpose.msra.mxu0 0.0
        %1504 = vmatpush.xpose.msra.mxu0 0.0
        %v1505 = vand.u32 %v1488, 4294901760
        %1506 = vmatpush.xpose.msra.mxu0 %v1505
        %v1507 = vand.u32 %v1485, 4294901760
        %v1508 = vsub.f32 %v1485, %v1507
        %v1509 = vand.u32 %v1508, 4294901760
        %v1510 = vsub.f32 %v1508, %v1509
        %v1511 = vand.u32 %v1510, 4294901760
        %1512 = vmatmul.f32.gmra.mxu0 %v1511
        %v1513 = vpop.f32.mrf.mxu0
        %v1514 = vadd.f32 %v1110, %v1513
        %1515 = vdwg.mxu0
        %1516 = vmatpush.xpose.msra.mxu0 0.0
        %1517 = vmatpush.xpose.msra.mxu0 0.0
        %1518 = vmatpush.xpose.msra.mxu0 0.0
        %1519 = vmatpush.xpose.msra.mxu0 0.0
        %1520 = vmatpush.xpose.msra.mxu0 0.0
        %1521 = vmatpush.xpose.msra.mxu0 0.0
        %1522 = vmatpush.xpose.msra.mxu0 0.0
        %1523 = vmatpush.xpose.msra.mxu0 0.0
        %1524 = vmatpush.xpose.msra.mxu0 0.0
        %1525 = vmatpush.xpose.msra.mxu0 0.0
        %1526 = vmatpush.xpose.msra.mxu0 0.0
        %1527 = vmatpush.xpose.msra.mxu0 0.0
        %1528 = vmatpush.xpose.msra.mxu0 0.0
        %1529 = vmatpush.xpose.msra.mxu0 0.0
        %1530 = vmatpush.xpose.msra.mxu0 0.0
        %v1531 = vand.u32 %v1488, 4294901760
        %v1532 = vsub.f32 %v1488, %v1531
        %v1533 = vand.u32 %v1532, 4294901760
        %v1534 = vsub.f32 %v1532, %v1533
        %v1535 = vand.u32 %v1534, 4294901760
        %1536 = vmatpush.xpose.msra.mxu0 %v1535
        %v1537 = vand.u32 %v1485, 4294901760
        %1538 = vmatmul.f32.gmra.mxu0 %v1537
        %v1539 = vpop.f32.mrf.mxu0
        %v1540 = vadd.f32 %v1514, %v1539
        %1541 = vdwg.mxu0
        %1542 = vmatpush.xpose.msra.mxu0 0.0
        %1543 = vmatpush.xpose.msra.mxu0 0.0
        %1544 = vmatpush.xpose.msra.mxu0 0.0
        %1545 = vmatpush.xpose.msra.mxu0 0.0
        %1546 = vmatpush.xpose.msra.mxu0 0.0
        %1547 = vmatpush.xpose.msra.mxu0 0.0
        %1548 = vmatpush.xpose.msra.mxu0 0.0
        %1549 = vmatpush.xpose.msra.mxu0 0.0
        %1550 = vmatpush.xpose.msra.mxu0 0.0
        %1551 = vmatpush.xpose.msra.mxu0 0.0
        %1552 = vmatpush.xpose.msra.mxu0 0.0
        %1553 = vmatpush.xpose.msra.mxu0 0.0
        %1554 = vmatpush.xpose.msra.mxu0 0.0
        %1555 = vmatpush.xpose.msra.mxu0 0.0
        %1556 = vmatpush.xpose.msra.mxu0 0.0
        %v1557 = vand.u32 %v1488, 4294901760
        %v1558 = vsub.f32 %v1488, %v1557
        %1559 = vmatpush.xpose.msra.mxu0 %v1558
        %v1560 = vand.u32 %v1485, 4294901760
        %v1561 = vsub.f32 %v1485, %v1560
        %1562 = vmatmul.f32.gmra.mxu0 %v1561
        %v1563 = vpop.f32.mrf.mxu0
        %v1564 = vadd.f32 %v1540, %v1563
        %1565 = vdwg.mxu0
        %1566 = vmatpush.xpose.msra.mxu0 0.0
        %1567 = vmatpush.xpose.msra.mxu0 0.0
        %1568 = vmatpush.xpose.msra.mxu0 0.0
        %1569 = vmatpush.xpose.msra.mxu0 0.0
        %1570 = vmatpush.xpose.msra.mxu0 0.0
        %1571 = vmatpush.xpose.msra.mxu0 0.0
        %1572 = vmatpush.xpose.msra.mxu0 0.0
        %1573 = vmatpush.xpose.msra.mxu0 0.0
        %1574 = vmatpush.xpose.msra.mxu0 0.0
        %1575 = vmatpush.xpose.msra.mxu0 0.0
        %1576 = vmatpush.xpose.msra.mxu0 0.0
        %1577 = vmatpush.xpose.msra.mxu0 0.0
        %1578 = vmatpush.xpose.msra.mxu0 0.0
        %1579 = vmatpush.xpose.msra.mxu0 0.0
        %1580 = vmatpush.xpose.msra.mxu0 0.0
        %v1581 = vand.u32 %v1488, 4294901760
        %1582 = vmatpush.xpose.msra.mxu0 %v1581
        %v1583 = vand.u32 %v1485, 4294901760
        %v1584 = vsub.f32 %v1485, %v1583
        %v1585 = vand.u32 %v1584, 4294901760
        %1586 = vmatmul.f32.gmra.mxu0 %v1585
        %v1587 = vpop.f32.mrf.mxu0
        %v1588 = vadd.f32 %v1564, %v1587
        %1589 = vdwg.mxu0
        %1590 = vmatpush.xpose.msra.mxu0 0.0
        %1591 = vmatpush.xpose.msra.mxu0 0.0
        %1592 = vmatpush.xpose.msra.mxu0 0.0
        %1593 = vmatpush.xpose.msra.mxu0 0.0
        %1594 = vmatpush.xpose.msra.mxu0 0.0
        %1595 = vmatpush.xpose.msra.mxu0 0.0
        %1596 = vmatpush.xpose.msra.mxu0 0.0
        %1597 = vmatpush.xpose.msra.mxu0 0.0
        %1598 = vmatpush.xpose.msra.mxu0 0.0
        %1599 = vmatpush.xpose.msra.mxu0 0.0
        %1600 = vmatpush.xpose.msra.mxu0 0.0
        %1601 = vmatpush.xpose.msra.mxu0 0.0
        %1602 = vmatpush.xpose.msra.mxu0 0.0
        %1603 = vmatpush.xpose.msra.mxu0 0.0
        %1604 = vmatpush.xpose.msra.mxu0 0.0
        %v1605 = vand.u32 %v1488, 4294901760
        %v1606 = vsub.f32 %v1488, %v1605
        %v1607 = vand.u32 %v1606, 4294901760
        %1608 = vmatpush.xpose.msra.mxu0 %v1607
        %v1609 = vand.u32 %v1485, 4294901760
        %1610 = vmatmul.f32.gmra.mxu0 %v1609
        %v1611 = vpop.f32.mrf.mxu0
        %v1612 = vadd.f32 %v1588, %v1611
        %1613 = vdwg.mxu0
        %1614 = vmatpush.xpose.msra.mxu0 0.0
        %1615 = vmatpush.xpose.msra.mxu0 0.0
        %1616 = vmatpush.xpose.msra.mxu0 0.0
        %1617 = vmatpush.xpose.msra.mxu0 0.0
        %1618 = vmatpush.xpose.msra.mxu0 0.0
        %1619 = vmatpush.xpose.msra.mxu0 0.0
        %1620 = vmatpush.xpose.msra.mxu0 0.0
        %1621 = vmatpush.xpose.msra.mxu0 0.0
        %1622 = vmatpush.xpose.msra.mxu0 0.0
        %1623 = vmatpush.xpose.msra.mxu0 0.0
        %1624 = vmatpush.xpose.msra.mxu0 0.0
        %1625 = vmatpush.xpose.msra.mxu0 0.0
        %1626 = vmatpush.xpose.msra.mxu0 0.0
        %1627 = vmatpush.xpose.msra.mxu0 0.0
        %1628 = vmatpush.xpose.msra.mxu0 0.0
        %v1629 = vand.u32 %v1488, 4294901760
        %1630 = vmatpush.xpose.msra.mxu0 %v1629
        %v1631 = vand.u32 %v1485, 4294901760
        %1632 = vmatmul.f32.gmra.mxu0 %v1631
        %v1633 = vpop.f32.mrf.mxu0
        %v1634 = vadd.f32 %v1612, %v1633
        %1635 = vdwg.mxu0
        %v1637 = vsel %vm1483, %v1227, 0
        %v1640 = vsel %vm1483, %v1356, 0
        %1642 = vmatpush.xpose.msra.mxu0 0.0
        %1643 = vmatpush.xpose.msra.mxu0 0.0
        %1644 = vmatpush.xpose.msra.mxu0 0.0
        %1645 = vmatpush.xpose.msra.mxu0 0.0
        %1646 = vmatpush.xpose.msra.mxu0 0.0
        %1647 = vmatpush.xpose.msra.mxu0 0.0
        %1648 = vmatpush.xpose.msra.mxu0 0.0
        %1649 = vmatpush.xpose.msra.mxu0 0.0
        %1650 = vmatpush.xpose.msra.mxu0 0.0
        %1651 = vmatpush.xpose.msra.mxu0 0.0
        %1652 = vmatpush.xpose.msra.mxu0 0.0
        %1653 = vmatpush.xpose.msra.mxu0 0.0
        %1654 = vmatpush.xpose.msra.mxu0 0.0
        %1655 = vmatpush.xpose.msra.mxu0 0.0
        %1656 = vmatpush.xpose.msra.mxu0 0.0
        %v1657 = vand.u32 %v1640, 4294901760
        %1658 = vmatpush.xpose.msra.mxu0 %v1657
        %v1659 = vand.u32 %v1637, 4294901760
        %v1660 = vsub.f32 %v1637, %v1659
        %v1661 = vand.u32 %v1660, 4294901760
        %v1662 = vsub.f32 %v1660, %v1661
        %v1663 = vand.u32 %v1662, 4294901760
        %1664 = vmatmul.f32.gmra.mxu0 %v1663
        %v1665 = vpop.f32.mrf.mxu0
        %v1666 = vadd.f32 %v1110, %v1665
        %1667 = vdwg.mxu0
        %1668 = vmatpush.xpose.msra.mxu0 0.0
        %1669 = vmatpush.xpose.msra.mxu0 0.0
        %1670 = vmatpush.xpose.msra.mxu0 0.0
        %1671 = vmatpush.xpose.msra.mxu0 0.0
        %1672 = vmatpush.xpose.msra.mxu0 0.0
        %1673 = vmatpush.xpose.msra.mxu0 0.0
        %1674 = vmatpush.xpose.msra.mxu0 0.0
        %1675 = vmatpush.xpose.msra.mxu0 0.0
        %1676 = vmatpush.xpose.msra.mxu0 0.0
        %1677 = vmatpush.xpose.msra.mxu0 0.0
        %1678 = vmatpush.xpose.msra.mxu0 0.0
        %1679 = vmatpush.xpose.msra.mxu0 0.0
        %1680 = vmatpush.xpose.msra.mxu0 0.0
        %1681 = vmatpush.xpose.msra.mxu0 0.0
        %1682 = vmatpush.xpose.msra.mxu0 0.0
        %v1683 = vand.u32 %v1640, 4294901760
        %v1684 = vsub.f32 %v1640, %v1683
        %v1685 = vand.u32 %v1684, 4294901760
        %v1686 = vsub.f32 %v1684, %v1685
        %v1687 = vand.u32 %v1686, 4294901760
        %1688 = vmatpush.xpose.msra.mxu0 %v1687
        %v1689 = vand.u32 %v1637, 4294901760
        %1690 = vmatmul.f32.gmra.mxu0 %v1689
        %v1691 = vpop.f32.mrf.mxu0
        %v1692 = vadd.f32 %v1666, %v1691
        %1693 = vdwg.mxu0
        %1694 = vmatpush.xpose.msra.mxu0 0.0
        %1695 = vmatpush.xpose.msra.mxu0 0.0
        %1696 = vmatpush.xpose.msra.mxu0 0.0
        %1697 = vmatpush.xpose.msra.mxu0 0.0
        %1698 = vmatpush.xpose.msra.mxu0 0.0
        %1699 = vmatpush.xpose.msra.mxu0 0.0
        %1700 = vmatpush.xpose.msra.mxu0 0.0
        %1701 = vmatpush.xpose.msra.mxu0 0.0
        %1702 = vmatpush.xpose.msra.mxu0 0.0
        %1703 = vmatpush.xpose.msra.mxu0 0.0
        %1704 = vmatpush.xpose.msra.mxu0 0.0
        %1705 = vmatpush.xpose.msra.mxu0 0.0
        %1706 = vmatpush.xpose.msra.mxu0 0.0
        %1707 = vmatpush.xpose.msra.mxu0 0.0
        %1708 = vmatpush.xpose.msra.mxu0 0.0
        %v1709 = vand.u32 %v1640, 4294901760
        %v1710 = vsub.f32 %v1640, %v1709
        %1711 = vmatpush.xpose.msra.mxu0 %v1710
        %v1712 = vand.u32 %v1637, 4294901760
        %v1713 = vsub.f32 %v1637, %v1712
        %1714 = vmatmul.f32.gmra.mxu0 %v1713
        %v1715 = vpop.f32.mrf.mxu0
        %v1716 = vadd.f32 %v1692, %v1715
        %1717 = vdwg.mxu0
        %1718 = vmatpush.xpose.msra.mxu0 0.0
        %1719 = vmatpush.xpose.msra.mxu0 0.0
        %1720 = vmatpush.xpose.msra.mxu0 0.0
        %1721 = vmatpush.xpose.msra.mxu0 0.0
        %1722 = vmatpush.xpose.msra.mxu0 0.0
        %1723 = vmatpush.xpose.msra.mxu0 0.0
        %1724 = vmatpush.xpose.msra.mxu0 0.0
        %1725 = vmatpush.xpose.msra.mxu0 0.0
        %1726 = vmatpush.xpose.msra.mxu0 0.0
        %1727 = vmatpush.xpose.msra.mxu0 0.0
        %1728 = vmatpush.xpose.msra.mxu0 0.0
        %1729 = vmatpush.xpose.msra.mxu0 0.0
        %1730 = vmatpush.xpose.msra.mxu0 0.0
        %1731 = vmatpush.xpose.msra.mxu0 0.0
        %1732 = vmatpush.xpose.msra.mxu0 0.0
        %v1733 = vand.u32 %v1640, 4294901760
        %1734 = vmatpush.xpose.msra.mxu0 %v1733
        %v1735 = vand.u32 %v1637, 4294901760
        %v1736 = vsub.f32 %v1637, %v1735
        %v1737 = vand.u32 %v1736, 4294901760
        %1738 = vmatmul.f32.gmra.mxu0 %v1737
        %v1739 = vpop.f32.mrf.mxu0
        %v1740 = vadd.f32 %v1716, %v1739
        %1741 = vdwg.mxu0
        %1742 = vmatpush.xpose.msra.mxu0 0.0
        %1743 = vmatpush.xpose.msra.mxu0 0.0
        %1744 = vmatpush.xpose.msra.mxu0 0.0
        %1745 = vmatpush.xpose.msra.mxu0 0.0
        %1746 = vmatpush.xpose.msra.mxu0 0.0
        %1747 = vmatpush.xpose.msra.mxu0 0.0
        %1748 = vmatpush.xpose.msra.mxu0 0.0
        %1749 = vmatpush.xpose.msra.mxu0 0.0
        %1750 = vmatpush.xpose.msra.mxu0 0.0
        %1751 = vmatpush.xpose.msra.mxu0 0.0
        %1752 = vmatpush.xpose.msra.mxu0 0.0
        %1753 = vmatpush.xpose.msra.mxu0 0.0
        %1754 = vmatpush.xpose.msra.mxu0 0.0
        %1755 = vmatpush.xpose.msra.mxu0 0.0
        %1756 = vmatpush.xpose.msra.mxu0 0.0
        %v1757 = vand.u32 %v1640, 4294901760
        %v1758 = vsub.f32 %v1640, %v1757
        %v1759 = vand.u32 %v1758, 4294901760
        %1760 = vmatpush.xpose.msra.mxu0 %v1759
        %v1761 = vand.u32 %v1637, 4294901760
        %1762 = vmatmul.f32.gmra.mxu0 %v1761
        %v1763 = vpop.f32.mrf.mxu0
        %v1764 = vadd.f32 %v1740, %v1763
        %1765 = vdwg.mxu0
        %1766 = vmatpush.xpose.msra.mxu0 0.0
        %1767 = vmatpush.xpose.msra.mxu0 0.0
        %1768 = vmatpush.xpose.msra.mxu0 0.0
        %1769 = vmatpush.xpose.msra.mxu0 0.0
        %1770 = vmatpush.xpose.msra.mxu0 0.0
        %1771 = vmatpush.xpose.msra.mxu0 0.0
        %1772 = vmatpush.xpose.msra.mxu0 0.0
        %1773 = vmatpush.xpose.msra.mxu0 0.0
        %1774 = vmatpush.xpose.msra.mxu0 0.0
        %1775 = vmatpush.xpose.msra.mxu0 0.0
        %1776 = vmatpush.xpose.msra.mxu0 0.0
        %1777 = vmatpush.xpose.msra.mxu0 0.0
        %1778 = vmatpush.xpose.msra.mxu0 0.0
        %1779 = vmatpush.xpose.msra.mxu0 0.0
        %1780 = vmatpush.xpose.msra.mxu0 0.0
        %v1781 = vand.u32 %v1640, 4294901760
        %1782 = vmatpush.xpose.msra.mxu0 %v1781
        %v1783 = vand.u32 %v1637, 4294901760
        %1784 = vmatmul.f32.gmra.mxu0 %v1783
        %v1785 = vpop.f32.mrf.mxu0
        %v1786 = vadd.f32 %v1764, %v1785
        %1787 = vdwg.mxu0
        %v1789 = vsel %vm1483, %v1229, 0
        %v1792 = vsel %vm1483, %v1358, 0
        %1794 = vmatpush.xpose.msra.mxu0 0.0
        %1795 = vmatpush.xpose.msra.mxu0 0.0
        %1796 = vmatpush.xpose.msra.mxu0 0.0
        %1797 = vmatpush.xpose.msra.mxu0 0.0
        %1798 = vmatpush.xpose.msra.mxu0 0.0
        %1799 = vmatpush.xpose.msra.mxu0 0.0
        %1800 = vmatpush.xpose.msra.mxu0 0.0
        %1801 = vmatpush.xpose.msra.mxu0 0.0
        %1802 = vmatpush.xpose.msra.mxu0 0.0
        %1803 = vmatpush.xpose.msra.mxu0 0.0
        %1804 = vmatpush.xpose.msra.mxu0 0.0
        %1805 = vmatpush.xpose.msra.mxu0 0.0
        %1806 = vmatpush.xpose.msra.mxu0 0.0
        %1807 = vmatpush.xpose.msra.mxu0 0.0
        %1808 = vmatpush.xpose.msra.mxu0 0.0
        %v1809 = vand.u32 %v1792, 4294901760
        %1810 = vmatpush.xpose.msra.mxu0 %v1809
        %v1811 = vand.u32 %v1789, 4294901760
        %v1812 = vsub.f32 %v1789, %v1811
        %v1813 = vand.u32 %v1812, 4294901760
        %v1814 = vsub.f32 %v1812, %v1813
        %v1815 = vand.u32 %v1814, 4294901760
        %1816 = vmatmul.f32.gmra.mxu0 %v1815
        %v1817 = vpop.f32.mrf.mxu0
        %v1818 = vadd.f32 %v1110, %v1817
        %1819 = vdwg.mxu0
        %1820 = vmatpush.xpose.msra.mxu0 0.0
        %1821 = vmatpush.xpose.msra.mxu0 0.0
        %1822 = vmatpush.xpose.msra.mxu0 0.0
        %1823 = vmatpush.xpose.msra.mxu0 0.0
        %1824 = vmatpush.xpose.msra.mxu0 0.0
        %1825 = vmatpush.xpose.msra.mxu0 0.0
        %1826 = vmatpush.xpose.msra.mxu0 0.0
        %1827 = vmatpush.xpose.msra.mxu0 0.0
        %1828 = vmatpush.xpose.msra.mxu0 0.0
        %1829 = vmatpush.xpose.msra.mxu0 0.0
        %1830 = vmatpush.xpose.msra.mxu0 0.0
        %1831 = vmatpush.xpose.msra.mxu0 0.0
        %1832 = vmatpush.xpose.msra.mxu0 0.0
        %1833 = vmatpush.xpose.msra.mxu0 0.0
        %1834 = vmatpush.xpose.msra.mxu0 0.0
        %v1835 = vand.u32 %v1792, 4294901760
        %v1836 = vsub.f32 %v1792, %v1835
        %v1837 = vand.u32 %v1836, 4294901760
        %v1838 = vsub.f32 %v1836, %v1837
        %v1839 = vand.u32 %v1838, 4294901760
        %1840 = vmatpush.xpose.msra.mxu0 %v1839
        %v1841 = vand.u32 %v1789, 4294901760
        %1842 = vmatmul.f32.gmra.mxu0 %v1841
        %v1843 = vpop.f32.mrf.mxu0
        %v1844 = vadd.f32 %v1818, %v1843
        %1845 = vdwg.mxu0
        %1846 = vmatpush.xpose.msra.mxu0 0.0
        %1847 = vmatpush.xpose.msra.mxu0 0.0
        %1848 = vmatpush.xpose.msra.mxu0 0.0
        %1849 = vmatpush.xpose.msra.mxu0 0.0
        %1850 = vmatpush.xpose.msra.mxu0 0.0
        %1851 = vmatpush.xpose.msra.mxu0 0.0
        %1852 = vmatpush.xpose.msra.mxu0 0.0
        %1853 = vmatpush.xpose.msra.mxu0 0.0
        %1854 = vmatpush.xpose.msra.mxu0 0.0
        %1855 = vmatpush.xpose.msra.mxu0 0.0
        %1856 = vmatpush.xpose.msra.mxu0 0.0
        %1857 = vmatpush.xpose.msra.mxu0 0.0
        %1858 = vmatpush.xpose.msra.mxu0 0.0
        %1859 = vmatpush.xpose.msra.mxu0 0.0
        %1860 = vmatpush.xpose.msra.mxu0 0.0
        %v1861 = vand.u32 %v1792, 4294901760
        %v1862 = vsub.f32 %v1792, %v1861
        %1863 = vmatpush.xpose.msra.mxu0 %v1862
        %v1864 = vand.u32 %v1789, 4294901760
        %v1865 = vsub.f32 %v1789, %v1864
        %1866 = vmatmul.f32.gmra.mxu0 %v1865
        %v1867 = vpop.f32.mrf.mxu0
        %v1868 = vadd.f32 %v1844, %v1867
        %1869 = vdwg.mxu0
        %1870 = vmatpush.xpose.msra.mxu0 0.0
        %1871 = vmatpush.xpose.msra.mxu0 0.0
        %1872 = vmatpush.xpose.msra.mxu0 0.0
        %1873 = vmatpush.xpose.msra.mxu0 0.0
        %1874 = vmatpush.xpose.msra.mxu0 0.0
        %1875 = vmatpush.xpose.msra.mxu0 0.0
        %1876 = vmatpush.xpose.msra.mxu0 0.0
        %1877 = vmatpush.xpose.msra.mxu0 0.0
        %1878 = vmatpush.xpose.msra.mxu0 0.0
        %1879 = vmatpush.xpose.msra.mxu0 0.0
        %1880 = vmatpush.xpose.msra.mxu0 0.0
        %1881 = vmatpush.xpose.msra.mxu0 0.0
        %1882 = vmatpush.xpose.msra.mxu0 0.0
        %1883 = vmatpush.xpose.msra.mxu0 0.0
        %1884 = vmatpush.xpose.msra.mxu0 0.0
        %v1885 = vand.u32 %v1792, 4294901760
        %1886 = vmatpush.xpose.msra.mxu0 %v1885
        %v1887 = vand.u32 %v1789, 4294901760
        %v1888 = vsub.f32 %v1789, %v1887
        %v1889 = vand.u32 %v1888, 4294901760
        %1890 = vmatmul.f32.gmra.mxu0 %v1889
        %v1891 = vpop.f32.mrf.mxu0
        %v1892 = vadd.f32 %v1868, %v1891
        %1893 = vdwg.mxu0
        %1894 = vmatpush.xpose.msra.mxu0 0.0
        %1895 = vmatpush.xpose.msra.mxu0 0.0
        %1896 = vmatpush.xpose.msra.mxu0 0.0
        %1897 = vmatpush.xpose.msra.mxu0 0.0
        %1898 = vmatpush.xpose.msra.mxu0 0.0
        %1899 = vmatpush.xpose.msra.mxu0 0.0
        %1900 = vmatpush.xpose.msra.mxu0 0.0
        %1901 = vmatpush.xpose.msra.mxu0 0.0
        %1902 = vmatpush.xpose.msra.mxu0 0.0
        %1903 = vmatpush.xpose.msra.mxu0 0.0
        %1904 = vmatpush.xpose.msra.mxu0 0.0
        %1905 = vmatpush.xpose.msra.mxu0 0.0
        %1906 = vmatpush.xpose.msra.mxu0 0.0
        %1907 = vmatpush.xpose.msra.mxu0 0.0
        %1908 = vmatpush.xpose.msra.mxu0 0.0
        %v1909 = vand.u32 %v1792, 4294901760
        %v1910 = vsub.f32 %v1792, %v1909
        %v1911 = vand.u32 %v1910, 4294901760
        %1912 = vmatpush.xpose.msra.mxu0 %v1911
        %v1913 = vand.u32 %v1789, 4294901760
        %1914 = vmatmul.f32.gmra.mxu0 %v1913
        %v1915 = vpop.f32.mrf.mxu0
        %v1916 = vadd.f32 %v1892, %v1915
        %1917 = vdwg.mxu0
        %1918 = vmatpush.xpose.msra.mxu0 0.0
        %1919 = vmatpush.xpose.msra.mxu0 0.0
        %1920 = vmatpush.xpose.msra.mxu0 0.0
        %1921 = vmatpush.xpose.msra.mxu0 0.0
        %1922 = vmatpush.xpose.msra.mxu0 0.0
        %1923 = vmatpush.xpose.msra.mxu0 0.0
        %1924 = vmatpush.xpose.msra.mxu0 0.0
        %1925 = vmatpush.xpose.msra.mxu0 0.0
        %1926 = vmatpush.xpose.msra.mxu0 0.0
        %1927 = vmatpush.xpose.msra.mxu0 0.0
        %1928 = vmatpush.xpose.msra.mxu0 0.0
        %1929 = vmatpush.xpose.msra.mxu0 0.0
        %1930 = vmatpush.xpose.msra.mxu0 0.0
        %1931 = vmatpush.xpose.msra.mxu0 0.0
        %1932 = vmatpush.xpose.msra.mxu0 0.0
        %v1933 = vand.u32 %v1792, 4294901760
        %1934 = vmatpush.xpose.msra.mxu0 %v1933
        %v1935 = vand.u32 %v1789, 4294901760
        %1936 = vmatmul.f32.gmra.mxu0 %v1935
        %v1937 = vpop.f32.mrf.mxu0
        %v1938 = vadd.f32 %v1916, %v1937
        %1939 = vdwg.mxu0
        %v1941 = vsel %vm1483, %v1231, 0
        %v1944 = vsel %vm1483, %v1360, 0
        %1946 = vmatpush.xpose.msra.mxu0 0.0
        %1947 = vmatpush.xpose.msra.mxu0 0.0
        %1948 = vmatpush.xpose.msra.mxu0 0.0
        %1949 = vmatpush.xpose.msra.mxu0 0.0
        %1950 = vmatpush.xpose.msra.mxu0 0.0
        %1951 = vmatpush.xpose.msra.mxu0 0.0
        %1952 = vmatpush.xpose.msra.mxu0 0.0
        %1953 = vmatpush.xpose.msra.mxu0 0.0
        %1954 = vmatpush.xpose.msra.mxu0 0.0
        %1955 = vmatpush.xpose.msra.mxu0 0.0
        %1956 = vmatpush.xpose.msra.mxu0 0.0
        %1957 = vmatpush.xpose.msra.mxu0 0.0
        %1958 = vmatpush.xpose.msra.mxu0 0.0
        %1959 = vmatpush.xpose.msra.mxu0 0.0
        %1960 = vmatpush.xpose.msra.mxu0 0.0
        %v1961 = vand.u32 %v1944, 4294901760
        %1962 = vmatpush.xpose.msra.mxu0 %v1961
        %v1963 = vand.u32 %v1941, 4294901760
        %v1964 = vsub.f32 %v1941, %v1963
        %v1965 = vand.u32 %v1964, 4294901760
        %v1966 = vsub.f32 %v1964, %v1965
        %v1967 = vand.u32 %v1966, 4294901760
        %1968 = vmatmul.f32.gmra.mxu0 %v1967
        %v1969 = vpop.f32.mrf.mxu0
        %v1970 = vadd.f32 %v1110, %v1969
        %1971 = vdwg.mxu0
        %1972 = vmatpush.xpose.msra.mxu0 0.0
        %1973 = vmatpush.xpose.msra.mxu0 0.0
        %1974 = vmatpush.xpose.msra.mxu0 0.0
        %1975 = vmatpush.xpose.msra.mxu0 0.0
        %1976 = vmatpush.xpose.msra.mxu0 0.0
        %1977 = vmatpush.xpose.msra.mxu0 0.0
        %1978 = vmatpush.xpose.msra.mxu0 0.0
        %1979 = vmatpush.xpose.msra.mxu0 0.0
        %1980 = vmatpush.xpose.msra.mxu0 0.0
        %1981 = vmatpush.xpose.msra.mxu0 0.0
        %1982 = vmatpush.xpose.msra.mxu0 0.0
        %1983 = vmatpush.xpose.msra.mxu0 0.0
        %1984 = vmatpush.xpose.msra.mxu0 0.0
        %1985 = vmatpush.xpose.msra.mxu0 0.0
        %1986 = vmatpush.xpose.msra.mxu0 0.0
        %v1987 = vand.u32 %v1944, 4294901760
        %v1988 = vsub.f32 %v1944, %v1987
        %v1989 = vand.u32 %v1988, 4294901760
        %v1990 = vsub.f32 %v1988, %v1989
        %v1991 = vand.u32 %v1990, 4294901760
        %1992 = vmatpush.xpose.msra.mxu0 %v1991
        %v1993 = vand.u32 %v1941, 4294901760
        %1994 = vmatmul.f32.gmra.mxu0 %v1993
        %v1995 = vpop.f32.mrf.mxu0
        %v1996 = vadd.f32 %v1970, %v1995
        %1997 = vdwg.mxu0
        %1998 = vmatpush.xpose.msra.mxu0 0.0
        %1999 = vmatpush.xpose.msra.mxu0 0.0
        %2000 = vmatpush.xpose.msra.mxu0 0.0
        %2001 = vmatpush.xpose.msra.mxu0 0.0
        %2002 = vmatpush.xpose.msra.mxu0 0.0
        %2003 = vmatpush.xpose.msra.mxu0 0.0
        %2004 = vmatpush.xpose.msra.mxu0 0.0
        %2005 = vmatpush.xpose.msra.mxu0 0.0
        %2006 = vmatpush.xpose.msra.mxu0 0.0
        %2007 = vmatpush.xpose.msra.mxu0 0.0
        %2008 = vmatpush.xpose.msra.mxu0 0.0
        %2009 = vmatpush.xpose.msra.mxu0 0.0
        %2010 = vmatpush.xpose.msra.mxu0 0.0
        %2011 = vmatpush.xpose.msra.mxu0 0.0
        %2012 = vmatpush.xpose.msra.mxu0 0.0
        %v2013 = vand.u32 %v1944, 4294901760
        %v2014 = vsub.f32 %v1944, %v2013
        %2015 = vmatpush.xpose.msra.mxu0 %v2014
        %v2016 = vand.u32 %v1941, 4294901760
        %v2017 = vsub.f32 %v1941, %v2016
        %2018 = vmatmul.f32.gmra.mxu0 %v2017
        %v2019 = vpop.f32.mrf.mxu0
        %v2020 = vadd.f32 %v1996, %v2019
        %2021 = vdwg.mxu0
        %2022 = vmatpush.xpose.msra.mxu0 0.0
        %2023 = vmatpush.xpose.msra.mxu0 0.0
        %2024 = vmatpush.xpose.msra.mxu0 0.0
        %2025 = vmatpush.xpose.msra.mxu0 0.0
        %2026 = vmatpush.xpose.msra.mxu0 0.0
        %2027 = vmatpush.xpose.msra.mxu0 0.0
        %2028 = vmatpush.xpose.msra.mxu0 0.0
        %2029 = vmatpush.xpose.msra.mxu0 0.0
        %2030 = vmatpush.xpose.msra.mxu0 0.0
        %2031 = vmatpush.xpose.msra.mxu0 0.0
        %2032 = vmatpush.xpose.msra.mxu0 0.0
        %2033 = vmatpush.xpose.msra.mxu0 0.0
        %2034 = vmatpush.xpose.msra.mxu0 0.0
        %2035 = vmatpush.xpose.msra.mxu0 0.0
        %2036 = vmatpush.xpose.msra.mxu0 0.0
        %v2037 = vand.u32 %v1944, 4294901760
        %2038 = vmatpush.xpose.msra.mxu0 %v2037
        %v2039 = vand.u32 %v1941, 4294901760
        %v2040 = vsub.f32 %v1941, %v2039
        %v2041 = vand.u32 %v2040, 4294901760
        %2042 = vmatmul.f32.gmra.mxu0 %v2041
        %v2043 = vpop.f32.mrf.mxu0
        %v2044 = vadd.f32 %v2020, %v2043
        %2045 = vdwg.mxu0
        %2046 = vmatpush.xpose.msra.mxu0 0.0
        %2047 = vmatpush.xpose.msra.mxu0 0.0
        %2048 = vmatpush.xpose.msra.mxu0 0.0
        %2049 = vmatpush.xpose.msra.mxu0 0.0
        %2050 = vmatpush.xpose.msra.mxu0 0.0
        %2051 = vmatpush.xpose.msra.mxu0 0.0
        %2052 = vmatpush.xpose.msra.mxu0 0.0
        %2053 = vmatpush.xpose.msra.mxu0 0.0
        %2054 = vmatpush.xpose.msra.mxu0 0.0
        %2055 = vmatpush.xpose.msra.mxu0 0.0
        %2056 = vmatpush.xpose.msra.mxu0 0.0
        %2057 = vmatpush.xpose.msra.mxu0 0.0
        %2058 = vmatpush.xpose.msra.mxu0 0.0
        %2059 = vmatpush.xpose.msra.mxu0 0.0
        %2060 = vmatpush.xpose.msra.mxu0 0.0
        %v2061 = vand.u32 %v1944, 4294901760
        %v2062 = vsub.f32 %v1944, %v2061
        %v2063 = vand.u32 %v2062, 4294901760
        %2064 = vmatpush.xpose.msra.mxu0 %v2063
        %v2065 = vand.u32 %v1941, 4294901760
        %2066 = vmatmul.f32.gmra.mxu0 %v2065
        %v2067 = vpop.f32.mrf.mxu0
        %v2068 = vadd.f32 %v2044, %v2067
        %2069 = vdwg.mxu0
        %2070 = vmatpush.xpose.msra.mxu0 0.0
        %2071 = vmatpush.xpose.msra.mxu0 0.0
        %2072 = vmatpush.xpose.msra.mxu0 0.0
        %2073 = vmatpush.xpose.msra.mxu0 0.0
        %2074 = vmatpush.xpose.msra.mxu0 0.0
        %2075 = vmatpush.xpose.msra.mxu0 0.0
        %2076 = vmatpush.xpose.msra.mxu0 0.0
        %2077 = vmatpush.xpose.msra.mxu0 0.0
        %2078 = vmatpush.xpose.msra.mxu0 0.0
        %2079 = vmatpush.xpose.msra.mxu0 0.0
        %2080 = vmatpush.xpose.msra.mxu0 0.0
        %2081 = vmatpush.xpose.msra.mxu0 0.0
        %2082 = vmatpush.xpose.msra.mxu0 0.0
        %2083 = vmatpush.xpose.msra.mxu0 0.0
        %2084 = vmatpush.xpose.msra.mxu0 0.0
        %v2085 = vand.u32 %v1944, 4294901760
        %2086 = vmatpush.xpose.msra.mxu0 %v2085
        %v2087 = vand.u32 %v1941, 4294901760
        %2088 = vmatmul.f32.gmra.mxu0 %v2087
        %v2089 = vpop.f32.mrf.mxu0
        %v2090 = vadd.f32 %v2068, %v2089
        %2091 = vdwg.mxu0
        %v2092 = vsel %vm1483, %v1634, -inf
        %2093 = vmax.xlane.f32.xlu0 %v2092
        %v2094 = vpop.xlane.xlu0 %2093
        %v2095 = vsel %vm1483, %v1786, -inf
        %2096 = vmax.xlane.f32.xlu0 %v2095
        %v2097 = vpop.xlane.xlu0 %2096
        %v2098 = vsel %vm1483, %v1938, -inf
        %2099 = vmax.xlane.f32.xlu0 %v2098
        %v2100 = vpop.xlane.xlu0 %2099
        %v2101 = vsel %vm1483, %v2090, -inf
        %2102 = vmax.xlane.f32.xlu0 %v2101
        %v2103 = vpop.xlane.xlu0 %2102
        %v2104 = vsub.f32 %v1634, %v2094
        %v2105 = vsub.f32 %v1786, %v2097
        %v2106 = vsub.f32 %v1938, %v2100
        %v2107 = vsub.f32 %v2090, %v2103
        %v2108 = vmul.f32 %v2104, 1.442695
        %v2109 = vpow.pop %v2108
        %v2110 = vmul.f32 %v2105, 1.442695
        %v2111 = vpow.pop %v2110
        %v2112 = vmul.f32 %v2106, 1.442695
        %v2113 = vpow.pop %v2112
        %v2114 = vmul.f32 %v2107, 1.442695
        %v2115 = vpow.pop %v2114
        %v2116 = vsel %vm1483, %v2109, 0.0
        %2117 = vadd.xlane.f32.xlu0 %v2116
        %v2118 = vpop.xlane.xlu0 %2117
        %v2119 = vsel %vm1483, %v2111, 0.0
        %2120 = vadd.xlane.f32.xlu0 %v2119
        %v2121 = vpop.xlane.xlu0 %2120
        %v2122 = vsel %vm1483, %v2113, 0.0
        %2123 = vadd.xlane.f32.xlu0 %v2122
        %v2124 = vpop.xlane.xlu0 %2123
        %v2125 = vsel %vm1483, %v2115, 0.0
        %2126 = vadd.xlane.f32.xlu0 %v2125
        %v2127 = vpop.xlane.xlu0 %2126
        %v2128 = vrcp.pop %v2118
        %v2129 = vrcp.pop %v2121
        %v2130 = vrcp.pop %v2124
        %v2131 = vrcp.pop %v2127
        %v2132 = vmul.f32 %v2118, %v2128
        %v2133 = vmul.f32 %v2121, %v2129
        %v2134 = vmul.f32 %v2124, %v2130
        %v2135 = vmul.f32 %v2127, %v2131
        %v2136 = vsub.f32 2.0, %v2132
        %v2137 = vsub.f32 2.0, %v2133
        %v2138 = vsub.f32 2.0, %v2134
        %v2139 = vsub.f32 2.0, %v2135
        %v2140 = vmul.f32 %v2128, %v2136
        %v2141 = vmul.f32 %v2129, %v2137
        %v2142 = vmul.f32 %v2130, %v2138
        %v2143 = vmul.f32 %v2131, %v2139
        %v2144 = vmul.f32 %v2109, %v2140
        %v2145 = vmul.f32 %v2111, %v2141
        %v2146 = vmul.f32 %v2113, %v2142
        %v2147 = vmul.f32 %v2115, %v2143
        %v2149 = vsel %vm1483, %v2144, 0
        %2151 = vmatpush.msra.mxu0 0.0
        %2152 = vmatpush.msra.mxu0 0.0
        %2153 = vmatpush.msra.mxu0 0.0
        %2154 = vmatpush.msra.mxu0 0.0
        %2155 = vmatpush.msra.mxu0 0.0
        %2156 = vmatpush.msra.mxu0 0.0
        %2157 = vmatpush.msra.mxu0 0.0
        %2158 = vmatpush.msra.mxu0 0.0
        %2159 = vmatpush.msra.mxu0 0.0
        %2160 = vmatpush.msra.mxu0 0.0
        %2161 = vmatpush.msra.mxu0 0.0
        %2162 = vmatpush.msra.mxu0 0.0
        %2163 = vmatpush.msra.mxu0 0.0
        %2164 = vmatpush.msra.mxu0 0.0
        %2165 = vmatpush.msra.mxu0 0.0
        %v2166 = vand.u32 %v1476, 4294901760
        %2167 = vmatpush.msra.mxu0 %v2166
        %v2168 = vand.u32 %v2149, 4294901760
        %v2169 = vsub.f32 %v2149, %v2168
        %v2170 = vand.u32 %v2169, 4294901760
        %v2171 = vsub.f32 %v2169, %v2170
        %v2172 = vand.u32 %v2171, 4294901760
        %2173 = vmatmul.f32.gmra.mxu0 %v2172
        %v2174 = vpop.f32.mrf.mxu0
        %v2175 = vadd.f32 0.0, %v2174
        %2176 = vdwg.mxu0
        %2177 = vmatpush.msra.mxu0 0.0
        %2178 = vmatpush.msra.mxu0 0.0
        %2179 = vmatpush.msra.mxu0 0.0
        %2180 = vmatpush.msra.mxu0 0.0
        %2181 = vmatpush.msra.mxu0 0.0
        %2182 = vmatpush.msra.mxu0 0.0
        %2183 = vmatpush.msra.mxu0 0.0
        %2184 = vmatpush.msra.mxu0 0.0
        %2185 = vmatpush.msra.mxu0 0.0
        %2186 = vmatpush.msra.mxu0 0.0
        %2187 = vmatpush.msra.mxu0 0.0
        %2188 = vmatpush.msra.mxu0 0.0
        %2189 = vmatpush.msra.mxu0 0.0
        %2190 = vmatpush.msra.mxu0 0.0
        %2191 = vmatpush.msra.mxu0 0.0
        %v2192 = vand.u32 %v1476, 4294901760
        %v2193 = vsub.f32 %v1476, %v2192
        %v2194 = vand.u32 %v2193, 4294901760
        %v2195 = vsub.f32 %v2193, %v2194
        %v2196 = vand.u32 %v2195, 4294901760
        %2197 = vmatpush.msra.mxu0 %v2196
        %v2198 = vand.u32 %v2149, 4294901760
        %2199 = vmatmul.f32.gmra.mxu0 %v2198
        %v2200 = vpop.f32.mrf.mxu0
        %v2201 = vadd.f32 %v2175, %v2200
        %2202 = vdwg.mxu0
        %2203 = vmatpush.msra.mxu0 0.0
        %2204 = vmatpush.msra.mxu0 0.0
        %2205 = vmatpush.msra.mxu0 0.0
        %2206 = vmatpush.msra.mxu0 0.0
        %2207 = vmatpush.msra.mxu0 0.0
        %2208 = vmatpush.msra.mxu0 0.0
        %2209 = vmatpush.msra.mxu0 0.0
        %2210 = vmatpush.msra.mxu0 0.0
        %2211 = vmatpush.msra.mxu0 0.0
        %2212 = vmatpush.msra.mxu0 0.0
        %2213 = vmatpush.msra.mxu0 0.0
        %2214 = vmatpush.msra.mxu0 0.0
        %2215 = vmatpush.msra.mxu0 0.0
        %2216 = vmatpush.msra.mxu0 0.0
        %2217 = vmatpush.msra.mxu0 0.0
        %v2218 = vand.u32 %v1476, 4294901760
        %v2219 = vsub.f32 %v1476, %v2218
        %2220 = vmatpush.msra.mxu0 %v2219
        %v2221 = vand.u32 %v2149, 4294901760
        %v2222 = vsub.f32 %v2149, %v2221
        %2223 = vmatmul.f32.gmra.mxu0 %v2222
        %v2224 = vpop.f32.mrf.mxu0
        %v2225 = vadd.f32 %v2201, %v2224
        %2226 = vdwg.mxu0
        %2227 = vmatpush.msra.mxu0 0.0
        %2228 = vmatpush.msra.mxu0 0.0
        %2229 = vmatpush.msra.mxu0 0.0
        %2230 = vmatpush.msra.mxu0 0.0
        %2231 = vmatpush.msra.mxu0 0.0
        %2232 = vmatpush.msra.mxu0 0.0
        %2233 = vmatpush.msra.mxu0 0.0
        %2234 = vmatpush.msra.mxu0 0.0
        %2235 = vmatpush.msra.mxu0 0.0
        %2236 = vmatpush.msra.mxu0 0.0
        %2237 = vmatpush.msra.mxu0 0.0
        %2238 = vmatpush.msra.mxu0 0.0
        %2239 = vmatpush.msra.mxu0 0.0
        %2240 = vmatpush.msra.mxu0 0.0
        %2241 = vmatpush.msra.mxu0 0.0
        %v2242 = vand.u32 %v1476, 4294901760
        %2243 = vmatpush.msra.mxu0 %v2242
        %v2244 = vand.u32 %v2149, 4294901760
        %v2245 = vsub.f32 %v2149, %v2244
        %v2246 = vand.u32 %v2245, 4294901760
        %2247 = vmatmul.f32.gmra.mxu0 %v2246
        %v2248 = vpop.f32.mrf.mxu0
        %v2249 = vadd.f32 %v2225, %v2248
        %2250 = vdwg.mxu0
        %2251 = vmatpush.msra.mxu0 0.0
        %2252 = vmatpush.msra.mxu0 0.0
        %2253 = vmatpush.msra.mxu0 0.0
        %2254 = vmatpush.msra.mxu0 0.0
        %2255 = vmatpush.msra.mxu0 0.0
        %2256 = vmatpush.msra.mxu0 0.0
        %2257 = vmatpush.msra.mxu0 0.0
        %2258 = vmatpush.msra.mxu0 0.0
        %2259 = vmatpush.msra.mxu0 0.0
        %2260 = vmatpush.msra.mxu0 0.0
        %2261 = vmatpush.msra.mxu0 0.0
        %2262 = vmatpush.msra.mxu0 0.0
        %2263 = vmatpush.msra.mxu0 0.0
        %2264 = vmatpush.msra.mxu0 0.0
        %2265 = vmatpush.msra.mxu0 0.0
        %v2266 = vand.u32 %v1476, 4294901760
        %v2267 = vsub.f32 %v1476, %v2266
        %v2268 = vand.u32 %v2267, 4294901760
        %2269 = vmatpush.msra.mxu0 %v2268
        %v2270 = vand.u32 %v2149, 4294901760
        %2271 = vmatmul.f32.gmra.mxu0 %v2270
        %v2272 = vpop.f32.mrf.mxu0
        %v2273 = vadd.f32 %v2249, %v2272
        %2274 = vdwg.mxu0
        %2275 = vmatpush.msra.mxu0 0.0
        %2276 = vmatpush.msra.mxu0 0.0
        %2277 = vmatpush.msra.mxu0 0.0
        %2278 = vmatpush.msra.mxu0 0.0
        %2279 = vmatpush.msra.mxu0 0.0
        %2280 = vmatpush.msra.mxu0 0.0
        %2281 = vmatpush.msra.mxu0 0.0
        %2282 = vmatpush.msra.mxu0 0.0
        %2283 = vmatpush.msra.mxu0 0.0
        %2284 = vmatpush.msra.mxu0 0.0
        %2285 = vmatpush.msra.mxu0 0.0
        %2286 = vmatpush.msra.mxu0 0.0
        %2287 = vmatpush.msra.mxu0 0.0
        %2288 = vmatpush.msra.mxu0 0.0
        %2289 = vmatpush.msra.mxu0 0.0
        %v2290 = vand.u32 %v1476, 4294901760
        %2291 = vmatpush.msra.mxu0 %v2290
        %v2292 = vand.u32 %v2149, 4294901760
        %2293 = vmatmul.f32.gmra.mxu0 %v2292
        %v2294 = vpop.f32.mrf.mxu0
        %v2295 = vadd.f32 %v2273, %v2294
        %2296 = vdwg.mxu0
        %v2298 = vsel %vm1483, %v2145, 0
        %2300 = vmatpush.msra.mxu0 0.0
        %2301 = vmatpush.msra.mxu0 0.0
        %2302 = vmatpush.msra.mxu0 0.0
        %2303 = vmatpush.msra.mxu0 0.0
        %2304 = vmatpush.msra.mxu0 0.0
        %2305 = vmatpush.msra.mxu0 0.0
        %2306 = vmatpush.msra.mxu0 0.0
        %2307 = vmatpush.msra.mxu0 0.0
        %2308 = vmatpush.msra.mxu0 0.0
        %2309 = vmatpush.msra.mxu0 0.0
        %2310 = vmatpush.msra.mxu0 0.0
        %2311 = vmatpush.msra.mxu0 0.0
        %2312 = vmatpush.msra.mxu0 0.0
        %2313 = vmatpush.msra.mxu0 0.0
        %2314 = vmatpush.msra.mxu0 0.0
        %v2315 = vand.u32 %v1478, 4294901760
        %2316 = vmatpush.msra.mxu0 %v2315
        %v2317 = vand.u32 %v2298, 4294901760
        %v2318 = vsub.f32 %v2298, %v2317
        %v2319 = vand.u32 %v2318, 4294901760
        %v2320 = vsub.f32 %v2318, %v2319
        %v2321 = vand.u32 %v2320, 4294901760
        %2322 = vmatmul.f32.gmra.mxu0 %v2321
        %v2323 = vpop.f32.mrf.mxu0
        %v2324 = vadd.f32 0.0, %v2323
        %2325 = vdwg.mxu0
        %2326 = vmatpush.msra.mxu0 0.0
        %2327 = vmatpush.msra.mxu0 0.0
        %2328 = vmatpush.msra.mxu0 0.0
        %2329 = vmatpush.msra.mxu0 0.0
        %2330 = vmatpush.msra.mxu0 0.0
        %2331 = vmatpush.msra.mxu0 0.0
        %2332 = vmatpush.msra.mxu0 0.0
        %2333 = vmatpush.msra.mxu0 0.0
        %2334 = vmatpush.msra.mxu0 0.0
        %2335 = vmatpush.msra.mxu0 0.0
        %2336 = vmatpush.msra.mxu0 0.0
        %2337 = vmatpush.msra.mxu0 0.0
        %2338 = vmatpush.msra.mxu0 0.0
        %2339 = vmatpush.msra.mxu0 0.0
        %2340 = vmatpush.msra.mxu0 0.0
        %v2341 = vand.u32 %v1478, 4294901760
        %v2342 = vsub.f32 %v1478, %v2341
        %v2343 = vand.u32 %v2342, 4294901760
        %v2344 = vsub.f32 %v2342, %v2343
        %v2345 = vand.u32 %v2344, 4294901760
        %2346 = vmatpush.msra.mxu0 %v2345
        %v2347 = vand.u32 %v2298, 4294901760
        %2348 = vmatmul.f32.gmra.mxu0 %v2347
        %v2349 = vpop.f32.mrf.mxu0
        %v2350 = vadd.f32 %v2324, %v2349
        %2351 = vdwg.mxu0
        %2352 = vmatpush.msra.mxu0 0.0
        %2353 = vmatpush.msra.mxu0 0.0
        %2354 = vmatpush.msra.mxu0 0.0
        %2355 = vmatpush.msra.mxu0 0.0
        %2356 = vmatpush.msra.mxu0 0.0
        %2357 = vmatpush.msra.mxu0 0.0
        %2358 = vmatpush.msra.mxu0 0.0
        %2359 = vmatpush.msra.mxu0 0.0
        %2360 = vmatpush.msra.mxu0 0.0
        %2361 = vmatpush.msra.mxu0 0.0
        %2362 = vmatpush.msra.mxu0 0.0
        %2363 = vmatpush.msra.mxu0 0.0
        %2364 = vmatpush.msra.mxu0 0.0
        %2365 = vmatpush.msra.mxu0 0.0
        %2366 = vmatpush.msra.mxu0 0.0
        %v2367 = vand.u32 %v1478, 4294901760
        %v2368 = vsub.f32 %v1478, %v2367
        %2369 = vmatpush.msra.mxu0 %v2368
        %v2370 = vand.u32 %v2298, 4294901760
        %v2371 = vsub.f32 %v2298, %v2370
        %2372 = vmatmul.f32.gmra.mxu0 %v2371
        %v2373 = vpop.f32.mrf.mxu0
        %v2374 = vadd.f32 %v2350, %v2373
        %2375 = vdwg.mxu0
        %2376 = vmatpush.msra.mxu0 0.0
        %2377 = vmatpush.msra.mxu0 0.0
        %2378 = vmatpush.msra.mxu0 0.0
        %2379 = vmatpush.msra.mxu0 0.0
        %2380 = vmatpush.msra.mxu0 0.0
        %2381 = vmatpush.msra.mxu0 0.0
        %2382 = vmatpush.msra.mxu0 0.0
        %2383 = vmatpush.msra.mxu0 0.0
        %2384 = vmatpush.msra.mxu0 0.0
        %2385 = vmatpush.msra.mxu0 0.0
        %2386 = vmatpush.msra.mxu0 0.0
        %2387 = vmatpush.msra.mxu0 0.0
        %2388 = vmatpush.msra.mxu0 0.0
        %2389 = vmatpush.msra.mxu0 0.0
        %2390 = vmatpush.msra.mxu0 0.0
        %v2391 = vand.u32 %v1478, 4294901760
        %2392 = vmatpush.msra.mxu0 %v2391
        %v2393 = vand.u32 %v2298, 4294901760
        %v2394 = vsub.f32 %v2298, %v2393
        %v2395 = vand.u32 %v2394, 4294901760
        %2396 = vmatmul.f32.gmra.mxu0 %v2395
        %v2397 = vpop.f32.mrf.mxu0
        %v2398 = vadd.f32 %v2374, %v2397
        %2399 = vdwg.mxu0
        %2400 = vmatpush.msra.mxu0 0.0
        %2401 = vmatpush.msra.mxu0 0.0
        %2402 = vmatpush.msra.mxu0 0.0
        %2403 = vmatpush.msra.mxu0 0.0
        %2404 = vmatpush.msra.mxu0 0.0
        %2405 = vmatpush.msra.mxu0 0.0
        %2406 = vmatpush.msra.mxu0 0.0
        %2407 = vmatpush.msra.mxu0 0.0
        %2408 = vmatpush.msra.mxu0 0.0
        %2409 = vmatpush.msra.mxu0 0.0
        %2410 = vmatpush.msra.mxu0 0.0
        %2411 = vmatpush.msra.mxu0 0.0
        %2412 = vmatpush.msra.mxu0 0.0
        %2413 = vmatpush.msra.mxu0 0.0
        %2414 = vmatpush.msra.mxu0 0.0
        %v2415 = vand.u32 %v1478, 4294901760
        %v2416 = vsub.f32 %v1478, %v2415
        %v2417 = vand.u32 %v2416, 4294901760
        %2418 = vmatpush.msra.mxu0 %v2417
        %v2419 = vand.u32 %v2298, 4294901760
        %2420 = vmatmul.f32.gmra.mxu0 %v2419
        %v2421 = vpop.f32.mrf.mxu0
        %v2422 = vadd.f32 %v2398, %v2421
        %2423 = vdwg.mxu0
        %2424 = vmatpush.msra.mxu0 0.0
        %2425 = vmatpush.msra.mxu0 0.0
        %2426 = vmatpush.msra.mxu0 0.0
        %2427 = vmatpush.msra.mxu0 0.0
        %2428 = vmatpush.msra.mxu0 0.0
        %2429 = vmatpush.msra.mxu0 0.0
        %2430 = vmatpush.msra.mxu0 0.0
        %2431 = vmatpush.msra.mxu0 0.0
        %2432 = vmatpush.msra.mxu0 0.0
        %2433 = vmatpush.msra.mxu0 0.0
        %2434 = vmatpush.msra.mxu0 0.0
        %2435 = vmatpush.msra.mxu0 0.0
        %2436 = vmatpush.msra.mxu0 0.0
        %2437 = vmatpush.msra.mxu0 0.0
        %2438 = vmatpush.msra.mxu0 0.0
        %v2439 = vand.u32 %v1478, 4294901760
        %2440 = vmatpush.msra.mxu0 %v2439
        %v2441 = vand.u32 %v2298, 4294901760
        %2442 = vmatmul.f32.gmra.mxu0 %v2441
        %v2443 = vpop.f32.mrf.mxu0
        %v2444 = vadd.f32 %v2422, %v2443
        %2445 = vdwg.mxu0
        %v2447 = vsel %vm1483, %v2146, 0
        %2449 = vmatpush.msra.mxu0 0.0
        %2450 = vmatpush.msra.mxu0 0.0
        %2451 = vmatpush.msra.mxu0 0.0
        %2452 = vmatpush.msra.mxu0 0.0
        %2453 = vmatpush.msra.mxu0 0.0
        %2454 = vmatpush.msra.mxu0 0.0
        %2455 = vmatpush.msra.mxu0 0.0
        %2456 = vmatpush.msra.mxu0 0.0
        %2457 = vmatpush.msra.mxu0 0.0
        %2458 = vmatpush.msra.mxu0 0.0
        %2459 = vmatpush.msra.mxu0 0.0
        %2460 = vmatpush.msra.mxu0 0.0
        %2461 = vmatpush.msra.mxu0 0.0
        %2462 = vmatpush.msra.mxu0 0.0
        %2463 = vmatpush.msra.mxu0 0.0
        %v2464 = vand.u32 %v1480, 4294901760
        %2465 = vmatpush.msra.mxu0 %v2464
        %v2466 = vand.u32 %v2447, 4294901760
        %v2467 = vsub.f32 %v2447, %v2466
        %v2468 = vand.u32 %v2467, 4294901760
        %v2469 = vsub.f32 %v2467, %v2468
        %v2470 = vand.u32 %v2469, 4294901760
        %2471 = vmatmul.f32.gmra.mxu0 %v2470
        %v2472 = vpop.f32.mrf.mxu0
        %v2473 = vadd.f32 0.0, %v2472
        %2474 = vdwg.mxu0
        %2475 = vmatpush.msra.mxu0 0.0
        %2476 = vmatpush.msra.mxu0 0.0
        %2477 = vmatpush.msra.mxu0 0.0
        %2478 = vmatpush.msra.mxu0 0.0
        %2479 = vmatpush.msra.mxu0 0.0
        %2480 = vmatpush.msra.mxu0 0.0
        %2481 = vmatpush.msra.mxu0 0.0
        %2482 = vmatpush.msra.mxu0 0.0
        %2483 = vmatpush.msra.mxu0 0.0
        %2484 = vmatpush.msra.mxu0 0.0
        %2485 = vmatpush.msra.mxu0 0.0
        %2486 = vmatpush.msra.mxu0 0.0
        %2487 = vmatpush.msra.mxu0 0.0
        %2488 = vmatpush.msra.mxu0 0.0
        %2489 = vmatpush.msra.mxu0 0.0
        %v2490 = vand.u32 %v1480, 4294901760
        %v2491 = vsub.f32 %v1480, %v2490
        %v2492 = vand.u32 %v2491, 4294901760
        %v2493 = vsub.f32 %v2491, %v2492
        %v2494 = vand.u32 %v2493, 4294901760
        %2495 = vmatpush.msra.mxu0 %v2494
        %v2496 = vand.u32 %v2447, 4294901760
        %2497 = vmatmul.f32.gmra.mxu0 %v2496
        %v2498 = vpop.f32.mrf.mxu0
        %v2499 = vadd.f32 %v2473, %v2498
        %2500 = vdwg.mxu0
        %2501 = vmatpush.msra.mxu0 0.0
        %2502 = vmatpush.msra.mxu0 0.0
        %2503 = vmatpush.msra.mxu0 0.0
        %2504 = vmatpush.msra.mxu0 0.0
        %2505 = vmatpush.msra.mxu0 0.0
        %2506 = vmatpush.msra.mxu0 0.0
        %2507 = vmatpush.msra.mxu0 0.0
        %2508 = vmatpush.msra.mxu0 0.0
        %2509 = vmatpush.msra.mxu0 0.0
        %2510 = vmatpush.msra.mxu0 0.0
        %2511 = vmatpush.msra.mxu0 0.0
        %2512 = vmatpush.msra.mxu0 0.0
        %2513 = vmatpush.msra.mxu0 0.0
        %2514 = vmatpush.msra.mxu0 0.0
        %2515 = vmatpush.msra.mxu0 0.0
        %v2516 = vand.u32 %v1480, 4294901760
        %v2517 = vsub.f32 %v1480, %v2516
        %2518 = vmatpush.msra.mxu0 %v2517
        %v2519 = vand.u32 %v2447, 4294901760
        %v2520 = vsub.f32 %v2447, %v2519
        %2521 = vmatmul.f32.gmra.mxu0 %v2520
        %v2522 = vpop.f32.mrf.mxu0
        %v2523 = vadd.f32 %v2499, %v2522
        %2524 = vdwg.mxu0
        %2525 = vmatpush.msra.mxu0 0.0
        %2526 = vmatpush.msra.mxu0 0.0
        %2527 = vmatpush.msra.mxu0 0.0
        %2528 = vmatpush.msra.mxu0 0.0
        %2529 = vmatpush.msra.mxu0 0.0
        %2530 = vmatpush.msra.mxu0 0.0
        %2531 = vmatpush.msra.mxu0 0.0
        %2532 = vmatpush.msra.mxu0 0.0
        %2533 = vmatpush.msra.mxu0 0.0
        %2534 = vmatpush.msra.mxu0 0.0
        %2535 = vmatpush.msra.mxu0 0.0
        %2536 = vmatpush.msra.mxu0 0.0
        %2537 = vmatpush.msra.mxu0 0.0
        %2538 = vmatpush.msra.mxu0 0.0
        %2539 = vmatpush.msra.mxu0 0.0
        %v2540 = vand.u32 %v1480, 4294901760
        %2541 = vmatpush.msra.mxu0 %v2540
        %v2542 = vand.u32 %v2447, 4294901760
        %v2543 = vsub.f32 %v2447, %v2542
        %v2544 = vand.u32 %v2543, 4294901760
        %2545 = vmatmul.f32.gmra.mxu0 %v2544
        %v2546 = vpop.f32.mrf.mxu0
        %v2547 = vadd.f32 %v2523, %v2546
        %2548 = vdwg.mxu0
        %2549 = vmatpush.msra.mxu0 0.0
        %2550 = vmatpush.msra.mxu0 0.0
        %2551 = vmatpush.msra.mxu0 0.0
        %2552 = vmatpush.msra.mxu0 0.0
        %2553 = vmatpush.msra.mxu0 0.0
        %2554 = vmatpush.msra.mxu0 0.0
        %2555 = vmatpush.msra.mxu0 0.0
        %2556 = vmatpush.msra.mxu0 0.0
        %2557 = vmatpush.msra.mxu0 0.0
        %2558 = vmatpush.msra.mxu0 0.0
        %2559 = vmatpush.msra.mxu0 0.0
        %2560 = vmatpush.msra.mxu0 0.0
        %2561 = vmatpush.msra.mxu0 0.0
        %2562 = vmatpush.msra.mxu0 0.0
        %2563 = vmatpush.msra.mxu0 0.0
        %v2564 = vand.u32 %v1480, 4294901760
        %v2565 = vsub.f32 %v1480, %v2564
        %v2566 = vand.u32 %v2565, 4294901760
        %2567 = vmatpush.msra.mxu0 %v2566
        %v2568 = vand.u32 %v2447, 4294901760
        %2569 = vmatmul.f32.gmra.mxu0 %v2568
        %v2570 = vpop.f32.mrf.mxu0
        %v2571 = vadd.f32 %v2547, %v2570
        %2572 = vdwg.mxu0
        %2573 = vmatpush.msra.mxu0 0.0
        %2574 = vmatpush.msra.mxu0 0.0
        %2575 = vmatpush.msra.mxu0 0.0
        %2576 = vmatpush.msra.mxu0 0.0
        %2577 = vmatpush.msra.mxu0 0.0
        %2578 = vmatpush.msra.mxu0 0.0
        %2579 = vmatpush.msra.mxu0 0.0
        %2580 = vmatpush.msra.mxu0 0.0
        %2581 = vmatpush.msra.mxu0 0.0
        %2582 = vmatpush.msra.mxu0 0.0
        %2583 = vmatpush.msra.mxu0 0.0
        %2584 = vmatpush.msra.mxu0 0.0
        %2585 = vmatpush.msra.mxu0 0.0
        %2586 = vmatpush.msra.mxu0 0.0
        %2587 = vmatpush.msra.mxu0 0.0
        %v2588 = vand.u32 %v1480, 4294901760
        %2589 = vmatpush.msra.mxu0 %v2588
        %v2590 = vand.u32 %v2447, 4294901760
        %2591 = vmatmul.f32.gmra.mxu0 %v2590
        %v2592 = vpop.f32.mrf.mxu0
        %v2593 = vadd.f32 %v2571, %v2592
        %2594 = vdwg.mxu0
        %v2596 = vsel %vm1483, %v2147, 0
        %2598 = vmatpush.msra.mxu0 0.0
        %2599 = vmatpush.msra.mxu0 0.0
        %2600 = vmatpush.msra.mxu0 0.0
        %2601 = vmatpush.msra.mxu0 0.0
        %2602 = vmatpush.msra.mxu0 0.0
        %2603 = vmatpush.msra.mxu0 0.0
        %2604 = vmatpush.msra.mxu0 0.0
        %2605 = vmatpush.msra.mxu0 0.0
        %2606 = vmatpush.msra.mxu0 0.0
        %2607 = vmatpush.msra.mxu0 0.0
        %2608 = vmatpush.msra.mxu0 0.0
        %2609 = vmatpush.msra.mxu0 0.0
        %2610 = vmatpush.msra.mxu0 0.0
        %2611 = vmatpush.msra.mxu0 0.0
        %2612 = vmatpush.msra.mxu0 0.0
        %v2613 = vand.u32 %v1482, 4294901760
        %2614 = vmatpush.msra.mxu0 %v2613
        %v2615 = vand.u32 %v2596, 4294901760
        %v2616 = vsub.f32 %v2596, %v2615
        %v2617 = vand.u32 %v2616, 4294901760
        %v2618 = vsub.f32 %v2616, %v2617
        %v2619 = vand.u32 %v2618, 4294901760
        %2620 = vmatmul.f32.gmra.mxu0 %v2619
        %v2621 = vpop.f32.mrf.mxu0
        %v2622 = vadd.f32 0.0, %v2621
        %2623 = vdwg.mxu0
        %2624 = vmatpush.msra.mxu0 0.0
        %2625 = vmatpush.msra.mxu0 0.0
        %2626 = vmatpush.msra.mxu0 0.0
        %2627 = vmatpush.msra.mxu0 0.0
        %2628 = vmatpush.msra.mxu0 0.0
        %2629 = vmatpush.msra.mxu0 0.0
        %2630 = vmatpush.msra.mxu0 0.0
        %2631 = vmatpush.msra.mxu0 0.0
        %2632 = vmatpush.msra.mxu0 0.0
        %2633 = vmatpush.msra.mxu0 0.0
        %2634 = vmatpush.msra.mxu0 0.0
        %2635 = vmatpush.msra.mxu0 0.0
        %2636 = vmatpush.msra.mxu0 0.0
        %2637 = vmatpush.msra.mxu0 0.0
        %2638 = vmatpush.msra.mxu0 0.0
        %v2639 = vand.u32 %v1482, 4294901760
        %v2640 = vsub.f32 %v1482, %v2639
        %v2641 = vand.u32 %v2640, 4294901760
        %v2642 = vsub.f32 %v2640, %v2641
        %v2643 = vand.u32 %v2642, 4294901760
        %2644 = vmatpush.msra.mxu0 %v2643
        %v2645 = vand.u32 %v2596, 4294901760
        %2646 = vmatmul.f32.gmra.mxu0 %v2645
        %v2647 = vpop.f32.mrf.mxu0
        %v2648 = vadd.f32 %v2622, %v2647
        %2649 = vdwg.mxu0
        %2650 = vmatpush.msra.mxu0 0.0
        %2651 = vmatpush.msra.mxu0 0.0
        %2652 = vmatpush.msra.mxu0 0.0
        %2653 = vmatpush.msra.mxu0 0.0
        %2654 = vmatpush.msra.mxu0 0.0
        %2655 = vmatpush.msra.mxu0 0.0
        %2656 = vmatpush.msra.mxu0 0.0
        %2657 = vmatpush.msra.mxu0 0.0
        %2658 = vmatpush.msra.mxu0 0.0
        %2659 = vmatpush.msra.mxu0 0.0
        %2660 = vmatpush.msra.mxu0 0.0
        %2661 = vmatpush.msra.mxu0 0.0
        %2662 = vmatpush.msra.mxu0 0.0
        %2663 = vmatpush.msra.mxu0 0.0
        %2664 = vmatpush.msra.mxu0 0.0
        %v2665 = vand.u32 %v1482, 4294901760
        %v2666 = vsub.f32 %v1482, %v2665
        %2667 = vmatpush.msra.mxu0 %v2666
        %v2668 = vand.u32 %v2596, 4294901760
        %v2669 = vsub.f32 %v2596, %v2668
        %2670 = vmatmul.f32.gmra.mxu0 %v2669
        %v2671 = vpop.f32.mrf.mxu0
        %v2672 = vadd.f32 %v2648, %v2671
        %2673 = vdwg.mxu0
        %2674 = vmatpush.msra.mxu0 0.0
        %2675 = vmatpush.msra.mxu0 0.0
        %2676 = vmatpush.msra.mxu0 0.0
        %2677 = vmatpush.msra.mxu0 0.0
        %2678 = vmatpush.msra.mxu0 0.0
        %2679 = vmatpush.msra.mxu0 0.0
        %2680 = vmatpush.msra.mxu0 0.0
        %2681 = vmatpush.msra.mxu0 0.0
        %2682 = vmatpush.msra.mxu0 0.0
        %2683 = vmatpush.msra.mxu0 0.0
        %2684 = vmatpush.msra.mxu0 0.0
        %2685 = vmatpush.msra.mxu0 0.0
        %2686 = vmatpush.msra.mxu0 0.0
        %2687 = vmatpush.msra.mxu0 0.0
        %2688 = vmatpush.msra.mxu0 0.0
        %v2689 = vand.u32 %v1482, 4294901760
        %2690 = vmatpush.msra.mxu0 %v2689
        %v2691 = vand.u32 %v2596, 4294901760
        %v2692 = vsub.f32 %v2596, %v2691
        %v2693 = vand.u32 %v2692, 4294901760
        %2694 = vmatmul.f32.gmra.mxu0 %v2693
        %v2695 = vpop.f32.mrf.mxu0
        %v2696 = vadd.f32 %v2672, %v2695
        %2697 = vdwg.mxu0
        %2698 = vmatpush.msra.mxu0 0.0
        %2699 = vmatpush.msra.mxu0 0.0
        %2700 = vmatpush.msra.mxu0 0.0
        %2701 = vmatpush.msra.mxu0 0.0
        %2702 = vmatpush.msra.mxu0 0.0
        %2703 = vmatpush.msra.mxu0 0.0
        %2704 = vmatpush.msra.mxu0 0.0
        %2705 = vmatpush.msra.mxu0 0.0
        %2706 = vmatpush.msra.mxu0 0.0
        %2707 = vmatpush.msra.mxu0 0.0
        %2708 = vmatpush.msra.mxu0 0.0
        %2709 = vmatpush.msra.mxu0 0.0
        %2710 = vmatpush.msra.mxu0 0.0
        %2711 = vmatpush.msra.mxu0 0.0
        %2712 = vmatpush.msra.mxu0 0.0
        %v2713 = vand.u32 %v1482, 4294901760
        %v2714 = vsub.f32 %v1482, %v2713
        %v2715 = vand.u32 %v2714, 4294901760
        %2716 = vmatpush.msra.mxu0 %v2715
        %v2717 = vand.u32 %v2596, 4294901760
        %2718 = vmatmul.f32.gmra.mxu0 %v2717
        %v2719 = vpop.f32.mrf.mxu0
        %v2720 = vadd.f32 %v2696, %v2719
        %2721 = vdwg.mxu0
        %2722 = vmatpush.msra.mxu0 0.0
        %2723 = vmatpush.msra.mxu0 0.0
        %2724 = vmatpush.msra.mxu0 0.0
        %2725 = vmatpush.msra.mxu0 0.0
        %2726 = vmatpush.msra.mxu0 0.0
        %2727 = vmatpush.msra.mxu0 0.0
        %2728 = vmatpush.msra.mxu0 0.0
        %2729 = vmatpush.msra.mxu0 0.0
        %2730 = vmatpush.msra.mxu0 0.0
        %2731 = vmatpush.msra.mxu0 0.0
        %2732 = vmatpush.msra.mxu0 0.0
        %2733 = vmatpush.msra.mxu0 0.0
        %2734 = vmatpush.msra.mxu0 0.0
        %2735 = vmatpush.msra.mxu0 0.0
        %2736 = vmatpush.msra.mxu0 0.0
        %v2737 = vand.u32 %v1482, 4294901760
        %2738 = vmatpush.msra.mxu0 %v2737
        %v2739 = vand.u32 %v2596, 4294901760
        %2740 = vmatmul.f32.gmra.mxu0 %v2739
        %v2741 = vpop.f32.mrf.mxu0
        %v2742 = vadd.f32 %v2720, %v2741
        %2743 = vdwg.mxu0
        %v2744 = vrot.slane %v2593, 4
        %v2745 = vsel %vm1122, %v2744, %v2295
        %v2746 = vrot.slane %v2295, 4
        %v2747 = vsel %vm1122, %v2593, %v2746
        %v2749 = vunpack.c.l.s4 1983009808
        %v2750 = vunpack.c.0.s8 %v2749
        %v2751 = vperm.slane %v2745, %v2750
        %v2753 = vunpack.c.l.s4 1983009808
        %v2754 = vunpack.c.0.s8 %v2753
        %v2755 = vperm.slane %v2747, %v2754
        %v2756 = vrot.slane %v2742, 4
        %v2757 = vsel %vm1122, %v2756, %v2444
        %v2758 = vrot.slane %v2444, 4
        %v2759 = vsel %vm1122, %v2742, %v2758
        %v2761 = vunpack.c.l.s4 1983009808
        %v2762 = vunpack.c.0.s8 %v2761
        %v2763 = vperm.slane %v2757, %v2762
        %v2765 = vunpack.c.l.s4 1983009808
        %v2766 = vunpack.c.0.s8 %v2765
        %v2767 = vperm.slane %v2759, %v2766
        %v2768 = vrot.slane %v2763, 4
        %v2769 = vsel %vm1122, %v2768, %v2751
        %v2770 = vrot.slane %v2751, 4
        %v2771 = vsel %vm1122, %v2763, %v2770
        %v2773 = vunpack.c.l.s4 1934713408
        %v2774 = vunpack.c.0.s8 %v2773
        %v2775 = vperm.slane %v2769, %v2774
        %v2777 = vunpack.c.l.s4 1934713408
        %v2778 = vunpack.c.0.s8 %v2777
        %v2779 = vperm.slane %v2771, %v2778
        %v2780 = vrot.slane %v2767, 4
        %v2781 = vsel %vm1122, %v2780, %v2755
        %v2782 = vrot.slane %v2755, 4
        %v2783 = vsel %vm1122, %v2767, %v2782
        %v2785 = vunpack.c.l.s4 1934713408
        %v2786 = vunpack.c.0.s8 %v2785
        %v2787 = vperm.slane %v2781, %v2786
        %v2789 = vunpack.c.l.s4 1934713408
        %v2790 = vunpack.c.0.s8 %v2789
        %v2791 = vperm.slane %v2783, %v2790
        %v2792 = vrot.slane %v2775, 4
        %v2793 = vsel %vm1122, 0.0, %v2792
        %v2794 = vrot.slane %v2779, 4
        %v2795 = vsel %vm1122, 0.0, %v2794
        %v2796 = vrot.slane %v2787, 4
        %v2797 = vsel %vm1122, 0.0, %v2796
        %v2798 = vrot.slane %v2791, 4
        %v2799 = vsel %vm1122, 0.0, %v2798
        %v2800 = vsel %vm1122, %v2794, %v2775
        %v2802 = vunpack.c.l.s4 1983009808
        %v2803 = vunpack.c.0.s8 %v2802
        %v2804 = vperm.slane %v2800, %v2803
        %v2805 = vrot.slane %v2795, 4
        %v2806 = vsel %vm1122, %v2805, %v2793
        %v2808 = vunpack.c.l.s4 1983009808
        %v2809 = vunpack.c.0.s8 %v2808
        %v2810 = vperm.slane %v2806, %v2809
        %v2811 = vsel %vm1122, %v2798, %v2787
        %v2813 = vunpack.c.l.s4 1983009808
        %v2814 = vunpack.c.0.s8 %v2813
        %v2815 = vperm.slane %v2811, %v2814
        %v2816 = vrot.slane %v2799, 4
        %v2817 = vsel %vm1122, %v2816, %v2797
        %v2819 = vunpack.c.l.s4 1983009808
        %v2820 = vunpack.c.0.s8 %v2819
        %v2821 = vperm.slane %v2817, %v2820
        %v2822 = vrot.slane %v2810, 4
        %v2823 = vsel %vm1122, %v2822, %v2804
        %v2824 = vrot.slane %v2804, 4
        %v2825 = vsel %vm1122, %v2810, %v2824
        %v2827 = vunpack.c.l.s4 1934713408
        %v2828 = vunpack.c.0.s8 %v2827
        %v2829 = vperm.slane %v2823, %v2828
        %v2831 = vunpack.c.l.s4 1934713408
        %v2832 = vunpack.c.0.s8 %v2831
        %v2833 = vperm.slane %v2825, %v2832
        %v2834 = vrot.slane %v2821, 4
        %v2835 = vsel %vm1122, %v2834, %v2815
        %v2836 = vrot.slane %v2815, 4
        %v2837 = vsel %vm1122, %v2821, %v2836
        %v2839 = vunpack.c.l.s4 1934713408
        %v2840 = vunpack.c.0.s8 %v2839
        %v2841 = vperm.slane %v2835, %v2840
        %v2843 = vunpack.c.l.s4 1934713408
        %v2844 = vunpack.c.0.s8 %v2843
        %v2845 = vperm.slane %v2837, %v2844
        %v2846 = vrot.slane %v2841, 4
        %v2847 = vsel %vm1122, %v2846, %v2829
        %v2848 = vrot.slane %v2829, 4
        %v2849 = vsel %vm1122, %v2841, %v2848
        %v2850 = vrot.slane %v2845, 4
        %v2851 = vsel %vm1122, %v2850, %v2833
        %v2852 = vrot.slane %v2833, 4
        %v2853 = vsel %vm1122, %v2845, %v2852
        %2855 = vrot.lane.b32.xlu0 %v2849, 8
        %v2856 = vpop.permute.xlu0 %2855
        %2859 = vrot.lane.b32.xlu0 %v2851, 16
        %v2860 = vpop.permute.xlu0 %2859
        %2863 = vrot.lane.b32.xlu0 %v2853, 24
        %v2864 = vpop.permute.xlu0 %2863
        %v2866 = vsel %vm1483, %v2847, %v2856
        %vm2867 = vcmask 130048
        %v2868 = vsel %vm2867, %v2866, %v2860
        %vm2869 = vcmask 195584
        %v2870 = vsel %vm2869, %v2868, %v2864
        %v2871 = vld [vmem:[#allocation8] sm:$0xff]
        %v2872 = vld [vmem:[#allocation8 + $0x8] sm:$0xff]
        %v2873 = vld [vmem:[#allocation8 + $0x10] sm:$0xff]
        %v2874 = vld [vmem:[#allocation8 + $0x18] sm:$0xff]
        %v2875 = vld [vmem:[%s7] sm:$0x1]
        %v2877 = vperm.slane %v2875, 0
        %v2880 = vsel %vm920, %v2870, 0
        %2882 = vmatpush.msra.mxu0 0.0
        %2883 = vmatpush.msra.mxu0 0.0
        %2884 = vmatpush.msra.mxu0 0.0
        %2885 = vmatpush.msra.mxu0 0.0
        %2886 = vmatpush.msra.mxu0 0.0
        %2887 = vmatpush.msra.mxu0 0.0
        %2888 = vmatpush.msra.mxu0 0.0
        %2889 = vmatpush.msra.mxu0 0.0
        %2890 = vmatpush.msra.mxu0 0.0
        %2891 = vmatpush.msra.mxu0 0.0
        %2892 = vmatpush.msra.mxu0 0.0
        %2893 = vmatpush.msra.mxu0 0.0
        %v2894 = vand.u32 %v2874, 4294901760
        %2895 = vmatpush.msra.mxu0 %v2894
        %v2896 = vand.u32 %v2873, 4294901760
        %2897 = vmatpush.msra.mxu0 %v2896
        %v2898 = vand.u32 %v2872, 4294901760
        %2899 = vmatpush.msra.mxu0 %v2898
        %v2900 = vand.u32 %v2871, 4294901760
        %2901 = vmatpush.msra.mxu0 %v2900
        %v2902 = vand.u32 %v2880, 4294901760
        %v2903 = vsub.f32 %v2880, %v2902
        %v2904 = vand.u32 %v2903, 4294901760
        %v2905 = vsub.f32 %v2903, %v2904
        %v2906 = vand.u32 %v2905, 4294901760
        %2907 = vmatmul.f32.gmra.mxu0 %v2906
        %v2908 = vpop.f32.mrf.mxu0
        %v2909 = vadd.f32 %v2877, %v2908
        %2910 = vdwg.mxu0
        %2911 = vmatpush.msra.mxu0 0.0
        %2912 = vmatpush.msra.mxu0 0.0
        %2913 = vmatpush.msra.mxu0 0.0
        %2914 = vmatpush.msra.mxu0 0.0
        %2915 = vmatpush.msra.mxu0 0.0
        %2916 = vmatpush.msra.mxu0 0.0
        %2917 = vmatpush.msra.mxu0 0.0
        %2918 = vmatpush.msra.mxu0 0.0
        %2919 = vmatpush.msra.mxu0 0.0
        %2920 = vmatpush.msra.mxu0 0.0
        %2921 = vmatpush.msra.mxu0 0.0
        %2922 = vmatpush.msra.mxu0 0.0
        %v2923 = vand.u32 %v2874, 4294901760
        %v2924 = vsub.f32 %v2874, %v2923
        %v2925 = vand.u32 %v2924, 4294901760
        %v2926 = vsub.f32 %v2924, %v2925
        %v2927 = vand.u32 %v2926, 4294901760
        %2928 = vmatpush.msra.mxu0 %v2927
        %v2929 = vand.u32 %v2873, 4294901760
        %v2930 = vsub.f32 %v2873, %v2929
        %v2931 = vand.u32 %v2930, 4294901760
        %v2932 = vsub.f32 %v2930, %v2931
        %v2933 = vand.u32 %v2932, 4294901760
        %2934 = vmatpush.msra.mxu0 %v2933
        %v2935 = vand.u32 %v2872, 4294901760
        %v2936 = vsub.f32 %v2872, %v2935
        %v2937 = vand.u32 %v2936, 4294901760
        %v2938 = vsub.f32 %v2936, %v2937
        %v2939 = vand.u32 %v2938, 4294901760
        %2940 = vmatpush.msra.mxu0 %v2939
        %v2941 = vand.u32 %v2871, 4294901760
        %v2942 = vsub.f32 %v2871, %v2941
        %v2943 = vand.u32 %v2942, 4294901760
        %v2944 = vsub.f32 %v2942, %v2943
        %v2945 = vand.u32 %v2944, 4294901760
        %2946 = vmatpush.msra.mxu0 %v2945
        %v2947 = vand.u32 %v2880, 4294901760
        %2948 = vmatmul.f32.gmra.mxu0 %v2947
        %v2949 = vpop.f32.mrf.mxu0
        %v2950 = vadd.f32 %v2909, %v2949
        %2951 = vdwg.mxu0
        %2952 = vmatpush.msra.mxu0 0.0
        %2953 = vmatpush.msra.mxu0 0.0
        %2954 = vmatpush.msra.mxu0 0.0
        %2955 = vmatpush.msra.mxu0 0.0
        %2956 = vmatpush.msra.mxu0 0.0
        %2957 = vmatpush.msra.mxu0 0.0
        %2958 = vmatpush.msra.mxu0 0.0
        %2959 = vmatpush.msra.mxu0 0.0
        %2960 = vmatpush.msra.mxu0 0.0
        %2961 = vmatpush.msra.mxu0 0.0
        %2962 = vmatpush.msra.mxu0 0.0
        %2963 = vmatpush.msra.mxu0 0.0
        %v2964 = vand.u32 %v2874, 4294901760
        %v2965 = vsub.f32 %v2874, %v2964
        %2966 = vmatpush.msra.mxu0 %v2965
        %v2967 = vand.u32 %v2873, 4294901760
        %v2968 = vsub.f32 %v2873, %v2967
        %2969 = vmatpush.msra.mxu0 %v2968
        %v2970 = vand.u32 %v2872, 4294901760
        %v2971 = vsub.f32 %v2872, %v2970
        %2972 = vmatpush.msra.mxu0 %v2971
        %v2973 = vand.u32 %v2871, 4294901760
        %v2974 = vsub.f32 %v2871, %v2973
        %2975 = vmatpush.msra.mxu0 %v2974
        %v2976 = vand.u32 %v2880, 4294901760
        %v2977 = vsub.f32 %v2880, %v2976
        %2978 = vmatmul.f32.gmra.mxu0 %v2977
        %v2979 = vpop.f32.mrf.mxu0
        %v2980 = vadd.f32 %v2950, %v2979
        %2981 = vdwg.mxu0
        %2982 = vmatpush.msra.mxu0 0.0
        %2983 = vmatpush.msra.mxu0 0.0
        %2984 = vmatpush.msra.mxu0 0.0
        %2985 = vmatpush.msra.mxu0 0.0
        %2986 = vmatpush.msra.mxu0 0.0
        %2987 = vmatpush.msra.mxu0 0.0
        %2988 = vmatpush.msra.mxu0 0.0
        %2989 = vmatpush.msra.mxu0 0.0
        %2990 = vmatpush.msra.mxu0 0.0
        %2991 = vmatpush.msra.mxu0 0.0
        %2992 = vmatpush.msra.mxu0 0.0
        %2993 = vmatpush.msra.mxu0 0.0
        %v2994 = vand.u32 %v2874, 4294901760
        %2995 = vmatpush.msra.mxu0 %v2994
        %v2996 = vand.u32 %v2873, 4294901760
        %2997 = vmatpush.msra.mxu0 %v2996
        %v2998 = vand.u32 %v2872, 4294901760
        %2999 = vmatpush.msra.mxu0 %v2998
        %v3000 = vand.u32 %v2871, 4294901760
        %3001 = vmatpush.msra.mxu0 %v3000
        %v3002 = vand.u32 %v2880, 4294901760
        %v3003 = vsub.f32 %v2880, %v3002
        %v3004 = vand.u32 %v3003, 4294901760
        %3005 = vmatmul.f32.gmra.mxu0 %v3004
        %v3006 = vpop.f32.mrf.mxu0
        %v3007 = vadd.f32 %v2980, %v3006
        %3008 = vdwg.mxu0
        %3009 = vmatpush.msra.mxu0 0.0
        %3010 = vmatpush.msra.mxu0 0.0
        %3011 = vmatpush.msra.mxu0 0.0
        %3012 = vmatpush.msra.mxu0 0.0
        %3013 = vmatpush.msra.mxu0 0.0
        %3014 = vmatpush.msra.mxu0 0.0
        %3015 = vmatpush.msra.mxu0 0.0
        %3016 = vmatpush.msra.mxu0 0.0
        %3017 = vmatpush.msra.mxu0 0.0
        %3018 = vmatpush.msra.mxu0 0.0
        %3019 = vmatpush.msra.mxu0 0.0
        %3020 = vmatpush.msra.mxu0 0.0
        %v3021 = vand.u32 %v2874, 4294901760
        %v3022 = vsub.f32 %v2874, %v3021
        %v3023 = vand.u32 %v3022, 4294901760
        %3024 = vmatpush.msra.mxu0 %v3023
        %v3025 = vand.u32 %v2873, 4294901760
        %v3026 = vsub.f32 %v2873, %v3025
        %v3027 = vand.u32 %v3026, 4294901760
        %3028 = vmatpush.msra.mxu0 %v3027
        %v3029 = vand.u32 %v2872, 4294901760
        %v3030 = vsub.f32 %v2872, %v3029
        %v3031 = vand.u32 %v3030, 4294901760
        %3032 = vmatpush.msra.mxu0 %v3031
        %v3033 = vand.u32 %v2871, 4294901760
        %v3034 = vsub.f32 %v2871, %v3033
        %v3035 = vand.u32 %v3034, 4294901760
        %3036 = vmatpush.msra.mxu0 %v3035
        %v3037 = vand.u32 %v2880, 4294901760
        %3038 = vmatmul.f32.gmra.mxu0 %v3037
        %v3039 = vpop.f32.mrf.mxu0
        %v3040 = vadd.f32 %v3007, %v3039
        %3041 = vdwg.mxu0
        %3042 = vmatpush.msra.mxu0 0.0
        %3043 = vmatpush.msra.mxu0 0.0
        %3044 = vmatpush.msra.mxu0 0.0
        %3045 = vmatpush.msra.mxu0 0.0
        %3046 = vmatpush.msra.mxu0 0.0
        %3047 = vmatpush.msra.mxu0 0.0
        %3048 = vmatpush.msra.mxu0 0.0
        %3049 = vmatpush.msra.mxu0 0.0
        %3050 = vmatpush.msra.mxu0 0.0
        %3051 = vmatpush.msra.mxu0 0.0
        %3052 = vmatpush.msra.mxu0 0.0
        %3053 = vmatpush.msra.mxu0 0.0
        %v3054 = vand.u32 %v2874, 4294901760
        %3055 = vmatpush.msra.mxu0 %v3054
        %v3056 = vand.u32 %v2873, 4294901760
        %3057 = vmatpush.msra.mxu0 %v3056
        %v3058 = vand.u32 %v2872, 4294901760
        %3059 = vmatpush.msra.mxu0 %v3058
        %v3060 = vand.u32 %v2871, 4294901760
        %3061 = vmatpush.msra.mxu0 %v3060
        %v3062 = vand.u32 %v2880, 4294901760
        %3063 = vmatmul.f32.gmra.mxu0 %v3062
        %v3064 = vpop.f32.mrf.mxu0
        %v3065 = vadd.f32 %v3040, %v3064
        %3066 = vdwg.mxu0
        %v3067 = vadd.f32 %v909, %v3065
        %v3068 = vsel %vm920, %v3067, 0.0
        %3069 = vadd.xlane.f32.xlu0 %v3068
        %v3070 = vpop.xlane.xlu0 %3069
        %v3071 = vrcp.pop 32.0
        %v3072 = vmul.f32 32.0, %v3071
        %v3073 = vsub.f32 1.0, %v3072
        %v3074 = vmul.f32 %v3071, %v3073
        %v3075 = vadd.f32 %v3071, %v3074
        %vm3076 = vweird.f32 %v3071
        %v3077 = vsel %vm3076, %v3071, %v3075
        %v3078 = vmul.f32 %v3070, %v3077
        %v3079 = vsub.f32 %v3067, %v3078
        %v3080 = vmul.f32 %v3079, %v3079
        %v3081 = vsel %vm920, %v3080, 0.0
        %3082 = vadd.xlane.f32.xlu0 %v3081
        %v3083 = vpop.xlane.xlu0 %3082
        %v3084 = vmul.f32 %v3083, %v3077
        %v3085 = vadd.f32 %v3084, 1e-05
        %v3086 = vrsqrt.pop %v3085
        %v3087 = vmul.f32 %v3086, %v3085
        %v3088 = vmul.f32 %v3087, %v3086
        %v3089 = vmul.f32 0.5, %v3088
        %v3090 = vsub.f32 1.5, %v3089
        %v3091 = vmul.f32 %v3086, %v3090
        %vm3092 = vweird.f32 %v3085
        %vm3093 = vweird.f32 %v3086
        %vm3094 = vmor %vm3092, %vm3093
        %v3095 = vsel %vm3094, %v3086, %v3091
        %v3096 = vmul.f32 %v3079, %v3095
        %v3097 = vld [vmem:[%s14] sm:$0x1]
        %v3099 = vperm.slane %v3097, 0
        %v3101 = vmul.f32 %v3096, %v3099
        %v3102 = vld [vmem:[%s15] sm:$0x1]
        %v3104 = vperm.slane %v3102, 0
        %v3106 = vadd.f32 %v3101, %v3104
        %v3107 = vld [vmem:[#allocation10] sm:$0xff]
        %v3108 = vld [vmem:[#allocation10 + $0x8] sm:$0xff]
        %v3109 = vld [vmem:[#allocation10 + $0x10] sm:$0xff]
        %v3110 = vld [vmem:[#allocation10 + $0x18] sm:$0xff]
        %v3111 = vld [vmem:[%s9] sm:$0x1]
        %v3113 = vperm.slane %v3111, 0
        %v3116 = vsel %vm920, %v3106, 0
        %3118 = vmatpush.msra.mxu0 0.0
        %3119 = vmatpush.msra.mxu0 0.0
        %3120 = vmatpush.msra.mxu0 0.0
        %3121 = vmatpush.msra.mxu0 0.0
        %3122 = vmatpush.msra.mxu0 0.0
        %3123 = vmatpush.msra.mxu0 0.0
        %3124 = vmatpush.msra.mxu0 0.0
        %3125 = vmatpush.msra.mxu0 0.0
        %3126 = vmatpush.msra.mxu0 0.0
        %3127 = vmatpush.msra.mxu0 0.0
        %3128 = vmatpush.msra.mxu0 0.0
        %3129 = vmatpush.msra.mxu0 0.0
        %v3130 = vand.u32 %v3110, 4294901760
        %3131 = vmatpush.msra.mxu0 %v3130
        %v3132 = vand.u32 %v3109, 4294901760
        %3133 = vmatpush.msra.mxu0 %v3132
        %v3134 = vand.u32 %v3108, 4294901760
        %3135 = vmatpush.msra.mxu0 %v3134
        %v3136 = vand.u32 %v3107, 4294901760
        %3137 = vmatpush.msra.mxu0 %v3136
        %v3138 = vand.u32 %v3116, 4294901760
        %v3139 = vsub.f32 %v3116, %v3138
        %v3140 = vand.u32 %v3139, 4294901760
        %v3141 = vsub.f32 %v3139, %v3140
        %v3142 = vand.u32 %v3141, 4294901760
        %3143 = vmatmul.f32.gmra.mxu0 %v3142
        %v3144 = vpop.f32.mrf.mxu0
        %v3145 = vadd.f32 %v3113, %v3144
        %3146 = vdwg.mxu0
        %3147 = vmatpush.msra.mxu0 0.0
        %3148 = vmatpush.msra.mxu0 0.0
        %3149 = vmatpush.msra.mxu0 0.0
        %3150 = vmatpush.msra.mxu0 0.0
        %3151 = vmatpush.msra.mxu0 0.0
        %3152 = vmatpush.msra.mxu0 0.0
        %3153 = vmatpush.msra.mxu0 0.0
        %3154 = vmatpush.msra.mxu0 0.0
        %3155 = vmatpush.msra.mxu0 0.0
        %3156 = vmatpush.msra.mxu0 0.0
        %3157 = vmatpush.msra.mxu0 0.0
        %3158 = vmatpush.msra.mxu0 0.0
        %v3159 = vand.u32 %v3110, 4294901760
        %v3160 = vsub.f32 %v3110, %v3159
        %v3161 = vand.u32 %v3160, 4294901760
        %v3162 = vsub.f32 %v3160, %v3161
        %v3163 = vand.u32 %v3162, 4294901760
        %3164 = vmatpush.msra.mxu0 %v3163
        %v3165 = vand.u32 %v3109, 4294901760
        %v3166 = vsub.f32 %v3109, %v3165
        %v3167 = vand.u32 %v3166, 4294901760
        %v3168 = vsub.f32 %v3166, %v3167
        %v3169 = vand.u32 %v3168, 4294901760
        %3170 = vmatpush.msra.mxu0 %v3169
        %v3171 = vand.u32 %v3108, 4294901760
        %v3172 = vsub.f32 %v3108, %v3171
        %v3173 = vand.u32 %v3172, 4294901760
        %v3174 = vsub.f32 %v3172, %v3173
        %v3175 = vand.u32 %v3174, 4294901760
        %3176 = vmatpush.msra.mxu0 %v3175
        %v3177 = vand.u32 %v3107, 4294901760
        %v3178 = vsub.f32 %v3107, %v3177
        %v3179 = vand.u32 %v3178, 4294901760
        %v3180 = vsub.f32 %v3178, %v3179
        %v3181 = vand.u32 %v3180, 4294901760
        %3182 = vmatpush.msra.mxu0 %v3181
        %v3183 = vand.u32 %v3116, 4294901760
        %3184 = vmatmul.f32.gmra.mxu0 %v3183
        %v3185 = vpop.f32.mrf.mxu0
        %v3186 = vadd.f32 %v3145, %v3185
        %3187 = vdwg.mxu0
        %3188 = vmatpush.msra.mxu0 0.0
        %3189 = vmatpush.msra.mxu0 0.0
        %3190 = vmatpush.msra.mxu0 0.0
        %3191 = vmatpush.msra.mxu0 0.0
        %3192 = vmatpush.msra.mxu0 0.0
        %3193 = vmatpush.msra.mxu0 0.0
        %3194 = vmatpush.msra.mxu0 0.0
        %3195 = vmatpush.msra.mxu0 0.0
        %3196 = vmatpush.msra.mxu0 0.0
        %3197 = vmatpush.msra.mxu0 0.0
        %3198 = vmatpush.msra.mxu0 0.0
        %3199 = vmatpush.msra.mxu0 0.0
        %v3200 = vand.u32 %v3110, 4294901760
        %v3201 = vsub.f32 %v3110, %v3200
        %3202 = vmatpush.msra.mxu0 %v3201
        %v3203 = vand.u32 %v3109, 4294901760
        %v3204 = vsub.f32 %v3109, %v3203
        %3205 = vmatpush.msra.mxu0 %v3204
        %v3206 = vand.u32 %v3108, 4294901760
        %v3207 = vsub.f32 %v3108, %v3206
        %3208 = vmatpush.msra.mxu0 %v3207
        %v3209 = vand.u32 %v3107, 4294901760
        %v3210 = vsub.f32 %v3107, %v3209
        %3211 = vmatpush.msra.mxu0 %v3210
        %v3212 = vand.u32 %v3116, 4294901760
        %v3213 = vsub.f32 %v3116, %v3212
        %3214 = vmatmul.f32.gmra.mxu0 %v3213
        %v3215 = vpop.f32.mrf.mxu0
        %v3216 = vadd.f32 %v3186, %v3215
        %3217 = vdwg.mxu0
        %3218 = vmatpush.msra.mxu0 0.0
        %3219 = vmatpush.msra.mxu0 0.0
        %3220 = vmatpush.msra.mxu0 0.0
        %3221 = vmatpush.msra.mxu0 0.0
        %3222 = vmatpush.msra.mxu0 0.0
        %3223 = vmatpush.msra.mxu0 0.0
        %3224 = vmatpush.msra.mxu0 0.0
        %3225 = vmatpush.msra.mxu0 0.0
        %3226 = vmatpush.msra.mxu0 0.0
        %3227 = vmatpush.msra.mxu0 0.0
        %3228 = vmatpush.msra.mxu0 0.0
        %3229 = vmatpush.msra.mxu0 0.0
        %v3230 = vand.u32 %v3110, 4294901760
        %3231 = vmatpush.msra.mxu0 %v3230
        %v3232 = vand.u32 %v3109, 4294901760
        %3233 = vmatpush.msra.mxu0 %v3232
        %v3234 = vand.u32 %v3108, 4294901760
        %3235 = vmatpush.msra.mxu0 %v3234
        %v3236 = vand.u32 %v3107, 4294901760
        %3237 = vmatpush.msra.mxu0 %v3236
        %v3238 = vand.u32 %v3116, 4294901760
        %v3239 = vsub.f32 %v3116, %v3238
        %v3240 = vand.u32 %v3239, 4294901760
        %3241 = vmatmul.f32.gmra.mxu0 %v3240
        %v3242 = vpop.f32.mrf.mxu0
        %v3243 = vadd.f32 %v3216, %v3242
        %3244 = vdwg.mxu0
        %3245 = vmatpush.msra.mxu0 0.0
        %3246 = vmatpush.msra.mxu0 0.0
        %3247 = vmatpush.msra.mxu0 0.0
        %3248 = vmatpush.msra.mxu0 0.0
        %3249 = vmatpush.msra.mxu0 0.0
        %3250 = vmatpush.msra.mxu0 0.0
        %3251 = vmatpush.msra.mxu0 0.0
        %3252 = vmatpush.msra.mxu0 0.0
        %3253 = vmatpush.msra.mxu0 0.0
        %3254 = vmatpush.msra.mxu0 0.0
        %3255 = vmatpush.msra.mxu0 0.0
        %3256 = vmatpush.msra.mxu0 0.0
        %v3257 = vand.u32 %v3110, 4294901760
        %v3258 = vsub.f32 %v3110, %v3257
        %v3259 = vand.u32 %v3258, 4294901760
        %3260 = vmatpush.msra.mxu0 %v3259
        %v3261 = vand.u32 %v3109, 4294901760
        %v3262 = vsub.f32 %v3109, %v3261
        %v3263 = vand.u32 %v3262, 4294901760
        %3264 = vmatpush.msra.mxu0 %v3263
        %v3265 = vand.u32 %v3108, 4294901760
        %v3266 = vsub.f32 %v3108, %v3265
        %v3267 = vand.u32 %v3266, 4294901760
        %3268 = vmatpush.msra.mxu0 %v3267
        %v3269 = vand.u32 %v3107, 4294901760
        %v3270 = vsub.f32 %v3107, %v3269
        %v3271 = vand.u32 %v3270, 4294901760
        %3272 = vmatpush.msra.mxu0 %v3271
        %v3273 = vand.u32 %v3116, 4294901760
        %3274 = vmatmul.f32.gmra.mxu0 %v3273
        %v3275 = vpop.f32.mrf.mxu0
        %v3276 = vadd.f32 %v3243, %v3275
        %3277 = vdwg.mxu0
        %3278 = vmatpush.msra.mxu0 0.0
        %3279 = vmatpush.msra.mxu0 0.0
        %3280 = vmatpush.msra.mxu0 0.0
        %3281 = vmatpush.msra.mxu0 0.0
        %3282 = vmatpush.msra.mxu0 0.0
        %3283 = vmatpush.msra.mxu0 0.0
        %3284 = vmatpush.msra.mxu0 0.0
        %3285 = vmatpush.msra.mxu0 0.0
        %3286 = vmatpush.msra.mxu0 0.0
        %3287 = vmatpush.msra.mxu0 0.0
        %3288 = vmatpush.msra.mxu0 0.0
        %3289 = vmatpush.msra.mxu0 0.0
        %v3290 = vand.u32 %v3110, 4294901760
        %3291 = vmatpush.msra.mxu0 %v3290
        %v3292 = vand.u32 %v3109, 4294901760
        %3293 = vmatpush.msra.mxu0 %v3292
        %v3294 = vand.u32 %v3108, 4294901760
        %3295 = vmatpush.msra.mxu0 %v3294
        %v3296 = vand.u32 %v3107, 4294901760
        %3297 = vmatpush.msra.mxu0 %v3296
        %v3298 = vand.u32 %v3116, 4294901760
        %3299 = vmatmul.f32.gmra.mxu0 %v3298
        %v3300 = vpop.f32.mrf.mxu0
        %v3301 = vadd.f32 %v3276, %v3300
        %3302 = vdwg.mxu0
        %v3303 = vld [vmem:[#allocation11] sm:$0xff]
        %v3304 = vld [vmem:[#allocation11 + $0x8] sm:$0xff]
        %v3305 = vld [vmem:[#allocation11 + $0x10] sm:$0xff]
        %v3306 = vld [vmem:[#allocation11 + $0x18] sm:$0xff]
        %v3307 = vld [vmem:[%s11] sm:$0x1]
        %v3309 = vperm.slane %v3307, 0
        %v3312 = vsel %vm920, %v910, 0
        %v3315 = vsel %vm920, %v911, 0
        %3317 = vmatpush.msra.mxu0 0.0
        %3318 = vmatpush.msra.mxu0 0.0
        %3319 = vmatpush.msra.mxu0 0.0
        %3320 = vmatpush.msra.mxu0 0.0
        %3321 = vmatpush.msra.mxu0 0.0
        %3322 = vmatpush.msra.mxu0 0.0
        %3323 = vmatpush.msra.mxu0 0.0
        %3324 = vmatpush.msra.mxu0 0.0
        %3325 = vmatpush.msra.mxu0 0.0
        %3326 = vmatpush.msra.mxu0 0.0
        %3327 = vmatpush.msra.mxu0 0.0
        %3328 = vmatpush.msra.mxu0 0.0
        %v3329 = vand.u32 %v3306, 4294901760
        %3330 = vmatpush.msra.mxu0 %v3329
        %v3331 = vand.u32 %v3305, 4294901760
        %3332 = vmatpush.msra.mxu0 %v3331
        %v3333 = vand.u32 %v3304, 4294901760
        %3334 = vmatpush.msra.mxu0 %v3333
        %v3335 = vand.u32 %v3303, 4294901760
        %3336 = vmatpush.msra.mxu0 %v3335
        %v3337 = vand.u32 %v3312, 4294901760
        %v3338 = vsub.f32 %v3312, %v3337
        %v3339 = vand.u32 %v3338, 4294901760
        %v3340 = vsub.f32 %v3338, %v3339
        %v3341 = vand.u32 %v3340, 4294901760
        %3342 = vmatmul.f32.gmra.mxu0 %v3341
        %v3343 = vpop.f32.mrf.mxu0
        %v3344 = vadd.f32 %v3309, %v3343
        %v3345 = vand.u32 %v3315, 4294901760
        %v3346 = vsub.f32 %v3315, %v3345
        %v3347 = vand.u32 %v3346, 4294901760
        %v3348 = vsub.f32 %v3346, %v3347
        %v3349 = vand.u32 %v3348, 4294901760
        %3350 = vmatmul.f32.gmra.mxu0 %v3349
        %v3351 = vpop.f32.mrf.mxu0
        %v3352 = vadd.f32 %v3309, %v3351
        %3353 = vdwg.mxu0
        %3354 = vmatpush.msra.mxu0 0.0
        %3355 = vmatpush.msra.mxu0 0.0
        %3356 = vmatpush.msra.mxu0 0.0
        %3357 = vmatpush.msra.mxu0 0.0
        %3358 = vmatpush.msra.mxu0 0.0
        %3359 = vmatpush.msra.mxu0 0.0
        %3360 = vmatpush.msra.mxu0 0.0
        %3361 = vmatpush.msra.mxu0 0.0
        %3362 = vmatpush.msra.mxu0 0.0
        %3363 = vmatpush.msra.mxu0 0.0
        %3364 = vmatpush.msra.mxu0 0.0
        %3365 = vmatpush.msra.mxu0 0.0
        %v3366 = vand.u32 %v3306, 4294901760
        %v3367 = vsub.f32 %v3306, %v3366
        %v3368 = vand.u32 %v3367, 4294901760
        %v3369 = vsub.f32 %v3367, %v3368
        %v3370 = vand.u32 %v3369, 4294901760
        %3371 = vmatpush.msra.mxu0 %v3370
        %v3372 = vand.u32 %v3305, 4294901760
        %v3373 = vsub.f32 %v3305, %v3372
        %v3374 = vand.u32 %v3373, 4294901760
        %v3375 = vsub.f32 %v3373, %v3374
        %v3376 = vand.u32 %v3375, 4294901760
        %3377 = vmatpush.msra.mxu0 %v3376
        %v3378 = vand.u32 %v3304, 4294901760
        %v3379 = vsub.f32 %v3304, %v3378
        %v3380 = vand.u32 %v3379, 4294901760
        %v3381 = vsub.f32 %v3379, %v3380
        %v3382 = vand.u32 %v3381, 4294901760
        %3383 = vmatpush.msra.mxu0 %v3382
        %v3384 = vand.u32 %v3303, 4294901760
        %v3385 = vsub.f32 %v3303, %v3384
        %v3386 = vand.u32 %v3385, 4294901760
        %v3387 = vsub.f32 %v3385, %v3386
        %v3388 = vand.u32 %v3387, 4294901760
        %3389 = vmatpush.msra.mxu0 %v3388
        %v3390 = vand.u32 %v3312, 4294901760
        %3391 = vmatmul.f32.gmra.mxu0 %v3390
        %v3392 = vpop.f32.mrf.mxu0
        %v3393 = vadd.f32 %v3344, %v3392
        %v3394 = vand.u32 %v3315, 4294901760
        %3395 = vmatmul.f32.gmra.mxu0 %v3394
        %v3396 = vpop.f32.mrf.mxu0
        %v3397 = vadd.f32 %v3352, %v3396
        %3398 = vdwg.mxu0
        %3399 = vmatpush.msra.mxu0 0.0
        %3400 = vmatpush.msra.mxu0 0.0
        %3401 = vmatpush.msra.mxu0 0.0
        %3402 = vmatpush.msra.mxu0 0.0
        %3403 = vmatpush.msra.mxu0 0.0
        %3404 = vmatpush.msra.mxu0 0.0
        %3405 = vmatpush.msra.mxu0 0.0
        %3406 = vmatpush.msra.mxu0 0.0
        %3407 = vmatpush.msra.mxu0 0.0
        %3408 = vmatpush.msra.mxu0 0.0
        %3409 = vmatpush.msra.mxu0 0.0
        %3410 = vmatpush.msra.mxu0 0.0
        %v3411 = vand.u32 %v3306, 4294901760
        %v3412 = vsub.f32 %v3306, %v3411
        %3413 = vmatpush.msra.mxu0 %v3412
        %v3414 = vand.u32 %v3305, 4294901760
        %v3415 = vsub.f32 %v3305, %v3414
        %3416 = vmatpush.msra.mxu0 %v3415
        %v3417 = vand.u32 %v3304, 4294901760
        %v3418 = vsub.f32 %v3304, %v3417
        %3419 = vmatpush.msra.mxu0 %v3418
        %v3420 = vand.u32 %v3303, 4294901760
        %v3421 = vsub.f32 %v3303, %v3420
        %3422 = vmatpush.msra.mxu0 %v3421
        %v3423 = vand.u32 %v3312, 4294901760
        %v3424 = vsub.f32 %v3312, %v3423
        %3425 = vmatmul.f32.gmra.mxu0 %v3424
        %v3426 = vpop.f32.mrf.mxu0
        %v3427 = vadd.f32 %v3393, %v3426
        %v3428 = vand.u32 %v3315, 4294901760
        %v3429 = vsub.f32 %v3315, %v3428
        %3430 = vmatmul.f32.gmra.mxu0 %v3429
        %v3431 = vpop.f32.mrf.mxu0
        %v3432 = vadd.f32 %v3397, %v3431
        %3433 = vdwg.mxu0
        %3434 = vmatpush.msra.mxu0 0.0
        %3435 = vmatpush.msra.mxu0 0.0
        %3436 = vmatpush.msra.mxu0 0.0
        %3437 = vmatpush.msra.mxu0 0.0
        %3438 = vmatpush.msra.mxu0 0.0
        %3439 = vmatpush.msra.mxu0 0.0
        %3440 = vmatpush.msra.mxu0 0.0
        %3441 = vmatpush.msra.mxu0 0.0
        %3442 = vmatpush.msra.mxu0 0.0
        %3443 = vmatpush.msra.mxu0 0.0
        %3444 = vmatpush.msra.mxu0 0.0
        %3445 = vmatpush.msra.mxu0 0.0
        %v3446 = vand.u32 %v3306, 4294901760
        %3447 = vmatpush.msra.mxu0 %v3446
        %v3448 = vand.u32 %v3305, 4294901760
        %3449 = vmatpush.msra.mxu0 %v3448
        %v3450 = vand.u32 %v3304, 4294901760
        %3451 = vmatpush.msra.mxu0 %v3450
        %v3452 = vand.u32 %v3303, 4294901760
        %3453 = vmatpush.msra.mxu0 %v3452
        %v3454 = vand.u32 %v3312, 4294901760
        %v3455 = vsub.f32 %v3312, %v3454
        %v3456 = vand.u32 %v3455, 4294901760
        %3457 = vmatmul.f32.gmra.mxu0 %v3456
        %v3458 = vpop.f32.mrf.mxu0
        %v3459 = vadd.f32 %v3427, %v3458
        %v3460 = vand.u32 %v3315, 4294901760
        %v3461 = vsub.f32 %v3315, %v3460
        %v3462 = vand.u32 %v3461, 4294901760
        %3463 = vmatmul.f32.gmra.mxu0 %v3462
        %v3464 = vpop.f32.mrf.mxu0
        %v3465 = vadd.f32 %v3432, %v3464
        %3466 = vdwg.mxu0
        %3467 = vmatpush.msra.mxu0 0.0
        %3468 = vmatpush.msra.mxu0 0.0
        %3469 = vmatpush.msra.mxu0 0.0
        %3470 = vmatpush.msra.mxu0 0.0
        %3471 = vmatpush.msra.mxu0 0.0
        %3472 = vmatpush.msra.mxu0 0.0
        %3473 = vmatpush.msra.mxu0 0.0
        %3474 = vmatpush.msra.mxu0 0.0
        %3475 = vmatpush.msra.mxu0 0.0
        %3476 = vmatpush.msra.mxu0 0.0
        %3477 = vmatpush.msra.mxu0 0.0
        %3478 = vmatpush.msra.mxu0 0.0
        %v3479 = vand.u32 %v3306, 4294901760
        %v3480 = vsub.f32 %v3306, %v3479
        %v3481 = vand.u32 %v3480, 4294901760
        %3482 = vmatpush.msra.mxu0 %v3481
        %v3483 = vand.u32 %v3305, 4294901760
        %v3484 = vsub.f32 %v3305, %v3483
        %v3485 = vand.u32 %v3484, 4294901760
        %3486 = vmatpush.msra.mxu0 %v3485
        %v3487 = vand.u32 %v3304, 4294901760
        %v3488 = vsub.f32 %v3304, %v3487
        %v3489 = vand.u32 %v3488, 4294901760
        %3490 = vmatpush.msra.mxu0 %v3489
        %v3491 = vand.u32 %v3303, 4294901760
        %v3492 = vsub.f32 %v3303, %v3491
        %v3493 = vand.u32 %v3492, 4294901760
        %3494 = vmatpush.msra.mxu0 %v3493
        %v3495 = vand.u32 %v3312, 4294901760
        %3496 = vmatmul.f32.gmra.mxu0 %v3495
        %v3497 = vpop.f32.mrf.mxu0
        %v3498 = vadd.f32 %v3459, %v3497
        %v3499 = vand.u32 %v3315, 4294901760
        %3500 = vmatmul.f32.gmra.mxu0 %v3499
        %v3501 = vpop.f32.mrf.mxu0
        %v3502 = vadd.f32 %v3465, %v3501
        %3503 = vdwg.mxu0
        %3504 = vmatpush.msra.mxu0 0.0
        %3505 = vmatpush.msra.mxu0 0.0
        %3506 = vmatpush.msra.mxu0 0.0
        %3507 = vmatpush.msra.mxu0 0.0
        %3508 = vmatpush.msra.mxu0 0.0
        %3509 = vmatpush.msra.mxu0 0.0
        %3510 = vmatpush.msra.mxu0 0.0
        %3511 = vmatpush.msra.mxu0 0.0
        %3512 = vmatpush.msra.mxu0 0.0
        %3513 = vmatpush.msra.mxu0 0.0
        %3514 = vmatpush.msra.mxu0 0.0
        %3515 = vmatpush.msra.mxu0 0.0
        %v3516 = vand.u32 %v3306, 4294901760
        %3517 = vmatpush.msra.mxu0 %v3516
        %v3518 = vand.u32 %v3305, 4294901760
        %3519 = vmatpush.msra.mxu0 %v3518
        %v3520 = vand.u32 %v3304, 4294901760
        %3521 = vmatpush.msra.mxu0 %v3520
        %v3522 = vand.u32 %v3303, 4294901760
        %3523 = vmatpush.msra.mxu0 %v3522
        %v3524 = vand.u32 %v3312, 4294901760
        %3525 = vmatmul.f32.gmra.mxu0 %v3524
        %v3526 = vpop.f32.mrf.mxu0
        %v3527 = vadd.f32 %v3498, %v3526
        %v3528 = vand.u32 %v3315, 4294901760
        %3529 = vmatmul.f32.gmra.mxu0 %v3528
        %v3530 = vpop.f32.mrf.mxu0
        %v3531 = vadd.f32 %v3502, %v3530
        %3532 = vdwg.mxu0
        %v3533 = vmul.f32 %v3301, 0.35355338
        %v3534 = vld [vmem:[%s908] sm:$0xff]
        %v3535 = vld [vmem:[%s908 + $0x8] sm:$0xff]
        %v3536 = vld [vmem:[%s908 + $0x10] sm:$0xff]
        %v3537 = vld [vmem:[%s908 + $0x18] sm:$0xff]
        %3539 = vrot.lane.b32.xlu0 %v3533, 120
        %v3540 = vpop.permute.xlu0 %3539
        %3542 = vrot.lane.b32.xlu0 %v3533, 112
        %v3543 = vpop.permute.xlu0 %3542
        %3545 = vrot.lane.b32.xlu0 %v3533, 104
        %v3546 = vpop.permute.xlu0 %3545
        %v3548 = vrot.slane %v3543, 4
        %v3549 = vsel %vm1122, %v3548, %v3533
        %v3550 = vrot.slane %v3533, 4
        %v3551 = vsel %vm1122, %v3543, %v3550
        %v3553 = vunpack.c.l.s4 1983009808
        %v3554 = vunpack.c.0.s8 %v3553
        %v3555 = vperm.slane %v3549, %v3554
        %v3557 = vunpack.c.l.s4 1983009808
        %v3558 = vunpack.c.0.s8 %v3557
        %v3559 = vperm.slane %v3551, %v3558
        %v3560 = vrot.slane %v3546, 4
        %v3561 = vsel %vm1122, %v3560, %v3540
        %v3562 = vrot.slane %v3540, 4
        %v3563 = vsel %vm1122, %v3546, %v3562
        %v3565 = vunpack.c.l.s4 1983009808
        %v3566 = vunpack.c.0.s8 %v3565
        %v3567 = vperm.slane %v3561, %v3566
        %v3569 = vunpack.c.l.s4 1983009808
        %v3570 = vunpack.c.0.s8 %v3569
        %v3571 = vperm.slane %v3563, %v3570
        %v3572 = vrot.slane %v3567, 4
        %v3573 = vsel %vm1122, %v3572, %v3555
        %v3574 = vrot.slane %v3555, 4
        %v3575 = vsel %vm1122, %v3567, %v3574
        %v3577 = vunpack.c.l.s4 1934713408
        %v3578 = vunpack.c.0.s8 %v3577
        %v3579 = vperm.slane %v3573, %v3578
        %v3581 = vunpack.c.l.s4 1934713408
        %v3582 = vunpack.c.0.s8 %v3581
        %v3583 = vperm.slane %v3575, %v3582
        %v3584 = vrot.slane %v3571, 4
        %v3585 = vsel %vm1122, %v3584, %v3559
        %v3586 = vrot.slane %v3559, 4
        %v3587 = vsel %vm1122, %v3571, %v3586
        %v3589 = vunpack.c.l.s4 1934713408
        %v3590 = vunpack.c.0.s8 %v3589
        %v3591 = vperm.slane %v3585, %v3590
        %v3593 = vunpack.c.l.s4 1934713408
        %v3594 = vunpack.c.0.s8 %v3593
        %v3595 = vperm.slane %v3587, %v3594
        %v3596 = vrot.slane %v3579, 4
        %v3597 = vsel %vm1122, 0.0, %v3596
        %v3598 = vrot.slane %v3583, 4
        %v3599 = vsel %vm1122, 0.0, %v3598
        %v3600 = vrot.slane %v3591, 4
        %v3601 = vsel %vm1122, 0.0, %v3600
        %v3602 = vrot.slane %v3595, 4
        %v3603 = vsel %vm1122, 0.0, %v3602
        %v3604 = vsel %vm1122, %v3598, %v3579
        %v3606 = vunpack.c.l.s4 1983009808
        %v3607 = vunpack.c.0.s8 %v3606
        %v3608 = vperm.slane %v3604, %v3607
        %v3609 = vrot.slane %v3599, 4
        %v3610 = vsel %vm1122, %v3609, %v3597
        %v3612 = vunpack.c.l.s4 1983009808
        %v3613 = vunpack.c.0.s8 %v3612
        %v3614 = vperm.slane %v3610, %v3613
        %v3615 = vsel %vm1122, %v3602, %v3591
        %v3617 = vunpack.c.l.s4 1983009808
        %v3618 = vunpack.c.0.s8 %v3617
        %v3619 = vperm.slane %v3615, %v3618
        %v3620 = vrot.slane %v3603, 4
        %v3621 = vsel %vm1122, %v3620, %v3601
        %v3623 = vunpack.c.l.s4 1983009808
        %v3624 = vunpack.c.0.s8 %v3623
        %v3625 = vperm.slane %v3621, %v3624
        %v3626 = vrot.slane %v3614, 4
        %v3627 = vsel %vm1122, %v3626, %v3608
        %v3628 = vrot.slane %v3608, 4
        %v3629 = vsel %vm1122, %v3614, %v3628
        %v3631 = vunpack.c.l.s4 1934713408
        %v3632 = vunpack.c.0.s8 %v3631
        %v3633 = vperm.slane %v3627, %v3632
        %v3635 = vunpack.c.l.s4 1934713408
        %v3636 = vunpack.c.0.s8 %v3635
        %v3637 = vperm.slane %v3629, %v3636
        %v3638 = vrot.slane %v3625, 4
        %v3639 = vsel %vm1122, %v3638, %v3619
        %v3640 = vrot.slane %v3619, 4
        %v3641 = vsel %vm1122, %v3625, %v3640
        %v3643 = vunpack.c.l.s4 1934713408
        %v3644 = vunpack.c.0.s8 %v3643
        %v3645 = vperm.slane %v3639, %v3644
        %v3647 = vunpack.c.l.s4 1934713408
        %v3648 = vunpack.c.0.s8 %v3647
        %v3649 = vperm.slane %v3641, %v3648
        %v3650 = vrot.slane %v3645, 4
        %v3651 = vsel %vm1122, %v3650, %v3633
        %v3652 = vrot.slane %v3633, 4
        %v3653 = vsel %vm1122, %v3645, %v3652
        %v3654 = vrot.slane %v3649, 4
        %v3655 = vsel %vm1122, %v3654, %v3637
        %v3656 = vrot.slane %v3637, 4
        %v3657 = vsel %vm1122, %v3649, %v3656
        %3660 = vrot.lane.b32.xlu0 %v3527, 120
        %v3661 = vpop.permute.xlu0 %3660
        %3662 = vrot.lane.b32.xlu0 %v3531, 120
        %v3663 = vpop.permute.xlu0 %3662
        %3666 = vrot.lane.b32.xlu0 %v3527, 112
        %v3667 = vpop.permute.xlu0 %3666
        %3668 = vrot.lane.b32.xlu0 %v3531, 112
        %v3669 = vpop.permute.xlu0 %3668
        %3672 = vrot.lane.b32.xlu0 %v3527, 104
        %v3673 = vpop.permute.xlu0 %3672
        %3674 = vrot.lane.b32.xlu0 %v3531, 104
        %v3675 = vpop.permute.xlu0 %3674
        %v3678 = vrot.slane %v3667, 4
        %v3679 = vsel %vm1122, %v3678, %v3527
        %v3680 = vrot.slane %v3527, 4
        %v3681 = vsel %vm1122, %v3667, %v3680
        %v3683 = vunpack.c.l.s4 1983009808
        %v3684 = vunpack.c.0.s8 %v3683
        %v3685 = vperm.slane %v3679, %v3684
        %v3687 = vunpack.c.l.s4 1983009808
        %v3688 = vunpack.c.0.s8 %v3687
        %v3689 = vperm.slane %v3681, %v3688
        %v3690 = vrot.slane %v3673, 4
        %v3691 = vsel %vm1122, %v3690, %v3661
        %v3692 = vrot.slane %v3661, 4
        %v3693 = vsel %vm1122, %v3673, %v3692
        %v3695 = vunpack.c.l.s4 1983009808
        %v3696 = vunpack.c.0.s8 %v3695
        %v3697 = vperm.slane %v3691, %v3696
        %v3699 = vunpack.c.l.s4 1983009808
        %v3700 = vunpack.c.0.s8 %v3699
        %v3701 = vperm.slane %v3693, %v3700
        %v3702 = vrot.slane %v3697, 4
        %v3703 = vsel %vm1122, %v3702, %v3685
        %v3704 = vrot.slane %v3685, 4
        %v3705 = vsel %vm1122, %v3697, %v3704
        %v3707 = vunpack.c.l.s4 1934713408
        %v3708 = vunpack.c.0.s8 %v3707
        %v3709 = vperm.slane %v3703, %v3708
        %v3711 = vunpack.c.l.s4 1934713408
        %v3712 = vunpack.c.0.s8 %v3711
        %v3713 = vperm.slane %v3705, %v3712
        %v3714 = vrot.slane %v3701, 4
        %v3715 = vsel %vm1122, %v3714, %v3689
        %v3716 = vrot.slane %v3689, 4
        %v3717 = vsel %vm1122, %v3701, %v3716
        %v3719 = vunpack.c.l.s4 1934713408
        %v3720 = vunpack.c.0.s8 %v3719
        %v3721 = vperm.slane %v3715, %v3720
        %v3723 = vunpack.c.l.s4 1934713408
        %v3724 = vunpack.c.0.s8 %v3723
        %v3725 = vperm.slane %v3717, %v3724
        %v3726 = vrot.slane %v3709, 4
        %v3727 = vsel %vm1122, 0.0, %v3726
        %v3728 = vrot.slane %v3713, 4
        %v3729 = vsel %vm1122, 0.0, %v3728
        %v3730 = vrot.slane %v3721, 4
        %v3731 = vsel %vm1122, 0.0, %v3730
        %v3732 = vrot.slane %v3725, 4
        %v3733 = vsel %vm1122, 0.0, %v3732
        %v3734 = vrot.slane %v3669, 4
        %v3735 = vsel %vm1122, %v3734, %v3531
        %v3736 = vrot.slane %v3531, 4
        %v3737 = vsel %vm1122, %v3669, %v3736
        %v3739 = vunpack.c.l.s4 1983009808
        %v3740 = vunpack.c.0.s8 %v3739
        %v3741 = vperm.slane %v3735, %v3740
        %v3743 = vunpack.c.l.s4 1983009808
        %v3744 = vunpack.c.0.s8 %v3743
        %v3745 = vperm.slane %v3737, %v3744
        %v3746 = vrot.slane %v3675, 4
        %v3747 = vsel %vm1122, %v3746, %v3663
        %v3748 = vrot.slane %v3663, 4
        %v3749 = vsel %vm1122, %v3675, %v3748
        %v3751 = vunpack.c.l.s4 1983009808
        %v3752 = vunpack.c.0.s8 %v3751
        %v3753 = vperm.slane %v3747, %v3752
        %v3755 = vunpack.c.l.s4 1983009808
        %v3756 = vunpack.c.0.s8 %v3755
        %v3757 = vperm.slane %v3749, %v3756
        %v3758 = vrot.slane %v3753, 4
        %v3759 = vsel %vm1122, %v3758, %v3741
        %v3760 = vrot.slane %v3741, 4
        %v3761 = vsel %vm1122, %v3753, %v3760
        %v3763 = vunpack.c.l.s4 1934713408
        %v3764 = vunpack.c.0.s8 %v3763
        %v3765 = vperm.slane %v3759, %v3764
        %v3767 = vunpack.c.l.s4 1934713408
        %v3768 = vunpack.c.0.s8 %v3767
        %v3769 = vperm.slane %v3761, %v3768
        %v3770 = vrot.slane %v3757, 4
        %v3771 = vsel %vm1122, %v3770, %v3745
        %v3772 = vrot.slane %v3745, 4
        %v3773 = vsel %vm1122, %v3757, %v3772
        %v3775 = vunpack.c.l.s4 1934713408
        %v3776 = vunpack.c.0.s8 %v3775
        %v3777 = vperm.slane %v3771, %v3776
        %v3779 = vunpack.c.l.s4 1934713408
        %v3780 = vunpack.c.0.s8 %v3779
        %v3781 = vperm.slane %v3773, %v3780
        %v3782 = vrot.slane %v3765, 4
        %v3783 = vsel %vm1122, 0.0, %v3782
        %v3784 = vrot.slane %v3769, 4
        %v3785 = vsel %vm1122, 0.0, %v3784
        %v3786 = vrot.slane %v3777, 4
        %v3787 = vsel %vm1122, 0.0, %v3786
        %v3788 = vrot.slane %v3781, 4
        %v3789 = vsel %vm1122, 0.0, %v3788
        %v3790 = vsel %vm1122, %v3728, %v3709
        %v3792 = vunpack.c.l.s4 1983009808
        %v3793 = vunpack.c.0.s8 %v3792
        %v3794 = vperm.slane %v3790, %v3793
        %v3795 = vrot.slane %v3729, 4
        %v3796 = vsel %vm1122, %v3795, %v3727
        %v3798 = vunpack.c.l.s4 1983009808
        %v3799 = vunpack.c.0.s8 %v3798
        %v3800 = vperm.slane %v3796, %v3799
        %v3801 = vsel %vm1122, %v3732, %v3721
        %v3803 = vunpack.c.l.s4 1983009808
        %v3804 = vunpack.c.0.s8 %v3803
        %v3805 = vperm.slane %v3801, %v3804
        %v3806 = vrot.slane %v3733, 4
        %v3807 = vsel %vm1122, %v3806, %v3731
        %v3809 = vunpack.c.l.s4 1983009808
        %v3810 = vunpack.c.0.s8 %v3809
        %v3811 = vperm.slane %v3807, %v3810
        %v3812 = vrot.slane %v3800, 4
        %v3813 = vsel %vm1122, %v3812, %v3794
        %v3814 = vrot.slane %v3794, 4
        %v3815 = vsel %vm1122, %v3800, %v3814
        %v3817 = vunpack.c.l.s4 1934713408
        %v3818 = vunpack.c.0.s8 %v3817
        %v3819 = vperm.slane %v3813, %v3818
        %v3821 = vunpack.c.l.s4 1934713408
        %v3822 = vunpack.c.0.s8 %v3821
        %v3823 = vperm.slane %v3815, %v3822
        %v3824 = vrot.slane %v3811, 4
        %v3825 = vsel %vm1122, %v3824, %v3805
        %v3826 = vrot.slane %v3805, 4
        %v3827 = vsel %vm1122, %v3811, %v3826
        %v3829 = vunpack.c.l.s4 1934713408
        %v3830 = vunpack.c.0.s8 %v3829
        %v3831 = vperm.slane %v3825, %v3830
        %v3833 = vunpack.c.l.s4 1934713408
        %v3834 = vunpack.c.0.s8 %v3833
        %v3835 = vperm.slane %v3827, %v3834
        %v3836 = vrot.slane %v3831, 4
        %v3837 = vsel %vm1122, %v3836, %v3819
        %v3838 = vrot.slane %v3819, 4
        %v3839 = vsel %vm1122, %v3831, %v3838
        %v3840 = vrot.slane %v3835, 4
        %v3841 = vsel %vm1122, %v3840, %v3823
        %v3842 = vrot.slane %v3823, 4
        %v3843 = vsel %vm1122, %v3835, %v3842
        %v3844 = vsel %vm1122, %v3784, %v3765
        %v3846 = vunpack.c.l.s4 1983009808
        %v3847 = vunpack.c.0.s8 %v3846
        %v3848 = vperm.slane %v3844, %v3847
        %v3849 = vrot.slane %v3785, 4
        %v3850 = vsel %vm1122, %v3849, %v3783
        %v3852 = vunpack.c.l.s4 1983009808
        %v3853 = vunpack.c.0.s8 %v3852
        %v3854 = vperm.slane %v3850, %v3853
        %v3855 = vsel %vm1122, %v3788, %v3777
        %v3857 = vunpack.c.l.s4 1983009808
        %v3858 = vunpack.c.0.s8 %v3857
        %v3859 = vperm.slane %v3855, %v3858
        %v3860 = vrot.slane %v3789, 4
        %v3861 = vsel %vm1122, %v3860, %v3787
        %v3863 = vunpack.c.l.s4 1983009808
        %v3864 = vunpack.c.0.s8 %v3863
        %v3865 = vperm.slane %v3861, %v3864
        %v3866 = vrot.slane %v3854, 4
        %v3867 = vsel %vm1122, %v3866, %v3848
        %v3868 = vrot.slane %v3848, 4
        %v3869 = vsel %vm1122, %v3854, %v3868
        %v3871 = vunpack.c.l.s4 1934713408
        %v3872 = vunpack.c.0.s8 %v3871
        %v3873 = vperm.slane %v3867, %v3872
        %v3875 = vunpack.c.l.s4 1934713408
        %v3876 = vunpack.c.0.s8 %v3875
        %v3877 = vperm.slane %v3869, %v3876
        %v3878 = vrot.slane %v3865, 4
        %v3879 = vsel %vm1122, %v3878, %v3859
        %v3880 = vrot.slane %v3859, 4
        %v3881 = vsel %vm1122, %v3865, %v3880
        %v3883 = vunpack.c.l.s4 1934713408
        %v3884 = vunpack.c.0.s8 %v3883
        %v3885 = vperm.slane %v3879, %v3884
        %v3887 = vunpack.c.l.s4 1934713408
        %v3888 = vunpack.c.0.s8 %v3887
        %v3889 = vperm.slane %v3881, %v3888
        %v3890 = vrot.slane %v3885, 4
        %v3891 = vsel %vm1122, %v3890, %v3873
        %v3892 = vrot.slane %v3873, 4
        %v3893 = vsel %vm1122, %v3885, %v3892
        %v3894 = vrot.slane %v3889, 4
        %v3895 = vsel %vm1122, %v3894, %v3877
        %v3896 = vrot.slane %v3877, 4
        %v3897 = vsel %vm1122, %v3889, %v3896
        %3898 = vrot.lane.b32.xlu0 %v3527, 96
        %v3899 = vpop.permute.xlu0 %3898
        %3900 = vrot.lane.b32.xlu0 %v3531, 96
        %v3901 = vpop.permute.xlu0 %3900
        %3902 = vrot.lane.b32.xlu0 %v3661, 96
        %v3903 = vpop.permute.xlu0 %3902
        %3904 = vrot.lane.b32.xlu0 %v3663, 96
        %v3905 = vpop.permute.xlu0 %3904
        %3906 = vrot.lane.b32.xlu0 %v3667, 96
        %v3907 = vpop.permute.xlu0 %3906
        %3908 = vrot.lane.b32.xlu0 %v3669, 96
        %v3909 = vpop.permute.xlu0 %3908
        %3910 = vrot.lane.b32.xlu0 %v3673, 96
        %v3911 = vpop.permute.xlu0 %3910
        %3912 = vrot.lane.b32.xlu0 %v3675, 96
        %v3913 = vpop.permute.xlu0 %3912
        %v3922 = vrot.slane %v3907, 4
        %v3923 = vsel %vm1122, %v3922, %v3899
        %v3924 = vrot.slane %v3899, 4
        %v3925 = vsel %vm1122, %v3907, %v3924
        %v3927 = vunpack.c.l.s4 1983009808
        %v3928 = vunpack.c.0.s8 %v3927
        %v3929 = vperm.slane %v3923, %v3928
        %v3931 = vunpack.c.l.s4 1983009808
        %v3932 = vunpack.c.0.s8 %v3931
        %v3933 = vperm.slane %v3925, %v3932
        %v3934 = vrot.slane %v3911, 4
        %v3935 = vsel %vm1122, %v3934, %v3903
        %v3936 = vrot.slane %v3903, 4
        %v3937 = vsel %vm1122, %v3911, %v3936
        %v3939 = vunpack.c.l.s4 1983009808
        %v3940 = vunpack.c.0.s8 %v3939
        %v3941 = vperm.slane %v3935, %v3940
        %v3943 = vunpack.c.l.s4 1983009808
        %v3944 = vunpack.c.0.s8 %v3943
        %v3945 = vperm.slane %v3937, %v3944
        %v3946 = vrot.slane %v3941, 4
        %v3947 = vsel %vm1122, %v3946, %v3929
        %v3948 = vrot.slane %v3929, 4
        %v3949 = vsel %vm1122, %v3941, %v3948
        %v3951 = vunpack.c.l.s4 1934713408
        %v3952 = vunpack.c.0.s8 %v3951
        %v3953 = vperm.slane %v3947, %v3952
        %v3955 = vunpack.c.l.s4 1934713408
        %v3956 = vunpack.c.0.s8 %v3955
        %v3957 = vperm.slane %v3949, %v3956
        %v3958 = vrot.slane %v3945, 4
        %v3959 = vsel %vm1122, %v3958, %v3933
        %v3960 = vrot.slane %v3933, 4
        %v3961 = vsel %vm1122, %v3945, %v3960
        %v3963 = vunpack.c.l.s4 1934713408
        %v3964 = vunpack.c.0.s8 %v3963
        %v3965 = vperm.slane %v3959, %v3964
        %v3967 = vunpack.c.l.s4 1934713408
        %v3968 = vunpack.c.0.s8 %v3967
        %v3969 = vperm.slane %v3961, %v3968
        %v3970 = vrot.slane %v3953, 4
        %v3971 = vsel %vm1122, 0.0, %v3970
        %v3972 = vrot.slane %v3957, 4
        %v3973 = vsel %vm1122, 0.0, %v3972
        %v3974 = vrot.slane %v3965, 4
        %v3975 = vsel %vm1122, 0.0, %v3974
        %v3976 = vrot.slane %v3969, 4
        %v3977 = vsel %vm1122, 0.0, %v3976
        %v3978 = vrot.slane %v3909, 4
        %v3979 = vsel %vm1122, %v3978, %v3901
        %v3980 = vrot.slane %v3901, 4
        %v3981 = vsel %vm1122, %v3909, %v3980
        %v3983 = vunpack.c.l.s4 1983009808
        %v3984 = vunpack.c.0.s8 %v3983
        %v3985 = vperm.slane %v3979, %v3984
        %v3987 = vunpack.c.l.s4 1983009808
        %v3988 = vunpack.c.0.s8 %v3987
        %v3989 = vperm.slane %v3981, %v3988
        %v3990 = vrot.slane %v3913, 4
        %v3991 = vsel %vm1122, %v3990, %v3905
        %v3992 = vrot.slane %v3905, 4
        %v3993 = vsel %vm1122, %v3913, %v3992
        %v3995 = vunpack.c.l.s4 1983009808
        %v3996 = vunpack.c.0.s8 %v3995
        %v3997 = vperm.slane %v3991, %v3996
        %v3999 = vunpack.c.l.s4 1983009808
        %v4000 = vunpack.c.0.s8 %v3999
        %v4001 = vperm.slane %v3993, %v4000
        %v4002 = vrot.slane %v3997, 4
        %v4003 = vsel %vm1122, %v4002, %v3985
        %v4004 = vrot.slane %v3985, 4
        %v4005 = vsel %vm1122, %v3997, %v4004
        %v4007 = vunpack.c.l.s4 1934713408
        %v4008 = vunpack.c.0.s8 %v4007
        %v4009 = vperm.slane %v4003, %v4008
        %v4011 = vunpack.c.l.s4 1934713408
        %v4012 = vunpack.c.0.s8 %v4011
        %v4013 = vperm.slane %v4005, %v4012
        %v4014 = vrot.slane %v4001, 4
        %v4015 = vsel %vm1122, %v4014, %v3989
        %v4016 = vrot.slane %v3989, 4
        %v4017 = vsel %vm1122, %v4001, %v4016
        %v4019 = vunpack.c.l.s4 1934713408
        %v4020 = vunpack.c.0.s8 %v4019
        %v4021 = vperm.slane %v4015, %v4020
        %v4023 = vunpack.c.l.s4 1934713408
        %v4024 = vunpack.c.0.s8 %v4023
        %v4025 = vperm.slane %v4017, %v4024
        %v4026 = vrot.slane %v4009, 4
        %v4027 = vsel %vm1122, 0.0, %v4026
        %v4028 = vrot.slane %v4013, 4
        %v4029 = vsel %vm1122, 0.0, %v4028
        %v4030 = vrot.slane %v4021, 4
        %v4031 = vsel %vm1122, 0.0, %v4030
        %v4032 = vrot.slane %v4025, 4
        %v4033 = vsel %vm1122, 0.0, %v4032
        %v4034 = vsel %vm1122, %v3972, %v3953
        %v4036 = vunpack.c.l.s4 1983009808
        %v4037 = vunpack.c.0.s8 %v4036
        %v4038 = vperm.slane %v4034, %v4037
        %v4039 = vrot.slane %v3973, 4
        %v4040 = vsel %vm1122, %v4039, %v3971
        %v4042 = vunpack.c.l.s4 1983009808
        %v4043 = vunpack.c.0.s8 %v4042
        %v4044 = vperm.slane %v4040, %v4043
        %v4045 = vsel %vm1122, %v3976, %v3965
        %v4047 = vunpack.c.l.s4 1983009808
        %v4048 = vunpack.c.0.s8 %v4047
        %v4049 = vperm.slane %v4045, %v4048
        %v4050 = vrot.slane %v3977, 4
        %v4051 = vsel %vm1122, %v4050, %v3975
        %v4053 = vunpack.c.l.s4 1983009808
        %v4054 = vunpack.c.0.s8 %v4053
        %v4055 = vperm.slane %v4051, %v4054
        %v4056 = vrot.slane %v4044, 4
        %v4057 = vsel %vm1122, %v4056, %v4038
        %v4058 = vrot.slane %v4038, 4
        %v4059 = vsel %vm1122, %v4044, %v4058
        %v4061 = vunpack.c.l.s4 1934713408
        %v4062 = vunpack.c.0.s8 %v4061
        %v4063 = vperm.slane %v4057, %v4062
        %v4065 = vunpack.c.l.s4 1934713408
        %v4066 = vunpack.c.0.s8 %v4065
        %v4067 = vperm.slane %v4059, %v4066
        %v4068 = vrot.slane %v4055, 4
        %v4069 = vsel %vm1122, %v4068, %v4049
        %v4070 = vrot.slane %v4049, 4
        %v4071 = vsel %vm1122, %v4055, %v4070
        %v4073 = vunpack.c.l.s4 1934713408
        %v4074 = vunpack.c.0.s8 %v4073
        %v4075 = vperm.slane %v4069, %v4074
        %v4077 = vunpack.c.l.s4 1934713408
        %v4078 = vunpack.c.0.s8 %v4077
        %v4079 = vperm.slane %v4071, %v4078
        %v4080 = vrot.slane %v4075, 4
        %v4081 = vsel %vm1122, %v4080, %v4063
        %v4082 = vrot.slane %v4063, 4
        %v4083 = vsel %vm1122, %v4075, %v4082
        %v4084 = vrot.slane %v4079, 4
        %v4085 = vsel %vm1122, %v4084, %v4067
        %v4086 = vrot.slane %v4067, 4
        %v4087 = vsel %vm1122, %v4079, %v4086
        %v4088 = vsel %vm1122, %v4028, %v4009
        %v4090 = vunpack.c.l.s4 1983009808
        %v4091 = vunpack.c.0.s8 %v4090
        %v4092 = vperm.slane %v4088, %v4091
        %v4093 = vrot.slane %v4029, 4
        %v4094 = vsel %vm1122, %v4093, %v4027
        %v4096 = vunpack.c.l.s4 1983009808
        %v4097 = vunpack.c.0.s8 %v4096
        %v4098 = vperm.slane %v4094, %v4097
        %v4099 = vsel %vm1122, %v4032, %v4021
        %v4101 = vunpack.c.l.s4 1983009808
        %v4102 = vunpack.c.0.s8 %v4101
        %v4103 = vperm.slane %v4099, %v4102
        %v4104 = vrot.slane %v4033, 4
        %v4105 = vsel %vm1122, %v4104, %v4031
        %v4107 = vunpack.c.l.s4 1983009808
        %v4108 = vunpack.c.0.s8 %v4107
        %v4109 = vperm.slane %v4105, %v4108
        %v4110 = vrot.slane %v4098, 4
        %v4111 = vsel %vm1122, %v4110, %v4092
        %v4112 = vrot.slane %v4092, 4
        %v4113 = vsel %vm1122, %v4098, %v4112
        %v4115 = vunpack.c.l.s4 1934713408
        %v4116 = vunpack.c.0.s8 %v4115
        %v4117 = vperm.slane %v4111, %v4116
        %v4119 = vunpack.c.l.s4 1934713408
        %v4120 = vunpack.c.0.s8 %v4119
        %v4121 = vperm.slane %v4113, %v4120
        %v4122 = vrot.slane %v4109, 4
        %v4123 = vsel %vm1122, %v4122, %v4103
        %v4124 = vrot.slane %v4103, 4
        %v4125 = vsel %vm1122, %v4109, %v4124
        %v4127 = vunpack.c.l.s4 1934713408
        %v4128 = vunpack.c.0.s8 %v4127
        %v4129 = vperm.slane %v4123, %v4128
        %v4131 = vunpack.c.l.s4 1934713408
        %v4132 = vunpack.c.0.s8 %v4131
        %v4133 = vperm.slane %v4125, %v4132
        %v4134 = vrot.slane %v4129, 4
        %v4135 = vsel %vm1122, %v4134, %v4117
        %v4136 = vrot.slane %v4117, 4
        %v4137 = vsel %vm1122, %v4129, %v4136
        %v4138 = vrot.slane %v4133, 4
        %v4139 = vsel %vm1122, %v4138, %v4121
        %v4140 = vrot.slane %v4121, 4
        %v4141 = vsel %vm1122, %v4133, %v4140
        %v4143 = vsel %vm1483, %v3651, 0
        %v4146 = vsel %vm1483, %v3837, 0
        %v4149 = vsel %vm1483, %v3891, 0
        %4151 = vmatpush.xpose.msra.mxu0 0.0
        %4152 = vmatpush.xpose.msra.mxu0 0.0
        %4153 = vmatpush.xpose.msra.mxu0 0.0
        %4154 = vmatpush.xpose.msra.mxu0 0.0
        %4155 = vmatpush.xpose.msra.mxu0 0.0
        %4156 = vmatpush.xpose.msra.mxu0 0.0
        %4157 = vmatpush.xpose.msra.mxu0 0.0
        %4158 = vmatpush.xpose.msra.mxu0 0.0
        %4159 = vmatpush.xpose.msra.mxu0 0.0
        %4160 = vmatpush.xpose.msra.mxu0 0.0
        %4161 = vmatpush.xpose.msra.mxu0 0.0
        %4162 = vmatpush.xpose.msra.mxu0 0.0
        %4163 = vmatpush.xpose.msra.mxu0 0.0
        %4164 = vmatpush.xpose.msra.mxu0 0.0
        %v4165 = vand.u32 %v4149, 4294901760
        %4166 = vmatpush.xpose.msra.mxu0 %v4165
        %v4167 = vand.u32 %v4146, 4294901760
        %4168 = vmatpush.xpose.msra.mxu0 %v4167
        %v4169 = vand.u32 %v4143, 4294901760
        %v4170 = vsub.f32 %v4143, %v4169
        %v4171 = vand.u32 %v4170, 4294901760
        %v4172 = vsub.f32 %v4170, %v4171
        %v4173 = vand.u32 %v4172, 4294901760
        %4174 = vmatmul.f32.gmra.mxu0 %v4173
        %v4175 = vpop.f32.mrf.mxu0
        %v4176 = vadd.f32 %v3534, %v4175
        %4177 = vdwg.mxu0
        %4178 = vmatpush.xpose.msra.mxu0 0.0
        %4179 = vmatpush.xpose.msra.mxu0 0.0
        %4180 = vmatpush.xpose.msra.mxu0 0.0
        %4181 = vmatpush.xpose.msra.mxu0 0.0
        %4182 = vmatpush.xpose.msra.mxu0 0.0
        %4183 = vmatpush.xpose.msra.mxu0 0.0
        %4184 = vmatpush.xpose.msra.mxu0 0.0
        %4185 = vmatpush.xpose.msra.mxu0 0.0
        %4186 = vmatpush.xpose.msra.mxu0 0.0
        %4187 = vmatpush.xpose.msra.mxu0 0.0
        %4188 = vmatpush.xpose.msra.mxu0 0.0
        %4189 = vmatpush.xpose.msra.mxu0 0.0
        %4190 = vmatpush.xpose.msra.mxu0 0.0
        %4191 = vmatpush.xpose.msra.mxu0 0.0
        %v4192 = vand.u32 %v4149, 4294901760
        %v4193 = vsub.f32 %v4149, %v4192
        %v4194 = vand.u32 %v4193, 4294901760
        %v4195 = vsub.f32 %v4193, %v4194
        %v4196 = vand.u32 %v4195, 4294901760
        %4197 = vmatpush.xpose.msra.mxu0 %v4196
        %v4198 = vand.u32 %v4146, 4294901760
        %v4199 = vsub.f32 %v4146, %v4198
        %v4200 = vand.u32 %v4199, 4294901760
        %v4201 = vsub.f32 %v4199, %v4200
        %v4202 = vand.u32 %v4201, 4294901760
        %4203 = vmatpush.xpose.msra.mxu0 %v4202
        %v4204 = vand.u32 %v4143, 4294901760
        %4205 = vmatmul.f32.gmra.mxu0 %v4204
        %v4206 = vpop.f32.mrf.mxu0
        %v4207 = vadd.f32 %v4176, %v4206
        %4208 = vdwg.mxu0
        %4209 = vmatpush.xpose.msra.mxu0 0.0
        %4210 = vmatpush.xpose.msra.mxu0 0.0
        %4211 = vmatpush.xpose.msra.mxu0 0.0
        %4212 = vmatpush.xpose.msra.mxu0 0.0
        %4213 = vmatpush.xpose.msra.mxu0 0.0
        %4214 = vmatpush.xpose.msra.mxu0 0.0
        %4215 = vmatpush.xpose.msra.mxu0 0.0
        %4216 = vmatpush.xpose.msra.mxu0 0.0
        %4217 = vmatpush.xpose.msra.mxu0 0.0
        %4218 = vmatpush.xpose.msra.mxu0 0.0
        %4219 = vmatpush.xpose.msra.mxu0 0.0
        %4220 = vmatpush.xpose.msra.mxu0 0.0
        %4221 = vmatpush.xpose.msra.mxu0 0.0
        %4222 = vmatpush.xpose.msra.mxu0 0.0
        %v4223 = vand.u32 %v4149, 4294901760
        %v4224 = vsub.f32 %v4149, %v4223
        %4225 = vmatpush.xpose.msra.mxu0 %v4224
        %v4226 = vand.u32 %v4146, 4294901760
        %v4227 = vsub.f32 %v4146, %v4226
        %4228 = vmatpush.xpose.msra.mxu0 %v4227
        %v4229 = vand.u32 %v4143, 4294901760
        %v4230 = vsub.f32 %v4143, %v4229
        %4231 = vmatmul.f32.gmra.mxu0 %v4230
        %v4232 = vpop.f32.mrf.mxu0
        %v4233 = vadd.f32 %v4207, %v4232
        %4234 = vdwg.mxu0
        %4235 = vmatpush.xpose.msra.mxu0 0.0
        %4236 = vmatpush.xpose.msra.mxu0 0.0
        %4237 = vmatpush.xpose.msra.mxu0 0.0
        %4238 = vmatpush.xpose.msra.mxu0 0.0
        %4239 = vmatpush.xpose.msra.mxu0 0.0
        %4240 = vmatpush.xpose.msra.mxu0 0.0
        %4241 = vmatpush.xpose.msra.mxu0 0.0
        %4242 = vmatpush.xpose.msra.mxu0 0.0
        %4243 = vmatpush.xpose.msra.mxu0 0.0
        %4244 = vmatpush.xpose.msra.mxu0 0.0
        %4245 = vmatpush.xpose.msra.mxu0 0.0
        %4246 = vmatpush.xpose.msra.mxu0 0.0
        %4247 = vmatpush.xpose.msra.mxu0 0.0
        %4248 = vmatpush.xpose.msra.mxu0 0.0
        %v4249 = vand.u32 %v4149, 4294901760
        %4250 = vmatpush.xpose.msra.mxu0 %v4249
        %v4251 = vand.u32 %v4146, 4294901760
        %4252 = vmatpush.xpose.msra.mxu0 %v4251
        %v4253 = vand.u32 %v4143, 4294901760
        %v4254 = vsub.f32 %v4143, %v4253
        %v4255 = vand.u32 %v4254, 4294901760
        %4256 = vmatmul.f32.gmra.mxu0 %v4255
        %v4257 = vpop.f32.mrf.mxu0
        %v4258 = vadd.f32 %v4233, %v4257
        %4259 = vdwg.mxu0
        %4260 = vmatpush.xpose.msra.mxu0 0.0
        %4261 = vmatpush.xpose.msra.mxu0 0.0
        %4262 = vmatpush.xpose.msra.mxu0 0.0
        %4263 = vmatpush.xpose.msra.mxu0 0.0
        %4264 = vmatpush.xpose.msra.mxu0 0.0
        %4265 = vmatpush.xpose.msra.mxu0 0.0
        %4266 = vmatpush.xpose.msra.mxu0 0.0
        %4267 = vmatpush.xpose.msra.mxu0 0.0
        %4268 = vmatpush.xpose.msra.mxu0 0.0
        %4269 = vmatpush.xpose.msra.mxu0 0.0
        %4270 = vmatpush.xpose.msra.mxu0 0.0
        %4271 = vmatpush.xpose.msra.mxu0 0.0
        %4272 = vmatpush.xpose.msra.mxu0 0.0
        %4273 = vmatpush.xpose.msra.mxu0 0.0
        %v4274 = vand.u32 %v4149, 4294901760
        %v4275 = vsub.f32 %v4149, %v4274
        %v4276 = vand.u32 %v4275, 4294901760
        %4277 = vmatpush.xpose.msra.mxu0 %v4276
        %v4278 = vand.u32 %v4146, 4294901760
        %v4279 = vsub.f32 %v4146, %v4278
        %v4280 = vand.u32 %v4279, 4294901760
        %4281 = vmatpush.xpose.msra.mxu0 %v4280
        %v4282 = vand.u32 %v4143, 4294901760
        %4283 = vmatmul.f32.gmra.mxu0 %v4282
        %v4284 = vpop.f32.mrf.mxu0
        %v4285 = vadd.f32 %v4258, %v4284
        %4286 = vdwg.mxu0
        %4287 = vmatpush.xpose.msra.mxu0 0.0
        %4288 = vmatpush.xpose.msra.mxu0 0.0
        %4289 = vmatpush.xpose.msra.mxu0 0.0
        %4290 = vmatpush.xpose.msra.mxu0 0.0
        %4291 = vmatpush.xpose.msra.mxu0 0.0
        %4292 = vmatpush.xpose.msra.mxu0 0.0
        %4293 = vmatpush.xpose.msra.mxu0 0.0
        %4294 = vmatpush.xpose.msra.mxu0 0.0
        %4295 = vmatpush.xpose.msra.mxu0 0.0
        %4296 = vmatpush.xpose.msra.mxu0 0.0
        %4297 = vmatpush.xpose.msra.mxu0 0.0
        %4298 = vmatpush.xpose.msra.mxu0 0.0
        %4299 = vmatpush.xpose.msra.mxu0 0.0
        %4300 = vmatpush.xpose.msra.mxu0 0.0
        %v4301 = vand.u32 %v4149, 4294901760
        %4302 = vmatpush.xpose.msra.mxu0 %v4301
        %v4303 = vand.u32 %v4146, 4294901760
        %4304 = vmatpush.xpose.msra.mxu0 %v4303
        %v4305 = vand.u32 %v4143, 4294901760
        %4306 = vmatmul.f32.gmra.mxu0 %v4305
        %v4307 = vpop.f32.mrf.mxu0
        %v4308 = vadd.f32 %v4285, %v4307
        %4309 = vdwg.mxu0
        %v4311 = vsel %vm1483, %v3653, 0
        %v4314 = vsel %vm1483, %v3839, 0
        %v4317 = vsel %vm1483, %v3893, 0
        %4319 = vmatpush.xpose.msra.mxu0 0.0
        %4320 = vmatpush.xpose.msra.mxu0 0.0
        %4321 = vmatpush.xpose.msra.mxu0 0.0
        %4322 = vmatpush.xpose.msra.mxu0 0.0
        %4323 = vmatpush.xpose.msra.mxu0 0.0
        %4324 = vmatpush.xpose.msra.mxu0 0.0
        %4325 = vmatpush.xpose.msra.mxu0 0.0
        %4326 = vmatpush.xpose.msra.mxu0 0.0
        %4327 = vmatpush.xpose.msra.mxu0 0.0
        %4328 = vmatpush.xpose.msra.mxu0 0.0
        %4329 = vmatpush.xpose.msra.mxu0 0.0
        %4330 = vmatpush.xpose.msra.mxu0 0.0
        %4331 = vmatpush.xpose.msra.mxu0 0.0
        %4332 = vmatpush.xpose.msra.mxu0 0.0
        %v4333 = vand.u32 %v4317, 4294901760
        %4334 = vmatpush.xpose.msra.mxu0 %v4333
        %v4335 = vand.u32 %v4314, 4294901760
        %4336 = vmatpush.xpose.msra.mxu0 %v4335
        %v4337 = vand.u32 %v4311, 4294901760
        %v4338 = vsub.f32 %v4311, %v4337
        %v4339 = vand.u32 %v4338, 4294901760
        %v4340 = vsub.f32 %v4338, %v4339
        %v4341 = vand.u32 %v4340, 4294901760
        %4342 = vmatmul.f32.gmra.mxu0 %v4341
        %v4343 = vpop.f32.mrf.mxu0
        %v4344 = vadd.f32 %v3535, %v4343
        %4345 = vdwg.mxu0
        %4346 = vmatpush.xpose.msra.mxu0 0.0
        %4347 = vmatpush.xpose.msra.mxu0 0.0
        %4348 = vmatpush.xpose.msra.mxu0 0.0
        %4349 = vmatpush.xpose.msra.mxu0 0.0
        %4350 = vmatpush.xpose.msra.mxu0 0.0
        %4351 = vmatpush.xpose.msra.mxu0 0.0
        %4352 = vmatpush.xpose.msra.mxu0 0.0
        %4353 = vmatpush.xpose.msra.mxu0 0.0
        %4354 = vmatpush.xpose.msra.mxu0 0.0
        %4355 = vmatpush.xpose.msra.mxu0 0.0
        %4356 = vmatpush.xpose.msra.mxu0 0.0
        %4357 = vmatpush.xpose.msra.mxu0 0.0
        %4358 = vmatpush.xpose.msra.mxu0 0.0
        %4359 = vmatpush.xpose.msra.mxu0 0.0
        %v4360 = vand.u32 %v4317, 4294901760
        %v4361 = vsub.f32 %v4317, %v4360
        %v4362 = vand.u32 %v4361, 4294901760
        %v4363 = vsub.f32 %v4361, %v4362
        %v4364 = vand.u32 %v4363, 4294901760
        %4365 = vmatpush.xpose.msra.mxu0 %v4364
        %v4366 = vand.u32 %v4314, 4294901760
        %v4367 = vsub.f32 %v4314, %v4366
        %v4368 = vand.u32 %v4367, 4294901760
        %v4369 = vsub.f32 %v4367, %v4368
        %v4370 = vand.u32 %v4369, 4294901760
        %4371 = vmatpush.xpose.msra.mxu0 %v4370
        %v4372 = vand.u32 %v4311, 4294901760
        %4373 = vmatmul.f32.gmra.mxu0 %v4372
        %v4374 = vpop.f32.mrf.mxu0
        %v4375 = vadd.f32 %v4344, %v4374
        %4376 = vdwg.mxu0
        %4377 = vmatpush.xpose.msra.mxu0 0.0
        %4378 = vmatpush.xpose.msra.mxu0 0.0
        %4379 = vmatpush.xpose.msra.mxu0 0.0
        %4380 = vmatpush.xpose.msra.mxu0 0.0
        %4381 = vmatpush.xpose.msra.mxu0 0.0
        %4382 = vmatpush.xpose.msra.mxu0 0.0
        %4383 = vmatpush.xpose.msra.mxu0 0.0
        %4384 = vmatpush.xpose.msra.mxu0 0.0
        %4385 = vmatpush.xpose.msra.mxu0 0.0
        %4386 = vmatpush.xpose.msra.mxu0 0.0
        %4387 = vmatpush.xpose.msra.mxu0 0.0
        %4388 = vmatpush.xpose.msra.mxu0 0.0
        %4389 = vmatpush.xpose.msra.mxu0 0.0
        %4390 = vmatpush.xpose.msra.mxu0 0.0
        %v4391 = vand.u32 %v4317, 4294901760
        %v4392 = vsub.f32 %v4317, %v4391
        %4393 = vmatpush.xpose.msra.mxu0 %v4392
        %v4394 = vand.u32 %v4314, 4294901760
        %v4395 = vsub.f32 %v4314, %v4394
        %4396 = vmatpush.xpose.msra.mxu0 %v4395
        %v4397 = vand.u32 %v4311, 4294901760
        %v4398 = vsub.f32 %v4311, %v4397
        %4399 = vmatmul.f32.gmra.mxu0 %v4398
        %v4400 = vpop.f32.mrf.mxu0
        %v4401 = vadd.f32 %v4375, %v4400
        %4402 = vdwg.mxu0
        %4403 = vmatpush.xpose.msra.mxu0 0.0
        %4404 = vmatpush.xpose.msra.mxu0 0.0
        %4405 = vmatpush.xpose.msra.mxu0 0.0
        %4406 = vmatpush.xpose.msra.mxu0 0.0
        %4407 = vmatpush.xpose.msra.mxu0 0.0
        %4408 = vmatpush.xpose.msra.mxu0 0.0
        %4409 = vmatpush.xpose.msra.mxu0 0.0
        %4410 = vmatpush.xpose.msra.mxu0 0.0
        %4411 = vmatpush.xpose.msra.mxu0 0.0
        %4412 = vmatpush.xpose.msra.mxu0 0.0
        %4413 = vmatpush.xpose.msra.mxu0 0.0
        %4414 = vmatpush.xpose.msra.mxu0 0.0
        %4415 = vmatpush.xpose.msra.mxu0 0.0
        %4416 = vmatpush.xpose.msra.mxu0 0.0
        %v4417 = vand.u32 %v4317, 4294901760
        %4418 = vmatpush.xpose.msra.mxu0 %v4417
        %v4419 = vand.u32 %v4314, 4294901760
        %4420 = vmatpush.xpose.msra.mxu0 %v4419
        %v4421 = vand.u32 %v4311, 4294901760
        %v4422 = vsub.f32 %v4311, %v4421
        %v4423 = vand.u32 %v4422, 4294901760
        %4424 = vmatmul.f32.gmra.mxu0 %v4423
        %v4425 = vpop.f32.mrf.mxu0
        %v4426 = vadd.f32 %v4401, %v4425
        %4427 = vdwg.mxu0
        %4428 = vmatpush.xpose.msra.mxu0 0.0
        %4429 = vmatpush.xpose.msra.mxu0 0.0
        %4430 = vmatpush.xpose.msra.mxu0 0.0
        %4431 = vmatpush.xpose.msra.mxu0 0.0
        %4432 = vmatpush.xpose.msra.mxu0 0.0
        %4433 = vmatpush.xpose.msra.mxu0 0.0
        %4434 = vmatpush.xpose.msra.mxu0 0.0
        %4435 = vmatpush.xpose.msra.mxu0 0.0
        %4436 = vmatpush.xpose.msra.mxu0 0.0
        %4437 = vmatpush.xpose.msra.mxu0 0.0
        %4438 = vmatpush.xpose.msra.mxu0 0.0
        %4439 = vmatpush.xpose.msra.mxu0 0.0
        %4440 = vmatpush.xpose.msra.mxu0 0.0
        %4441 = vmatpush.xpose.msra.mxu0 0.0
        %v4442 = vand.u32 %v4317, 4294901760
        %v4443 = vsub.f32 %v4317, %v4442
        %v4444 = vand.u32 %v4443, 4294901760
        %4445 = vmatpush.xpose.msra.mxu0 %v4444
        %v4446 = vand.u32 %v4314, 4294901760
        %v4447 = vsub.f32 %v4314, %v4446
        %v4448 = vand.u32 %v4447, 4294901760
        %4449 = vmatpush.xpose.msra.mxu0 %v4448
        %v4450 = vand.u32 %v4311, 4294901760
        %4451 = vmatmul.f32.gmra.mxu0 %v4450
        %v4452 = vpop.f32.mrf.mxu0
        %v4453 = vadd.f32 %v4426, %v4452
        %4454 = vdwg.mxu0
        %4455 = vmatpush.xpose.msra.mxu0 0.0
        %4456 = vmatpush.xpose.msra.mxu0 0.0
        %4457 = vmatpush.xpose.msra.mxu0 0.0
        %4458 = vmatpush.xpose.msra.mxu0 0.0
        %4459 = vmatpush.xpose.msra.mxu0 0.0
        %4460 = vmatpush.xpose.msra.mxu0 0.0
        %4461 = vmatpush.xpose.msra.mxu0 0.0
        %4462 = vmatpush.xpose.msra.mxu0 0.0
        %4463 = vmatpush.xpose.msra.mxu0 0.0
        %4464 = vmatpush.xpose.msra.mxu0 0.0
        %4465 = vmatpush.xpose.msra.mxu0 0.0
        %4466 = vmatpush.xpose.msra.mxu0 0.0
        %4467 = vmatpush.xpose.msra.mxu0 0.0
        %4468 = vmatpush.xpose.msra.mxu0 0.0
        %v4469 = vand.u32 %v4317, 4294901760
        %4470 = vmatpush.xpose.msra.mxu0 %v4469
        %v4471 = vand.u32 %v4314, 4294901760
        %4472 = vmatpush.xpose.msra.mxu0 %v4471
        %v4473 = vand.u32 %v4311, 4294901760
        %4474 = vmatmul.f32.gmra.mxu0 %v4473
        %v4475 = vpop.f32.mrf.mxu0
        %v4476 = vadd.f32 %v4453, %v4475
        %4477 = vdwg.mxu0
        %v4479 = vsel %vm1483, %v3655, 0
        %v4482 = vsel %vm1483, %v3841, 0
        %v4485 = vsel %vm1483, %v3895, 0
        %4487 = vmatpush.xpose.msra.mxu0 0.0
        %4488 = vmatpush.xpose.msra.mxu0 0.0
        %4489 = vmatpush.xpose.msra.mxu0 0.0
        %4490 = vmatpush.xpose.msra.mxu0 0.0
        %4491 = vmatpush.xpose.msra.mxu0 0.0
        %4492 = vmatpush.xpose.msra.mxu0 0.0
        %4493 = vmatpush.xpose.msra.mxu0 0.0
        %4494 = vmatpush.xpose.msra.mxu0 0.0
        %4495 = vmatpush.xpose.msra.mxu0 0.0
        %4496 = vmatpush.xpose.msra.mxu0 0.0
        %4497 = vmatpush.xpose.msra.mxu0 0.0
        %4498 = vmatpush.xpose.msra.mxu0 0.0
        %4499 = vmatpush.xpose.msra.mxu0 0.0
        %4500 = vmatpush.xpose.msra.mxu0 0.0
        %v4501 = vand.u32 %v4485, 4294901760
        %4502 = vmatpush.xpose.msra.mxu0 %v4501
        %v4503 = vand.u32 %v4482, 4294901760
        %4504 = vmatpush.xpose.msra.mxu0 %v4503
        %v4505 = vand.u32 %v4479, 4294901760
        %v4506 = vsub.f32 %v4479, %v4505
        %v4507 = vand.u32 %v4506, 4294901760
        %v4508 = vsub.f32 %v4506, %v4507
        %v4509 = vand.u32 %v4508, 4294901760
        %4510 = vmatmul.f32.gmra.mxu0 %v4509
        %v4511 = vpop.f32.mrf.mxu0
        %v4512 = vadd.f32 %v3536, %v4511
        %4513 = vdwg.mxu0
        %4514 = vmatpush.xpose.msra.mxu0 0.0
        %4515 = vmatpush.xpose.msra.mxu0 0.0
        %4516 = vmatpush.xpose.msra.mxu0 0.0
        %4517 = vmatpush.xpose.msra.mxu0 0.0
        %4518 = vmatpush.xpose.msra.mxu0 0.0
        %4519 = vmatpush.xpose.msra.mxu0 0.0
        %4520 = vmatpush.xpose.msra.mxu0 0.0
        %4521 = vmatpush.xpose.msra.mxu0 0.0
        %4522 = vmatpush.xpose.msra.mxu0 0.0
        %4523 = vmatpush.xpose.msra.mxu0 0.0
        %4524 = vmatpush.xpose.msra.mxu0 0.0
        %4525 = vmatpush.xpose.msra.mxu0 0.0
        %4526 = vmatpush.xpose.msra.mxu0 0.0
        %4527 = vmatpush.xpose.msra.mxu0 0.0
        %v4528 = vand.u32 %v4485, 4294901760
        %v4529 = vsub.f32 %v4485, %v4528
        %v4530 = vand.u32 %v4529, 4294901760
        %v4531 = vsub.f32 %v4529, %v4530
        %v4532 = vand.u32 %v4531, 4294901760
        %4533 = vmatpush.xpose.msra.mxu0 %v4532
        %v4534 = vand.u32 %v4482, 4294901760
        %v4535 = vsub.f32 %v4482, %v4534
        %v4536 = vand.u32 %v4535, 4294901760
        %v4537 = vsub.f32 %v4535, %v4536
        %v4538 = vand.u32 %v4537, 4294901760
        %4539 = vmatpush.xpose.msra.mxu0 %v4538
        %v4540 = vand.u32 %v4479, 4294901760
        %4541 = vmatmul.f32.gmra.mxu0 %v4540
        %v4542 = vpop.f32.mrf.mxu0
        %v4543 = vadd.f32 %v4512, %v4542
        %4544 = vdwg.mxu0
        %4545 = vmatpush.xpose.msra.mxu0 0.0
        %4546 = vmatpush.xpose.msra.mxu0 0.0
        %4547 = vmatpush.xpose.msra.mxu0 0.0
        %4548 = vmatpush.xpose.msra.mxu0 0.0
        %4549 = vmatpush.xpose.msra.mxu0 0.0
        %4550 = vmatpush.xpose.msra.mxu0 0.0
        %4551 = vmatpush.xpose.msra.mxu0 0.0
        %4552 = vmatpush.xpose.msra.mxu0 0.0
        %4553 = vmatpush.xpose.msra.mxu0 0.0
        %4554 = vmatpush.xpose.msra.mxu0 0.0
        %4555 = vmatpush.xpose.msra.mxu0 0.0
        %4556 = vmatpush.xpose.msra.mxu0 0.0
        %4557 = vmatpush.xpose.msra.mxu0 0.0
        %4558 = vmatpush.xpose.msra.mxu0 0.0
        %v4559 = vand.u32 %v4485, 4294901760
        %v4560 = vsub.f32 %v4485, %v4559
        %4561 = vmatpush.xpose.msra.mxu0 %v4560
        %v4562 = vand.u32 %v4482, 4294901760
        %v4563 = vsub.f32 %v4482, %v4562
        %4564 = vmatpush.xpose.msra.mxu0 %v4563
        %v4565 = vand.u32 %v4479, 4294901760
        %v4566 = vsub.f32 %v4479, %v4565
        %4567 = vmatmul.f32.gmra.mxu0 %v4566
        %v4568 = vpop.f32.mrf.mxu0
        %v4569 = vadd.f32 %v4543, %v4568
        %4570 = vdwg.mxu0
        %4571 = vmatpush.xpose.msra.mxu0 0.0
        %4572 = vmatpush.xpose.msra.mxu0 0.0
        %4573 = vmatpush.xpose.msra.mxu0 0.0
        %4574 = vmatpush.xpose.msra.mxu0 0.0
        %4575 = vmatpush.xpose.msra.mxu0 0.0
        %4576 = vmatpush.xpose.msra.mxu0 0.0
        %4577 = vmatpush.xpose.msra.mxu0 0.0
        %4578 = vmatpush.xpose.msra.mxu0 0.0
        %4579 = vmatpush.xpose.msra.mxu0 0.0
        %4580 = vmatpush.xpose.msra.mxu0 0.0
        %4581 = vmatpush.xpose.msra.mxu0 0.0
        %4582 = vmatpush.xpose.msra.mxu0 0.0
        %4583 = vmatpush.xpose.msra.mxu0 0.0
        %4584 = vmatpush.xpose.msra.mxu0 0.0
        %v4585 = vand.u32 %v4485, 4294901760
        %4586 = vmatpush.xpose.msra.mxu0 %v4585
        %v4587 = vand.u32 %v4482, 4294901760
        %4588 = vmatpush.xpose.msra.mxu0 %v4587
        %v4589 = vand.u32 %v4479, 4294901760
        %v4590 = vsub.f32 %v4479, %v4589
        %v4591 = vand.u32 %v4590, 4294901760
        %4592 = vmatmul.f32.gmra.mxu0 %v4591
        %v4593 = vpop.f32.mrf.mxu0
        %v4594 = vadd.f32 %v4569, %v4593
        %4595 = vdwg.mxu0
        %4596 = vmatpush.xpose.msra.mxu0 0.0
        %4597 = vmatpush.xpose.msra.mxu0 0.0
        %4598 = vmatpush.xpose.msra.mxu0 0.0
        %4599 = vmatpush.xpose.msra.mxu0 0.0
        %4600 = vmatpush.xpose.msra.mxu0 0.0
        %4601 = vmatpush.xpose.msra.mxu0 0.0
        %4602 = vmatpush.xpose.msra.mxu0 0.0
        %4603 = vmatpush.xpose.msra.mxu0 0.0
        %4604 = vmatpush.xpose.msra.mxu0 0.0
        %4605 = vmatpush.xpose.msra.mxu0 0.0
        %4606 = vmatpush.xpose.msra.mxu0 0.0
        %4607 = vmatpush.xpose.msra.mxu0 0.0
        %4608 = vmatpush.xpose.msra.mxu0 0.0
        %4609 = vmatpush.xpose.msra.mxu0 0.0
        %v4610 = vand.u32 %v4485, 4294901760
        %v4611 = vsub.f32 %v4485, %v4610
        %v4612 = vand.u32 %v4611, 4294901760
        %4613 = vmatpush.xpose.msra.mxu0 %v4612
        %v4614 = vand.u32 %v4482, 4294901760
        %v4615 = vsub.f32 %v4482, %v4614
        %v4616 = vand.u32 %v4615, 4294901760
        %4617 = vmatpush.xpose.msra.mxu0 %v4616
        %v4618 = vand.u32 %v4479, 4294901760
        %4619 = vmatmul.f32.gmra.mxu0 %v4618
        %v4620 = vpop.f32.mrf.mxu0
        %v4621 = vadd.f32 %v4594, %v4620
        %4622 = vdwg.mxu0
        %4623 = vmatpush.xpose.msra.mxu0 0.0
        %4624 = vmatpush.xpose.msra.mxu0 0.0
        %4625 = vmatpush.xpose.msra.mxu0 0.0
        %4626 = vmatpush.xpose.msra.mxu0 0.0
        %4627 = vmatpush.xpose.msra.mxu0 0.0
        %4628 = vmatpush.xpose.msra.mxu0 0.0
        %4629 = vmatpush.xpose.msra.mxu0 0.0
        %4630 = vmatpush.xpose.msra.mxu0 0.0
        %4631 = vmatpush.xpose.msra.mxu0 0.0
        %4632 = vmatpush.xpose.msra.mxu0 0.0
        %4633 = vmatpush.xpose.msra.mxu0 0.0
        %4634 = vmatpush.xpose.msra.mxu0 0.0
        %4635 = vmatpush.xpose.msra.mxu0 0.0
        %4636 = vmatpush.xpose.msra.mxu0 0.0
        %v4637 = vand.u32 %v4485, 4294901760
        %4638 = vmatpush.xpose.msra.mxu0 %v4637
        %v4639 = vand.u32 %v4482, 4294901760
        %4640 = vmatpush.xpose.msra.mxu0 %v4639
        %v4641 = vand.u32 %v4479, 4294901760
        %4642 = vmatmul.f32.gmra.mxu0 %v4641
        %v4643 = vpop.f32.mrf.mxu0
        %v4644 = vadd.f32 %v4621, %v4643
        %4645 = vdwg.mxu0
        %v4647 = vsel %vm1483, %v3657, 0
        %v4650 = vsel %vm1483, %v3843, 0
        %v4653 = vsel %vm1483, %v3897, 0
        %4655 = vmatpush.xpose.msra.mxu0 0.0
        %4656 = vmatpush.xpose.msra.mxu0 0.0
        %4657 = vmatpush.xpose.msra.mxu0 0.0
        %4658 = vmatpush.xpose.msra.mxu0 0.0
        %4659 = vmatpush.xpose.msra.mxu0 0.0
        %4660 = vmatpush.xpose.msra.mxu0 0.0
        %4661 = vmatpush.xpose.msra.mxu0 0.0
        %4662 = vmatpush.xpose.msra.mxu0 0.0
        %4663 = vmatpush.xpose.msra.mxu0 0.0
        %4664 = vmatpush.xpose.msra.mxu0 0.0
        %4665 = vmatpush.xpose.msra.mxu0 0.0
        %4666 = vmatpush.xpose.msra.mxu0 0.0
        %4667 = vmatpush.xpose.msra.mxu0 0.0
        %4668 = vmatpush.xpose.msra.mxu0 0.0
        %v4669 = vand.u32 %v4653, 4294901760
        %4670 = vmatpush.xpose.msra.mxu0 %v4669
        %v4671 = vand.u32 %v4650, 4294901760
        %4672 = vmatpush.xpose.msra.mxu0 %v4671
        %v4673 = vand.u32 %v4647, 4294901760
        %v4674 = vsub.f32 %v4647, %v4673
        %v4675 = vand.u32 %v4674, 4294901760
        %v4676 = vsub.f32 %v4674, %v4675
        %v4677 = vand.u32 %v4676, 4294901760
        %4678 = vmatmul.f32.gmra.mxu0 %v4677
        %v4679 = vpop.f32.mrf.mxu0
        %v4680 = vadd.f32 %v3537, %v4679
        %4681 = vdwg.mxu0
        %4682 = vmatpush.xpose.msra.mxu0 0.0
        %4683 = vmatpush.xpose.msra.mxu0 0.0
        %4684 = vmatpush.xpose.msra.mxu0 0.0
        %4685 = vmatpush.xpose.msra.mxu0 0.0
        %4686 = vmatpush.xpose.msra.mxu0 0.0
        %4687 = vmatpush.xpose.msra.mxu0 0.0
        %4688 = vmatpush.xpose.msra.mxu0 0.0
        %4689 = vmatpush.xpose.msra.mxu0 0.0
        %4690 = vmatpush.xpose.msra.mxu0 0.0
        %4691 = vmatpush.xpose.msra.mxu0 0.0
        %4692 = vmatpush.xpose.msra.mxu0 0.0
        %4693 = vmatpush.xpose.msra.mxu0 0.0
        %4694 = vmatpush.xpose.msra.mxu0 0.0
        %4695 = vmatpush.xpose.msra.mxu0 0.0
        %v4696 = vand.u32 %v4653, 4294901760
        %v4697 = vsub.f32 %v4653, %v4696
        %v4698 = vand.u32 %v4697, 4294901760
        %v4699 = vsub.f32 %v4697, %v4698
        %v4700 = vand.u32 %v4699, 4294901760
        %4701 = vmatpush.xpose.msra.mxu0 %v4700
        %v4702 = vand.u32 %v4650, 4294901760
        %v4703 = vsub.f32 %v4650, %v4702
        %v4704 = vand.u32 %v4703, 4294901760
        %v4705 = vsub.f32 %v4703, %v4704
        %v4706 = vand.u32 %v4705, 4294901760
        %4707 = vmatpush.xpose.msra.mxu0 %v4706
        %v4708 = vand.u32 %v4647, 4294901760
        %4709 = vmatmul.f32.gmra.mxu0 %v4708
        %v4710 = vpop.f32.mrf.mxu0
        %v4711 = vadd.f32 %v4680, %v4710
        %4712 = vdwg.mxu0
        %4713 = vmatpush.xpose.msra.mxu0 0.0
        %4714 = vmatpush.xpose.msra.mxu0 0.0
        %4715 = vmatpush.xpose.msra.mxu0 0.0
        %4716 = vmatpush.xpose.msra.mxu0 0.0
        %4717 = vmatpush.xpose.msra.mxu0 0.0
        %4718 = vmatpush.xpose.msra.mxu0 0.0
        %4719 = vmatpush.xpose.msra.mxu0 0.0
        %4720 = vmatpush.xpose.msra.mxu0 0.0
        %4721 = vmatpush.xpose.msra.mxu0 0.0
        %4722 = vmatpush.xpose.msra.mxu0 0.0
        %4723 = vmatpush.xpose.msra.mxu0 0.0
        %4724 = vmatpush.xpose.msra.mxu0 0.0
        %4725 = vmatpush.xpose.msra.mxu0 0.0
        %4726 = vmatpush.xpose.msra.mxu0 0.0
        %v4727 = vand.u32 %v4653, 4294901760
        %v4728 = vsub.f32 %v4653, %v4727
        %4729 = vmatpush.xpose.msra.mxu0 %v4728
        %v4730 = vand.u32 %v4650, 4294901760
        %v4731 = vsub.f32 %v4650, %v4730
        %4732 = vmatpush.xpose.msra.mxu0 %v4731
        %v4733 = vand.u32 %v4647, 4294901760
        %v4734 = vsub.f32 %v4647, %v4733
        %4735 = vmatmul.f32.gmra.mxu0 %v4734
        %v4736 = vpop.f32.mrf.mxu0
        %v4737 = vadd.f32 %v4711, %v4736
        %4738 = vdwg.mxu0
        %4739 = vmatpush.xpose.msra.mxu0 0.0
        %4740 = vmatpush.xpose.msra.mxu0 0.0
        %4741 = vmatpush.xpose.msra.mxu0 0.0
        %4742 = vmatpush.xpose.msra.mxu0 0.0
        %4743 = vmatpush.xpose.msra.mxu0 0.0
        %4744 = vmatpush.xpose.msra.mxu0 0.0
        %4745 = vmatpush.xpose.msra.mxu0 0.0
        %4746 = vmatpush.xpose.msra.mxu0 0.0
        %4747 = vmatpush.xpose.msra.mxu0 0.0
        %4748 = vmatpush.xpose.msra.mxu0 0.0
        %4749 = vmatpush.xpose.msra.mxu0 0.0
        %4750 = vmatpush.xpose.msra.mxu0 0.0
        %4751 = vmatpush.xpose.msra.mxu0 0.0
        %4752 = vmatpush.xpose.msra.mxu0 0.0
        %v4753 = vand.u32 %v4653, 4294901760
        %4754 = vmatpush.xpose.msra.mxu0 %v4753
        %v4755 = vand.u32 %v4650, 4294901760
        %4756 = vmatpush.xpose.msra.mxu0 %v4755
        %v4757 = vand.u32 %v4647, 4294901760
        %v4758 = vsub.f32 %v4647, %v4757
        %v4759 = vand.u32 %v4758, 4294901760
        %4760 = vmatmul.f32.gmra.mxu0 %v4759
        %v4761 = vpop.f32.mrf.mxu0
        %v4762 = vadd.f32 %v4737, %v4761
        %4763 = vdwg.mxu0
        %4764 = vmatpush.xpose.msra.mxu0 0.0
        %4765 = vmatpush.xpose.msra.mxu0 0.0
        %4766 = vmatpush.xpose.msra.mxu0 0.0
        %4767 = vmatpush.xpose.msra.mxu0 0.0
        %4768 = vmatpush.xpose.msra.mxu0 0.0
        %4769 = vmatpush.xpose.msra.mxu0 0.0
        %4770 = vmatpush.xpose.msra.mxu0 0.0
        %4771 = vmatpush.xpose.msra.mxu0 0.0
        %4772 = vmatpush.xpose.msra.mxu0 0.0
        %4773 = vmatpush.xpose.msra.mxu0 0.0
        %4774 = vmatpush.xpose.msra.mxu0 0.0
        %4775 = vmatpush.xpose.msra.mxu0 0.0
        %4776 = vmatpush.xpose.msra.mxu0 0.0
        %4777 = vmatpush.xpose.msra.mxu0 0.0
        %v4778 = vand.u32 %v4653, 4294901760
        %v4779 = vsub.f32 %v4653, %v4778
        %v4780 = vand.u32 %v4779, 4294901760
        %4781 = vmatpush.xpose.msra.mxu0 %v4780
        %v4782 = vand.u32 %v4650, 4294901760
        %v4783 = vsub.f32 %v4650, %v4782
        %v4784 = vand.u32 %v4783, 4294901760
        %4785 = vmatpush.xpose.msra.mxu0 %v4784
        %v4786 = vand.u32 %v4647, 4294901760
        %4787 = vmatmul.f32.gmra.mxu0 %v4786
        %v4788 = vpop.f32.mrf.mxu0
        %v4789 = vadd.f32 %v4762, %v4788
        %4790 = vdwg.mxu0
        %4791 = vmatpush.xpose.msra.mxu0 0.0
        %4792 = vmatpush.xpose.msra.mxu0 0.0
        %4793 = vmatpush.xpose.msra.mxu0 0.0
        %4794 = vmatpush.xpose.msra.mxu0 0.0
        %4795 = vmatpush.xpose.msra.mxu0 0.0
        %4796 = vmatpush.xpose.msra.mxu0 0.0
        %4797 = vmatpush.xpose.msra.mxu0 0.0
        %4798 = vmatpush.xpose.msra.mxu0 0.0
        %4799 = vmatpush.xpose.msra.mxu0 0.0
        %4800 = vmatpush.xpose.msra.mxu0 0.0
        %4801 = vmatpush.xpose.msra.mxu0 0.0
        %4802 = vmatpush.xpose.msra.mxu0 0.0
        %4803 = vmatpush.xpose.msra.mxu0 0.0
        %4804 = vmatpush.xpose.msra.mxu0 0.0
        %v4805 = vand.u32 %v4653, 4294901760
        %4806 = vmatpush.xpose.msra.mxu0 %v4805
        %v4807 = vand.u32 %v4650, 4294901760
        %4808 = vmatpush.xpose.msra.mxu0 %v4807
        %v4809 = vand.u32 %v4647, 4294901760
        %4810 = vmatmul.f32.gmra.mxu0 %v4809
        %v4811 = vpop.f32.mrf.mxu0
        %v4812 = vadd.f32 %v4789, %v4811
        %4813 = vdwg.mxu0
        %v4814 = vsel %vm2867, %v4308, -inf
        %4815 = vmax.xlane.f32.xlu0 %v4814
        %v4816 = vpop.xlane.xlu0 %4815
        %v4817 = vsel %vm2867, %v4476, -inf
        %4818 = vmax.xlane.f32.xlu0 %v4817
        %v4819 = vpop.xlane.xlu0 %4818
        %v4820 = vsel %vm2867, %v4644, -inf
        %4821 = vmax.xlane.f32.xlu0 %v4820
        %v4822 = vpop.xlane.xlu0 %4821
        %v4823 = vsel %vm2867, %v4812, -inf
        %4824 = vmax.xlane.f32.xlu0 %v4823
        %v4825 = vpop.xlane.xlu0 %4824
        %v4826 = vsub.f32 %v4308, %v4816
        %v4827 = vsub.f32 %v4476, %v4819
        %v4828 = vsub.f32 %v4644, %v4822
        %v4829 = vsub.f32 %v4812, %v4825
        %v4830 = vmul.f32 %v4826, 1.442695
        %v4831 = vpow.pop %v4830
        %v4832 = vmul.f32 %v4827, 1.442695
        %v4833 = vpow.pop %v4832
        %v4834 = vmul.f32 %v4828, 1.442695
        %v4835 = vpow.pop %v4834
        %v4836 = vmul.f32 %v4829, 1.442695
        %v4837 = vpow.pop %v4836
        %v4838 = vsel %vm2867, %v4831, 0.0
        %4839 = vadd.xlane.f32.xlu0 %v4838
        %v4840 = vpop.xlane.xlu0 %4839
        %v4841 = vsel %vm2867, %v4833, 0.0
        %4842 = vadd.xlane.f32.xlu0 %v4841
        %v4843 = vpop.xlane.xlu0 %4842
        %v4844 = vsel %vm2867, %v4835, 0.0
        %4845 = vadd.xlane.f32.xlu0 %v4844
        %v4846 = vpop.xlane.xlu0 %4845
        %v4847 = vsel %vm2867, %v4837, 0.0
        %4848 = vadd.xlane.f32.xlu0 %v4847
        %v4849 = vpop.xlane.xlu0 %4848
        %v4850 = vrcp.pop %v4840
        %v4851 = vrcp.pop %v4843
        %v4852 = vrcp.pop %v4846
        %v4853 = vrcp.pop %v4849
        %v4854 = vmul.f32 %v4840, %v4850
        %v4855 = vmul.f32 %v4843, %v4851
        %v4856 = vmul.f32 %v4846, %v4852
        %v4857 = vmul.f32 %v4849, %v4853
        %v4858 = vsub.f32 2.0, %v4854
        %v4859 = vsub.f32 2.0, %v4855
        %v4860 = vsub.f32 2.0, %v4856
        %v4861 = vsub.f32 2.0, %v4857
        %v4862 = vmul.f32 %v4850, %v4858
        %v4863 = vmul.f32 %v4851, %v4859
        %v4864 = vmul.f32 %v4852, %v4860
        %v4865 = vmul.f32 %v4853, %v4861
        %v4866 = vmul.f32 %v4831, %v4862
        %v4867 = vmul.f32 %v4833, %v4863
        %v4868 = vmul.f32 %v4835, %v4864
        %v4869 = vmul.f32 %v4837, %v4865
        %v4871 = vsel %vm2867, %v4866, 0
        %4873 = vmatpush.msra.mxu0 0.0
        %4874 = vmatpush.msra.mxu0 0.0
        %4875 = vmatpush.msra.mxu0 0.0
        %4876 = vmatpush.msra.mxu0 0.0
        %4877 = vmatpush.msra.mxu0 0.0
        %4878 = vmatpush.msra.mxu0 0.0
        %4879 = vmatpush.msra.mxu0 0.0
        %4880 = vmatpush.msra.mxu0 0.0
        %4881 = vmatpush.msra.mxu0 0.0
        %4882 = vmatpush.msra.mxu0 0.0
        %4883 = vmatpush.msra.mxu0 0.0
        %4884 = vmatpush.msra.mxu0 0.0
        %4885 = vmatpush.msra.mxu0 0.0
        %4886 = vmatpush.msra.mxu0 0.0
        %v4887 = vand.u32 %v4135, 4294901760
        %4888 = vmatpush.msra.mxu0 %v4887
        %v4889 = vand.u32 %v4081, 4294901760
        %4890 = vmatpush.msra.mxu0 %v4889
        %v4891 = vand.u32 %v4871, 4294901760
        %v4892 = vsub.f32 %v4871, %v4891
        %v4893 = vand.u32 %v4892, 4294901760
        %v4894 = vsub.f32 %v4892, %v4893
        %v4895 = vand.u32 %v4894, 4294901760
        %4896 = vmatmul.f32.gmra.mxu0 %v4895
        %v4897 = vpop.f32.mrf.mxu0
        %v4898 = vadd.f32 0.0, %v4897
        %4899 = vdwg.mxu0
        %4900 = vmatpush.msra.mxu0 0.0
        %4901 = vmatpush.msra.mxu0 0.0
        %4902 = vmatpush.msra.mxu0 0.0
        %4903 = vmatpush.msra.mxu0 0.0
        %4904 = vmatpush.msra.mxu0 0.0
        %4905 = vmatpush.msra.mxu0 0.0
        %4906 = vmatpush.msra.mxu0 0.0
        %4907 = vmatpush.msra.mxu0 0.0
        %4908 = vmatpush.msra.mxu0 0.0
        %4909 = vmatpush.msra.mxu0 0.0
        %4910 = vmatpush.msra.mxu0 0.0
        %4911 = vmatpush.msra.mxu0 0.0
        %4912 = vmatpush.msra.mxu0 0.0
        %4913 = vmatpush.msra.mxu0 0.0
        %v4914 = vand.u32 %v4135, 4294901760
        %v4915 = vsub.f32 %v4135, %v4914
        %v4916 = vand.u32 %v4915, 4294901760
        %v4917 = vsub.f32 %v4915, %v4916
        %v4918 = vand.u32 %v4917, 4294901760
        %4919 = vmatpush.msra.mxu0 %v4918
        %v4920 = vand.u32 %v4081, 4294901760
        %v4921 = vsub.f32 %v4081, %v4920
        %v4922 = vand.u32 %v4921, 4294901760
        %v4923 = vsub.f32 %v4921, %v4922
        %v4924 = vand.u32 %v4923, 4294901760
        %4925 = vmatpush.msra.mxu0 %v4924
        %v4926 = vand.u32 %v4871, 4294901760
        %4927 = vmatmul.f32.gmra.mxu0 %v4926
        %v4928 = vpop.f32.mrf.mxu0
        %v4929 = vadd.f32 %v4898, %v4928
        %4930 = vdwg.mxu0
        %4931 = vmatpush.msra.mxu0 0.0
        %4932 = vmatpush.msra.mxu0 0.0
        %4933 = vmatpush.msra.mxu0 0.0
        %4934 = vmatpush.msra.mxu0 0.0
        %4935 = vmatpush.msra.mxu0 0.0
        %4936 = vmatpush.msra.mxu0 0.0
        %4937 = vmatpush.msra.mxu0 0.0
        %4938 = vmatpush.msra.mxu0 0.0
        %4939 = vmatpush.msra.mxu0 0.0
        %4940 = vmatpush.msra.mxu0 0.0
        %4941 = vmatpush.msra.mxu0 0.0
        %4942 = vmatpush.msra.mxu0 0.0
        %4943 = vmatpush.msra.mxu0 0.0
        %4944 = vmatpush.msra.mxu0 0.0
        %v4945 = vand.u32 %v4135, 4294901760
        %v4946 = vsub.f32 %v4135, %v4945
        %4947 = vmatpush.msra.mxu0 %v4946
        %v4948 = vand.u32 %v4081, 4294901760
        %v4949 = vsub.f32 %v4081, %v4948
        %4950 = vmatpush.msra.mxu0 %v4949
        %v4951 = vand.u32 %v4871, 4294901760
        %v4952 = vsub.f32 %v4871, %v4951
        %4953 = vmatmul.f32.gmra.mxu0 %v4952
        %v4954 = vpop.f32.mrf.mxu0
        %v4955 = vadd.f32 %v4929, %v4954
        %4956 = vdwg.mxu0
        %4957 = vmatpush.msra.mxu0 0.0
        %4958 = vmatpush.msra.mxu0 0.0
        %4959 = vmatpush.msra.mxu0 0.0
        %4960 = vmatpush.msra.mxu0 0.0
        %4961 = vmatpush.msra.mxu0 0.0
        %4962 = vmatpush.msra.mxu0 0.0
        %4963 = vmatpush.msra.mxu0 0.0
        %4964 = vmatpush.msra.mxu0 0.0
        %4965 = vmatpush.msra.mxu0 0.0
        %4966 = vmatpush.msra.mxu0 0.0
        %4967 = vmatpush.msra.mxu0 0.0
        %4968 = vmatpush.msra.mxu0 0.0
        %4969 = vmatpush.msra.mxu0 0.0
        %4970 = vmatpush.msra.mxu0 0.0
        %v4971 = vand.u32 %v4135, 4294901760
        %4972 = vmatpush.msra.mxu0 %v4971
        %v4973 = vand.u32 %v4081, 4294901760
        %4974 = vmatpush.msra.mxu0 %v4973
        %v4975 = vand.u32 %v4871, 4294901760
        %v4976 = vsub.f32 %v4871, %v4975
        %v4977 = vand.u32 %v4976, 4294901760
        %4978 = vmatmul.f32.gmra.mxu0 %v4977
        %v4979 = vpop.f32.mrf.mxu0
        %v4980 = vadd.f32 %v4955, %v4979
        %4981 = vdwg.mxu0
        %4982 = vmatpush.msra.mxu0 0.0
        %4983 = vmatpush.msra.mxu0 0.0
        %4984 = vmatpush.msra.mxu0 0.0
        %4985 = vmatpush.msra.mxu0 0.0
        %4986 = vmatpush.msra.mxu0 0.0
        %4987 = vmatpush.msra.mxu0 0.0
        %4988 = vmatpush.msra.mxu0 0.0
        %4989 = vmatpush.msra.mxu0 0.0
        %4990 = vmatpush.msra.mxu0 0.0
        %4991 = vmatpush.msra.mxu0 0.0
        %4992 = vmatpush.msra.mxu0 0.0
        %4993 = vmatpush.msra.mxu0 0.0
        %4994 = vmatpush.msra.mxu0 0.0
        %4995 = vmatpush.msra.mxu0 0.0
        %v4996 = vand.u32 %v4135, 4294901760
        %v4997 = vsub.f32 %v4135, %v4996
        %v4998 = vand.u32 %v4997, 4294901760
        %4999 = vmatpush.msra.mxu0 %v4998
        %v5000 = vand.u32 %v4081, 4294901760
        %v5001 = vsub.f32 %v4081, %v5000
        %v5002 = vand.u32 %v5001, 4294901760
        %5003 = vmatpush.msra.mxu0 %v5002
        %v5004 = vand.u32 %v4871, 4294901760
        %5005 = vmatmul.f32.gmra.mxu0 %v5004
        %v5006 = vpop.f32.mrf.mxu0
        %v5007 = vadd.f32 %v4980, %v5006
        %5008 = vdwg.mxu0
        %5009 = vmatpush.msra.mxu0 0.0
        %5010 = vmatpush.msra.mxu0 0.0
        %5011 = vmatpush.msra.mxu0 0.0
        %5012 = vmatpush.msra.mxu0 0.0
        %5013 = vmatpush.msra.mxu0 0.0
        %5014 = vmatpush.msra.mxu0 0.0
        %5015 = vmatpush.msra.mxu0 0.0
        %5016 = vmatpush.msra.mxu0 0.0
        %5017 = vmatpush.msra.mxu0 0.0
        %5018 = vmatpush.msra.mxu0 0.0
        %5019 = vmatpush.msra.mxu0 0.0
        %5020 = vmatpush.msra.mxu0 0.0
        %5021 = vmatpush.msra.mxu0 0.0
        %5022 = vmatpush.msra.mxu0 0.0
        %v5023 = vand.u32 %v4135, 4294901760
        %5024 = vmatpush.msra.mxu0 %v5023
        %v5025 = vand.u32 %v4081, 4294901760
        %5026 = vmatpush.msra.mxu0 %v5025
        %v5027 = vand.u32 %v4871, 4294901760
        %5028 = vmatmul.f32.gmra.mxu0 %v5027
        %v5029 = vpop.f32.mrf.mxu0
        %v5030 = vadd.f32 %v5007, %v5029
        %5031 = vdwg.mxu0
        %v5033 = vsel %vm2867, %v4867, 0
        %5035 = vmatpush.msra.mxu0 0.0
        %5036 = vmatpush.msra.mxu0 0.0
        %5037 = vmatpush.msra.mxu0 0.0
        %5038 = vmatpush.msra.mxu0 0.0
        %5039 = vmatpush.msra.mxu0 0.0
        %5040 = vmatpush.msra.mxu0 0.0
        %5041 = vmatpush.msra.mxu0 0.0
        %5042 = vmatpush.msra.mxu0 0.0
        %5043 = vmatpush.msra.mxu0 0.0
        %5044 = vmatpush.msra.mxu0 0.0
        %5045 = vmatpush.msra.mxu0 0.0
        %5046 = vmatpush.msra.mxu0 0.0
        %5047 = vmatpush.msra.mxu0 0.0
        %5048 = vmatpush.msra.mxu0 0.0
        %v5049 = vand.u32 %v4137, 4294901760
        %5050 = vmatpush.msra.mxu0 %v5049
        %v5051 = vand.u32 %v4083, 4294901760
        %5052 = vmatpush.msra.mxu0 %v5051
        %v5053 = vand.u32 %v5033, 4294901760
        %v5054 = vsub.f32 %v5033, %v5053
        %v5055 = vand.u32 %v5054, 4294901760
        %v5056 = vsub.f32 %v5054, %v5055
        %v5057 = vand.u32 %v5056, 4294901760
        %5058 = vmatmul.f32.gmra.mxu0 %v5057
        %v5059 = vpop.f32.mrf.mxu0
        %v5060 = vadd.f32 0.0, %v5059
        %5061 = vdwg.mxu0
        %5062 = vmatpush.msra.mxu0 0.0
        %5063 = vmatpush.msra.mxu0 0.0
        %5064 = vmatpush.msra.mxu0 0.0
        %5065 = vmatpush.msra.mxu0 0.0
        %5066 = vmatpush.msra.mxu0 0.0
        %5067 = vmatpush.msra.mxu0 0.0
        %5068 = vmatpush.msra.mxu0 0.0
        %5069 = vmatpush.msra.mxu0 0.0
        %5070 = vmatpush.msra.mxu0 0.0
        %5071 = vmatpush.msra.mxu0 0.0
        %5072 = vmatpush.msra.mxu0 0.0
        %5073 = vmatpush.msra.mxu0 0.0
        %5074 = vmatpush.msra.mxu0 0.0
        %5075 = vmatpush.msra.mxu0 0.0
        %v5076 = vand.u32 %v4137, 4294901760
        %v5077 = vsub.f32 %v4137, %v5076
        %v5078 = vand.u32 %v5077, 4294901760
        %v5079 = vsub.f32 %v5077, %v5078
        %v5080 = vand.u32 %v5079, 4294901760
        %5081 = vmatpush.msra.mxu0 %v5080
        %v5082 = vand.u32 %v4083, 4294901760
        %v5083 = vsub.f32 %v4083, %v5082
        %v5084 = vand.u32 %v5083, 4294901760
        %v5085 = vsub.f32 %v5083, %v5084
        %v5086 = vand.u32 %v5085, 4294901760
        %5087 = vmatpush.msra.mxu0 %v5086
        %v5088 = vand.u32 %v5033, 4294901760
        %5089 = vmatmul.f32.gmra.mxu0 %v5088
        %v5090 = vpop.f32.mrf.mxu0
        %v5091 = vadd.f32 %v5060, %v5090
        %5092 = vdwg.mxu0
        %5093 = vmatpush.msra.mxu0 0.0
        %5094 = vmatpush.msra.mxu0 0.0
        %5095 = vmatpush.msra.mxu0 0.0
        %5096 = vmatpush.msra.mxu0 0.0
        %5097 = vmatpush.msra.mxu0 0.0
        %5098 = vmatpush.msra.mxu0 0.0
        %5099 = vmatpush.msra.mxu0 0.0
        %5100 = vmatpush.msra.mxu0 0.0
        %5101 = vmatpush.msra.mxu0 0.0
        %5102 = vmatpush.msra.mxu0 0.0
        %5103 = vmatpush.msra.mxu0 0.0
        %5104 = vmatpush.msra.mxu0 0.0
        %5105 = vmatpush.msra.mxu0 0.0
        %5106 = vmatpush.msra.mxu0 0.0
        %v5107 = vand.u32 %v4137, 4294901760
        %v5108 = vsub.f32 %v4137, %v5107
        %5109 = vmatpush.msra.mxu0 %v5108
        %v5110 = vand.u32 %v4083, 4294901760
        %v5111 = vsub.f32 %v4083, %v5110
        %5112 = vmatpush.msra.mxu0 %v5111
        %v5113 = vand.u32 %v5033, 4294901760
        %v5114 = vsub.f32 %v5033, %v5113
        %5115 = vmatmul.f32.gmra.mxu0 %v5114
        %v5116 = vpop.f32.mrf.mxu0
        %v5117 = vadd.f32 %v5091, %v5116
        %5118 = vdwg.mxu0
        %5119 = vmatpush.msra.mxu0 0.0
        %5120 = vmatpush.msra.mxu0 0.0
        %5121 = vmatpush.msra.mxu0 0.0
        %5122 = vmatpush.msra.mxu0 0.0
        %5123 = vmatpush.msra.mxu0 0.0
        %5124 = vmatpush.msra.mxu0 0.0
        %5125 = vmatpush.msra.mxu0 0.0
        %5126 = vmatpush.msra.mxu0 0.0
        %5127 = vmatpush.msra.mxu0 0.0
        %5128 = vmatpush.msra.mxu0 0.0
        %5129 = vmatpush.msra.mxu0 0.0
        %5130 = vmatpush.msra.mxu0 0.0
        %5131 = vmatpush.msra.mxu0 0.0
        %5132 = vmatpush.msra.mxu0 0.0
        %v5133 = vand.u32 %v4137, 4294901760
        %5134 = vmatpush.msra.mxu0 %v5133
        %v5135 = vand.u32 %v4083, 4294901760
        %5136 = vmatpush.msra.mxu0 %v5135
        %v5137 = vand.u32 %v5033, 4294901760
        %v5138 = vsub.f32 %v5033, %v5137
        %v5139 = vand.u32 %v5138, 4294901760
        %5140 = vmatmul.f32.gmra.mxu0 %v5139
        %v5141 = vpop.f32.mrf.mxu0
        %v5142 = vadd.f32 %v5117, %v5141
        %5143 = vdwg.mxu0
        %5144 = vmatpush.msra.mxu0 0.0
        %5145 = vmatpush.msra.mxu0 0.0
        %5146 = vmatpush.msra.mxu0 0.0
        %5147 = vmatpush.msra.mxu0 0.0
        %5148 = vmatpush.msra.mxu0 0.0
        %5149 = vmatpush.msra.mxu0 0.0
        %5150 = vmatpush.msra.mxu0 0.0
        %5151 = vmatpush.msra.mxu0 0.0
        %5152 = vmatpush.msra.mxu0 0.0
        %5153 = vmatpush.msra.mxu0 0.0
        %5154 = vmatpush.msra.mxu0 0.0
        %5155 = vmatpush.msra.mxu0 0.0
        %5156 = vmatpush.msra.mxu0 0.0
        %5157 = vmatpush.msra.mxu0 0.0
        %v5158 = vand.u32 %v4137, 4294901760
        %v5159 = vsub.f32 %v4137, %v5158
        %v5160 = vand.u32 %v5159, 4294901760
        %5161 = vmatpush.msra.mxu0 %v5160
        %v5162 = vand.u32 %v4083, 4294901760
        %v5163 = vsub.f32 %v4083, %v5162
        %v5164 = vand.u32 %v5163, 4294901760
        %5165 = vmatpush.msra.mxu0 %v5164
        %v5166 = vand.u32 %v5033, 4294901760
        %5167 = vmatmul.f32.gmra.mxu0 %v5166
        %v5168 = vpop.f32.mrf.mxu0
        %v5169 = vadd.f32 %v5142, %v5168
        %5170 = vdwg.mxu0
        %5171 = vmatpush.msra.mxu0 0.0
        %5172 = vmatpush.msra.mxu0 0.0
        %5173 = vmatpush.msra.mxu0 0.0
        %5174 = vmatpush.msra.mxu0 0.0
        %5175 = vmatpush.msra.mxu0 0.0
        %5176 = vmatpush.msra.mxu0 0.0
        %5177 = vmatpush.msra.mxu0 0.0
        %5178 = vmatpush.msra.mxu0 0.0
        %5179 = vmatpush.msra.mxu0 0.0
        %5180 = vmatpush.msra.mxu0 0.0
        %5181 = vmatpush.msra.mxu0 0.0
        %5182 = vmatpush.msra.mxu0 0.0
        %5183 = vmatpush.msra.mxu0 0.0
        %5184 = vmatpush.msra.mxu0 0.0
        %v5185 = vand.u32 %v4137, 4294901760
        %5186 = vmatpush.msra.mxu0 %v5185
        %v5187 = vand.u32 %v4083, 4294901760
        %5188 = vmatpush.msra.mxu0 %v5187
        %v5189 = vand.u32 %v5033, 4294901760
        %5190 = vmatmul.f32.gmra.mxu0 %v5189
        %v5191 = vpop.f32.mrf.mxu0
        %v5192 = vadd.f32 %v5169, %v5191
        %5193 = vdwg.mxu0
        %v5195 = vsel %vm2867, %v4868, 0
        %5197 = vmatpush.msra.mxu0 0.0
        %5198 = vmatpush.msra.mxu0 0.0
        %5199 = vmatpush.msra.mxu0 0.0
        %5200 = vmatpush.msra.mxu0 0.0
        %5201 = vmatpush.msra.mxu0 0.0
        %5202 = vmatpush.msra.mxu0 0.0
        %5203 = vmatpush.msra.mxu0 0.0
        %5204 = vmatpush.msra.mxu0 0.0
        %5205 = vmatpush.msra.mxu0 0.0
        %5206 = vmatpush.msra.mxu0 0.0
        %5207 = vmatpush.msra.mxu0 0.0
        %5208 = vmatpush.msra.mxu0 0.0
        %5209 = vmatpush.msra.mxu0 0.0
        %5210 = vmatpush.msra.mxu0 0.0
        %v5211 = vand.u32 %v4139, 4294901760
        %5212 = vmatpush.msra.mxu0 %v5211
        %v5213 = vand.u32 %v4085, 4294901760
        %5214 = vmatpush.msra.mxu0 %v5213
        %v5215 = vand.u32 %v5195, 4294901760
        %v5216 = vsub.f32 %v5195, %v5215
        %v5217 = vand.u32 %v5216, 4294901760
        %v5218 = vsub.f32 %v5216, %v5217
        %v5219 = vand.u32 %v5218, 4294901760
        %5220 = vmatmul.f32.gmra.mxu0 %v5219
        %v5221 = vpop.f32.mrf.mxu0
        %v5222 = vadd.f32 0.0, %v5221
        %5223 = vdwg.mxu0
        %5224 = vmatpush.msra.mxu0 0.0
        %5225 = vmatpush.msra.mxu0 0.0
        %5226 = vmatpush.msra.mxu0 0.0
        %5227 = vmatpush.msra.mxu0 0.0
        %5228 = vmatpush.msra.mxu0 0.0
        %5229 = vmatpush.msra.mxu0 0.0
        %5230 = vmatpush.msra.mxu0 0.0
        %5231 = vmatpush.msra.mxu0 0.0
        %5232 = vmatpush.msra.mxu0 0.0
        %5233 = vmatpush.msra.mxu0 0.0
        %5234 = vmatpush.msra.mxu0 0.0
        %5235 = vmatpush.msra.mxu0 0.0
        %5236 = vmatpush.msra.mxu0 0.0
        %5237 = vmatpush.msra.mxu0 0.0
        %v5238 = vand.u32 %v4139, 4294901760
        %v5239 = vsub.f32 %v4139, %v5238
        %v5240 = vand.u32 %v5239, 4294901760
        %v5241 = vsub.f32 %v5239, %v5240
        %v5242 = vand.u32 %v5241, 4294901760
        %5243 = vmatpush.msra.mxu0 %v5242
        %v5244 = vand.u32 %v4085, 4294901760
        %v5245 = vsub.f32 %v4085, %v5244
        %v5246 = vand.u32 %v5245, 4294901760
        %v5247 = vsub.f32 %v5245, %v5246
        %v5248 = vand.u32 %v5247, 4294901760
        %5249 = vmatpush.msra.mxu0 %v5248
        %v5250 = vand.u32 %v5195, 4294901760
        %5251 = vmatmul.f32.gmra.mxu0 %v5250
        %v5252 = vpop.f32.mrf.mxu0
        %v5253 = vadd.f32 %v5222, %v5252
        %5254 = vdwg.mxu0
        %5255 = vmatpush.msra.mxu0 0.0
        %5256 = vmatpush.msra.mxu0 0.0
        %5257 = vmatpush.msra.mxu0 0.0
        %5258 = vmatpush.msra.mxu0 0.0
        %5259 = vmatpush.msra.mxu0 0.0
        %5260 = vmatpush.msra.mxu0 0.0
        %5261 = vmatpush.msra.mxu0 0.0
        %5262 = vmatpush.msra.mxu0 0.0
        %5263 = vmatpush.msra.mxu0 0.0
        %5264 = vmatpush.msra.mxu0 0.0
        %5265 = vmatpush.msra.mxu0 0.0
        %5266 = vmatpush.msra.mxu0 0.0
        %5267 = vmatpush.msra.mxu0 0.0
        %5268 = vmatpush.msra.mxu0 0.0
        %v5269 = vand.u32 %v4139, 4294901760
        %v5270 = vsub.f32 %v4139, %v5269
        %5271 = vmatpush.msra.mxu0 %v5270
        %v5272 = vand.u32 %v4085, 4294901760
        %v5273 = vsub.f32 %v4085, %v5272
        %5274 = vmatpush.msra.mxu0 %v5273
        %v5275 = vand.u32 %v5195, 4294901760
        %v5276 = vsub.f32 %v5195, %v5275
        %5277 = vmatmul.f32.gmra.mxu0 %v5276
        %v5278 = vpop.f32.mrf.mxu0
        %v5279 = vadd.f32 %v5253, %v5278
        %5280 = vdwg.mxu0
        %5281 = vmatpush.msra.mxu0 0.0
        %5282 = vmatpush.msra.mxu0 0.0
        %5283 = vmatpush.msra.mxu0 0.0
        %5284 = vmatpush.msra.mxu0 0.0
        %5285 = vmatpush.msra.mxu0 0.0
        %5286 = vmatpush.msra.mxu0 0.0
        %5287 = vmatpush.msra.mxu0 0.0
        %5288 = vmatpush.msra.mxu0 0.0
        %5289 = vmatpush.msra.mxu0 0.0
        %5290 = vmatpush.msra.mxu0 0.0
        %5291 = vmatpush.msra.mxu0 0.0
        %5292 = vmatpush.msra.mxu0 0.0
        %5293 = vmatpush.msra.mxu0 0.0
        %5294 = vmatpush.msra.mxu0 0.0
        %v5295 = vand.u32 %v4139, 4294901760
        %5296 = vmatpush.msra.mxu0 %v5295
        %v5297 = vand.u32 %v4085, 4294901760
        %5298 = vmatpush.msra.mxu0 %v5297
        %v5299 = vand.u32 %v5195, 4294901760
        %v5300 = vsub.f32 %v5195, %v5299
        %v5301 = vand.u32 %v5300, 4294901760
        %5302 = vmatmul.f32.gmra.mxu0 %v5301
        %v5303 = vpop.f32.mrf.mxu0
        %v5304 = vadd.f32 %v5279, %v5303
        %5305 = vdwg.mxu0
        %5306 = vmatpush.msra.mxu0 0.0
        %5307 = vmatpush.msra.mxu0 0.0
        %5308 = vmatpush.msra.mxu0 0.0
        %5309 = vmatpush.msra.mxu0 0.0
        %5310 = vmatpush.msra.mxu0 0.0
        %5311 = vmatpush.msra.mxu0 0.0
        %5312 = vmatpush.msra.mxu0 0.0
        %5313 = vmatpush.msra.mxu0 0.0
        %5314 = vmatpush.msra.mxu0 0.0
        %5315 = vmatpush.msra.mxu0 0.0
        %5316 = vmatpush.msra.mxu0 0.0
        %5317 = vmatpush.msra.mxu0 0.0
        %5318 = vmatpush.msra.mxu0 0.0
        %5319 = vmatpush.msra.mxu0 0.0
        %v5320 = vand.u32 %v4139, 4294901760
        %v5321 = vsub.f32 %v4139, %v5320
        %v5322 = vand.u32 %v5321, 4294901760
        %5323 = vmatpush.msra.mxu0 %v5322
        %v5324 = vand.u32 %v4085, 4294901760
        %v5325 = vsub.f32 %v4085, %v5324
        %v5326 = vand.u32 %v5325, 4294901760
        %5327 = vmatpush.msra.mxu0 %v5326
        %v5328 = vand.u32 %v5195, 4294901760
        %5329 = vmatmul.f32.gmra.mxu0 %v5328
        %v5330 = vpop.f32.mrf.mxu0
        %v5331 = vadd.f32 %v5304, %v5330
        %5332 = vdwg.mxu0
        %5333 = vmatpush.msra.mxu0 0.0
        %5334 = vmatpush.msra.mxu0 0.0
        %5335 = vmatpush.msra.mxu0 0.0
        %5336 = vmatpush.msra.mxu0 0.0
        %5337 = vmatpush.msra.mxu0 0.0
        %5338 = vmatpush.msra.mxu0 0.0
        %5339 = vmatpush.msra.mxu0 0.0
        %5340 = vmatpush.msra.mxu0 0.0
        %5341 = vmatpush.msra.mxu0 0.0
        %5342 = vmatpush.msra.mxu0 0.0
        %5343 = vmatpush.msra.mxu0 0.0
        %5344 = vmatpush.msra.mxu0 0.0
        %5345 = vmatpush.msra.mxu0 0.0
        %5346 = vmatpush.msra.mxu0 0.0
        %v5347 = vand.u32 %v4139, 4294901760
        %5348 = vmatpush.msra.mxu0 %v5347
        %v5349 = vand.u32 %v4085, 4294901760
        %5350 = vmatpush.msra.mxu0 %v5349
        %v5351 = vand.u32 %v5195, 4294901760
        %5352 = vmatmul.f32.gmra.mxu0 %v5351
        %v5353 = vpop.f32.mrf.mxu0
        %v5354 = vadd.f32 %v5331, %v5353
        %5355 = vdwg.mxu0
        %v5357 = vsel %vm2867, %v4869, 0
        %5359 = vmatpush.msra.mxu0 0.0
        %5360 = vmatpush.msra.mxu0 0.0
        %5361 = vmatpush.msra.mxu0 0.0
        %5362 = vmatpush.msra.mxu0 0.0
        %5363 = vmatpush.msra.mxu0 0.0
        %5364 = vmatpush.msra.mxu0 0.0
        %5365 = vmatpush.msra.mxu0 0.0
        %5366 = vmatpush.msra.mxu0 0.0
        %5367 = vmatpush.msra.mxu0 0.0
        %5368 = vmatpush.msra.mxu0 0.0
        %5369 = vmatpush.msra.mxu0 0.0
        %5370 = vmatpush.msra.mxu0 0.0
        %5371 = vmatpush.msra.mxu0 0.0
        %5372 = vmatpush.msra.mxu0 0.0
        %v5373 = vand.u32 %v4141, 4294901760
        %5374 = vmatpush.msra.mxu0 %v5373
        %v5375 = vand.u32 %v4087, 4294901760
        %5376 = vmatpush.msra.mxu0 %v5375
        %v5377 = vand.u32 %v5357, 4294901760
        %v5378 = vsub.f32 %v5357, %v5377
        %v5379 = vand.u32 %v5378, 4294901760
        %v5380 = vsub.f32 %v5378, %v5379
        %v5381 = vand.u32 %v5380, 4294901760
        %5382 = vmatmul.f32.gmra.mxu0 %v5381
        %v5383 = vpop.f32.mrf.mxu0
        %v5384 = vadd.f32 0.0, %v5383
        %5385 = vdwg.mxu0
        %5386 = vmatpush.msra.mxu0 0.0
        %5387 = vmatpush.msra.mxu0 0.0
        %5388 = vmatpush.msra.mxu0 0.0
        %5389 = vmatpush.msra.mxu0 0.0
        %5390 = vmatpush.msra.mxu0 0.0
        %5391 = vmatpush.msra.mxu0 0.0
        %5392 = vmatpush.msra.mxu0 0.0
        %5393 = vmatpush.msra.mxu0 0.0
        %5394 = vmatpush.msra.mxu0 0.0
        %5395 = vmatpush.msra.mxu0 0.0
        %5396 = vmatpush.msra.mxu0 0.0
        %5397 = vmatpush.msra.mxu0 0.0
        %5398 = vmatpush.msra.mxu0 0.0
        %5399 = vmatpush.msra.mxu0 0.0
        %v5400 = vand.u32 %v4141, 4294901760
        %v5401 = vsub.f32 %v4141, %v5400
        %v5402 = vand.u32 %v5401, 4294901760
        %v5403 = vsub.f32 %v5401, %v5402
        %v5404 = vand.u32 %v5403, 4294901760
        %5405 = vmatpush.msra.mxu0 %v5404
        %v5406 = vand.u32 %v4087, 4294901760
        %v5407 = vsub.f32 %v4087, %v5406
        %v5408 = vand.u32 %v5407, 4294901760
        %v5409 = vsub.f32 %v5407, %v5408
        %v5410 = vand.u32 %v5409, 4294901760
        %5411 = vmatpush.msra.mxu0 %v5410
        %v5412 = vand.u32 %v5357, 4294901760
        %5413 = vmatmul.f32.gmra.mxu0 %v5412
        %v5414 = vpop.f32.mrf.mxu0
        %v5415 = vadd.f32 %v5384, %v5414
        %5416 = vdwg.mxu0
        %5417 = vmatpush.msra.mxu0 0.0
        %5418 = vmatpush.msra.mxu0 0.0
        %5419 = vmatpush.msra.mxu0 0.0
        %5420 = vmatpush.msra.mxu0 0.0
        %5421 = vmatpush.msra.mxu0 0.0
        %5422 = vmatpush.msra.mxu0 0.0
        %5423 = vmatpush.msra.mxu0 0.0
        %5424 = vmatpush.msra.mxu0 0.0
        %5425 = vmatpush.msra.mxu0 0.0
        %5426 = vmatpush.msra.mxu0 0.0
        %5427 = vmatpush.msra.mxu0 0.0
        %5428 = vmatpush.msra.mxu0 0.0
        %5429 = vmatpush.msra.mxu0 0.0
        %5430 = vmatpush.msra.mxu0 0.0
        %v5431 = vand.u32 %v4141, 4294901760
        %v5432 = vsub.f32 %v4141, %v5431
        %5433 = vmatpush.msra.mxu0 %v5432
        %v5434 = vand.u32 %v4087, 4294901760
        %v5435 = vsub.f32 %v4087, %v5434
        %5436 = vmatpush.msra.mxu0 %v5435
        %v5437 = vand.u32 %v5357, 4294901760
        %v5438 = vsub.f32 %v5357, %v5437
        %5439 = vmatmul.f32.gmra.mxu0 %v5438
        %v5440 = vpop.f32.mrf.mxu0
        %v5441 = vadd.f32 %v5415, %v5440
        %5442 = vdwg.mxu0
        %5443 = vmatpush.msra.mxu0 0.0
        %5444 = vmatpush.msra.mxu0 0.0
        %5445 = vmatpush.msra.mxu0 0.0
        %5446 = vmatpush.msra.mxu0 0.0
        %5447 = vmatpush.msra.mxu0 0.0
        %5448 = vmatpush.msra.mxu0 0.0
        %5449 = vmatpush.msra.mxu0 0.0
        %5450 = vmatpush.msra.mxu0 0.0
        %5451 = vmatpush.msra.mxu0 0.0
        %5452 = vmatpush.msra.mxu0 0.0
        %5453 = vmatpush.msra.mxu0 0.0
        %5454 = vmatpush.msra.mxu0 0.0
        %5455 = vmatpush.msra.mxu0 0.0
        %5456 = vmatpush.msra.mxu0 0.0
        %v5457 = vand.u32 %v4141, 4294901760
        %5458 = vmatpush.msra.mxu0 %v5457
        %v5459 = vand.u32 %v4087, 4294901760
        %5460 = vmatpush.msra.mxu0 %v5459
        %v5461 = vand.u32 %v5357, 4294901760
        %v5462 = vsub.f32 %v5357, %v5461
        %v5463 = vand.u32 %v5462, 4294901760
        %5464 = vmatmul.f32.gmra.mxu0 %v5463
        %v5465 = vpop.f32.mrf.mxu0
        %v5466 = vadd.f32 %v5441, %v5465
        %5467 = vdwg.mxu0
        %5468 = vmatpush.msra.mxu0 0.0
        %5469 = vmatpush.msra.mxu0 0.0
        %5470 = vmatpush.msra.mxu0 0.0
        %5471 = vmatpush.msra.mxu0 0.0
        %5472 = vmatpush.msra.mxu0 0.0
        %5473 = vmatpush.msra.mxu0 0.0
        %5474 = vmatpush.msra.mxu0 0.0
        %5475 = vmatpush.msra.mxu0 0.0
        %5476 = vmatpush.msra.mxu0 0.0
        %5477 = vmatpush.msra.mxu0 0.0
        %5478 = vmatpush.msra.mxu0 0.0
        %5479 = vmatpush.msra.mxu0 0.0
        %5480 = vmatpush.msra.mxu0 0.0
        %5481 = vmatpush.msra.mxu0 0.0
        %v5482 = vand.u32 %v4141, 4294901760
        %v5483 = vsub.f32 %v4141, %v5482
        %v5484 = vand.u32 %v5483, 4294901760
        %5485 = vmatpush.msra.mxu0 %v5484
        %v5486 = vand.u32 %v4087, 4294901760
        %v5487 = vsub.f32 %v4087, %v5486
        %v5488 = vand.u32 %v5487, 4294901760
        %5489 = vmatpush.msra.mxu0 %v5488
        %v5490 = vand.u32 %v5357, 4294901760
        %5491 = vmatmul.f32.gmra.mxu0 %v5490
        %v5492 = vpop.f32.mrf.mxu0
        %v5493 = vadd.f32 %v5466, %v5492
        %5494 = vdwg.mxu0
        %5495 = vmatpush.msra.mxu0 0.0
        %5496 = vmatpush.msra.mxu0 0.0
        %5497 = vmatpush.msra.mxu0 0.0
        %5498 = vmatpush.msra.mxu0 0.0
        %5499 = vmatpush.msra.mxu0 0.0
        %5500 = vmatpush.msra.mxu0 0.0
        %5501 = vmatpush.msra.mxu0 0.0
        %5502 = vmatpush.msra.mxu0 0.0
        %5503 = vmatpush.msra.mxu0 0.0
        %5504 = vmatpush.msra.mxu0 0.0
        %5505 = vmatpush.msra.mxu0 0.0
        %5506 = vmatpush.msra.mxu0 0.0
        %5507 = vmatpush.msra.mxu0 0.0
        %5508 = vmatpush.msra.mxu0 0.0
        %v5509 = vand.u32 %v4141, 4294901760
        %5510 = vmatpush.msra.mxu0 %v5509
        %v5511 = vand.u32 %v4087, 4294901760
        %5512 = vmatpush.msra.mxu0 %v5511
        %v5513 = vand.u32 %v5357, 4294901760
        %5514 = vmatmul.f32.gmra.mxu0 %v5513
        %v5515 = vpop.f32.mrf.mxu0
        %v5516 = vadd.f32 %v5493, %v5515
        %5517 = vdwg.mxu0
        %v5518 = vrot.slane %v5354, 4
        %v5519 = vsel %vm1122, %v5518, %v5030
        %v5520 = vrot.slane %v5030, 4
        %v5521 = vsel %vm1122, %v5354, %v5520
        %v5523 = vunpack.c.l.s4 1983009808
        %v5524 = vunpack.c.0.s8 %v5523
        %v5525 = vperm.slane %v5519, %v5524
        %v5527 = vunpack.c.l.s4 1983009808
        %v5528 = vunpack.c.0.s8 %v5527
        %v5529 = vperm.slane %v5521, %v5528
        %v5530 = vrot.slane %v5516, 4
        %v5531 = vsel %vm1122, %v5530, %v5192
        %v5532 = vrot.slane %v5192, 4
        %v5533 = vsel %vm1122, %v5516, %v5532
        %v5535 = vunpack.c.l.s4 1983009808
        %v5536 = vunpack.c.0.s8 %v5535
        %v5537 = vperm.slane %v5531, %v5536
        %v5539 = vunpack.c.l.s4 1983009808
        %v5540 = vunpack.c.0.s8 %v5539
        %v5541 = vperm.slane %v5533, %v5540
        %v5542 = vrot.slane %v5537, 4
        %v5543 = vsel %vm1122, %v5542, %v5525
        %v5544 = vrot.slane %v5525, 4
        %v5545 = vsel %vm1122, %v5537, %v5544
        %v5547 = vunpack.c.l.s4 1934713408
        %v5548 = vunpack.c.0.s8 %v5547
        %v5549 = vperm.slane %v5543, %v5548
        %v5551 = vunpack.c.l.s4 1934713408
        %v5552 = vunpack.c.0.s8 %v5551
        %v5553 = vperm.slane %v5545, %v5552
        %v5554 = vrot.slane %v5541, 4
        %v5555 = vsel %vm1122, %v5554, %v5529
        %v5556 = vrot.slane %v5529, 4
        %v5557 = vsel %vm1122, %v5541, %v5556
        %v5559 = vunpack.c.l.s4 1934713408
        %v5560 = vunpack.c.0.s8 %v5559
        %v5561 = vperm.slane %v5555, %v5560
        %v5563 = vunpack.c.l.s4 1934713408
        %v5564 = vunpack.c.0.s8 %v5563
        %v5565 = vperm.slane %v5557, %v5564
        %v5566 = vrot.slane %v5549, 4
        %v5567 = vsel %vm1122, 0.0, %v5566
        %v5568 = vrot.slane %v5553, 4
        %v5569 = vsel %vm1122, 0.0, %v5568
        %v5570 = vrot.slane %v5561, 4
        %v5571 = vsel %vm1122, 0.0, %v5570
        %v5572 = vrot.slane %v5565, 4
        %v5573 = vsel %vm1122, 0.0, %v5572
        %v5574 = vsel %vm1122, %v5568, %v5549
        %v5576 = vunpack.c.l.s4 1983009808
        %v5577 = vunpack.c.0.s8 %v5576
        %v5578 = vperm.slane %v5574, %v5577
        %v5579 = vrot.slane %v5569, 4
        %v5580 = vsel %vm1122, %v5579, %v5567
        %v5582 = vunpack.c.l.s4 1983009808
        %v5583 = vunpack.c.0.s8 %v5582
        %v5584 = vperm.slane %v5580, %v5583
        %v5585 = vsel %vm1122, %v5572, %v5561
        %v5587 = vunpack.c.l.s4 1983009808
        %v5588 = vunpack.c.0.s8 %v5587
        %v5589 = vperm.slane %v5585, %v5588
        %v5590 = vrot.slane %v5573, 4
        %v5591 = vsel %vm1122, %v5590, %v5571
        %v5593 = vunpack.c.l.s4 1983009808
        %v5594 = vunpack.c.0.s8 %v5593
        %v5595 = vperm.slane %v5591, %v5594
        %v5596 = vrot.slane %v5584, 4
        %v5597 = vsel %vm1122, %v5596, %v5578
        %v5598 = vrot.slane %v5578, 4
        %v5599 = vsel %vm1122, %v5584, %v5598
        %v5601 = vunpack.c.l.s4 1934713408
        %v5602 = vunpack.c.0.s8 %v5601
        %v5603 = vperm.slane %v5597, %v5602
        %v5605 = vunpack.c.l.s4 1934713408
        %v5606 = vunpack.c.0.s8 %v5605
        %v5607 = vperm.slane %v5599, %v5606
        %v5608 = vrot.slane %v5595, 4
        %v5609 = vsel %vm1122, %v5608, %v5589
        %v5610 = vrot.slane %v5589, 4
        %v5611 = vsel %vm1122, %v5595, %v5610
        %v5613 = vunpack.c.l.s4 1934713408
        %v5614 = vunpack.c.0.s8 %v5613
        %v5615 = vperm.slane %v5609, %v5614
        %v5617 = vunpack.c.l.s4 1934713408
        %v5618 = vunpack.c.0.s8 %v5617
        %v5619 = vperm.slane %v5611, %v5618
        %v5620 = vrot.slane %v5615, 4
        %v5621 = vsel %vm1122, %v5620, %v5603
        %v5622 = vrot.slane %v5603, 4
        %v5623 = vsel %vm1122, %v5615, %v5622
        %v5624 = vrot.slane %v5619, 4
        %v5625 = vsel %vm1122, %v5624, %v5607
        %v5626 = vrot.slane %v5607, 4
        %v5627 = vsel %vm1122, %v5619, %v5626
        %5629 = vrot.lane.b32.xlu0 %v5623, 8
        %v5630 = vpop.permute.xlu0 %5629
        %5633 = vrot.lane.b32.xlu0 %v5625, 16
        %v5634 = vpop.permute.xlu0 %5633
        %5637 = vrot.lane.b32.xlu0 %v5627, 24
        %v5638 = vpop.permute.xlu0 %5637
        %v5640 = vsel %vm1483, %v5621, %v5630
        %v5641 = vsel %vm2867, %v5640, %v5634
        %v5642 = vsel %vm2869, %v5641, %v5638
        %v5643 = vld [vmem:[#allocation13] sm:$0xff]
        %v5644 = vld [vmem:[#allocation13 + $0x8] sm:$0xff]
        %v5645 = vld [vmem:[#allocation13 + $0x10] sm:$0xff]
        %v5646 = vld [vmem:[#allocation13 + $0x18] sm:$0xff]
        %v5647 = vld [vmem:[%s13] sm:$0x1]
        %v5649 = vperm.slane %v5647, 0
        %v5652 = vsel %vm920, %v5642, 0
        %5654 = vmatpush.msra.mxu0 0.0
        %5655 = vmatpush.msra.mxu0 0.0
        %5656 = vmatpush.msra.mxu0 0.0
        %5657 = vmatpush.msra.mxu0 0.0
        %5658 = vmatpush.msra.mxu0 0.0
        %5659 = vmatpush.msra.mxu0 0.0
        %5660 = vmatpush.msra.mxu0 0.0
        %5661 = vmatpush.msra.mxu0 0.0
        %5662 = vmatpush.msra.mxu0 0.0
        %5663 = vmatpush.msra.mxu0 0.0
        %5664 = vmatpush.msra.mxu0 0.0
        %5665 = vmatpush.msra.mxu0 0.0
        %v5666 = vand.u32 %v5646, 4294901760
        %5667 = vmatpush.msra.mxu0 %v5666
        %v5668 = vand.u32 %v5645, 4294901760
        %5669 = vmatpush.msra.mxu0 %v5668
        %v5670 = vand.u32 %v5644, 4294901760
        %5671 = vmatpush.msra.mxu0 %v5670
        %v5672 = vand.u32 %v5643, 4294901760
        %5673 = vmatpush.msra.mxu0 %v5672
        %v5674 = vand.u32 %v5652, 4294901760
        %v5675 = vsub.f32 %v5652, %v5674
        %v5676 = vand.u32 %v5675, 4294901760
        %v5677 = vsub.f32 %v5675, %v5676
        %v5678 = vand.u32 %v5677, 4294901760
        %5679 = vmatmul.f32.gmra.mxu0 %v5678
        %v5680 = vpop.f32.mrf.mxu0
        %v5681 = vadd.f32 %v5649, %v5680
        %5682 = vdwg.mxu0
        %5683 = vmatpush.msra.mxu0 0.0
        %5684 = vmatpush.msra.mxu0 0.0
        %5685 = vmatpush.msra.mxu0 0.0
        %5686 = vmatpush.msra.mxu0 0.0
        %5687 = vmatpush.msra.mxu0 0.0
        %5688 = vmatpush.msra.mxu0 0.0
        %5689 = vmatpush.msra.mxu0 0.0
        %5690 = vmatpush.msra.mxu0 0.0
        %5691 = vmatpush.msra.mxu0 0.0
        %5692 = vmatpush.msra.mxu0 0.0
        %5693 = vmatpush.msra.mxu0 0.0
        %5694 = vmatpush.msra.mxu0 0.0
        %v5695 = vand.u32 %v5646, 4294901760
        %v5696 = vsub.f32 %v5646, %v5695
        %v5697 = vand.u32 %v5696, 4294901760
        %v5698 = vsub.f32 %v5696, %v5697
        %v5699 = vand.u32 %v5698, 4294901760
        %5700 = vmatpush.msra.mxu0 %v5699
        %v5701 = vand.u32 %v5645, 4294901760
        %v5702 = vsub.f32 %v5645, %v5701
        %v5703 = vand.u32 %v5702, 4294901760
        %v5704 = vsub.f32 %v5702, %v5703
        %v5705 = vand.u32 %v5704, 4294901760
        %5706 = vmatpush.msra.mxu0 %v5705
        %v5707 = vand.u32 %v5644, 4294901760
        %v5708 = vsub.f32 %v5644, %v5707
        %v5709 = vand.u32 %v5708, 4294901760
        %v5710 = vsub.f32 %v5708, %v5709
        %v5711 = vand.u32 %v5710, 4294901760
        %5712 = vmatpush.msra.mxu0 %v5711
        %v5713 = vand.u32 %v5643, 4294901760
        %v5714 = vsub.f32 %v5643, %v5713
        %v5715 = vand.u32 %v5714, 4294901760
        %v5716 = vsub.f32 %v5714, %v5715
        %v5717 = vand.u32 %v5716, 4294901760
        %5718 = vmatpush.msra.mxu0 %v5717
        %v5719 = vand.u32 %v5652, 4294901760
        %5720 = vmatmul.f32.gmra.mxu0 %v5719
        %v5721 = vpop.f32.mrf.mxu0
        %v5722 = vadd.f32 %v5681, %v5721
        %5723 = vdwg.mxu0
        %5724 = vmatpush.msra.mxu0 0.0
        %5725 = vmatpush.msra.mxu0 0.0
        %5726 = vmatpush.msra.mxu0 0.0
        %5727 = vmatpush.msra.mxu0 0.0
        %5728 = vmatpush.msra.mxu0 0.0
        %5729 = vmatpush.msra.mxu0 0.0
        %5730 = vmatpush.msra.mxu0 0.0
        %5731 = vmatpush.msra.mxu0 0.0
        %5732 = vmatpush.msra.mxu0 0.0
        %5733 = vmatpush.msra.mxu0 0.0
        %5734 = vmatpush.msra.mxu0 0.0
        %5735 = vmatpush.msra.mxu0 0.0
        %v5736 = vand.u32 %v5646, 4294901760
        %v5737 = vsub.f32 %v5646, %v5736
        %5738 = vmatpush.msra.mxu0 %v5737
        %v5739 = vand.u32 %v5645, 4294901760
        %v5740 = vsub.f32 %v5645, %v5739
        %5741 = vmatpush.msra.mxu0 %v5740
        %v5742 = vand.u32 %v5644, 4294901760
        %v5743 = vsub.f32 %v5644, %v5742
        %5744 = vmatpush.msra.mxu0 %v5743
        %v5745 = vand.u32 %v5643, 4294901760
        %v5746 = vsub.f32 %v5643, %v5745
        %5747 = vmatpush.msra.mxu0 %v5746
        %v5748 = vand.u32 %v5652, 4294901760
        %v5749 = vsub.f32 %v5652, %v5748
        %5750 = vmatmul.f32.gmra.mxu0 %v5749
        %v5751 = vpop.f32.mrf.mxu0
        %v5752 = vadd.f32 %v5722, %v5751
        %5753 = vdwg.mxu0
        %5754 = vmatpush.msra.mxu0 0.0
        %5755 = vmatpush.msra.mxu0 0.0
        %5756 = vmatpush.msra.mxu0 0.0
        %5757 = vmatpush.msra.mxu0 0.0
        %5758 = vmatpush.msra.mxu0 0.0
        %5759 = vmatpush.msra.mxu0 0.0
        %5760 = vmatpush.msra.mxu0 0.0
        %5761 = vmatpush.msra.mxu0 0.0
        %5762 = vmatpush.msra.mxu0 0.0
        %5763 = vmatpush.msra.mxu0 0.0
        %5764 = vmatpush.msra.mxu0 0.0
        %5765 = vmatpush.msra.mxu0 0.0
        %v5766 = vand.u32 %v5646, 4294901760
        %5767 = vmatpush.msra.mxu0 %v5766
        %v5768 = vand.u32 %v5645, 4294901760
        %5769 = vmatpush.msra.mxu0 %v5768
        %v5770 = vand.u32 %v5644, 4294901760
        %5771 = vmatpush.msra.mxu0 %v5770
        %v5772 = vand.u32 %v5643, 4294901760
        %5773 = vmatpush.msra.mxu0 %v5772
        %v5774 = vand.u32 %v5652, 4294901760
        %v5775 = vsub.f32 %v5652, %v5774
        %v5776 = vand.u32 %v5775, 4294901760
        %5777 = vmatmul.f32.gmra.mxu0 %v5776
        %v5778 = vpop.f32.mrf.mxu0
        %v5779 = vadd.f32 %v5752, %v5778
        %5780 = vdwg.mxu0
        %5781 = vmatpush.msra.mxu0 0.0
        %5782 = vmatpush.msra.mxu0 0.0
        %5783 = vmatpush.msra.mxu0 0.0
        %5784 = vmatpush.msra.mxu0 0.0
        %5785 = vmatpush.msra.mxu0 0.0
        %5786 = vmatpush.msra.mxu0 0.0
        %5787 = vmatpush.msra.mxu0 0.0
        %5788 = vmatpush.msra.mxu0 0.0
        %5789 = vmatpush.msra.mxu0 0.0
        %5790 = vmatpush.msra.mxu0 0.0
        %5791 = vmatpush.msra.mxu0 0.0
        %5792 = vmatpush.msra.mxu0 0.0
        %v5793 = vand.u32 %v5646, 4294901760
        %v5794 = vsub.f32 %v5646, %v5793
        %v5795 = vand.u32 %v5794, 4294901760
        %5796 = vmatpush.msra.mxu0 %v5795
        %v5797 = vand.u32 %v5645, 4294901760
        %v5798 = vsub.f32 %v5645, %v5797
        %v5799 = vand.u32 %v5798, 4294901760
        %5800 = vmatpush.msra.mxu0 %v5799
        %v5801 = vand.u32 %v5644, 4294901760
        %v5802 = vsub.f32 %v5644, %v5801
        %v5803 = vand.u32 %v5802, 4294901760
        %5804 = vmatpush.msra.mxu0 %v5803
        %v5805 = vand.u32 %v5643, 4294901760
        %v5806 = vsub.f32 %v5643, %v5805
        %v5807 = vand.u32 %v5806, 4294901760
        %5808 = vmatpush.msra.mxu0 %v5807
        %v5809 = vand.u32 %v5652, 4294901760
        %5810 = vmatmul.f32.gmra.mxu0 %v5809
        %v5811 = vpop.f32.mrf.mxu0
        %v5812 = vadd.f32 %v5779, %v5811
        %5813 = vdwg.mxu0
        %5814 = vmatpush.msra.mxu0 0.0
        %5815 = vmatpush.msra.mxu0 0.0
        %5816 = vmatpush.msra.mxu0 0.0
        %5817 = vmatpush.msra.mxu0 0.0
        %5818 = vmatpush.msra.mxu0 0.0
        %5819 = vmatpush.msra.mxu0 0.0
        %5820 = vmatpush.msra.mxu0 0.0
        %5821 = vmatpush.msra.mxu0 0.0
        %5822 = vmatpush.msra.mxu0 0.0
        %5823 = vmatpush.msra.mxu0 0.0
        %5824 = vmatpush.msra.mxu0 0.0
        %5825 = vmatpush.msra.mxu0 0.0
        %v5826 = vand.u32 %v5646, 4294901760
        %5827 = vmatpush.msra.mxu0 %v5826
        %v5828 = vand.u32 %v5645, 4294901760
        %5829 = vmatpush.msra.mxu0 %v5828
        %v5830 = vand.u32 %v5644, 4294901760
        %5831 = vmatpush.msra.mxu0 %v5830
        %v5832 = vand.u32 %v5643, 4294901760
        %5833 = vmatpush.msra.mxu0 %v5832
        %v5834 = vand.u32 %v5652, 4294901760
        %5835 = vmatmul.f32.gmra.mxu0 %v5834
        %v5836 = vpop.f32.mrf.mxu0
        %v5837 = vadd.f32 %v5812, %v5836
        %5838 = vdwg.mxu0
        %v5839 = vadd.f32 %v3106, %v5837
        %v5840 = vsel %vm920, %v5839, 0.0
        %5841 = vadd.xlane.f32.xlu0 %v5840
        %v5842 = vpop.xlane.xlu0 %5841
        %v5843 = vmul.f32 %v5842, %v3077
        %v5844 = vsub.f32 %v5839, %v5843
        %v5845 = vmul.f32 %v5844, %v5844
        %v5846 = vsel %vm920, %v5845, 0.0
        %5847 = vadd.xlane.f32.xlu0 %v5846
        %v5848 = vpop.xlane.xlu0 %5847
        %v5849 = vmul.f32 %v5848, %v3077
        %v5850 = vadd.f32 %v5849, 1e-05
        %v5851 = vrsqrt.pop %v5850
        %v5852 = vmul.f32 %v5851, %v5850
        %v5853 = vmul.f32 %v5852, %v5851
        %v5854 = vmul.f32 0.5, %v5853
        %v5855 = vsub.f32 1.5, %v5854
        %v5856 = vmul.f32 %v5851, %v5855
        %vm5857 = vweird.f32 %v5850
        %vm5858 = vweird.f32 %v5851
        %vm5859 = vmor %vm5857, %vm5858
        %v5860 = vsel %vm5859, %v5851, %v5856
        %v5861 = vmul.f32 %v5844, %v5860
        %v5862 = vld [vmem:[%s16] sm:$0x1]
        %v5864 = vperm.slane %v5862, 0
        %v5866 = vmul.f32 %v5861, %v5864
        %v5867 = vld [vmem:[%s17] sm:$0x1]
        %v5869 = vperm.slane %v5867, 0
        %v5871 = vadd.f32 %v5866, %v5869
        %v5872 = vld [vmem:[#allocation14] sm:$0xff]
        %v5873 = vld [vmem:[#allocation14 + $0x8] sm:$0xff]
        %v5874 = vld [vmem:[#allocation14 + $0x10] sm:$0xff]
        %v5875 = vld [vmem:[#allocation14 + $0x18] sm:$0xff]
        %v5876 = vld [vmem:[%s21] sm:$0x1]
        %v5878 = vperm.slane %v5876, 0
        %v5881 = vsel %vm920, %v5871, 0
        %5883 = vmatpush.msra.mxu0 0.0
        %5884 = vmatpush.msra.mxu0 0.0
        %5885 = vmatpush.msra.mxu0 0.0
        %5886 = vmatpush.msra.mxu0 0.0
        %5887 = vmatpush.msra.mxu0 0.0
        %5888 = vmatpush.msra.mxu0 0.0
        %5889 = vmatpush.msra.mxu0 0.0
        %5890 = vmatpush.msra.mxu0 0.0
        %5891 = vmatpush.msra.mxu0 0.0
        %5892 = vmatpush.msra.mxu0 0.0
        %5893 = vmatpush.msra.mxu0 0.0
        %5894 = vmatpush.msra.mxu0 0.0
        %v5895 = vand.u32 %v5875, 4294901760
        %5896 = vmatpush.msra.mxu0 %v5895
        %v5897 = vand.u32 %v5874, 4294901760
        %5898 = vmatpush.msra.mxu0 %v5897
        %v5899 = vand.u32 %v5873, 4294901760
        %5900 = vmatpush.msra.mxu0 %v5899
        %v5901 = vand.u32 %v5872, 4294901760
        %5902 = vmatpush.msra.mxu0 %v5901
        %v5903 = vand.u32 %v5881, 4294901760
        %v5904 = vsub.f32 %v5881, %v5903
        %v5905 = vand.u32 %v5904, 4294901760
        %v5906 = vsub.f32 %v5904, %v5905
        %v5907 = vand.u32 %v5906, 4294901760
        %5908 = vmatmul.f32.gmra.mxu0 %v5907
        %v5909 = vpop.f32.mrf.mxu0
        %v5910 = vadd.f32 %v5878, %v5909
        %5911 = vdwg.mxu0
        %5912 = vmatpush.msra.mxu0 0.0
        %5913 = vmatpush.msra.mxu0 0.0
        %5914 = vmatpush.msra.mxu0 0.0
        %5915 = vmatpush.msra.mxu0 0.0
        %5916 = vmatpush.msra.mxu0 0.0
        %5917 = vmatpush.msra.mxu0 0.0
        %5918 = vmatpush.msra.mxu0 0.0
        %5919 = vmatpush.msra.mxu0 0.0
        %5920 = vmatpush.msra.mxu0 0.0
        %5921 = vmatpush.msra.mxu0 0.0
        %5922 = vmatpush.msra.mxu0 0.0
        %5923 = vmatpush.msra.mxu0 0.0
        %v5924 = vand.u32 %v5875, 4294901760
        %v5925 = vsub.f32 %v5875, %v5924
        %v5926 = vand.u32 %v5925, 4294901760
        %v5927 = vsub.f32 %v5925, %v5926
        %v5928 = vand.u32 %v5927, 4294901760
        %5929 = vmatpush.msra.mxu0 %v5928
        %v5930 = vand.u32 %v5874, 4294901760
        %v5931 = vsub.f32 %v5874, %v5930
        %v5932 = vand.u32 %v5931, 4294901760
        %v5933 = vsub.f32 %v5931, %v5932
        %v5934 = vand.u32 %v5933, 4294901760
        %5935 = vmatpush.msra.mxu0 %v5934
        %v5936 = vand.u32 %v5873, 4294901760
        %v5937 = vsub.f32 %v5873, %v5936
        %v5938 = vand.u32 %v5937, 4294901760
        %v5939 = vsub.f32 %v5937, %v5938
        %v5940 = vand.u32 %v5939, 4294901760
        %5941 = vmatpush.msra.mxu0 %v5940
        %v5942 = vand.u32 %v5872, 4294901760
        %v5943 = vsub.f32 %v5872, %v5942
        %v5944 = vand.u32 %v5943, 4294901760
        %v5945 = vsub.f32 %v5943, %v5944
        %v5946 = vand.u32 %v5945, 4294901760
        %5947 = vmatpush.msra.mxu0 %v5946
        %v5948 = vand.u32 %v5881, 4294901760
        %5949 = vmatmul.f32.gmra.mxu0 %v5948
        %v5950 = vpop.f32.mrf.mxu0
        %v5951 = vadd.f32 %v5910, %v5950
        %5952 = vdwg.mxu0
        %5953 = vmatpush.msra.mxu0 0.0
        %5954 = vmatpush.msra.mxu0 0.0
        %5955 = vmatpush.msra.mxu0 0.0
        %5956 = vmatpush.msra.mxu0 0.0
        %5957 = vmatpush.msra.mxu0 0.0
        %5958 = vmatpush.msra.mxu0 0.0
        %5959 = vmatpush.msra.mxu0 0.0
        %5960 = vmatpush.msra.mxu0 0.0
        %5961 = vmatpush.msra.mxu0 0.0
        %5962 = vmatpush.msra.mxu0 0.0
        %5963 = vmatpush.msra.mxu0 0.0
        %5964 = vmatpush.msra.mxu0 0.0
        %v5965 = vand.u32 %v5875, 4294901760
        %v5966 = vsub.f32 %v5875, %v5965
        %5967 = vmatpush.msra.mxu0 %v5966
        %v5968 = vand.u32 %v5874, 4294901760
        %v5969 = vsub.f32 %v5874, %v5968
        %5970 = vmatpush.msra.mxu0 %v5969
        %v5971 = vand.u32 %v5873, 4294901760
        %v5972 = vsub.f32 %v5873, %v5971
        %5973 = vmatpush.msra.mxu0 %v5972
        %v5974 = vand.u32 %v5872, 4294901760
        %v5975 = vsub.f32 %v5872, %v5974
        %5976 = vmatpush.msra.mxu0 %v5975
        %v5977 = vand.u32 %v5881, 4294901760
        %v5978 = vsub.f32 %v5881, %v5977
        %5979 = vmatmul.f32.gmra.mxu0 %v5978
        %v5980 = vpop.f32.mrf.mxu0
        %v5981 = vadd.f32 %v5951, %v5980
        %5982 = vdwg.mxu0
        %5983 = vmatpush.msra.mxu0 0.0
        %5984 = vmatpush.msra.mxu0 0.0
        %5985 = vmatpush.msra.mxu0 0.0
        %5986 = vmatpush.msra.mxu0 0.0
        %5987 = vmatpush.msra.mxu0 0.0
        %5988 = vmatpush.msra.mxu0 0.0
        %5989 = vmatpush.msra.mxu0 0.0
        %5990 = vmatpush.msra.mxu0 0.0
        %5991 = vmatpush.msra.mxu0 0.0
        %5992 = vmatpush.msra.mxu0 0.0
        %5993 = vmatpush.msra.mxu0 0.0
        %5994 = vmatpush.msra.mxu0 0.0
        %v5995 = vand.u32 %v5875, 4294901760
        %5996 = vmatpush.msra.mxu0 %v5995
        %v5997 = vand.u32 %v5874, 4294901760
        %5998 = vmatpush.msra.mxu0 %v5997
        %v5999 = vand.u32 %v5873, 4294901760
        %6000 = vmatpush.msra.mxu0 %v5999
        %v6001 = vand.u32 %v5872, 4294901760
        %6002 = vmatpush.msra.mxu0 %v6001
        %v6003 = vand.u32 %v5881, 4294901760
        %v6004 = vsub.f32 %v5881, %v6003
        %v6005 = vand.u32 %v6004, 4294901760
        %6006 = vmatmul.f32.gmra.mxu0 %v6005
        %v6007 = vpop.f32.mrf.mxu0
        %v6008 = vadd.f32 %v5981, %v6007
        %6009 = vdwg.mxu0
        %6010 = vmatpush.msra.mxu0 0.0
        %6011 = vmatpush.msra.mxu0 0.0
        %6012 = vmatpush.msra.mxu0 0.0
        %6013 = vmatpush.msra.mxu0 0.0
        %6014 = vmatpush.msra.mxu0 0.0
        %6015 = vmatpush.msra.mxu0 0.0
        %6016 = vmatpush.msra.mxu0 0.0
        %6017 = vmatpush.msra.mxu0 0.0
        %6018 = vmatpush.msra.mxu0 0.0
        %6019 = vmatpush.msra.mxu0 0.0
        %6020 = vmatpush.msra.mxu0 0.0
        %6021 = vmatpush.msra.mxu0 0.0
        %v6022 = vand.u32 %v5875, 4294901760
        %v6023 = vsub.f32 %v5875, %v6022
        %v6024 = vand.u32 %v6023, 4294901760
        %6025 = vmatpush.msra.mxu0 %v6024
        %v6026 = vand.u32 %v5874, 4294901760
        %v6027 = vsub.f32 %v5874, %v6026
        %v6028 = vand.u32 %v6027, 4294901760
        %6029 = vmatpush.msra.mxu0 %v6028
        %v6030 = vand.u32 %v5873, 4294901760
        %v6031 = vsub.f32 %v5873, %v6030
        %v6032 = vand.u32 %v6031, 4294901760
        %6033 = vmatpush.msra.mxu0 %v6032
        %v6034 = vand.u32 %v5872, 4294901760
        %v6035 = vsub.f32 %v5872, %v6034
        %v6036 = vand.u32 %v6035, 4294901760
        %6037 = vmatpush.msra.mxu0 %v6036
        %v6038 = vand.u32 %v5881, 4294901760
        %6039 = vmatmul.f32.gmra.mxu0 %v6038
        %v6040 = vpop.f32.mrf.mxu0
        %v6041 = vadd.f32 %v6008, %v6040
        %6042 = vdwg.mxu0
        %6043 = vmatpush.msra.mxu0 0.0
        %6044 = vmatpush.msra.mxu0 0.0
        %6045 = vmatpush.msra.mxu0 0.0
        %6046 = vmatpush.msra.mxu0 0.0
        %6047 = vmatpush.msra.mxu0 0.0
        %6048 = vmatpush.msra.mxu0 0.0
        %6049 = vmatpush.msra.mxu0 0.0
        %6050 = vmatpush.msra.mxu0 0.0
        %6051 = vmatpush.msra.mxu0 0.0
        %6052 = vmatpush.msra.mxu0 0.0
        %6053 = vmatpush.msra.mxu0 0.0
        %6054 = vmatpush.msra.mxu0 0.0
        %v6055 = vand.u32 %v5875, 4294901760
        %6056 = vmatpush.msra.mxu0 %v6055
        %v6057 = vand.u32 %v5874, 4294901760
        %6058 = vmatpush.msra.mxu0 %v6057
        %v6059 = vand.u32 %v5873, 4294901760
        %6060 = vmatpush.msra.mxu0 %v6059
        %v6061 = vand.u32 %v5872, 4294901760
        %6062 = vmatpush.msra.mxu0 %v6061
        %v6063 = vand.u32 %v5881, 4294901760
        %6064 = vmatmul.f32.gmra.mxu0 %v6063
        %v6065 = vpop.f32.mrf.mxu0
        %v6066 = vadd.f32 %v6041, %v6065
        %6067 = vdwg.mxu0
        %v6068 = vmax.f32 %v6066, 0.0
        %v6069 = vld [vmem:[%s22] sm:$0xff]
        %v6070 = vld [vmem:[%s22 + $0x8] sm:$0xff]
        %v6071 = vld [vmem:[%s22 + $0x10] sm:$0xff]
        %v6072 = vld [vmem:[%s22 + $0x18] sm:$0xff]
        %v6073 = vld [vmem:[%s22 + $0x20] sm:$0xff]
        %v6074 = vld [vmem:[%s22 + $0x28] sm:$0xff]
        %v6075 = vld [vmem:[%s22 + $0x30] sm:$0xff]
        %v6076 = vld [vmem:[%s22 + $0x38] sm:$0xff]
        %v6077 = vld [vmem:[%s23] sm:$0x1]
        %v6079 = vperm.slane %v6077, 0
        %vm6081 = vcmask 523264
        %v6083 = vsel %vm6081, %v6068, 0
        %6085 = vmatpush.msra.mxu0 0.0
        %6086 = vmatpush.msra.mxu0 0.0
        %6087 = vmatpush.msra.mxu0 0.0
        %6088 = vmatpush.msra.mxu0 0.0
        %6089 = vmatpush.msra.mxu0 0.0
        %6090 = vmatpush.msra.mxu0 0.0
        %6091 = vmatpush.msra.mxu0 0.0
        %6092 = vmatpush.msra.mxu0 0.0
        %v6093 = vand.u32 %v6076, 4294901760
        %6094 = vmatpush.msra.mxu0 %v6093
        %v6095 = vand.u32 %v6075, 4294901760
        %6096 = vmatpush.msra.mxu0 %v6095
        %v6097 = vand.u32 %v6074, 4294901760
        %6098 = vmatpush.msra.mxu0 %v6097
        %v6099 = vand.u32 %v6073, 4294901760
        %6100 = vmatpush.msra.mxu0 %v6099
        %v6101 = vand.u32 %v6072, 4294901760
        %6102 = vmatpush.msra.mxu0 %v6101
        %v6103 = vand.u32 %v6071, 4294901760
        %6104 = vmatpush.msra.mxu0 %v6103
        %v6105 = vand.u32 %v6070, 4294901760
        %6106 = vmatpush.msra.mxu0 %v6105
        %v6107 = vand.u32 %v6069, 4294901760
        %6108 = vmatpush.msra.mxu0 %v6107
        %v6109 = vand.u32 %v6083, 4294901760
        %v6110 = vsub.f32 %v6083, %v6109
        %v6111 = vand.u32 %v6110, 4294901760
        %v6112 = vsub.f32 %v6110, %v6111
        %v6113 = vand.u32 %v6112, 4294901760
        %6114 = vmatmul.f32.gmra.mxu0 %v6113
        %v6115 = vpop.f32.mrf.mxu0
        %v6116 = vadd.f32 %v6079, %v6115
        %6117 = vdwg.mxu0
        %6118 = vmatpush.msra.mxu0 0.0
        %6119 = vmatpush.msra.mxu0 0.0
        %6120 = vmatpush.msra.mxu0 0.0
        %6121 = vmatpush.msra.mxu0 0.0
        %6122 = vmatpush.msra.mxu0 0.0
        %6123 = vmatpush.msra.mxu0 0.0
        %6124 = vmatpush.msra.mxu0 0.0
        %6125 = vmatpush.msra.mxu0 0.0
        %v6126 = vand.u32 %v6076, 4294901760
        %v6127 = vsub.f32 %v6076, %v6126
        %v6128 = vand.u32 %v6127, 4294901760
        %v6129 = vsub.f32 %v6127, %v6128
        %v6130 = vand.u32 %v6129, 4294901760
        %6131 = vmatpush.msra.mxu0 %v6130
        %v6132 = vand.u32 %v6075, 4294901760
        %v6133 = vsub.f32 %v6075, %v6132
        %v6134 = vand.u32 %v6133, 4294901760
        %v6135 = vsub.f32 %v6133, %v6134
        %v6136 = vand.u32 %v6135, 4294901760
        %6137 = vmatpush.msra.mxu0 %v6136
        %v6138 = vand.u32 %v6074, 4294901760
        %v6139 = vsub.f32 %v6074, %v6138
        %v6140 = vand.u32 %v6139, 4294901760
        %v6141 = vsub.f32 %v6139, %v6140
        %v6142 = vand.u32 %v6141, 4294901760
        %6143 = vmatpush.msra.mxu0 %v6142
        %v6144 = vand.u32 %v6073, 4294901760
        %v6145 = vsub.f32 %v6073, %v6144
        %v6146 = vand.u32 %v6145, 4294901760
        %v6147 = vsub.f32 %v6145, %v6146
        %v6148 = vand.u32 %v6147, 4294901760
        %6149 = vmatpush.msra.mxu0 %v6148
        %v6150 = vand.u32 %v6072, 4294901760
        %v6151 = vsub.f32 %v6072, %v6150
        %v6152 = vand.u32 %v6151, 4294901760
        %v6153 = vsub.f32 %v6151, %v6152
        %v6154 = vand.u32 %v6153, 4294901760
        %6155 = vmatpush.msra.mxu0 %v6154
        %v6156 = vand.u32 %v6071, 4294901760
        %v6157 = vsub.f32 %v6071, %v6156
        %v6158 = vand.u32 %v6157, 4294901760
        %v6159 = vsub.f32 %v6157, %v6158
        %v6160 = vand.u32 %v6159, 4294901760
        %6161 = vmatpush.msra.mxu0 %v6160
        %v6162 = vand.u32 %v6070, 4294901760
        %v6163 = vsub.f32 %v6070, %v6162
        %v6164 = vand.u32 %v6163, 4294901760
        %v6165 = vsub.f32 %v6163, %v6164
        %v6166 = vand.u32 %v6165, 4294901760
        %6167 = vmatpush.msra.mxu0 %v6166
        %v6168 = vand.u32 %v6069, 4294901760
        %v6169 = vsub.f32 %v6069, %v6168
        %v6170 = vand.u32 %v6169, 4294901760
        %v6171 = vsub.f32 %v6169, %v6170
        %v6172 = vand.u32 %v6171, 4294901760
        %6173 = vmatpush.msra.mxu0 %v6172
        %v6174 = vand.u32 %v6083, 4294901760
        %6175 = vmatmul.f32.gmra.mxu0 %v6174
        %v6176 = vpop.f32.mrf.mxu0
        %v6177 = vadd.f32 %v6116, %v6176
        %6178 = vdwg.mxu0
        %6179 = vmatpush.msra.mxu0 0.0
        %6180 = vmatpush.msra.mxu0 0.0
        %6181 = vmatpush.msra.mxu0 0.0
        %6182 = vmatpush.msra.mxu0 0.0
        %6183 = vmatpush.msra.mxu0 0.0
        %6184 = vmatpush.msra.mxu0 0.0
        %6185 = vmatpush.msra.mxu0 0.0
        %6186 = vmatpush.msra.mxu0 0.0
        %v6187 = vand.u32 %v6076, 4294901760
        %v6188 = vsub.f32 %v6076, %v6187
        %6189 = vmatpush.msra.mxu0 %v6188
        %v6190 = vand.u32 %v6075, 4294901760
        %v6191 = vsub.f32 %v6075, %v6190
        %6192 = vmatpush.msra.mxu0 %v6191
        %v6193 = vand.u32 %v6074, 4294901760
        %v6194 = vsub.f32 %v6074, %v6193
        %6195 = vmatpush.msra.mxu0 %v6194
        %v6196 = vand.u32 %v6073, 4294901760
        %v6197 = vsub.f32 %v6073, %v6196
        %6198 = vmatpush.msra.mxu0 %v6197
        %v6199 = vand.u32 %v6072, 4294901760
        %v6200 = vsub.f32 %v6072, %v6199
        %6201 = vmatpush.msra.mxu0 %v6200
        %v6202 = vand.u32 %v6071, 4294901760
        %v6203 = vsub.f32 %v6071, %v6202
        %6204 = vmatpush.msra.mxu0 %v6203
        %v6205 = vand.u32 %v6070, 4294901760
        %v6206 = vsub.f32 %v6070, %v6205
        %6207 = vmatpush.msra.mxu0 %v6206
        %v6208 = vand.u32 %v6069, 4294901760
        %v6209 = vsub.f32 %v6069, %v6208
        %6210 = vmatpush.msra.mxu0 %v6209
        %v6211 = vand.u32 %v6083, 4294901760
        %v6212 = vsub.f32 %v6083, %v6211
        %6213 = vmatmul.f32.gmra.mxu0 %v6212
        %v6214 = vpop.f32.mrf.mxu0
        %v6215 = vadd.f32 %v6177, %v6214
        %6216 = vdwg.mxu0
        %6217 = vmatpush.msra.mxu0 0.0
        %6218 = vmatpush.msra.mxu0 0.0
        %6219 = vmatpush.msra.mxu0 0.0
        %6220 = vmatpush.msra.mxu0 0.0
        %6221 = vmatpush.msra.mxu0 0.0
        %6222 = vmatpush.msra.mxu0 0.0
        %6223 = vmatpush.msra.mxu0 0.0
        %6224 = vmatpush.msra.mxu0 0.0
        %v6225 = vand.u32 %v6076, 4294901760
        %6226 = vmatpush.msra.mxu0 %v6225
        %v6227 = vand.u32 %v6075, 4294901760
        %6228 = vmatpush.msra.mxu0 %v6227
        %v6229 = vand.u32 %v6074, 4294901760
        %6230 = vmatpush.msra.mxu0 %v6229
        %v6231 = vand.u32 %v6073, 4294901760
        %6232 = vmatpush.msra.mxu0 %v6231
        %v6233 = vand.u32 %v6072, 4294901760
        %6234 = vmatpush.msra.mxu0 %v6233
        %v6235 = vand.u32 %v6071, 4294901760
        %6236 = vmatpush.msra.mxu0 %v6235
        %v6237 = vand.u32 %v6070, 4294901760
        %6238 = vmatpush.msra.mxu0 %v6237
        %v6239 = vand.u32 %v6069, 4294901760
        %6240 = vmatpush.msra.mxu0 %v6239
        %v6241 = vand.u32 %v6083, 4294901760
        %v6242 = vsub.f32 %v6083, %v6241
        %v6243 = vand.u32 %v6242, 4294901760
        %6244 = vmatmul.f32.gmra.mxu0 %v6243
        %v6245 = vpop.f32.mrf.mxu0
        %v6246 = vadd.f32 %v6215, %v6245
        %6247 = vdwg.mxu0
        %6248 = vmatpush.msra.mxu0 0.0
        %6249 = vmatpush.msra.mxu0 0.0
        %6250 = vmatpush.msra.mxu0 0.0
        %6251 = vmatpush.msra.mxu0 0.0
        %6252 = vmatpush.msra.mxu0 0.0
        %6253 = vmatpush.msra.mxu0 0.0
        %6254 = vmatpush.msra.mxu0 0.0
        %6255 = vmatpush.msra.mxu0 0.0
        %v6256 = vand.u32 %v6076, 4294901760
        %v6257 = vsub.f32 %v6076, %v6256
        %v6258 = vand.u32 %v6257, 4294901760
        %6259 = vmatpush.msra.mxu0 %v6258
        %v6260 = vand.u32 %v6075, 4294901760
        %v6261 = vsub.f32 %v6075, %v6260
        %v6262 = vand.u32 %v6261, 4294901760
        %6263 = vmatpush.msra.mxu0 %v6262
        %v6264 = vand.u32 %v6074, 4294901760
        %v6265 = vsub.f32 %v6074, %v6264
        %v6266 = vand.u32 %v6265, 4294901760
        %6267 = vmatpush.msra.mxu0 %v6266
        %v6268 = vand.u32 %v6073, 4294901760
        %v6269 = vsub.f32 %v6073, %v6268
        %v6270 = vand.u32 %v6269, 4294901760
        %6271 = vmatpush.msra.mxu0 %v6270
        %v6272 = vand.u32 %v6072, 4294901760
        %v6273 = vsub.f32 %v6072, %v6272
        %v6274 = vand.u32 %v6273, 4294901760
        %6275 = vmatpush.msra.mxu0 %v6274
        %v6276 = vand.u32 %v6071, 4294901760
        %v6277 = vsub.f32 %v6071, %v6276
        %v6278 = vand.u32 %v6277, 4294901760
        %6279 = vmatpush.msra.mxu0 %v6278
        %v6280 = vand.u32 %v6070, 4294901760
        %v6281 = vsub.f32 %v6070, %v6280
        %v6282 = vand.u32 %v6281, 4294901760
        %6283 = vmatpush.msra.mxu0 %v6282
        %v6284 = vand.u32 %v6069, 4294901760
        %v6285 = vsub.f32 %v6069, %v6284
        %v6286 = vand.u32 %v6285, 4294901760
        %6287 = vmatpush.msra.mxu0 %v6286
        %v6288 = vand.u32 %v6083, 4294901760
        %6289 = vmatmul.f32.gmra.mxu0 %v6288
        %v6290 = vpop.f32.mrf.mxu0
        %v6291 = vadd.f32 %v6246, %v6290
        %6292 = vdwg.mxu0
        %6293 = vmatpush.msra.mxu0 0.0
        %6294 = vmatpush.msra.mxu0 0.0
        %6295 = vmatpush.msra.mxu0 0.0
        %6296 = vmatpush.msra.mxu0 0.0
        %6297 = vmatpush.msra.mxu0 0.0
        %6298 = vmatpush.msra.mxu0 0.0
        %6299 = vmatpush.msra.mxu0 0.0
        %6300 = vmatpush.msra.mxu0 0.0
        %v6301 = vand.u32 %v6076, 4294901760
        %6302 = vmatpush.msra.mxu0 %v6301
        %v6303 = vand.u32 %v6075, 4294901760
        %6304 = vmatpush.msra.mxu0 %v6303
        %v6305 = vand.u32 %v6074, 4294901760
        %6306 = vmatpush.msra.mxu0 %v6305
        %v6307 = vand.u32 %v6073, 4294901760
        %6308 = vmatpush.msra.mxu0 %v6307
        %v6309 = vand.u32 %v6072, 4294901760
        %6310 = vmatpush.msra.mxu0 %v6309
        %v6311 = vand.u32 %v6071, 4294901760
        %6312 = vmatpush.msra.mxu0 %v6311
        %v6313 = vand.u32 %v6070, 4294901760
        %6314 = vmatpush.msra.mxu0 %v6313
        %v6315 = vand.u32 %v6069, 4294901760
        %6316 = vmatpush.msra.mxu0 %v6315
        %v6317 = vand.u32 %v6083, 4294901760
        %6318 = vmatmul.f32.gmra.mxu0 %v6317
        %v6319 = vpop.f32.mrf.mxu0
        %v6320 = vadd.f32 %v6291, %v6319
        %6321 = vdwg.mxu0
        %v6322 = vadd.f32 %v5871, %v6320
        %v6323 = vsel %vm920, %v6322, 0.0
        %6324 = vadd.xlane.f32.xlu0 %v6323
        %v6325 = vpop.xlane.xlu0 %6324
        %v6326 = vmul.f32 %v6325, %v3077
        %v6327 = vsub.f32 %v6322, %v6326
        %v6328 = vmul.f32 %v6327, %v6327
        %v6329 = vsel %vm920, %v6328, 0.0
        %6330 = vadd.xlane.f32.xlu0 %v6329
        %v6331 = vpop.xlane.xlu0 %6330
        %v6332 = vmul.f32 %v6331, %v3077
        %v6333 = vadd.f32 %v6332, 1e-05
        %v6334 = vrsqrt.pop %v6333
        %v6335 = vmul.f32 %v6334, %v6333
        %v6336 = vmul.f32 %v6335, %v6334
        %v6337 = vmul.f32 0.5, %v6336
        %v6338 = vsub.f32 1.5, %v6337
        %v6339 = vmul.f32 %v6334, %v6338
        %vm6340 = vweird.f32 %v6333
        %vm6341 = vweird.f32 %v6334
        %vm6342 = vmor %vm6340, %vm6341
        %v6343 = vsel %vm6342, %v6334, %v6339
        %v6344 = vmul.f32 %v6327, %v6343
        %v6345 = vld [vmem:[%s18] sm:$0x1]
        %v6347 = vperm.slane %v6345, 0
        %v6349 = vmul.f32 %v6344, %v6347
        %v6350 = vld [vmem:[%s19] sm:$0x1]
        %v6352 = vperm.slane %v6350, 0
        %v6354 = vadd.f32 %v6349, %v6352
        %v6355 = vsel %vm920, %v6354, 0.0
        %6356 = vst [vmem:[%s898] sm:$0xff] %v6355
        %s6357 = sand.u32 %s572, 1
        %s6358 = scalar_lea.sflag [#allocation4], %s6357
        %s6359 = sand.u32 %s572, 1
        %s6360 = smul.addr %s6359, 8
        %s6361 = scalar_lea.vmem [#allocation16], %s6360
        // Predicated region
        $region149: #{tpu_custom_call.1} parent=115 // pred_check
          %p6362 = pneg %p582
        $region150: #{tpu_custom_call.1} parent=115 // pred_check_branch
          %6364 = sbr.rel (%p6362) target = $region152
        $region151: #{tpu_custom_call.1} parent=115 // pred_region
          %6366 = vsyncadd %s6358, 0
          %s6367 = smul.addr %s45, 8
          %s6368 = scalar_lea.hbm %s24, %s6367
          %s6370 = sshll.u32 %s6361, 4
          %s6371 = int_to_ptr.vmem [resolvable:$true] %s6370
          %s6372 = sshll.u32 %s6368, 4
          %s6373 = int_to_ptr.hbm [resolvable:$true] %s6372
          %6375 = dma.vmem_to_hbm [thread:$0]  %s6371, 128, %s6373, %s6358
        $region152: #{tpu_custom_call.1} parent=115 // pred_fallthru
          _
      $region116: #{tpu_custom_call.1} parent=5 // pred_fallthru
        _
      %p6376 = scmp.le.s32.totalorder 2, %s40
      // Predicated region
      $region153: #{tpu_custom_call.1} parent=5 // pred_check
        %p6377 = pneg %p6376
      $region154: #{tpu_custom_call.1} parent=5 // pred_check_branch
        %6379 = sbr.rel (%p6377) target = $region156
      $region155: #{tpu_custom_call.1} parent=5 // pred_region
        %s6380 = ssub.s32 %s40, 2
        // Predicated region
        $region157: #{tpu_custom_call.1} parent=155 // pred_check
          %p6381 = pneg %p588
        $region158: #{tpu_custom_call.1} parent=155 // pred_check_branch
          %6383 = sbr.rel (%p6381) target = $region160
        $region159: #{tpu_custom_call.1} parent=155 // pred_region
          %s6384 = sand.u32 %s573, 1
          %s6385 = scalar_lea.sflag [#allocation4], %s6384
          %s6386 = sand.u32 %s573, 1
          %s6387 = smul.addr %s6386, 8
          %s6388 = scalar_lea.vmem [#allocation16], %s6387
          %6390 = dma.done %s6385, 128
        $region160: #{tpu_custom_call.1} parent=155 // pred_fallthru
          _
      $region156: #{tpu_custom_call.1} parent=5 // pred_fallthru
        _
    $region6: #{tpu_custom_call.1} parent=1 // loop_footer
      %s44 = sadd.s32 1, %s40
    $region7: #{tpu_custom_call.1} parent=1 // loop_footer_branch
      %39 = sbr.rel target = $region3
    $region8: #{tpu_custom_call.1} parent=1 // loop_exit
      _
    %6391 = vsyncpa [#allocation3], 1
    %s6392 = scalar_lea.sflag [#allocation3], 1
    %6393 = vsyncpa %s6392, 1
    %6394 = vsyncpa [#allocation6], 1
    %6395 = vsyncpa [#allocation9], 1
    %6396 = vsyncpa [#allocation12], 1
    %6397 = vsyncpa [#allocation15], 1
    %6398 = vsyncpa [#allocation4], 1
    %s6399 = scalar_lea.sflag [#allocation4], 1
    %6400 = vsyncpa %s6399, 1

</llo_original>
